<compile_context>
chip_gen: v6e
topology: v6e:2x2x1
jax: 0.10.0
libtpu: 0.0.40
codegen_flags: <defaults>
</compile_context>

<pallas_src>
import functools

import jax
import jax.numpy as jnp
from jax.experimental import pallas as pl
from jax.experimental.pallas import tpu as pltpu


_LANE = 128
_SUBLANE = 8


def _round_up(x, m):
    return (x + m - 1) // m * m


# ---------------------------------------------------------------------------
# Kernels
# ---------------------------------------------------------------------------
def _mlp3_kernel(x_ref, w1_ref, b1_ref, w2_ref, b2_ref, w3_ref, b3_ref, o_ref):
    x = x_ref[...]                                                # bf16 [T, 2048]
    h1 = jnp.dot(x, w1_ref[...], preferred_element_type=jnp.float32) + b1_ref[...]
    h1 = jnp.maximum(h1, 0.0).astype(jnp.bfloat16)                # [T, 1024]
    h2 = jnp.dot(h1, w2_ref[...], preferred_element_type=jnp.float32) + b2_ref[...]
    h2 = jnp.maximum(h2, 0.0).astype(jnp.bfloat16)                # [T, 512]
    o_ref[...] = (
        jnp.dot(h2, w3_ref[...], preferred_element_type=jnp.float32) + b3_ref[...]
    ).astype(o_ref.dtype)                                         # [T, 128] lane-dense


def _mlp2_kernel(x_ref, w1_ref, b1_ref, w2_ref, b2_ref, o_ref):
    x = x_ref[...]                                                # bf16 [T, 2048]
    h1 = jnp.dot(x, w1_ref[...], preferred_element_type=jnp.float32) + b1_ref[...]
    h1 = jnp.maximum(h1, 0.0).astype(jnp.bfloat16)                # [T, 512]
    o_ref[...] = (
        jnp.dot(h1, w2_ref[...], preferred_element_type=jnp.float32) + b2_ref[...]
    ).astype(o_ref.dtype)


def _resident_spec(shape):
    # Full array, same block index for every batch tile -> stays resident in
    # VMEM across grid steps (no re-DMA).
    return pl.BlockSpec(shape, lambda i: (0,) * len(shape))


# ---------------------------------------------------------------------------
# Wrapper
# ---------------------------------------------------------------------------
@functools.partial(jax.jit, static_argnames=("net_depth", "tile_b"))
def net_forward(x, params, net_depth, tile_b=256):
    """Forward pass of `Net`.

    x: [B, 2048] float (cast to bf16 for the MXU).
    params: dict from `init_params` (bf16 weights [in, out], f32 biases [1, out]).
    Returns [B, num_classes] float32 logits.
    """
    B, D_in = x.shape
    assert D_in == 2048

    num_classes = params["w_last"].shape[1]
    nc_pad = _round_up(num_classes, _LANE)         # lane-dense output

    # Batch tile: as large as possible (up to tile_b) without over-padding
    # tiny batches; always a multiple of the 8-row sublane granule.
    tile = min(tile_b, _round_up(B, _SUBLANE))
    B_pad = _round_up(B, tile)

    xb = x.astype(jnp.bfloat16)
    if B_pad != B:
        xb = jnp.pad(xb, ((0, B_pad - B), (0, 0)))

    # Zero-pad the classifier weights/bias out to 128 lanes.
    w_last = params["w_last"]
    b_last = params["b_last"]
    if nc_pad != num_classes:
        w_last = jnp.pad(w_last, ((0, 0), (0, nc_pad - num_classes)))
        b_last = jnp.pad(b_last, ((0, 0), (0, nc_pad - num_classes)))

    if net_depth == 3:
        kernel = _mlp3_kernel
        layers = [
            (params["w1"], params["b1"]),
            (params["w2"], params["b2"]),
            (w_last, b_last),
        ]
    elif net_depth == 2:
        kernel = _mlp2_kernel
        layers = [
            (params["w1"], params["b1"]),
            (w_last, b_last),
        ]
    else:
        raise ValueError(f"unsupported net_depth={net_depth}")

    grid = (B_pad // tile,)
    x_spec = pl.BlockSpec((tile, D_in), lambda i: (i, 0))
    o_spec = pl.BlockSpec((tile, nc_pad), lambda i: (i, 0))
    out_shape = jax.ShapeDtypeStruct((B_pad, nc_pad), jnp.float32)

    in_specs = [x_spec]
    operands = [xb]
    for w, b in layers:
        in_specs += [_resident_spec(w.shape), _resident_spec(b.shape)]
        operands += [w, b]

    flops = 2 * B_pad * sum(w.shape[0] * w.shape[1] for w, _ in layers)
    bytes_accessed = (
        xb.size * xb.dtype.itemsize
        + sum(w.size * w.dtype.itemsize + b.size * b.dtype.itemsize for w, b in layers)
        + B_pad * nc_pad * 4
    )

    out = pl.pallas_call(
        kernel,
        out_shape=out_shape,
        grid_spec=pltpu.PrefetchScalarGridSpec(
            num_scalar_prefetch=0,
            grid=grid,
            in_specs=in_specs,
            out_specs=o_spec,
        ),
        compiler_params=pltpu.CompilerParams(
            dimension_semantics=("parallel",),
            vmem_limit_bytes=48 << 20,   # safe on v5e/v6e (128 MiB) and v7x (64 MiB)
        ),
        cost_estimate=pl.CostEstimate(
            flops=flops, transcendentals=0, bytes_accessed=bytes_accessed
        ),
    )(*operands)

    return out[:B, :num_classes]


# ---------------------------------------------------------------------------
# Parameters (mirror nn.Linear init; weights stored as [in, out])
# ---------------------------------------------------------------------------
def init_params(key, num_classes, net_depth):
    """Weights are kept in bf16 (MXU-native); biases in f32, shaped [1, out]."""

    def linear(k, fan_in, fan_out):
        kw, kb = jax.random.split(k)
        bound = 1.0 / jnp.sqrt(fan_in)
        w = jax.random.uniform(kw, (fan_in, fan_out), jnp.float32, -bound, bound)
        b = jax.random.uniform(kb, (1, fan_out), jnp.float32, -bound, bound)
        return w.astype(jnp.bfloat16), b

    if net_depth == 3:
        k1, k2, k3 = jax.random.split(key, 3)
        w1, b1 = linear(k1, 2048, 1024)
        w2, b2 = linear(k2, 1024, 512)
        w3, b3 = linear(k3, 512, num_classes)
        return {"w1": w1, "b1": b1, "w2": w2, "b2": b2,
                "w_last": w3, "b_last": b3}
    elif net_depth == 2:
        k1, k2 = jax.random.split(key, 2)
        w1, b1 = linear(k1, 2048, 512)
        w2, b2 = linear(k2, 512, num_classes)
        return {"w1": w1, "b1": b1, "w_last": w2, "b_last": b2}
    else:
        raise ValueError(f"unsupported net_depth={net_depth}")


def _reference(x, params, net_depth):
    """Pure-JAX reference using the same bf16-weights / f32-accumulate recipe."""
    if net_depth == 3:
        names = [("w1", "b1"), ("w2", "b2"), ("w_last", "b_last")]
    else:
        names = [("w1", "b1"), ("w_last", "b_last")]
    h = x.astype(jnp.bfloat16)
    for i, (wn, bn) in enumerate(names):
        y = jnp.dot(h, params[wn], preferred_element_type=jnp.float32) + params[bn]
        if i < len(names) - 1:
            h = jnp.maximum(y, 0.0).astype(jnp.bfloat16)
        else:
            return y


if __name__ == "__main__":
    key = jax.random.PRNGKey(0)
    k_x, k_p3, k_p2 = jax.random.split(key, 3)

    num_classes = 10

    # Small batch (single grid step; tile collapses to the padded batch).
    x_small = jax.random.normal(k_x, (8, 2048), dtype=jnp.float32)

    params3 = init_params(k_p3, num_classes, net_depth=3)
    out3 = jax.block_until_ready(net_forward(x_small, params3, net_depth=3))
    ref3 = _reference(x_small, params3, 3)
    assert out3.shape == (8, num_classes)
    assert jnp.allclose(out3, ref3, atol=2e-2, rtol=2e-2)

    params2 = init_params(k_p2, num_classes, net_depth=2)
    out2 = jax.block_until_ready(net_forward(x_small, params2, net_depth=2))
    ref2 = _reference(x_small, params2, 2)
    assert out2.shape == (8, num_classes)
    assert jnp.allclose(out2, ref2, atol=2e-2, rtol=2e-2)

    # Larger, non-multiple batch: exercises the 256-row tiles, batch padding,
    # and a multi-step "parallel" grid (shardable across v7x's 2 TensorCores).
    x_big = jax.random.normal(k_x, (384, 2048), dtype=jnp.float32)
    out_big = jax.block_until_ready(net_forward(x_big, params3, net_depth=3))
    ref_big = _reference(x_big, params3, 3)
    assert out_big.shape == (384, num_classes)
    assert jnp.allclose(out_big, ref_big, atol=2e-2, rtol=2e-2)

    print("KERNEL_OK")
</pallas_src>

<mosaic_0001>
module attributes {stable_mosaic.version = 11 : i64} {
  func.func @_mlp3_kernel(%arg0: i32, %arg1: memref<8x2048xbf16, #tpu.memory_space<vmem>>, %arg2: memref<2048x1024xbf16, #tpu.memory_space<vmem>>, %arg3: memref<1x1024xf32, #tpu.memory_space<vmem>>, %arg4: memref<1024x512xbf16, #tpu.memory_space<vmem>>, %arg5: memref<1x512xf32, #tpu.memory_space<vmem>>, %arg6: memref<512x128xbf16, #tpu.memory_space<vmem>>, %arg7: memref<1x128xf32, #tpu.memory_space<vmem>>, %arg8: memref<8x128xf32, #tpu.memory_space<vmem>>) attributes {dimension_semantics = [#tpu.dimension_semantics<parallel>], iteration_bounds = array<i64: 1>, scalar_prefetch = 0 : i64, scratch_operands = 0 : i64, tpu.core_type = #tpu.core_type<tc>, window_params = [{transform_indices = @transform_0, window_bounds = array<i64: 8, 2048>}, {pipeline_mode = #tpu.pipeline_mode<synchronous>, transform_indices = @transform_1, window_bounds = array<i64: 2048, 1024>}, {pipeline_mode = #tpu.pipeline_mode<synchronous>, transform_indices = @transform_2, window_bounds = array<i64: 1, 1024>}, {pipeline_mode = #tpu.pipeline_mode<synchronous>, transform_indices = @transform_3, window_bounds = array<i64: 1024, 512>}, {pipeline_mode = #tpu.pipeline_mode<synchronous>, transform_indices = @transform_4, window_bounds = array<i64: 1, 512>}, {pipeline_mode = #tpu.pipeline_mode<synchronous>, transform_indices = @transform_5, window_bounds = array<i64: 512, 128>}, {pipeline_mode = #tpu.pipeline_mode<synchronous>, transform_indices = @transform_6, window_bounds = array<i64: 1, 128>}, {transform_indices = @transform_7, window_bounds = array<i64: 8, 128>}]} {
    %c0 = arith.constant 0 : index
    %c0_0 = arith.constant 0 : index
    %0 = vector.load %arg1[%c0, %c0_0] : memref<8x2048xbf16, #tpu.memory_space<vmem>>, vector<8x2048xbf16>
    %c0_1 = arith.constant 0 : index
    %c0_2 = arith.constant 0 : index
    %1 = vector.load %arg2[%c0_1, %c0_2] : memref<2048x1024xbf16, #tpu.memory_space<vmem>>, vector<2048x1024xbf16>
    %cst = arith.constant dense<0.000000e+00> : vector<8x1024xf32>
    %2 = tpu.matmul %0, %1, %cst {dimension_numbers = #tpu.dot_dimension_numbers<[1], [0], [0], [1], [0, 0, 1, 1], [], []>} : vector<8x2048xbf16>, vector<2048x1024xbf16>, vector<8x1024xf32> -> vector<8x1024xf32>
    %c0_3 = arith.constant 0 : index
    %c0_4 = arith.constant 0 : index
    %3 = vector.load %arg3[%c0_3, %c0_4] : memref<1x1024xf32, #tpu.memory_space<vmem>>, vector<1x1024xf32>
    %4 = vector.broadcast %3 : vector<1x1024xf32> to vector<8x1024xf32>
    %5 = arith.addf %2, %4 : vector<8x1024xf32>
    %cst_5 = arith.constant 0.000000e+00 : f32
    %6 = vector.broadcast %cst_5 : f32 to vector<8x1024xf32>
    %7 = arith.maximumf %5, %6 : vector<8x1024xf32>
    %8 = arith.truncf %7 : vector<8x1024xf32> to vector<8x1024xbf16>
    %c0_6 = arith.constant 0 : index
    %c0_7 = arith.constant 0 : index
    %9 = vector.load %arg4[%c0_6, %c0_7] : memref<1024x512xbf16, #tpu.memory_space<vmem>>, vector<1024x512xbf16>
    %cst_8 = arith.constant dense<0.000000e+00> : vector<8x512xf32>
    %10 = tpu.matmul %8, %9, %cst_8 {dimension_numbers = #tpu.dot_dimension_numbers<[1], [0], [0], [1], [0, 0, 1, 1], [], []>} : vector<8x1024xbf16>, vector<1024x512xbf16>, vector<8x512xf32> -> vector<8x512xf32>
    %c0_9 = arith.constant 0 : index
    %c0_10 = arith.constant 0 : index
    %11 = vector.load %arg5[%c0_9, %c0_10] : memref<1x512xf32, #tpu.memory_space<vmem>>, vector<1x512xf32>
    %12 = vector.broadcast %11 : vector<1x512xf32> to vector<8x512xf32>
    %13 = arith.addf %10, %12 : vector<8x512xf32>
    %cst_11 = arith.constant 0.000000e+00 : f32
    %14 = vector.broadcast %cst_11 : f32 to vector<8x512xf32>
    %15 = arith.maximumf %13, %14 : vector<8x512xf32>
    %16 = arith.truncf %15 : vector<8x512xf32> to vector<8x512xbf16>
    %c0_12 = arith.constant 0 : index
    %c0_13 = arith.constant 0 : index
    %17 = vector.load %arg6[%c0_12, %c0_13] : memref<512x128xbf16, #tpu.memory_space<vmem>>, vector<512x128xbf16>
    %cst_14 = arith.constant dense<0.000000e+00> : vector<8x128xf32>
    %18 = tpu.matmul %16, %17, %cst_14 {dimension_numbers = #tpu.dot_dimension_numbers<[1], [0], [0], [1], [0, 0, 1, 1], [], []>} : vector<8x512xbf16>, vector<512x128xbf16>, vector<8x128xf32> -> vector<8x128xf32>
    %c0_15 = arith.constant 0 : index
    %c0_16 = arith.constant 0 : index
    %19 = vector.load %arg7[%c0_15, %c0_16] : memref<1x128xf32, #tpu.memory_space<vmem>>, vector<1x128xf32>
    %20 = vector.broadcast %19 : vector<1x128xf32> to vector<8x128xf32>
    %21 = arith.addf %18, %20 : vector<8x128xf32>
    %c0_17 = arith.constant 0 : index
    %c0_18 = arith.constant 0 : index
    %22 = vector.load %arg8[%c0_17, %c0_18] : memref<8x128xf32, #tpu.memory_space<vmem>>, vector<8x128xf32>
    tpu.vector_store %arg8[%c0_17, %c0_18], %21 {strides = array<i32>} : memref<8x128xf32, #tpu.memory_space<vmem>>, vector<8x128xf32>,
    return
  }
  func.func @transform_0(%arg0: i32) -> (i32, i32) {
    %c0_i32 = arith.constant 0 : i32
    %c0_i32_0 = arith.constant 0 : i32
    return %arg0, %c0_i32 : i32, i32
  }
  func.func @transform_1(%arg0: i32) -> (i32, i32) {
    %c0_i32 = arith.constant 0 : i32
    %c0_i32_0 = arith.constant 0 : i32
    %c0_i32_1 = arith.constant 0 : i32
    return %c0_i32, %c0_i32_0 : i32, i32
  }
  func.func @transform_2(%arg0: i32) -> (i32, i32) {
    %c0_i32 = arith.constant 0 : i32
    %c0_i32_0 = arith.constant 0 : i32
    %c0_i32_1 = arith.constant 0 : i32
    return %c0_i32, %c0_i32_0 : i32, i32
  }
  func.func @transform_3(%arg0: i32) -> (i32, i32) {
    %c0_i32 = arith.constant 0 : i32
    %c0_i32_0 = arith.constant 0 : i32
    %c0_i32_1 = arith.constant 0 : i32
    return %c0_i32, %c0_i32_0 : i32, i32
  }
  func.func @transform_4(%arg0: i32) -> (i32, i32) {
    %c0_i32 = arith.constant 0 : i32
    %c0_i32_0 = arith.constant 0 : i32
    %c0_i32_1 = arith.constant 0 : i32
    return %c0_i32, %c0_i32_0 : i32, i32
  }
  func.func @transform_5(%arg0: i32) -> (i32, i32) {
    %c0_i32 = arith.constant 0 : i32
    %c0_i32_0 = arith.constant 0 : i32
    %c0_i32_1 = arith.constant 0 : i32
    return %c0_i32, %c0_i32_0 : i32, i32
  }
  func.func @transform_6(%arg0: i32) -> (i32, i32) {
    %c0_i32 = arith.constant 0 : i32
    %c0_i32_0 = arith.constant 0 : i32
    %c0_i32_1 = arith.constant 0 : i32
    return %c0_i32, %c0_i32_0 : i32, i32
  }
  func.func @transform_7(%arg0: i32) -> (i32, i32) {
    %c0_i32 = arith.constant 0 : i32
    %c0_i32_0 = arith.constant 0 : i32
    return %arg0, %c0_i32 : i32, i32
  }
}

</mosaic_0001>

<llo_original>
// kernel: net_forward.1
$region0: #{net_forward.1}
  #allocation0 [shape = 'u32[]', space=smem, size = 0x4, offset = 0x4, fixed_abs, tag = 'smem constant byte address 0x4 - core index']
  #allocation1 [shape = 'u32[144,128]{1,0:T(1,128)}', space=vmem, size = 0x12000, scoped, tag = 'internal scratch']
  %s0 = inlined_call_operand.vmem [shape: bf16[8,2048], index: 0, kind: input, shape index: {}]
  %s1 = inlined_call_operand.hbm [shape: bf16[2048,1024], index: 1, kind: input, shape index: {}]
  %s2 = inlined_call_operand.hbm [shape: f32[1,1024], index: 2, kind: input, shape index: {}]
  %s3 = inlined_call_operand.hbm [shape: bf16[1024,512], index: 3, kind: input, shape index: {}]
  %s4 = inlined_call_operand.hbm [shape: f32[1,512], index: 4, kind: input, shape index: {}]
  %s5 = inlined_call_operand.vmem [shape: bf16[512,128], index: 5, kind: input, shape index: {}]
  %s6 = inlined_call_operand.vmem [shape: f32[1,128], index: 6, kind: input, shape index: {}]
  %s7 = inlined_call_operand.hbm [shape: f32[8,128], index: 7, kind: output, shape index: {}]
  %s8 = sld [smem:[#allocation0]]
  $region54: #{net_forward.1} parent=0
    _
  %s10 = ssub.s32 1, %s8
  %s11 = scalar_select 0, %s10, %s8
  $region1: #{net_forward.1} parent=0
    #allocation2 [shape = 'u8[4194304]{0}', space=vmem, size = 0x400000, scoped, tag = 'input window, operand 1, single buffered']
    #allocation3 [shape = 's32[1]{0}', space=sflag, size = 0x4, scoped, tag = 'scoped memory for net_forward.1']
    #allocation4 [shape = 's32[1]{0}', space=sflag, size = 0x4, scoped, tag = 'scoped memory for net_forward.1']
    #allocation5 [shape = 'u8[4096]{0}', space=vmem, size = 0x1000, scoped, tag = 'input window, operand 2, single buffered']
    #allocation6 [shape = 's32[1]{0}', space=sflag, size = 0x4, scoped, tag = 'scoped memory for net_forward.1']
    #allocation7 [shape = 'u8[1048576]{0}', space=vmem, size = 0x100000, scoped, tag = 'input window, operand 3, single buffered']
    #allocation8 [shape = 'u8[2048]{0}', space=vmem, size = 0x800, scoped, tag = 'input window, operand 4, single buffered']
    #allocation9 [shape = 's32[1]{0}', space=sflag, size = 0x4, scoped, tag = 'scoped memory for net_forward.1']
    #allocation10 [shape = 'u8[4096]{0}', space=vmem, size = 0x1000, scoped, tag = 'output window, operand 0, single buffered']
    %12 = vsyncpa [#allocation3], 0
    %13 = vsyncpa [#allocation6], 0
    %14 = vsyncpa [#allocation9], 0
    %15 = vsyncpa [#allocation4], 0
    // Predicated region
    $region2: #{net_forward.1} parent=1 // pred_check
      _
    $region3: #{net_forward.1} parent=1 // pred_check_branch
      %17 = sbr.rel (0) target = $region5
    $region4: #{net_forward.1} parent=1 // pred_region
      _
    $region5: #{net_forward.1} parent=1 // pred_fallthru
      _
    // Predicated region
    $region6: #{net_forward.1} parent=1 // pred_check
      _
    $region7: #{net_forward.1} parent=1 // pred_check_branch
      %19 = sbr.rel (0) target = $region9
    $region8: #{net_forward.1} parent=1 // pred_region
      %s21 = ssub.s32 131072, 131072
      %22 = vsyncadd [#allocation3], %s21
      %s23 = sshll.u32 [#allocation2], 4
      %s24 = int_to_ptr.vmem [resolvable:$true] %s23
      %29 = dma.hbm_to_vmem [thread:$0]  %s1, 131072, %s24, [#allocation3], 512, 512, 32
    $region9: #{net_forward.1} parent=1 // pred_fallthru
      _
    // Predicated region
    $region10: #{net_forward.1} parent=1 // pred_check
      _
    $region11: #{net_forward.1} parent=1 // pred_check_branch
      %31 = sbr.rel (0) target = $region13
    $region12: #{net_forward.1} parent=1 // pred_region
      %s33 = ssub.s32 128, 128
      %34 = vsyncadd [#allocation6], %s33
      %s36 = sshll.u32 [#allocation5], 4
      %s37 = int_to_ptr.vmem [resolvable:$true] %s36
      %39 = dma.hbm_to_vmem [thread:$0]  %s2, 128, %s37, [#allocation6]
    $region13: #{net_forward.1} parent=1 // pred_fallthru
      _
    // Predicated region
    $region14: #{net_forward.1} parent=1 // pred_check
      _
    $region15: #{net_forward.1} parent=1 // pred_check_branch
      %41 = sbr.rel (0) target = $region17
    $region16: #{net_forward.1} parent=1 // pred_region
      %s43 = ssub.s32 32768, 32768
      %44 = vsyncadd [#allocation6], %s43
      %s45 = sshll.u32 [#allocation7], 4
      %s46 = int_to_ptr.vmem [resolvable:$true] %s45
      %51 = dma.hbm_to_vmem [thread:$0]  %s3, 32768, %s46, [#allocation6], 256, 256, 16
    $region17: #{net_forward.1} parent=1 // pred_fallthru
      _
    // Predicated region
    $region18: #{net_forward.1} parent=1 // pred_check
      _
    $region19: #{net_forward.1} parent=1 // pred_check_branch
      %53 = sbr.rel (0) target = $region21
    $region20: #{net_forward.1} parent=1 // pred_region
      %s55 = ssub.s32 64, 64
      %56 = vsyncadd [#allocation9], %s55
      %s58 = sshll.u32 [#allocation8], 4
      %s59 = int_to_ptr.vmem [resolvable:$true] %s58
      %61 = dma.hbm_to_vmem [thread:$0]  %s4, 64, %s59, [#allocation9]
    $region21: #{net_forward.1} parent=1 // pred_fallthru
      _
    // Predicated region
    $region22: #{net_forward.1} parent=1 // pred_check
      _
    $region23: #{net_forward.1} parent=1 // pred_check_branch
      %63 = sbr.rel (0) target = $region25
    $region24: #{net_forward.1} parent=1 // pred_region
      _
    $region25: #{net_forward.1} parent=1 // pred_fallthru
      _
    // Predicated region
    $region26: #{net_forward.1} parent=1 // pred_check
      _
    $region27: #{net_forward.1} parent=1 // pred_check_branch
      %65 = sbr.rel (0) target = $region29
    $region28: #{net_forward.1} parent=1 // pred_region
      _
    $region29: #{net_forward.1} parent=1 // pred_fallthru
      _
    // Predicated region
    $region30: #{net_forward.1} parent=1 // pred_check
      _
    $region31: #{net_forward.1} parent=1 // pred_check_branch
      %67 = sbr.rel (0) target = $region33
    $region32: #{net_forward.1} parent=1 // pred_region
      %68 = dma.done [#allocation3], 131072
    $region33: #{net_forward.1} parent=1 // pred_fallthru
      _
    // Predicated region
    $region34: #{net_forward.1} parent=1 // pred_check
      _
    $region35: #{net_forward.1} parent=1 // pred_check_branch
      %70 = sbr.rel (0) target = $region37
    $region36: #{net_forward.1} parent=1 // pred_region
      %71 = dma.done [#allocation6], 128
    $region37: #{net_forward.1} parent=1 // pred_fallthru
      _
    // Predicated region
    $region38: #{net_forward.1} parent=1 // pred_check
      _
    $region39: #{net_forward.1} parent=1 // pred_check_branch
      %73 = sbr.rel (0) target = $region41
    $region40: #{net_forward.1} parent=1 // pred_region
      %74 = dma.done [#allocation6], 32768
    $region41: #{net_forward.1} parent=1 // pred_fallthru
      _
    // Predicated region
    $region42: #{net_forward.1} parent=1 // pred_check
      _
    $region43: #{net_forward.1} parent=1 // pred_check_branch
      %76 = sbr.rel (0) target = $region45
    $region44: #{net_forward.1} parent=1 // pred_region
      %77 = dma.done [#allocation9], 64
    $region45: #{net_forward.1} parent=1 // pred_fallthru
      _
    %v79 = vld [vmem:[%s0] sm:$0xff]
    %v80 = vld [vmem:[%s0 + $0x8] sm:$0xff]
    %v81 = vld [vmem:[%s0 + $0x10] sm:$0xff]
    %v82 = vld [vmem:[%s0 + $0x18] sm:$0xff]
    %v83 = vld [vmem:[%s0 + $0x20] sm:$0xff]
    %v84 = vld [vmem:[%s0 + $0x28] sm:$0xff]
    %v85 = vld [vmem:[%s0 + $0x30] sm:$0xff]
    %v86 = vld [vmem:[%s0 + $0x38] sm:$0xff]
    %v87 = vld [vmem:[#allocation2] sm:$0xff]
    %v88 = vld [vmem:[#allocation2 + $0x8] sm:$0xff]
    %v89 = vld [vmem:[#allocation2 + $0x10] sm:$0xff]
    %v90 = vld [vmem:[#allocation2 + $0x18] sm:$0xff]
    %v91 = vld [vmem:[#allocation2 + $0x20] sm:$0xff]
    %v92 = vld [vmem:[#allocation2 + $0x28] sm:$0xff]
    %v93 = vld [vmem:[#allocation2 + $0x30] sm:$0xff]
    %v94 = vld [vmem:[#allocation2 + $0x38] sm:$0xff]
    %v95 = vld [vmem:[#allocation2 + $0x40] sm:$0xff]
    %v96 = vld [vmem:[#allocation2 + $0x48] sm:$0xff]
    %v97 = vld [vmem:[#allocation2 + $0x50] sm:$0xff]
    %v98 = vld [vmem:[#allocation2 + $0x58] sm:$0xff]
    %v99 = vld [vmem:[#allocation2 + $0x60] sm:$0xff]
    %v100 = vld [vmem:[#allocation2 + $0x68] sm:$0xff]
    %v101 = vld [vmem:[#allocation2 + $0x70] sm:$0xff]
    %v102 = vld [vmem:[#allocation2 + $0x78] sm:$0xff]
    %v103 = vld [vmem:[#allocation2 + $0x80] sm:$0xff]
    %v104 = vld [vmem:[#allocation2 + $0x88] sm:$0xff]
    %v105 = vld [vmem:[#allocation2 + $0x90] sm:$0xff]
    %v106 = vld [vmem:[#allocation2 + $0x98] sm:$0xff]
    %v107 = vld [vmem:[#allocation2 + $0xa0] sm:$0xff]
    %v108 = vld [vmem:[#allocation2 + $0xa8] sm:$0xff]
    %v109 = vld [vmem:[#allocation2 + $0xb0] sm:$0xff]
    %v110 = vld [vmem:[#allocation2 + $0xb8] sm:$0xff]
    %v111 = vld [vmem:[#allocation2 + $0xc0] sm:$0xff]
    %v112 = vld [vmem:[#allocation2 + $0xc8] sm:$0xff]
    %v113 = vld [vmem:[#allocation2 + $0xd0] sm:$0xff]
    %v114 = vld [vmem:[#allocation2 + $0xd8] sm:$0xff]
    %v115 = vld [vmem:[#allocation2 + $0xe0] sm:$0xff]
    %v116 = vld [vmem:[#allocation2 + $0xe8] sm:$0xff]
    %v117 = vld [vmem:[#allocation2 + $0xf0] sm:$0xff]
    %v118 = vld [vmem:[#allocation2 + $0xf8] sm:$0xff]
    %v119 = vld [vmem:[#allocation2 + $0x100] sm:$0xff]
    %v120 = vld [vmem:[#allocation2 + $0x108] sm:$0xff]
    %v121 = vld [vmem:[#allocation2 + $0x110] sm:$0xff]
    %v122 = vld [vmem:[#allocation2 + $0x118] sm:$0xff]
    %v123 = vld [vmem:[#allocation2 + $0x120] sm:$0xff]
    %v124 = vld [vmem:[#allocation2 + $0x128] sm:$0xff]
    %v125 = vld [vmem:[#allocation2 + $0x130] sm:$0xff]
    %v126 = vld [vmem:[#allocation2 + $0x138] sm:$0xff]
    %v127 = vld [vmem:[#allocation2 + $0x140] sm:$0xff]
    %v128 = vld [vmem:[#allocation2 + $0x148] sm:$0xff]
    %v129 = vld [vmem:[#allocation2 + $0x150] sm:$0xff]
    %v130 = vld [vmem:[#allocation2 + $0x158] sm:$0xff]
    %v131 = vld [vmem:[#allocation2 + $0x160] sm:$0xff]
    %v132 = vld [vmem:[#allocation2 + $0x168] sm:$0xff]
    %v133 = vld [vmem:[#allocation2 + $0x170] sm:$0xff]
    %v134 = vld [vmem:[#allocation2 + $0x178] sm:$0xff]
    %v135 = vld [vmem:[#allocation2 + $0x180] sm:$0xff]
    %v136 = vld [vmem:[#allocation2 + $0x188] sm:$0xff]
    %v137 = vld [vmem:[#allocation2 + $0x190] sm:$0xff]
    %v138 = vld [vmem:[#allocation2 + $0x198] sm:$0xff]
    %v139 = vld [vmem:[#allocation2 + $0x1a0] sm:$0xff]
    %v140 = vld [vmem:[#allocation2 + $0x1a8] sm:$0xff]
    %v141 = vld [vmem:[#allocation2 + $0x1b0] sm:$0xff]
    %v142 = vld [vmem:[#allocation2 + $0x1b8] sm:$0xff]
    %v143 = vld [vmem:[#allocation2 + $0x1c0] sm:$0xff]
    %v144 = vld [vmem:[#allocation2 + $0x1c8] sm:$0xff]
    %v145 = vld [vmem:[#allocation2 + $0x1d0] sm:$0xff]
    %v146 = vld [vmem:[#allocation2 + $0x1d8] sm:$0xff]
    %v147 = vld [vmem:[#allocation2 + $0x1e0] sm:$0xff]
    %v148 = vld [vmem:[#allocation2 + $0x1e8] sm:$0xff]
    %v149 = vld [vmem:[#allocation2 + $0x1f0] sm:$0xff]
    %v150 = vld [vmem:[#allocation2 + $0x1f8] sm:$0xff]
    %v151 = vld [vmem:[#allocation2 + $0x200] sm:$0xff]
    %v152 = vld [vmem:[#allocation2 + $0x208] sm:$0xff]
    %v153 = vld [vmem:[#allocation2 + $0x210] sm:$0xff]
    %v154 = vld [vmem:[#allocation2 + $0x218] sm:$0xff]
    %v155 = vld [vmem:[#allocation2 + $0x220] sm:$0xff]
    %v156 = vld [vmem:[#allocation2 + $0x228] sm:$0xff]
    %v157 = vld [vmem:[#allocation2 + $0x230] sm:$0xff]
    %v158 = vld [vmem:[#allocation2 + $0x238] sm:$0xff]
    %v159 = vld [vmem:[#allocation2 + $0x240] sm:$0xff]
    %v160 = vld [vmem:[#allocation2 + $0x248] sm:$0xff]
    %v161 = vld [vmem:[#allocation2 + $0x250] sm:$0xff]
    %v162 = vld [vmem:[#allocation2 + $0x258] sm:$0xff]
    %v163 = vld [vmem:[#allocation2 + $0x260] sm:$0xff]
    %v164 = vld [vmem:[#allocation2 + $0x268] sm:$0xff]
    %v165 = vld [vmem:[#allocation2 + $0x270] sm:$0xff]
    %v166 = vld [vmem:[#allocation2 + $0x278] sm:$0xff]
    %v167 = vld [vmem:[#allocation2 + $0x280] sm:$0xff]
    %v168 = vld [vmem:[#allocation2 + $0x288] sm:$0xff]
    %v169 = vld [vmem:[#allocation2 + $0x290] sm:$0xff]
    %v170 = vld [vmem:[#allocation2 + $0x298] sm:$0xff]
    %v171 = vld [vmem:[#allocation2 + $0x2a0] sm:$0xff]
    %v172 = vld [vmem:[#allocation2 + $0x2a8] sm:$0xff]
    %v173 = vld [vmem:[#allocation2 + $0x2b0] sm:$0xff]
    %v174 = vld [vmem:[#allocation2 + $0x2b8] sm:$0xff]
    %v175 = vld [vmem:[#allocation2 + $0x2c0] sm:$0xff]
    %v176 = vld [vmem:[#allocation2 + $0x2c8] sm:$0xff]
    %v177 = vld [vmem:[#allocation2 + $0x2d0] sm:$0xff]
    %v178 = vld [vmem:[#allocation2 + $0x2d8] sm:$0xff]
    %v179 = vld [vmem:[#allocation2 + $0x2e0] sm:$0xff]
    %v180 = vld [vmem:[#allocation2 + $0x2e8] sm:$0xff]
    %v181 = vld [vmem:[#allocation2 + $0x2f0] sm:$0xff]
    %v182 = vld [vmem:[#allocation2 + $0x2f8] sm:$0xff]
    %v183 = vld [vmem:[#allocation2 + $0x300] sm:$0xff]
    %v184 = vld [vmem:[#allocation2 + $0x308] sm:$0xff]
    %v185 = vld [vmem:[#allocation2 + $0x310] sm:$0xff]
    %v186 = vld [vmem:[#allocation2 + $0x318] sm:$0xff]
    %v187 = vld [vmem:[#allocation2 + $0x320] sm:$0xff]
    %v188 = vld [vmem:[#allocation2 + $0x328] sm:$0xff]
    %v189 = vld [vmem:[#allocation2 + $0x330] sm:$0xff]
    %v190 = vld [vmem:[#allocation2 + $0x338] sm:$0xff]
    %v191 = vld [vmem:[#allocation2 + $0x340] sm:$0xff]
    %v192 = vld [vmem:[#allocation2 + $0x348] sm:$0xff]
    %v193 = vld [vmem:[#allocation2 + $0x350] sm:$0xff]
    %v194 = vld [vmem:[#allocation2 + $0x358] sm:$0xff]
    %v195 = vld [vmem:[#allocation2 + $0x360] sm:$0xff]
    %v196 = vld [vmem:[#allocation2 + $0x368] sm:$0xff]
    %v197 = vld [vmem:[#allocation2 + $0x370] sm:$0xff]
    %v198 = vld [vmem:[#allocation2 + $0x378] sm:$0xff]
    %v199 = vld [vmem:[#allocation2 + $0x380] sm:$0xff]
    %v200 = vld [vmem:[#allocation2 + $0x388] sm:$0xff]
    %v201 = vld [vmem:[#allocation2 + $0x390] sm:$0xff]
    %v202 = vld [vmem:[#allocation2 + $0x398] sm:$0xff]
    %v203 = vld [vmem:[#allocation2 + $0x3a0] sm:$0xff]
    %v204 = vld [vmem:[#allocation2 + $0x3a8] sm:$0xff]
    %v205 = vld [vmem:[#allocation2 + $0x3b0] sm:$0xff]
    %v206 = vld [vmem:[#allocation2 + $0x3b8] sm:$0xff]
    %v207 = vld [vmem:[#allocation2 + $0x3c0] sm:$0xff]
    %v208 = vld [vmem:[#allocation2 + $0x3c8] sm:$0xff]
    %v209 = vld [vmem:[#allocation2 + $0x3d0] sm:$0xff]
    %v210 = vld [vmem:[#allocation2 + $0x3d8] sm:$0xff]
    %v211 = vld [vmem:[#allocation2 + $0x3e0] sm:$0xff]
    %v212 = vld [vmem:[#allocation2 + $0x3e8] sm:$0xff]
    %v213 = vld [vmem:[#allocation2 + $0x3f0] sm:$0xff]
    %v214 = vld [vmem:[#allocation2 + $0x3f8] sm:$0xff]
    %v215 = vld [vmem:[#allocation2 + $0x400] sm:$0xff]
    %v216 = vld [vmem:[#allocation2 + $0x408] sm:$0xff]
    %v217 = vld [vmem:[#allocation2 + $0x410] sm:$0xff]
    %v218 = vld [vmem:[#allocation2 + $0x418] sm:$0xff]
    %v219 = vld [vmem:[#allocation2 + $0x420] sm:$0xff]
    %v220 = vld [vmem:[#allocation2 + $0x428] sm:$0xff]
    %v221 = vld [vmem:[#allocation2 + $0x430] sm:$0xff]
    %v222 = vld [vmem:[#allocation2 + $0x438] sm:$0xff]
    %v223 = vld [vmem:[#allocation2 + $0x440] sm:$0xff]
    %v224 = vld [vmem:[#allocation2 + $0x448] sm:$0xff]
    %v225 = vld [vmem:[#allocation2 + $0x450] sm:$0xff]
    %v226 = vld [vmem:[#allocation2 + $0x458] sm:$0xff]
    %v227 = vld [vmem:[#allocation2 + $0x460] sm:$0xff]
    %v228 = vld [vmem:[#allocation2 + $0x468] sm:$0xff]
    %v229 = vld [vmem:[#allocation2 + $0x470] sm:$0xff]
    %v230 = vld [vmem:[#allocation2 + $0x478] sm:$0xff]
    %v231 = vld [vmem:[#allocation2 + $0x480] sm:$0xff]
    %v232 = vld [vmem:[#allocation2 + $0x488] sm:$0xff]
    %v233 = vld [vmem:[#allocation2 + $0x490] sm:$0xff]
    %v234 = vld [vmem:[#allocation2 + $0x498] sm:$0xff]
    %v235 = vld [vmem:[#allocation2 + $0x4a0] sm:$0xff]
    %v236 = vld [vmem:[#allocation2 + $0x4a8] sm:$0xff]
    %v237 = vld [vmem:[#allocation2 + $0x4b0] sm:$0xff]
    %v238 = vld [vmem:[#allocation2 + $0x4b8] sm:$0xff]
    %v239 = vld [vmem:[#allocation2 + $0x4c0] sm:$0xff]
    %v240 = vld [vmem:[#allocation2 + $0x4c8] sm:$0xff]
    %v241 = vld [vmem:[#allocation2 + $0x4d0] sm:$0xff]
    %v242 = vld [vmem:[#allocation2 + $0x4d8] sm:$0xff]
    %v243 = vld [vmem:[#allocation2 + $0x4e0] sm:$0xff]
    %v244 = vld [vmem:[#allocation2 + $0x4e8] sm:$0xff]
    %v245 = vld [vmem:[#allocation2 + $0x4f0] sm:$0xff]
    %v246 = vld [vmem:[#allocation2 + $0x4f8] sm:$0xff]
    %v247 = vld [vmem:[#allocation2 + $0x500] sm:$0xff]
    %v248 = vld [vmem:[#allocation2 + $0x508] sm:$0xff]
    %v249 = vld [vmem:[#allocation2 + $0x510] sm:$0xff]
    %v250 = vld [vmem:[#allocation2 + $0x518] sm:$0xff]
    %v251 = vld [vmem:[#allocation2 + $0x520] sm:$0xff]
    %v252 = vld [vmem:[#allocation2 + $0x528] sm:$0xff]
    %v253 = vld [vmem:[#allocation2 + $0x530] sm:$0xff]
    %v254 = vld [vmem:[#allocation2 + $0x538] sm:$0xff]
    %v255 = vld [vmem:[#allocation2 + $0x540] sm:$0xff]
    %v256 = vld [vmem:[#allocation2 + $0x548] sm:$0xff]
    %v257 = vld [vmem:[#allocation2 + $0x550] sm:$0xff]
    %v258 = vld [vmem:[#allocation2 + $0x558] sm:$0xff]
    %v259 = vld [vmem:[#allocation2 + $0x560] sm:$0xff]
    %v260 = vld [vmem:[#allocation2 + $0x568] sm:$0xff]
    %v261 = vld [vmem:[#allocation2 + $0x570] sm:$0xff]
    %v262 = vld [vmem:[#allocation2 + $0x578] sm:$0xff]
    %v263 = vld [vmem:[#allocation2 + $0x580] sm:$0xff]
    %v264 = vld [vmem:[#allocation2 + $0x588] sm:$0xff]
    %v265 = vld [vmem:[#allocation2 + $0x590] sm:$0xff]
    %v266 = vld [vmem:[#allocation2 + $0x598] sm:$0xff]
    %v267 = vld [vmem:[#allocation2 + $0x5a0] sm:$0xff]
    %v268 = vld [vmem:[#allocation2 + $0x5a8] sm:$0xff]
    %v269 = vld [vmem:[#allocation2 + $0x5b0] sm:$0xff]
    %v270 = vld [vmem:[#allocation2 + $0x5b8] sm:$0xff]
    %v271 = vld [vmem:[#allocation2 + $0x5c0] sm:$0xff]
    %v272 = vld [vmem:[#allocation2 + $0x5c8] sm:$0xff]
    %v273 = vld [vmem:[#allocation2 + $0x5d0] sm:$0xff]
    %v274 = vld [vmem:[#allocation2 + $0x5d8] sm:$0xff]
    %v275 = vld [vmem:[#allocation2 + $0x5e0] sm:$0xff]
    %v276 = vld [vmem:[#allocation2 + $0x5e8] sm:$0xff]
    %v277 = vld [vmem:[#allocation2 + $0x5f0] sm:$0xff]
    %v278 = vld [vmem:[#allocation2 + $0x5f8] sm:$0xff]
    %v279 = vld [vmem:[#allocation2 + $0x600] sm:$0xff]
    %v280 = vld [vmem:[#allocation2 + $0x608] sm:$0xff]
    %v281 = vld [vmem:[#allocation2 + $0x610] sm:$0xff]
    %v282 = vld [vmem:[#allocation2 + $0x618] sm:$0xff]
    %v283 = vld [vmem:[#allocation2 + $0x620] sm:$0xff]
    %v284 = vld [vmem:[#allocation2 + $0x628] sm:$0xff]
    %v285 = vld [vmem:[#allocation2 + $0x630] sm:$0xff]
    %v286 = vld [vmem:[#allocation2 + $0x638] sm:$0xff]
    %v287 = vld [vmem:[#allocation2 + $0x640] sm:$0xff]
    %v288 = vld [vmem:[#allocation2 + $0x648] sm:$0xff]
    %v289 = vld [vmem:[#allocation2 + $0x650] sm:$0xff]
    %v290 = vld [vmem:[#allocation2 + $0x658] sm:$0xff]
    %v291 = vld [vmem:[#allocation2 + $0x660] sm:$0xff]
    %v292 = vld [vmem:[#allocation2 + $0x668] sm:$0xff]
    %v293 = vld [vmem:[#allocation2 + $0x670] sm:$0xff]
    %v294 = vld [vmem:[#allocation2 + $0x678] sm:$0xff]
    %v295 = vld [vmem:[#allocation2 + $0x680] sm:$0xff]
    %v296 = vld [vmem:[#allocation2 + $0x688] sm:$0xff]
    %v297 = vld [vmem:[#allocation2 + $0x690] sm:$0xff]
    %v298 = vld [vmem:[#allocation2 + $0x698] sm:$0xff]
    %v299 = vld [vmem:[#allocation2 + $0x6a0] sm:$0xff]
    %v300 = vld [vmem:[#allocation2 + $0x6a8] sm:$0xff]
    %v301 = vld [vmem:[#allocation2 + $0x6b0] sm:$0xff]
    %v302 = vld [vmem:[#allocation2 + $0x6b8] sm:$0xff]
    %v303 = vld [vmem:[#allocation2 + $0x6c0] sm:$0xff]
    %v304 = vld [vmem:[#allocation2 + $0x6c8] sm:$0xff]
    %v305 = vld [vmem:[#allocation2 + $0x6d0] sm:$0xff]
    %v306 = vld [vmem:[#allocation2 + $0x6d8] sm:$0xff]
    %v307 = vld [vmem:[#allocation2 + $0x6e0] sm:$0xff]
    %v308 = vld [vmem:[#allocation2 + $0x6e8] sm:$0xff]
    %v309 = vld [vmem:[#allocation2 + $0x6f0] sm:$0xff]
    %v310 = vld [vmem:[#allocation2 + $0x6f8] sm:$0xff]
    %v311 = vld [vmem:[#allocation2 + $0x700] sm:$0xff]
    %v312 = vld [vmem:[#allocation2 + $0x708] sm:$0xff]
    %v313 = vld [vmem:[#allocation2 + $0x710] sm:$0xff]
    %v314 = vld [vmem:[#allocation2 + $0x718] sm:$0xff]
    %v315 = vld [vmem:[#allocation2 + $0x720] sm:$0xff]
    %v316 = vld [vmem:[#allocation2 + $0x728] sm:$0xff]
    %v317 = vld [vmem:[#allocation2 + $0x730] sm:$0xff]
    %v318 = vld [vmem:[#allocation2 + $0x738] sm:$0xff]
    %v319 = vld [vmem:[#allocation2 + $0x740] sm:$0xff]
    %v320 = vld [vmem:[#allocation2 + $0x748] sm:$0xff]
    %v321 = vld [vmem:[#allocation2 + $0x750] sm:$0xff]
    %v322 = vld [vmem:[#allocation2 + $0x758] sm:$0xff]
    %v323 = vld [vmem:[#allocation2 + $0x760] sm:$0xff]
    %v324 = vld [vmem:[#allocation2 + $0x768] sm:$0xff]
    %v325 = vld [vmem:[#allocation2 + $0x770] sm:$0xff]
    %v326 = vld [vmem:[#allocation2 + $0x778] sm:$0xff]
    %v327 = vld [vmem:[#allocation2 + $0x780] sm:$0xff]
    %v328 = vld [vmem:[#allocation2 + $0x788] sm:$0xff]
    %v329 = vld [vmem:[#allocation2 + $0x790] sm:$0xff]
    %v330 = vld [vmem:[#allocation2 + $0x798] sm:$0xff]
    %v331 = vld [vmem:[#allocation2 + $0x7a0] sm:$0xff]
    %v332 = vld [vmem:[#allocation2 + $0x7a8] sm:$0xff]
    %v333 = vld [vmem:[#allocation2 + $0x7b0] sm:$0xff]
    %v334 = vld [vmem:[#allocation2 + $0x7b8] sm:$0xff]
    %v335 = vld [vmem:[#allocation2 + $0x7c0] sm:$0xff]
    %v336 = vld [vmem:[#allocation2 + $0x7c8] sm:$0xff]
    %v337 = vld [vmem:[#allocation2 + $0x7d0] sm:$0xff]
    %v338 = vld [vmem:[#allocation2 + $0x7d8] sm:$0xff]
    %v339 = vld [vmem:[#allocation2 + $0x7e0] sm:$0xff]
    %v340 = vld [vmem:[#allocation2 + $0x7e8] sm:$0xff]
    %v341 = vld [vmem:[#allocation2 + $0x7f0] sm:$0xff]
    %v342 = vld [vmem:[#allocation2 + $0x7f8] sm:$0xff]
    %v343 = vld [vmem:[#allocation2 + $0x800] sm:$0xff]
    %v344 = vld [vmem:[#allocation2 + $0x808] sm:$0xff]
    %v345 = vld [vmem:[#allocation2 + $0x810] sm:$0xff]
    %v346 = vld [vmem:[#allocation2 + $0x818] sm:$0xff]
    %v347 = vld [vmem:[#allocation2 + $0x820] sm:$0xff]
    %v348 = vld [vmem:[#allocation2 + $0x828] sm:$0xff]
    %v349 = vld [vmem:[#allocation2 + $0x830] sm:$0xff]
    %v350 = vld [vmem:[#allocation2 + $0x838] sm:$0xff]
    %v351 = vld [vmem:[#allocation2 + $0x840] sm:$0xff]
    %v352 = vld [vmem:[#allocation2 + $0x848] sm:$0xff]
    %v353 = vld [vmem:[#allocation2 + $0x850] sm:$0xff]
    %v354 = vld [vmem:[#allocation2 + $0x858] sm:$0xff]
    %v355 = vld [vmem:[#allocation2 + $0x860] sm:$0xff]
    %v356 = vld [vmem:[#allocation2 + $0x868] sm:$0xff]
    %v357 = vld [vmem:[#allocation2 + $0x870] sm:$0xff]
    %v358 = vld [vmem:[#allocation2 + $0x878] sm:$0xff]
    %v359 = vld [vmem:[#allocation2 + $0x880] sm:$0xff]
    %v360 = vld [vmem:[#allocation2 + $0x888] sm:$0xff]
    %v361 = vld [vmem:[#allocation2 + $0x890] sm:$0xff]
    %v362 = vld [vmem:[#allocation2 + $0x898] sm:$0xff]
    %v363 = vld [vmem:[#allocation2 + $0x8a0] sm:$0xff]
    %v364 = vld [vmem:[#allocation2 + $0x8a8] sm:$0xff]
    %v365 = vld [vmem:[#allocation2 + $0x8b0] sm:$0xff]
    %v366 = vld [vmem:[#allocation2 + $0x8b8] sm:$0xff]
    %v367 = vld [vmem:[#allocation2 + $0x8c0] sm:$0xff]
    %v368 = vld [vmem:[#allocation2 + $0x8c8] sm:$0xff]
    %v369 = vld [vmem:[#allocation2 + $0x8d0] sm:$0xff]
    %v370 = vld [vmem:[#allocation2 + $0x8d8] sm:$0xff]
    %v371 = vld [vmem:[#allocation2 + $0x8e0] sm:$0xff]
    %v372 = vld [vmem:[#allocation2 + $0x8e8] sm:$0xff]
    %v373 = vld [vmem:[#allocation2 + $0x8f0] sm:$0xff]
    %v374 = vld [vmem:[#allocation2 + $0x8f8] sm:$0xff]
    %v375 = vld [vmem:[#allocation2 + $0x900] sm:$0xff]
    %v376 = vld [vmem:[#allocation2 + $0x908] sm:$0xff]
    %v377 = vld [vmem:[#allocation2 + $0x910] sm:$0xff]
    %v378 = vld [vmem:[#allocation2 + $0x918] sm:$0xff]
    %v379 = vld [vmem:[#allocation2 + $0x920] sm:$0xff]
    %v380 = vld [vmem:[#allocation2 + $0x928] sm:$0xff]
    %v381 = vld [vmem:[#allocation2 + $0x930] sm:$0xff]
    %v382 = vld [vmem:[#allocation2 + $0x938] sm:$0xff]
    %v383 = vld [vmem:[#allocation2 + $0x940] sm:$0xff]
    %v384 = vld [vmem:[#allocation2 + $0x948] sm:$0xff]
    %v385 = vld [vmem:[#allocation2 + $0x950] sm:$0xff]
    %v386 = vld [vmem:[#allocation2 + $0x958] sm:$0xff]
    %v387 = vld [vmem:[#allocation2 + $0x960] sm:$0xff]
    %v388 = vld [vmem:[#allocation2 + $0x968] sm:$0xff]
    %v389 = vld [vmem:[#allocation2 + $0x970] sm:$0xff]
    %v390 = vld [vmem:[#allocation2 + $0x978] sm:$0xff]
    %v391 = vld [vmem:[#allocation2 + $0x980] sm:$0xff]
    %v392 = vld [vmem:[#allocation2 + $0x988] sm:$0xff]
    %v393 = vld [vmem:[#allocation2 + $0x990] sm:$0xff]
    %v394 = vld [vmem:[#allocation2 + $0x998] sm:$0xff]
    %v395 = vld [vmem:[#allocation2 + $0x9a0] sm:$0xff]
    %v396 = vld [vmem:[#allocation2 + $0x9a8] sm:$0xff]
    %v397 = vld [vmem:[#allocation2 + $0x9b0] sm:$0xff]
    %v398 = vld [vmem:[#allocation2 + $0x9b8] sm:$0xff]
    %v399 = vld [vmem:[#allocation2 + $0x9c0] sm:$0xff]
    %v400 = vld [vmem:[#allocation2 + $0x9c8] sm:$0xff]
    %v401 = vld [vmem:[#allocation2 + $0x9d0] sm:$0xff]
    %v402 = vld [vmem:[#allocation2 + $0x9d8] sm:$0xff]
    %v403 = vld [vmem:[#allocation2 + $0x9e0] sm:$0xff]
    %v404 = vld [vmem:[#allocation2 + $0x9e8] sm:$0xff]
    %v405 = vld [vmem:[#allocation2 + $0x9f0] sm:$0xff]
    %v406 = vld [vmem:[#allocation2 + $0x9f8] sm:$0xff]
    %v407 = vld [vmem:[#allocation2 + $0xa00] sm:$0xff]
    %v408 = vld [vmem:[#allocation2 + $0xa08] sm:$0xff]
    %v409 = vld [vmem:[#allocation2 + $0xa10] sm:$0xff]
    %v410 = vld [vmem:[#allocation2 + $0xa18] sm:$0xff]
    %v411 = vld [vmem:[#allocation2 + $0xa20] sm:$0xff]
    %v412 = vld [vmem:[#allocation2 + $0xa28] sm:$0xff]
    %v413 = vld [vmem:[#allocation2 + $0xa30] sm:$0xff]
    %v414 = vld [vmem:[#allocation2 + $0xa38] sm:$0xff]
    %v415 = vld [vmem:[#allocation2 + $0xa40] sm:$0xff]
    %v416 = vld [vmem:[#allocation2 + $0xa48] sm:$0xff]
    %v417 = vld [vmem:[#allocation2 + $0xa50] sm:$0xff]
    %v418 = vld [vmem:[#allocation2 + $0xa58] sm:$0xff]
    %v419 = vld [vmem:[#allocation2 + $0xa60] sm:$0xff]
    %v420 = vld [vmem:[#allocation2 + $0xa68] sm:$0xff]
    %v421 = vld [vmem:[#allocation2 + $0xa70] sm:$0xff]
    %v422 = vld [vmem:[#allocation2 + $0xa78] sm:$0xff]
    %v423 = vld [vmem:[#allocation2 + $0xa80] sm:$0xff]
    %v424 = vld [vmem:[#allocation2 + $0xa88] sm:$0xff]
    %v425 = vld [vmem:[#allocation2 + $0xa90] sm:$0xff]
    %v426 = vld [vmem:[#allocation2 + $0xa98] sm:$0xff]
    %v427 = vld [vmem:[#allocation2 + $0xaa0] sm:$0xff]
    %v428 = vld [vmem:[#allocation2 + $0xaa8] sm:$0xff]
    %v429 = vld [vmem:[#allocation2 + $0xab0] sm:$0xff]
    %v430 = vld [vmem:[#allocation2 + $0xab8] sm:$0xff]
    %v431 = vld [vmem:[#allocation2 + $0xac0] sm:$0xff]
    %v432 = vld [vmem:[#allocation2 + $0xac8] sm:$0xff]
    %v433 = vld [vmem:[#allocation2 + $0xad0] sm:$0xff]
    %v434 = vld [vmem:[#allocation2 + $0xad8] sm:$0xff]
    %v435 = vld [vmem:[#allocation2 + $0xae0] sm:$0xff]
    %v436 = vld [vmem:[#allocation2 + $0xae8] sm:$0xff]
    %v437 = vld [vmem:[#allocation2 + $0xaf0] sm:$0xff]
    %v438 = vld [vmem:[#allocation2 + $0xaf8] sm:$0xff]
    %v439 = vld [vmem:[#allocation2 + $0xb00] sm:$0xff]
    %v440 = vld [vmem:[#allocation2 + $0xb08] sm:$0xff]
    %v441 = vld [vmem:[#allocation2 + $0xb10] sm:$0xff]
    %v442 = vld [vmem:[#allocation2 + $0xb18] sm:$0xff]
    %v443 = vld [vmem:[#allocation2 + $0xb20] sm:$0xff]
    %v444 = vld [vmem:[#allocation2 + $0xb28] sm:$0xff]
    %v445 = vld [vmem:[#allocation2 + $0xb30] sm:$0xff]
    %v446 = vld [vmem:[#allocation2 + $0xb38] sm:$0xff]
    %v447 = vld [vmem:[#allocation2 + $0xb40] sm:$0xff]
    %v448 = vld [vmem:[#allocation2 + $0xb48] sm:$0xff]
    %v449 = vld [vmem:[#allocation2 + $0xb50] sm:$0xff]
    %v450 = vld [vmem:[#allocation2 + $0xb58] sm:$0xff]
    %v451 = vld [vmem:[#allocation2 + $0xb60] sm:$0xff]
    %v452 = vld [vmem:[#allocation2 + $0xb68] sm:$0xff]
    %v453 = vld [vmem:[#allocation2 + $0xb70] sm:$0xff]
    %v454 = vld [vmem:[#allocation2 + $0xb78] sm:$0xff]
    %v455 = vld [vmem:[#allocation2 + $0xb80] sm:$0xff]
    %v456 = vld [vmem:[#allocation2 + $0xb88] sm:$0xff]
    %v457 = vld [vmem:[#allocation2 + $0xb90] sm:$0xff]
    %v458 = vld [vmem:[#allocation2 + $0xb98] sm:$0xff]
    %v459 = vld [vmem:[#allocation2 + $0xba0] sm:$0xff]
    %v460 = vld [vmem:[#allocation2 + $0xba8] sm:$0xff]
    %v461 = vld [vmem:[#allocation2 + $0xbb0] sm:$0xff]
    %v462 = vld [vmem:[#allocation2 + $0xbb8] sm:$0xff]
    %v463 = vld [vmem:[#allocation2 + $0xbc0] sm:$0xff]
    %v464 = vld [vmem:[#allocation2 + $0xbc8] sm:$0xff]
    %v465 = vld [vmem:[#allocation2 + $0xbd0] sm:$0xff]
    %v466 = vld [vmem:[#allocation2 + $0xbd8] sm:$0xff]
    %v467 = vld [vmem:[#allocation2 + $0xbe0] sm:$0xff]
    %v468 = vld [vmem:[#allocation2 + $0xbe8] sm:$0xff]
    %v469 = vld [vmem:[#allocation2 + $0xbf0] sm:$0xff]
    %v470 = vld [vmem:[#allocation2 + $0xbf8] sm:$0xff]
    %v471 = vld [vmem:[#allocation2 + $0xc00] sm:$0xff]
    %v472 = vld [vmem:[#allocation2 + $0xc08] sm:$0xff]
    %v473 = vld [vmem:[#allocation2 + $0xc10] sm:$0xff]
    %v474 = vld [vmem:[#allocation2 + $0xc18] sm:$0xff]
    %v475 = vld [vmem:[#allocation2 + $0xc20] sm:$0xff]
    %v476 = vld [vmem:[#allocation2 + $0xc28] sm:$0xff]
    %v477 = vld [vmem:[#allocation2 + $0xc30] sm:$0xff]
    %v478 = vld [vmem:[#allocation2 + $0xc38] sm:$0xff]
    %v479 = vld [vmem:[#allocation2 + $0xc40] sm:$0xff]
    %v480 = vld [vmem:[#allocation2 + $0xc48] sm:$0xff]
    %v481 = vld [vmem:[#allocation2 + $0xc50] sm:$0xff]
    %v482 = vld [vmem:[#allocation2 + $0xc58] sm:$0xff]
    %v483 = vld [vmem:[#allocation2 + $0xc60] sm:$0xff]
    %v484 = vld [vmem:[#allocation2 + $0xc68] sm:$0xff]
    %v485 = vld [vmem:[#allocation2 + $0xc70] sm:$0xff]
    %v486 = vld [vmem:[#allocation2 + $0xc78] sm:$0xff]
    %v487 = vld [vmem:[#allocation2 + $0xc80] sm:$0xff]
    %v488 = vld [vmem:[#allocation2 + $0xc88] sm:$0xff]
    %v489 = vld [vmem:[#allocation2 + $0xc90] sm:$0xff]
    %v490 = vld [vmem:[#allocation2 + $0xc98] sm:$0xff]
    %v491 = vld [vmem:[#allocation2 + $0xca0] sm:$0xff]
    %v492 = vld [vmem:[#allocation2 + $0xca8] sm:$0xff]
    %v493 = vld [vmem:[#allocation2 + $0xcb0] sm:$0xff]
    %v494 = vld [vmem:[#allocation2 + $0xcb8] sm:$0xff]
    %v495 = vld [vmem:[#allocation2 + $0xcc0] sm:$0xff]
    %v496 = vld [vmem:[#allocation2 + $0xcc8] sm:$0xff]
    %v497 = vld [vmem:[#allocation2 + $0xcd0] sm:$0xff]
    %v498 = vld [vmem:[#allocation2 + $0xcd8] sm:$0xff]
    %v499 = vld [vmem:[#allocation2 + $0xce0] sm:$0xff]
    %v500 = vld [vmem:[#allocation2 + $0xce8] sm:$0xff]
    %v501 = vld [vmem:[#allocation2 + $0xcf0] sm:$0xff]
    %v502 = vld [vmem:[#allocation2 + $0xcf8] sm:$0xff]
    %v503 = vld [vmem:[#allocation2 + $0xd00] sm:$0xff]
    %v504 = vld [vmem:[#allocation2 + $0xd08] sm:$0xff]
    %v505 = vld [vmem:[#allocation2 + $0xd10] sm:$0xff]
    %v506 = vld [vmem:[#allocation2 + $0xd18] sm:$0xff]
    %v507 = vld [vmem:[#allocation2 + $0xd20] sm:$0xff]
    %v508 = vld [vmem:[#allocation2 + $0xd28] sm:$0xff]
    %v509 = vld [vmem:[#allocation2 + $0xd30] sm:$0xff]
    %v510 = vld [vmem:[#allocation2 + $0xd38] sm:$0xff]
    %v511 = vld [vmem:[#allocation2 + $0xd40] sm:$0xff]
    %v512 = vld [vmem:[#allocation2 + $0xd48] sm:$0xff]
    %v513 = vld [vmem:[#allocation2 + $0xd50] sm:$0xff]
    %v514 = vld [vmem:[#allocation2 + $0xd58] sm:$0xff]
    %v515 = vld [vmem:[#allocation2 + $0xd60] sm:$0xff]
    %v516 = vld [vmem:[#allocation2 + $0xd68] sm:$0xff]
    %v517 = vld [vmem:[#allocation2 + $0xd70] sm:$0xff]
    %v518 = vld [vmem:[#allocation2 + $0xd78] sm:$0xff]
    %v519 = vld [vmem:[#allocation2 + $0xd80] sm:$0xff]
    %v520 = vld [vmem:[#allocation2 + $0xd88] sm:$0xff]
    %v521 = vld [vmem:[#allocation2 + $0xd90] sm:$0xff]
    %v522 = vld [vmem:[#allocation2 + $0xd98] sm:$0xff]
    %v523 = vld [vmem:[#allocation2 + $0xda0] sm:$0xff]
    %v524 = vld [vmem:[#allocation2 + $0xda8] sm:$0xff]
    %v525 = vld [vmem:[#allocation2 + $0xdb0] sm:$0xff]
    %v526 = vld [vmem:[#allocation2 + $0xdb8] sm:$0xff]
    %v527 = vld [vmem:[#allocation2 + $0xdc0] sm:$0xff]
    %v528 = vld [vmem:[#allocation2 + $0xdc8] sm:$0xff]
    %v529 = vld [vmem:[#allocation2 + $0xdd0] sm:$0xff]
    %v530 = vld [vmem:[#allocation2 + $0xdd8] sm:$0xff]
    %v531 = vld [vmem:[#allocation2 + $0xde0] sm:$0xff]
    %v532 = vld [vmem:[#allocation2 + $0xde8] sm:$0xff]
    %v533 = vld [vmem:[#allocation2 + $0xdf0] sm:$0xff]
    %v534 = vld [vmem:[#allocation2 + $0xdf8] sm:$0xff]
    %v535 = vld [vmem:[#allocation2 + $0xe00] sm:$0xff]
    %v536 = vld [vmem:[#allocation2 + $0xe08] sm:$0xff]
    %v537 = vld [vmem:[#allocation2 + $0xe10] sm:$0xff]
    %v538 = vld [vmem:[#allocation2 + $0xe18] sm:$0xff]
    %v539 = vld [vmem:[#allocation2 + $0xe20] sm:$0xff]
    %v540 = vld [vmem:[#allocation2 + $0xe28] sm:$0xff]
    %v541 = vld [vmem:[#allocation2 + $0xe30] sm:$0xff]
    %v542 = vld [vmem:[#allocation2 + $0xe38] sm:$0xff]
    %v543 = vld [vmem:[#allocation2 + $0xe40] sm:$0xff]
    %v544 = vld [vmem:[#allocation2 + $0xe48] sm:$0xff]
    %v545 = vld [vmem:[#allocation2 + $0xe50] sm:$0xff]
    %v546 = vld [vmem:[#allocation2 + $0xe58] sm:$0xff]
    %v547 = vld [vmem:[#allocation2 + $0xe60] sm:$0xff]
    %v548 = vld [vmem:[#allocation2 + $0xe68] sm:$0xff]
    %v549 = vld [vmem:[#allocation2 + $0xe70] sm:$0xff]
    %v550 = vld [vmem:[#allocation2 + $0xe78] sm:$0xff]
    %v551 = vld [vmem:[#allocation2 + $0xe80] sm:$0xff]
    %v552 = vld [vmem:[#allocation2 + $0xe88] sm:$0xff]
    %v553 = vld [vmem:[#allocation2 + $0xe90] sm:$0xff]
    %v554 = vld [vmem:[#allocation2 + $0xe98] sm:$0xff]
    %v555 = vld [vmem:[#allocation2 + $0xea0] sm:$0xff]
    %v556 = vld [vmem:[#allocation2 + $0xea8] sm:$0xff]
    %v557 = vld [vmem:[#allocation2 + $0xeb0] sm:$0xff]
    %v558 = vld [vmem:[#allocation2 + $0xeb8] sm:$0xff]
    %v559 = vld [vmem:[#allocation2 + $0xec0] sm:$0xff]
    %v560 = vld [vmem:[#allocation2 + $0xec8] sm:$0xff]
    %v561 = vld [vmem:[#allocation2 + $0xed0] sm:$0xff]
    %v562 = vld [vmem:[#allocation2 + $0xed8] sm:$0xff]
    %v563 = vld [vmem:[#allocation2 + $0xee0] sm:$0xff]
    %v564 = vld [vmem:[#allocation2 + $0xee8] sm:$0xff]
    %v565 = vld [vmem:[#allocation2 + $0xef0] sm:$0xff]
    %v566 = vld [vmem:[#allocation2 + $0xef8] sm:$0xff]
    %v567 = vld [vmem:[#allocation2 + $0xf00] sm:$0xff]
    %v568 = vld [vmem:[#allocation2 + $0xf08] sm:$0xff]
    %v569 = vld [vmem:[#allocation2 + $0xf10] sm:$0xff]
    %v570 = vld [vmem:[#allocation2 + $0xf18] sm:$0xff]
    %v571 = vld [vmem:[#allocation2 + $0xf20] sm:$0xff]
    %v572 = vld [vmem:[#allocation2 + $0xf28] sm:$0xff]
    %v573 = vld [vmem:[#allocation2 + $0xf30] sm:$0xff]
    %v574 = vld [vmem:[#allocation2 + $0xf38] sm:$0xff]
    %v575 = vld [vmem:[#allocation2 + $0xf40] sm:$0xff]
    %v576 = vld [vmem:[#allocation2 + $0xf48] sm:$0xff]
    %v577 = vld [vmem:[#allocation2 + $0xf50] sm:$0xff]
    %v578 = vld [vmem:[#allocation2 + $0xf58] sm:$0xff]
    %v579 = vld [vmem:[#allocation2 + $0xf60] sm:$0xff]
    %v580 = vld [vmem:[#allocation2 + $0xf68] sm:$0xff]
    %v581 = vld [vmem:[#allocation2 + $0xf70] sm:$0xff]
    %v582 = vld [vmem:[#allocation2 + $0xf78] sm:$0xff]
    %v583 = vld [vmem:[#allocation2 + $0xf80] sm:$0xff]
    %v584 = vld [vmem:[#allocation2 + $0xf88] sm:$0xff]
    %v585 = vld [vmem:[#allocation2 + $0xf90] sm:$0xff]
    %v586 = vld [vmem:[#allocation2 + $0xf98] sm:$0xff]
    %v587 = vld [vmem:[#allocation2 + $0xfa0] sm:$0xff]
    %v588 = vld [vmem:[#allocation2 + $0xfa8] sm:$0xff]
    %v589 = vld [vmem:[#allocation2 + $0xfb0] sm:$0xff]
    %v590 = vld [vmem:[#allocation2 + $0xfb8] sm:$0xff]
    %v591 = vld [vmem:[#allocation2 + $0xfc0] sm:$0xff]
    %v592 = vld [vmem:[#allocation2 + $0xfc8] sm:$0xff]
    %v593 = vld [vmem:[#allocation2 + $0xfd0] sm:$0xff]
    %v594 = vld [vmem:[#allocation2 + $0xfd8] sm:$0xff]
    %v595 = vld [vmem:[#allocation2 + $0xfe0] sm:$0xff]
    %v596 = vld [vmem:[#allocation2 + $0xfe8] sm:$0xff]
    %v597 = vld [vmem:[#allocation2 + $0xff0] sm:$0xff]
    %v598 = vld [vmem:[#allocation2 + $0xff8] sm:$0xff]
    %v599 = vld [vmem:[#allocation2 + $0x1000] sm:$0xff]
    %v600 = vld [vmem:[#allocation2 + $0x1008] sm:$0xff]
    %v601 = vld [vmem:[#allocation2 + $0x1010] sm:$0xff]
    %v602 = vld [vmem:[#allocation2 + $0x1018] sm:$0xff]
    %v603 = vld [vmem:[#allocation2 + $0x1020] sm:$0xff]
    %v604 = vld [vmem:[#allocation2 + $0x1028] sm:$0xff]
    %v605 = vld [vmem:[#allocation2 + $0x1030] sm:$0xff]
    %v606 = vld [vmem:[#allocation2 + $0x1038] sm:$0xff]
    %v607 = vld [vmem:[#allocation2 + $0x1040] sm:$0xff]
    %v608 = vld [vmem:[#allocation2 + $0x1048] sm:$0xff]
    %v609 = vld [vmem:[#allocation2 + $0x1050] sm:$0xff]
    %v610 = vld [vmem:[#allocation2 + $0x1058] sm:$0xff]
    %v611 = vld [vmem:[#allocation2 + $0x1060] sm:$0xff]
    %v612 = vld [vmem:[#allocation2 + $0x1068] sm:$0xff]
    %v613 = vld [vmem:[#allocation2 + $0x1070] sm:$0xff]
    %v614 = vld [vmem:[#allocation2 + $0x1078] sm:$0xff]
    %v615 = vld [vmem:[#allocation2 + $0x1080] sm:$0xff]
    %v616 = vld [vmem:[#allocation2 + $0x1088] sm:$0xff]
    %v617 = vld [vmem:[#allocation2 + $0x1090] sm:$0xff]
    %v618 = vld [vmem:[#allocation2 + $0x1098] sm:$0xff]
    %v619 = vld [vmem:[#allocation2 + $0x10a0] sm:$0xff]
    %v620 = vld [vmem:[#allocation2 + $0x10a8] sm:$0xff]
    %v621 = vld [vmem:[#allocation2 + $0x10b0] sm:$0xff]
    %v622 = vld [vmem:[#allocation2 + $0x10b8] sm:$0xff]
    %v623 = vld [vmem:[#allocation2 + $0x10c0] sm:$0xff]
    %v624 = vld [vmem:[#allocation2 + $0x10c8] sm:$0xff]
    %v625 = vld [vmem:[#allocation2 + $0x10d0] sm:$0xff]
    %v626 = vld [vmem:[#allocation2 + $0x10d8] sm:$0xff]
    %v627 = vld [vmem:[#allocation2 + $0x10e0] sm:$0xff]
    %v628 = vld [vmem:[#allocation2 + $0x10e8] sm:$0xff]
    %v629 = vld [vmem:[#allocation2 + $0x10f0] sm:$0xff]
    %v630 = vld [vmem:[#allocation2 + $0x10f8] sm:$0xff]
    %v631 = vld [vmem:[#allocation2 + $0x1100] sm:$0xff]
    %v632 = vld [vmem:[#allocation2 + $0x1108] sm:$0xff]
    %v633 = vld [vmem:[#allocation2 + $0x1110] sm:$0xff]
    %v634 = vld [vmem:[#allocation2 + $0x1118] sm:$0xff]
    %v635 = vld [vmem:[#allocation2 + $0x1120] sm:$0xff]
    %v636 = vld [vmem:[#allocation2 + $0x1128] sm:$0xff]
    %v637 = vld [vmem:[#allocation2 + $0x1130] sm:$0xff]
    %v638 = vld [vmem:[#allocation2 + $0x1138] sm:$0xff]
    %v639 = vld [vmem:[#allocation2 + $0x1140] sm:$0xff]
    %v640 = vld [vmem:[#allocation2 + $0x1148] sm:$0xff]
    %v641 = vld [vmem:[#allocation2 + $0x1150] sm:$0xff]
    %v642 = vld [vmem:[#allocation2 + $0x1158] sm:$0xff]
    %v643 = vld [vmem:[#allocation2 + $0x1160] sm:$0xff]
    %v644 = vld [vmem:[#allocation2 + $0x1168] sm:$0xff]
    %v645 = vld [vmem:[#allocation2 + $0x1170] sm:$0xff]
    %v646 = vld [vmem:[#allocation2 + $0x1178] sm:$0xff]
    %v647 = vld [vmem:[#allocation2 + $0x1180] sm:$0xff]
    %v648 = vld [vmem:[#allocation2 + $0x1188] sm:$0xff]
    %v649 = vld [vmem:[#allocation2 + $0x1190] sm:$0xff]
    %v650 = vld [vmem:[#allocation2 + $0x1198] sm:$0xff]
    %v651 = vld [vmem:[#allocation2 + $0x11a0] sm:$0xff]
    %v652 = vld [vmem:[#allocation2 + $0x11a8] sm:$0xff]
    %v653 = vld [vmem:[#allocation2 + $0x11b0] sm:$0xff]
    %v654 = vld [vmem:[#allocation2 + $0x11b8] sm:$0xff]
    %v655 = vld [vmem:[#allocation2 + $0x11c0] sm:$0xff]
    %v656 = vld [vmem:[#allocation2 + $0x11c8] sm:$0xff]
    %v657 = vld [vmem:[#allocation2 + $0x11d0] sm:$0xff]
    %v658 = vld [vmem:[#allocation2 + $0x11d8] sm:$0xff]
    %v659 = vld [vmem:[#allocation2 + $0x11e0] sm:$0xff]
    %v660 = vld [vmem:[#allocation2 + $0x11e8] sm:$0xff]
    %v661 = vld [vmem:[#allocation2 + $0x11f0] sm:$0xff]
    %v662 = vld [vmem:[#allocation2 + $0x11f8] sm:$0xff]
    %v663 = vld [vmem:[#allocation2 + $0x1200] sm:$0xff]
    %v664 = vld [vmem:[#allocation2 + $0x1208] sm:$0xff]
    %v665 = vld [vmem:[#allocation2 + $0x1210] sm:$0xff]
    %v666 = vld [vmem:[#allocation2 + $0x1218] sm:$0xff]
    %v667 = vld [vmem:[#allocation2 + $0x1220] sm:$0xff]
    %v668 = vld [vmem:[#allocation2 + $0x1228] sm:$0xff]
    %v669 = vld [vmem:[#allocation2 + $0x1230] sm:$0xff]
    %v670 = vld [vmem:[#allocation2 + $0x1238] sm:$0xff]
    %v671 = vld [vmem:[#allocation2 + $0x1240] sm:$0xff]
    %v672 = vld [vmem:[#allocation2 + $0x1248] sm:$0xff]
    %v673 = vld [vmem:[#allocation2 + $0x1250] sm:$0xff]
    %v674 = vld [vmem:[#allocation2 + $0x1258] sm:$0xff]
    %v675 = vld [vmem:[#allocation2 + $0x1260] sm:$0xff]
    %v676 = vld [vmem:[#allocation2 + $0x1268] sm:$0xff]
    %v677 = vld [vmem:[#allocation2 + $0x1270] sm:$0xff]
    %v678 = vld [vmem:[#allocation2 + $0x1278] sm:$0xff]
    %v679 = vld [vmem:[#allocation2 + $0x1280] sm:$0xff]
    %v680 = vld [vmem:[#allocation2 + $0x1288] sm:$0xff]
    %v681 = vld [vmem:[#allocation2 + $0x1290] sm:$0xff]
    %v682 = vld [vmem:[#allocation2 + $0x1298] sm:$0xff]
    %v683 = vld [vmem:[#allocation2 + $0x12a0] sm:$0xff]
    %v684 = vld [vmem:[#allocation2 + $0x12a8] sm:$0xff]
    %v685 = vld [vmem:[#allocation2 + $0x12b0] sm:$0xff]
    %v686 = vld [vmem:[#allocation2 + $0x12b8] sm:$0xff]
    %v687 = vld [vmem:[#allocation2 + $0x12c0] sm:$0xff]
    %v688 = vld [vmem:[#allocation2 + $0x12c8] sm:$0xff]
    %v689 = vld [vmem:[#allocation2 + $0x12d0] sm:$0xff]
    %v690 = vld [vmem:[#allocation2 + $0x12d8] sm:$0xff]
    %v691 = vld [vmem:[#allocation2 + $0x12e0] sm:$0xff]
    %v692 = vld [vmem:[#allocation2 + $0x12e8] sm:$0xff]
    %v693 = vld [vmem:[#allocation2 + $0x12f0] sm:$0xff]
    %v694 = vld [vmem:[#allocation2 + $0x12f8] sm:$0xff]
    %v695 = vld [vmem:[#allocation2 + $0x1300] sm:$0xff]
    %v696 = vld [vmem:[#allocation2 + $0x1308] sm:$0xff]
    %v697 = vld [vmem:[#allocation2 + $0x1310] sm:$0xff]
    %v698 = vld [vmem:[#allocation2 + $0x1318] sm:$0xff]
    %v699 = vld [vmem:[#allocation2 + $0x1320] sm:$0xff]
    %v700 = vld [vmem:[#allocation2 + $0x1328] sm:$0xff]
    %v701 = vld [vmem:[#allocation2 + $0x1330] sm:$0xff]
    %v702 = vld [vmem:[#allocation2 + $0x1338] sm:$0xff]
    %v703 = vld [vmem:[#allocation2 + $0x1340] sm:$0xff]
    %v704 = vld [vmem:[#allocation2 + $0x1348] sm:$0xff]
    %v705 = vld [vmem:[#allocation2 + $0x1350] sm:$0xff]
    %v706 = vld [vmem:[#allocation2 + $0x1358] sm:$0xff]
    %v707 = vld [vmem:[#allocation2 + $0x1360] sm:$0xff]
    %v708 = vld [vmem:[#allocation2 + $0x1368] sm:$0xff]
    %v709 = vld [vmem:[#allocation2 + $0x1370] sm:$0xff]
    %v710 = vld [vmem:[#allocation2 + $0x1378] sm:$0xff]
    %v711 = vld [vmem:[#allocation2 + $0x1380] sm:$0xff]
    %v712 = vld [vmem:[#allocation2 + $0x1388] sm:$0xff]
    %v713 = vld [vmem:[#allocation2 + $0x1390] sm:$0xff]
    %v714 = vld [vmem:[#allocation2 + $0x1398] sm:$0xff]
    %v715 = vld [vmem:[#allocation2 + $0x13a0] sm:$0xff]
    %v716 = vld [vmem:[#allocation2 + $0x13a8] sm:$0xff]
    %v717 = vld [vmem:[#allocation2 + $0x13b0] sm:$0xff]
    %v718 = vld [vmem:[#allocation2 + $0x13b8] sm:$0xff]
    %v719 = vld [vmem:[#allocation2 + $0x13c0] sm:$0xff]
    %v720 = vld [vmem:[#allocation2 + $0x13c8] sm:$0xff]
    %v721 = vld [vmem:[#allocation2 + $0x13d0] sm:$0xff]
    %v722 = vld [vmem:[#allocation2 + $0x13d8] sm:$0xff]
    %v723 = vld [vmem:[#allocation2 + $0x13e0] sm:$0xff]
    %v724 = vld [vmem:[#allocation2 + $0x13e8] sm:$0xff]
    %v725 = vld [vmem:[#allocation2 + $0x13f0] sm:$0xff]
    %v726 = vld [vmem:[#allocation2 + $0x13f8] sm:$0xff]
    %v727 = vld [vmem:[#allocation2 + $0x1400] sm:$0xff]
    %v728 = vld [vmem:[#allocation2 + $0x1408] sm:$0xff]
    %v729 = vld [vmem:[#allocation2 + $0x1410] sm:$0xff]
    %v730 = vld [vmem:[#allocation2 + $0x1418] sm:$0xff]
    %v731 = vld [vmem:[#allocation2 + $0x1420] sm:$0xff]
    %v732 = vld [vmem:[#allocation2 + $0x1428] sm:$0xff]
    %v733 = vld [vmem:[#allocation2 + $0x1430] sm:$0xff]
    %v734 = vld [vmem:[#allocation2 + $0x1438] sm:$0xff]
    %v735 = vld [vmem:[#allocation2 + $0x1440] sm:$0xff]
    %v736 = vld [vmem:[#allocation2 + $0x1448] sm:$0xff]
    %v737 = vld [vmem:[#allocation2 + $0x1450] sm:$0xff]
    %v738 = vld [vmem:[#allocation2 + $0x1458] sm:$0xff]
    %v739 = vld [vmem:[#allocation2 + $0x1460] sm:$0xff]
    %v740 = vld [vmem:[#allocation2 + $0x1468] sm:$0xff]
    %v741 = vld [vmem:[#allocation2 + $0x1470] sm:$0xff]
    %v742 = vld [vmem:[#allocation2 + $0x1478] sm:$0xff]
    %v743 = vld [vmem:[#allocation2 + $0x1480] sm:$0xff]
    %v744 = vld [vmem:[#allocation2 + $0x1488] sm:$0xff]
    %v745 = vld [vmem:[#allocation2 + $0x1490] sm:$0xff]
    %v746 = vld [vmem:[#allocation2 + $0x1498] sm:$0xff]
    %v747 = vld [vmem:[#allocation2 + $0x14a0] sm:$0xff]
    %v748 = vld [vmem:[#allocation2 + $0x14a8] sm:$0xff]
    %v749 = vld [vmem:[#allocation2 + $0x14b0] sm:$0xff]
    %v750 = vld [vmem:[#allocation2 + $0x14b8] sm:$0xff]
    %v751 = vld [vmem:[#allocation2 + $0x14c0] sm:$0xff]
    %v752 = vld [vmem:[#allocation2 + $0x14c8] sm:$0xff]
    %v753 = vld [vmem:[#allocation2 + $0x14d0] sm:$0xff]
    %v754 = vld [vmem:[#allocation2 + $0x14d8] sm:$0xff]
    %v755 = vld [vmem:[#allocation2 + $0x14e0] sm:$0xff]
    %v756 = vld [vmem:[#allocation2 + $0x14e8] sm:$0xff]
    %v757 = vld [vmem:[#allocation2 + $0x14f0] sm:$0xff]
    %v758 = vld [vmem:[#allocation2 + $0x14f8] sm:$0xff]
    %v759 = vld [vmem:[#allocation2 + $0x1500] sm:$0xff]
    %v760 = vld [vmem:[#allocation2 + $0x1508] sm:$0xff]
    %v761 = vld [vmem:[#allocation2 + $0x1510] sm:$0xff]
    %v762 = vld [vmem:[#allocation2 + $0x1518] sm:$0xff]
    %v763 = vld [vmem:[#allocation2 + $0x1520] sm:$0xff]
    %v764 = vld [vmem:[#allocation2 + $0x1528] sm:$0xff]
    %v765 = vld [vmem:[#allocation2 + $0x1530] sm:$0xff]
    %v766 = vld [vmem:[#allocation2 + $0x1538] sm:$0xff]
    %v767 = vld [vmem:[#allocation2 + $0x1540] sm:$0xff]
    %v768 = vld [vmem:[#allocation2 + $0x1548] sm:$0xff]
    %v769 = vld [vmem:[#allocation2 + $0x1550] sm:$0xff]
    %v770 = vld [vmem:[#allocation2 + $0x1558] sm:$0xff]
    %v771 = vld [vmem:[#allocation2 + $0x1560] sm:$0xff]
    %v772 = vld [vmem:[#allocation2 + $0x1568] sm:$0xff]
    %v773 = vld [vmem:[#allocation2 + $0x1570] sm:$0xff]
    %v774 = vld [vmem:[#allocation2 + $0x1578] sm:$0xff]
    %v775 = vld [vmem:[#allocation2 + $0x1580] sm:$0xff]
    %v776 = vld [vmem:[#allocation2 + $0x1588] sm:$0xff]
    %v777 = vld [vmem:[#allocation2 + $0x1590] sm:$0xff]
    %v778 = vld [vmem:[#allocation2 + $0x1598] sm:$0xff]
    %v779 = vld [vmem:[#allocation2 + $0x15a0] sm:$0xff]
    %v780 = vld [vmem:[#allocation2 + $0x15a8] sm:$0xff]
    %v781 = vld [vmem:[#allocation2 + $0x15b0] sm:$0xff]
    %v782 = vld [vmem:[#allocation2 + $0x15b8] sm:$0xff]
    %v783 = vld [vmem:[#allocation2 + $0x15c0] sm:$0xff]
    %v784 = vld [vmem:[#allocation2 + $0x15c8] sm:$0xff]
    %v785 = vld [vmem:[#allocation2 + $0x15d0] sm:$0xff]
    %v786 = vld [vmem:[#allocation2 + $0x15d8] sm:$0xff]
    %v787 = vld [vmem:[#allocation2 + $0x15e0] sm:$0xff]
    %v788 = vld [vmem:[#allocation2 + $0x15e8] sm:$0xff]
    %v789 = vld [vmem:[#allocation2 + $0x15f0] sm:$0xff]
    %v790 = vld [vmem:[#allocation2 + $0x15f8] sm:$0xff]
    %v791 = vld [vmem:[#allocation2 + $0x1600] sm:$0xff]
    %v792 = vld [vmem:[#allocation2 + $0x1608] sm:$0xff]
    %v793 = vld [vmem:[#allocation2 + $0x1610] sm:$0xff]
    %v794 = vld [vmem:[#allocation2 + $0x1618] sm:$0xff]
    %v795 = vld [vmem:[#allocation2 + $0x1620] sm:$0xff]
    %v796 = vld [vmem:[#allocation2 + $0x1628] sm:$0xff]
    %v797 = vld [vmem:[#allocation2 + $0x1630] sm:$0xff]
    %v798 = vld [vmem:[#allocation2 + $0x1638] sm:$0xff]
    %v799 = vld [vmem:[#allocation2 + $0x1640] sm:$0xff]
    %v800 = vld [vmem:[#allocation2 + $0x1648] sm:$0xff]
    %v801 = vld [vmem:[#allocation2 + $0x1650] sm:$0xff]
    %v802 = vld [vmem:[#allocation2 + $0x1658] sm:$0xff]
    %v803 = vld [vmem:[#allocation2 + $0x1660] sm:$0xff]
    %v804 = vld [vmem:[#allocation2 + $0x1668] sm:$0xff]
    %v805 = vld [vmem:[#allocation2 + $0x1670] sm:$0xff]
    %v806 = vld [vmem:[#allocation2 + $0x1678] sm:$0xff]
    %v807 = vld [vmem:[#allocation2 + $0x1680] sm:$0xff]
    %v808 = vld [vmem:[#allocation2 + $0x1688] sm:$0xff]
    %v809 = vld [vmem:[#allocation2 + $0x1690] sm:$0xff]
    %v810 = vld [vmem:[#allocation2 + $0x1698] sm:$0xff]
    %v811 = vld [vmem:[#allocation2 + $0x16a0] sm:$0xff]
    %v812 = vld [vmem:[#allocation2 + $0x16a8] sm:$0xff]
    %v813 = vld [vmem:[#allocation2 + $0x16b0] sm:$0xff]
    %v814 = vld [vmem:[#allocation2 + $0x16b8] sm:$0xff]
    %v815 = vld [vmem:[#allocation2 + $0x16c0] sm:$0xff]
    %v816 = vld [vmem:[#allocation2 + $0x16c8] sm:$0xff]
    %v817 = vld [vmem:[#allocation2 + $0x16d0] sm:$0xff]
    %v818 = vld [vmem:[#allocation2 + $0x16d8] sm:$0xff]
    %v819 = vld [vmem:[#allocation2 + $0x16e0] sm:$0xff]
    %v820 = vld [vmem:[#allocation2 + $0x16e8] sm:$0xff]
    %v821 = vld [vmem:[#allocation2 + $0x16f0] sm:$0xff]
    %v822 = vld [vmem:[#allocation2 + $0x16f8] sm:$0xff]
    %v823 = vld [vmem:[#allocation2 + $0x1700] sm:$0xff]
    %v824 = vld [vmem:[#allocation2 + $0x1708] sm:$0xff]
    %v825 = vld [vmem:[#allocation2 + $0x1710] sm:$0xff]
    %v826 = vld [vmem:[#allocation2 + $0x1718] sm:$0xff]
    %v827 = vld [vmem:[#allocation2 + $0x1720] sm:$0xff]
    %v828 = vld [vmem:[#allocation2 + $0x1728] sm:$0xff]
    %v829 = vld [vmem:[#allocation2 + $0x1730] sm:$0xff]
    %v830 = vld [vmem:[#allocation2 + $0x1738] sm:$0xff]
    %v831 = vld [vmem:[#allocation2 + $0x1740] sm:$0xff]
    %v832 = vld [vmem:[#allocation2 + $0x1748] sm:$0xff]
    %v833 = vld [vmem:[#allocation2 + $0x1750] sm:$0xff]
    %v834 = vld [vmem:[#allocation2 + $0x1758] sm:$0xff]
    %v835 = vld [vmem:[#allocation2 + $0x1760] sm:$0xff]
    %v836 = vld [vmem:[#allocation2 + $0x1768] sm:$0xff]
    %v837 = vld [vmem:[#allocation2 + $0x1770] sm:$0xff]
    %v838 = vld [vmem:[#allocation2 + $0x1778] sm:$0xff]
    %v839 = vld [vmem:[#allocation2 + $0x1780] sm:$0xff]
    %v840 = vld [vmem:[#allocation2 + $0x1788] sm:$0xff]
    %v841 = vld [vmem:[#allocation2 + $0x1790] sm:$0xff]
    %v842 = vld [vmem:[#allocation2 + $0x1798] sm:$0xff]
    %v843 = vld [vmem:[#allocation2 + $0x17a0] sm:$0xff]
    %v844 = vld [vmem:[#allocation2 + $0x17a8] sm:$0xff]
    %v845 = vld [vmem:[#allocation2 + $0x17b0] sm:$0xff]
    %v846 = vld [vmem:[#allocation2 + $0x17b8] sm:$0xff]
    %v847 = vld [vmem:[#allocation2 + $0x17c0] sm:$0xff]
    %v848 = vld [vmem:[#allocation2 + $0x17c8] sm:$0xff]
    %v849 = vld [vmem:[#allocation2 + $0x17d0] sm:$0xff]
    %v850 = vld [vmem:[#allocation2 + $0x17d8] sm:$0xff]
    %v851 = vld [vmem:[#allocation2 + $0x17e0] sm:$0xff]
    %v852 = vld [vmem:[#allocation2 + $0x17e8] sm:$0xff]
    %v853 = vld [vmem:[#allocation2 + $0x17f0] sm:$0xff]
    %v854 = vld [vmem:[#allocation2 + $0x17f8] sm:$0xff]
    %v855 = vld [vmem:[#allocation2 + $0x1800] sm:$0xff]
    %v856 = vld [vmem:[#allocation2 + $0x1808] sm:$0xff]
    %v857 = vld [vmem:[#allocation2 + $0x1810] sm:$0xff]
    %v858 = vld [vmem:[#allocation2 + $0x1818] sm:$0xff]
    %v859 = vld [vmem:[#allocation2 + $0x1820] sm:$0xff]
    %v860 = vld [vmem:[#allocation2 + $0x1828] sm:$0xff]
    %v861 = vld [vmem:[#allocation2 + $0x1830] sm:$0xff]
    %v862 = vld [vmem:[#allocation2 + $0x1838] sm:$0xff]
    %v863 = vld [vmem:[#allocation2 + $0x1840] sm:$0xff]
    %v864 = vld [vmem:[#allocation2 + $0x1848] sm:$0xff]
    %v865 = vld [vmem:[#allocation2 + $0x1850] sm:$0xff]
    %v866 = vld [vmem:[#allocation2 + $0x1858] sm:$0xff]
    %v867 = vld [vmem:[#allocation2 + $0x1860] sm:$0xff]
    %v868 = vld [vmem:[#allocation2 + $0x1868] sm:$0xff]
    %v869 = vld [vmem:[#allocation2 + $0x1870] sm:$0xff]
    %v870 = vld [vmem:[#allocation2 + $0x1878] sm:$0xff]
    %v871 = vld [vmem:[#allocation2 + $0x1880] sm:$0xff]
    %v872 = vld [vmem:[#allocation2 + $0x1888] sm:$0xff]
    %v873 = vld [vmem:[#allocation2 + $0x1890] sm:$0xff]
    %v874 = vld [vmem:[#allocation2 + $0x1898] sm:$0xff]
    %v875 = vld [vmem:[#allocation2 + $0x18a0] sm:$0xff]
    %v876 = vld [vmem:[#allocation2 + $0x18a8] sm:$0xff]
    %v877 = vld [vmem:[#allocation2 + $0x18b0] sm:$0xff]
    %v878 = vld [vmem:[#allocation2 + $0x18b8] sm:$0xff]
    %v879 = vld [vmem:[#allocation2 + $0x18c0] sm:$0xff]
    %v880 = vld [vmem:[#allocation2 + $0x18c8] sm:$0xff]
    %v881 = vld [vmem:[#allocation2 + $0x18d0] sm:$0xff]
    %v882 = vld [vmem:[#allocation2 + $0x18d8] sm:$0xff]
    %v883 = vld [vmem:[#allocation2 + $0x18e0] sm:$0xff]
    %v884 = vld [vmem:[#allocation2 + $0x18e8] sm:$0xff]
    %v885 = vld [vmem:[#allocation2 + $0x18f0] sm:$0xff]
    %v886 = vld [vmem:[#allocation2 + $0x18f8] sm:$0xff]
    %v887 = vld [vmem:[#allocation2 + $0x1900] sm:$0xff]
    %v888 = vld [vmem:[#allocation2 + $0x1908] sm:$0xff]
    %v889 = vld [vmem:[#allocation2 + $0x1910] sm:$0xff]
    %v890 = vld [vmem:[#allocation2 + $0x1918] sm:$0xff]
    %v891 = vld [vmem:[#allocation2 + $0x1920] sm:$0xff]
    %v892 = vld [vmem:[#allocation2 + $0x1928] sm:$0xff]
    %v893 = vld [vmem:[#allocation2 + $0x1930] sm:$0xff]
    %v894 = vld [vmem:[#allocation2 + $0x1938] sm:$0xff]
    %v895 = vld [vmem:[#allocation2 + $0x1940] sm:$0xff]
    %v896 = vld [vmem:[#allocation2 + $0x1948] sm:$0xff]
    %v897 = vld [vmem:[#allocation2 + $0x1950] sm:$0xff]
    %v898 = vld [vmem:[#allocation2 + $0x1958] sm:$0xff]
    %v899 = vld [vmem:[#allocation2 + $0x1960] sm:$0xff]
    %v900 = vld [vmem:[#allocation2 + $0x1968] sm:$0xff]
    %v901 = vld [vmem:[#allocation2 + $0x1970] sm:$0xff]
    %v902 = vld [vmem:[#allocation2 + $0x1978] sm:$0xff]
    %v903 = vld [vmem:[#allocation2 + $0x1980] sm:$0xff]
    %v904 = vld [vmem:[#allocation2 + $0x1988] sm:$0xff]
    %v905 = vld [vmem:[#allocation2 + $0x1990] sm:$0xff]
    %v906 = vld [vmem:[#allocation2 + $0x1998] sm:$0xff]
    %v907 = vld [vmem:[#allocation2 + $0x19a0] sm:$0xff]
    %v908 = vld [vmem:[#allocation2 + $0x19a8] sm:$0xff]
    %v909 = vld [vmem:[#allocation2 + $0x19b0] sm:$0xff]
    %v910 = vld [vmem:[#allocation2 + $0x19b8] sm:$0xff]
    %v911 = vld [vmem:[#allocation2 + $0x19c0] sm:$0xff]
    %v912 = vld [vmem:[#allocation2 + $0x19c8] sm:$0xff]
    %v913 = vld [vmem:[#allocation2 + $0x19d0] sm:$0xff]
    %v914 = vld [vmem:[#allocation2 + $0x19d8] sm:$0xff]
    %v915 = vld [vmem:[#allocation2 + $0x19e0] sm:$0xff]
    %v916 = vld [vmem:[#allocation2 + $0x19e8] sm:$0xff]
    %v917 = vld [vmem:[#allocation2 + $0x19f0] sm:$0xff]
    %v918 = vld [vmem:[#allocation2 + $0x19f8] sm:$0xff]
    %v919 = vld [vmem:[#allocation2 + $0x1a00] sm:$0xff]
    %v920 = vld [vmem:[#allocation2 + $0x1a08] sm:$0xff]
    %v921 = vld [vmem:[#allocation2 + $0x1a10] sm:$0xff]
    %v922 = vld [vmem:[#allocation2 + $0x1a18] sm:$0xff]
    %v923 = vld [vmem:[#allocation2 + $0x1a20] sm:$0xff]
    %v924 = vld [vmem:[#allocation2 + $0x1a28] sm:$0xff]
    %v925 = vld [vmem:[#allocation2 + $0x1a30] sm:$0xff]
    %v926 = vld [vmem:[#allocation2 + $0x1a38] sm:$0xff]
    %v927 = vld [vmem:[#allocation2 + $0x1a40] sm:$0xff]
    %v928 = vld [vmem:[#allocation2 + $0x1a48] sm:$0xff]
    %v929 = vld [vmem:[#allocation2 + $0x1a50] sm:$0xff]
    %v930 = vld [vmem:[#allocation2 + $0x1a58] sm:$0xff]
    %v931 = vld [vmem:[#allocation2 + $0x1a60] sm:$0xff]
    %v932 = vld [vmem:[#allocation2 + $0x1a68] sm:$0xff]
    %v933 = vld [vmem:[#allocation2 + $0x1a70] sm:$0xff]
    %v934 = vld [vmem:[#allocation2 + $0x1a78] sm:$0xff]
    %v935 = vld [vmem:[#allocation2 + $0x1a80] sm:$0xff]
    %v936 = vld [vmem:[#allocation2 + $0x1a88] sm:$0xff]
    %v937 = vld [vmem:[#allocation2 + $0x1a90] sm:$0xff]
    %v938 = vld [vmem:[#allocation2 + $0x1a98] sm:$0xff]
    %v939 = vld [vmem:[#allocation2 + $0x1aa0] sm:$0xff]
    %v940 = vld [vmem:[#allocation2 + $0x1aa8] sm:$0xff]
    %v941 = vld [vmem:[#allocation2 + $0x1ab0] sm:$0xff]
    %v942 = vld [vmem:[#allocation2 + $0x1ab8] sm:$0xff]
    %v943 = vld [vmem:[#allocation2 + $0x1ac0] sm:$0xff]
    %v944 = vld [vmem:[#allocation2 + $0x1ac8] sm:$0xff]
    %v945 = vld [vmem:[#allocation2 + $0x1ad0] sm:$0xff]
    %v946 = vld [vmem:[#allocation2 + $0x1ad8] sm:$0xff]
    %v947 = vld [vmem:[#allocation2 + $0x1ae0] sm:$0xff]
    %v948 = vld [vmem:[#allocation2 + $0x1ae8] sm:$0xff]
    %v949 = vld [vmem:[#allocation2 + $0x1af0] sm:$0xff]
    %v950 = vld [vmem:[#allocation2 + $0x1af8] sm:$0xff]
    %v951 = vld [vmem:[#allocation2 + $0x1b00] sm:$0xff]
    %v952 = vld [vmem:[#allocation2 + $0x1b08] sm:$0xff]
    %v953 = vld [vmem:[#allocation2 + $0x1b10] sm:$0xff]
    %v954 = vld [vmem:[#allocation2 + $0x1b18] sm:$0xff]
    %v955 = vld [vmem:[#allocation2 + $0x1b20] sm:$0xff]
    %v956 = vld [vmem:[#allocation2 + $0x1b28] sm:$0xff]
    %v957 = vld [vmem:[#allocation2 + $0x1b30] sm:$0xff]
    %v958 = vld [vmem:[#allocation2 + $0x1b38] sm:$0xff]
    %v959 = vld [vmem:[#allocation2 + $0x1b40] sm:$0xff]
    %v960 = vld [vmem:[#allocation2 + $0x1b48] sm:$0xff]
    %v961 = vld [vmem:[#allocation2 + $0x1b50] sm:$0xff]
    %v962 = vld [vmem:[#allocation2 + $0x1b58] sm:$0xff]
    %v963 = vld [vmem:[#allocation2 + $0x1b60] sm:$0xff]
    %v964 = vld [vmem:[#allocation2 + $0x1b68] sm:$0xff]
    %v965 = vld [vmem:[#allocation2 + $0x1b70] sm:$0xff]
    %v966 = vld [vmem:[#allocation2 + $0x1b78] sm:$0xff]
    %v967 = vld [vmem:[#allocation2 + $0x1b80] sm:$0xff]
    %v968 = vld [vmem:[#allocation2 + $0x1b88] sm:$0xff]
    %v969 = vld [vmem:[#allocation2 + $0x1b90] sm:$0xff]
    %v970 = vld [vmem:[#allocation2 + $0x1b98] sm:$0xff]
    %v971 = vld [vmem:[#allocation2 + $0x1ba0] sm:$0xff]
    %v972 = vld [vmem:[#allocation2 + $0x1ba8] sm:$0xff]
    %v973 = vld [vmem:[#allocation2 + $0x1bb0] sm:$0xff]
    %v974 = vld [vmem:[#allocation2 + $0x1bb8] sm:$0xff]
    %v975 = vld [vmem:[#allocation2 + $0x1bc0] sm:$0xff]
    %v976 = vld [vmem:[#allocation2 + $0x1bc8] sm:$0xff]
    %v977 = vld [vmem:[#allocation2 + $0x1bd0] sm:$0xff]
    %v978 = vld [vmem:[#allocation2 + $0x1bd8] sm:$0xff]
    %v979 = vld [vmem:[#allocation2 + $0x1be0] sm:$0xff]
    %v980 = vld [vmem:[#allocation2 + $0x1be8] sm:$0xff]
    %v981 = vld [vmem:[#allocation2 + $0x1bf0] sm:$0xff]
    %v982 = vld [vmem:[#allocation2 + $0x1bf8] sm:$0xff]
    %v983 = vld [vmem:[#allocation2 + $0x1c00] sm:$0xff]
    %v984 = vld [vmem:[#allocation2 + $0x1c08] sm:$0xff]
    %v985 = vld [vmem:[#allocation2 + $0x1c10] sm:$0xff]
    %v986 = vld [vmem:[#allocation2 + $0x1c18] sm:$0xff]
    %v987 = vld [vmem:[#allocation2 + $0x1c20] sm:$0xff]
    %v988 = vld [vmem:[#allocation2 + $0x1c28] sm:$0xff]
    %v989 = vld [vmem:[#allocation2 + $0x1c30] sm:$0xff]
    %v990 = vld [vmem:[#allocation2 + $0x1c38] sm:$0xff]
    %v991 = vld [vmem:[#allocation2 + $0x1c40] sm:$0xff]
    %v992 = vld [vmem:[#allocation2 + $0x1c48] sm:$0xff]
    %v993 = vld [vmem:[#allocation2 + $0x1c50] sm:$0xff]
    %v994 = vld [vmem:[#allocation2 + $0x1c58] sm:$0xff]
    %v995 = vld [vmem:[#allocation2 + $0x1c60] sm:$0xff]
    %v996 = vld [vmem:[#allocation2 + $0x1c68] sm:$0xff]
    %v997 = vld [vmem:[#allocation2 + $0x1c70] sm:$0xff]
    %v998 = vld [vmem:[#allocation2 + $0x1c78] sm:$0xff]
    %v999 = vld [vmem:[#allocation2 + $0x1c80] sm:$0xff]
    %v1000 = vld [vmem:[#allocation2 + $0x1c88] sm:$0xff]
    %v1001 = vld [vmem:[#allocation2 + $0x1c90] sm:$0xff]
    %v1002 = vld [vmem:[#allocation2 + $0x1c98] sm:$0xff]
    %v1003 = vld [vmem:[#allocation2 + $0x1ca0] sm:$0xff]
    %v1004 = vld [vmem:[#allocation2 + $0x1ca8] sm:$0xff]
    %v1005 = vld [vmem:[#allocation2 + $0x1cb0] sm:$0xff]
    %v1006 = vld [vmem:[#allocation2 + $0x1cb8] sm:$0xff]
    %v1007 = vld [vmem:[#allocation2 + $0x1cc0] sm:$0xff]
    %v1008 = vld [vmem:[#allocation2 + $0x1cc8] sm:$0xff]
    %v1009 = vld [vmem:[#allocation2 + $0x1cd0] sm:$0xff]
    %v1010 = vld [vmem:[#allocation2 + $0x1cd8] sm:$0xff]
    %v1011 = vld [vmem:[#allocation2 + $0x1ce0] sm:$0xff]
    %v1012 = vld [vmem:[#allocation2 + $0x1ce8] sm:$0xff]
    %v1013 = vld [vmem:[#allocation2 + $0x1cf0] sm:$0xff]
    %v1014 = vld [vmem:[#allocation2 + $0x1cf8] sm:$0xff]
    %v1015 = vld [vmem:[#allocation2 + $0x1d00] sm:$0xff]
    %v1016 = vld [vmem:[#allocation2 + $0x1d08] sm:$0xff]
    %v1017 = vld [vmem:[#allocation2 + $0x1d10] sm:$0xff]
    %v1018 = vld [vmem:[#allocation2 + $0x1d18] sm:$0xff]
    %v1019 = vld [vmem:[#allocation2 + $0x1d20] sm:$0xff]
    %v1020 = vld [vmem:[#allocation2 + $0x1d28] sm:$0xff]
    %v1021 = vld [vmem:[#allocation2 + $0x1d30] sm:$0xff]
    %v1022 = vld [vmem:[#allocation2 + $0x1d38] sm:$0xff]
    %v1023 = vld [vmem:[#allocation2 + $0x1d40] sm:$0xff]
    %v1024 = vld [vmem:[#allocation2 + $0x1d48] sm:$0xff]
    %v1025 = vld [vmem:[#allocation2 + $0x1d50] sm:$0xff]
    %v1026 = vld [vmem:[#allocation2 + $0x1d58] sm:$0xff]
    %v1027 = vld [vmem:[#allocation2 + $0x1d60] sm:$0xff]
    %v1028 = vld [vmem:[#allocation2 + $0x1d68] sm:$0xff]
    %v1029 = vld [vmem:[#allocation2 + $0x1d70] sm:$0xff]
    %v1030 = vld [vmem:[#allocation2 + $0x1d78] sm:$0xff]
    %v1031 = vld [vmem:[#allocation2 + $0x1d80] sm:$0xff]
    %v1032 = vld [vmem:[#allocation2 + $0x1d88] sm:$0xff]
    %v1033 = vld [vmem:[#allocation2 + $0x1d90] sm:$0xff]
    %v1034 = vld [vmem:[#allocation2 + $0x1d98] sm:$0xff]
    %v1035 = vld [vmem:[#allocation2 + $0x1da0] sm:$0xff]
    %v1036 = vld [vmem:[#allocation2 + $0x1da8] sm:$0xff]
    %v1037 = vld [vmem:[#allocation2 + $0x1db0] sm:$0xff]
    %v1038 = vld [vmem:[#allocation2 + $0x1db8] sm:$0xff]
    %v1039 = vld [vmem:[#allocation2 + $0x1dc0] sm:$0xff]
    %v1040 = vld [vmem:[#allocation2 + $0x1dc8] sm:$0xff]
    %v1041 = vld [vmem:[#allocation2 + $0x1dd0] sm:$0xff]
    %v1042 = vld [vmem:[#allocation2 + $0x1dd8] sm:$0xff]
    %v1043 = vld [vmem:[#allocation2 + $0x1de0] sm:$0xff]
    %v1044 = vld [vmem:[#allocation2 + $0x1de8] sm:$0xff]
    %v1045 = vld [vmem:[#allocation2 + $0x1df0] sm:$0xff]
    %v1046 = vld [vmem:[#allocation2 + $0x1df8] sm:$0xff]
    %v1047 = vld [vmem:[#allocation2 + $0x1e00] sm:$0xff]
    %v1048 = vld [vmem:[#allocation2 + $0x1e08] sm:$0xff]
    %v1049 = vld [vmem:[#allocation2 + $0x1e10] sm:$0xff]
    %v1050 = vld [vmem:[#allocation2 + $0x1e18] sm:$0xff]
    %v1051 = vld [vmem:[#allocation2 + $0x1e20] sm:$0xff]
    %v1052 = vld [vmem:[#allocation2 + $0x1e28] sm:$0xff]
    %v1053 = vld [vmem:[#allocation2 + $0x1e30] sm:$0xff]
    %v1054 = vld [vmem:[#allocation2 + $0x1e38] sm:$0xff]
    %v1055 = vld [vmem:[#allocation2 + $0x1e40] sm:$0xff]
    %v1056 = vld [vmem:[#allocation2 + $0x1e48] sm:$0xff]
    %v1057 = vld [vmem:[#allocation2 + $0x1e50] sm:$0xff]
    %v1058 = vld [vmem:[#allocation2 + $0x1e58] sm:$0xff]
    %v1059 = vld [vmem:[#allocation2 + $0x1e60] sm:$0xff]
    %v1060 = vld [vmem:[#allocation2 + $0x1e68] sm:$0xff]
    %v1061 = vld [vmem:[#allocation2 + $0x1e70] sm:$0xff]
    %v1062 = vld [vmem:[#allocation2 + $0x1e78] sm:$0xff]
    %v1063 = vld [vmem:[#allocation2 + $0x1e80] sm:$0xff]
    %v1064 = vld [vmem:[#allocation2 + $0x1e88] sm:$0xff]
    %v1065 = vld [vmem:[#allocation2 + $0x1e90] sm:$0xff]
    %v1066 = vld [vmem:[#allocation2 + $0x1e98] sm:$0xff]
    %v1067 = vld [vmem:[#allocation2 + $0x1ea0] sm:$0xff]
    %v1068 = vld [vmem:[#allocation2 + $0x1ea8] sm:$0xff]
    %v1069 = vld [vmem:[#allocation2 + $0x1eb0] sm:$0xff]
    %v1070 = vld [vmem:[#allocation2 + $0x1eb8] sm:$0xff]
    %v1071 = vld [vmem:[#allocation2 + $0x1ec0] sm:$0xff]
    %v1072 = vld [vmem:[#allocation2 + $0x1ec8] sm:$0xff]
    %v1073 = vld [vmem:[#allocation2 + $0x1ed0] sm:$0xff]
    %v1074 = vld [vmem:[#allocation2 + $0x1ed8] sm:$0xff]
    %v1075 = vld [vmem:[#allocation2 + $0x1ee0] sm:$0xff]
    %v1076 = vld [vmem:[#allocation2 + $0x1ee8] sm:$0xff]
    %v1077 = vld [vmem:[#allocation2 + $0x1ef0] sm:$0xff]
    %v1078 = vld [vmem:[#allocation2 + $0x1ef8] sm:$0xff]
    %v1079 = vld [vmem:[#allocation2 + $0x1f00] sm:$0xff]
    %v1080 = vld [vmem:[#allocation2 + $0x1f08] sm:$0xff]
    %v1081 = vld [vmem:[#allocation2 + $0x1f10] sm:$0xff]
    %v1082 = vld [vmem:[#allocation2 + $0x1f18] sm:$0xff]
    %v1083 = vld [vmem:[#allocation2 + $0x1f20] sm:$0xff]
    %v1084 = vld [vmem:[#allocation2 + $0x1f28] sm:$0xff]
    %v1085 = vld [vmem:[#allocation2 + $0x1f30] sm:$0xff]
    %v1086 = vld [vmem:[#allocation2 + $0x1f38] sm:$0xff]
    %v1087 = vld [vmem:[#allocation2 + $0x1f40] sm:$0xff]
    %v1088 = vld [vmem:[#allocation2 + $0x1f48] sm:$0xff]
    %v1089 = vld [vmem:[#allocation2 + $0x1f50] sm:$0xff]
    %v1090 = vld [vmem:[#allocation2 + $0x1f58] sm:$0xff]
    %v1091 = vld [vmem:[#allocation2 + $0x1f60] sm:$0xff]
    %v1092 = vld [vmem:[#allocation2 + $0x1f68] sm:$0xff]
    %v1093 = vld [vmem:[#allocation2 + $0x1f70] sm:$0xff]
    %v1094 = vld [vmem:[#allocation2 + $0x1f78] sm:$0xff]
    %v1095 = vld [vmem:[#allocation2 + $0x1f80] sm:$0xff]
    %v1096 = vld [vmem:[#allocation2 + $0x1f88] sm:$0xff]
    %v1097 = vld [vmem:[#allocation2 + $0x1f90] sm:$0xff]
    %v1098 = vld [vmem:[#allocation2 + $0x1f98] sm:$0xff]
    %v1099 = vld [vmem:[#allocation2 + $0x1fa0] sm:$0xff]
    %v1100 = vld [vmem:[#allocation2 + $0x1fa8] sm:$0xff]
    %v1101 = vld [vmem:[#allocation2 + $0x1fb0] sm:$0xff]
    %v1102 = vld [vmem:[#allocation2 + $0x1fb8] sm:$0xff]
    %v1103 = vld [vmem:[#allocation2 + $0x1fc0] sm:$0xff]
    %v1104 = vld [vmem:[#allocation2 + $0x1fc8] sm:$0xff]
    %v1105 = vld [vmem:[#allocation2 + $0x1fd0] sm:$0xff]
    %v1106 = vld [vmem:[#allocation2 + $0x1fd8] sm:$0xff]
    %v1107 = vld [vmem:[#allocation2 + $0x1fe0] sm:$0xff]
    %v1108 = vld [vmem:[#allocation2 + $0x1fe8] sm:$0xff]
    %v1109 = vld [vmem:[#allocation2 + $0x1ff0] sm:$0xff]
    %v1110 = vld [vmem:[#allocation2 + $0x1ff8] sm:$0xff]
    %v1111 = vld [vmem:[#allocation5] sm:$0xff]
    %v1113 = vlaneseq
    %v1114 = vshrl.u32 %v1113, 7
    %v1115 = vsub.s32 0, %v1114
    %v1116 = vrot.slane %v1111, %v1115
    %v1117 = vlaneseq
    %v1118 = vshrl.u32 %v1117, 7
    %v1119 = vsub.s32 1, %v1118
    %v1120 = vrot.slane %v1111, %v1119
    %v1121 = vlaneseq
    %v1122 = vshrl.u32 %v1121, 7
    %v1123 = vsub.s32 2, %v1122
    %v1124 = vrot.slane %v1111, %v1123
    %v1125 = vlaneseq
    %v1126 = vshrl.u32 %v1125, 7
    %v1127 = vsub.s32 3, %v1126
    %v1128 = vrot.slane %v1111, %v1127
    %v1129 = vlaneseq
    %v1130 = vshrl.u32 %v1129, 7
    %v1131 = vsub.s32 4, %v1130
    %v1132 = vrot.slane %v1111, %v1131
    %v1133 = vlaneseq
    %v1134 = vshrl.u32 %v1133, 7
    %v1135 = vsub.s32 5, %v1134
    %v1136 = vrot.slane %v1111, %v1135
    %v1137 = vlaneseq
    %v1138 = vshrl.u32 %v1137, 7
    %v1139 = vsub.s32 6, %v1138
    %v1140 = vrot.slane %v1111, %v1139
    %v1141 = vlaneseq
    %v1142 = vshrl.u32 %v1141, 7
    %v1143 = vsub.s32 7, %v1142
    %v1144 = vrot.slane %v1111, %v1143
    %v1161 = vunpack.c.l.b16 %v79
    %v1162 = vunpack.c.h.b16 %v79
    %v1163 = vunpack.c.l.b16 %v80
    %v1164 = vunpack.c.h.b16 %v80
    %v1165 = vunpack.c.l.b16 %v81
    %v1166 = vunpack.c.h.b16 %v81
    %v1167 = vunpack.c.l.b16 %v82
    %v1168 = vunpack.c.h.b16 %v82
    %v1169 = vunpack.c.l.b16 %v83
    %v1170 = vunpack.c.h.b16 %v83
    %v1171 = vunpack.c.l.b16 %v84
    %v1172 = vunpack.c.h.b16 %v84
    %v1173 = vunpack.c.l.b16 %v85
    %v1174 = vunpack.c.h.b16 %v85
    %v1175 = vunpack.c.l.b16 %v86
    %v1176 = vunpack.c.h.b16 %v86
    %v1177 = vpack.c.b16 %v1161, %v1161
    %v1178 = vpack.c.b16 %v1162, %v1162
    %v1179 = vpack.c.b16 %v1163, %v1163
    %v1180 = vpack.c.b16 %v1164, %v1164
    %v1181 = vpack.c.b16 %v1165, %v1165
    %v1182 = vpack.c.b16 %v1166, %v1166
    %v1183 = vpack.c.b16 %v1167, %v1167
    %v1184 = vpack.c.b16 %v1168, %v1168
    %v1185 = vpack.c.b16 %v1169, %v1169
    %v1186 = vpack.c.b16 %v1170, %v1170
    %v1187 = vpack.c.b16 %v1171, %v1171
    %v1188 = vpack.c.b16 %v1172, %v1172
    %v1189 = vpack.c.b16 %v1173, %v1173
    %v1190 = vpack.c.b16 %v1174, %v1174
    %v1191 = vpack.c.b16 %v1175, %v1175
    %v1192 = vpack.c.b16 %v1176, %v1176
    %v2233 = vunpack.c.l.b16 %v87
    %v2234 = vunpack.c.h.b16 %v87
    %v2235 = vunpack.c.l.b16 %v88
    %v2236 = vunpack.c.h.b16 %v88
    %v2237 = vunpack.c.l.b16 %v89
    %v2238 = vunpack.c.h.b16 %v89
    %v2239 = vunpack.c.l.b16 %v90
    %v2240 = vunpack.c.h.b16 %v90
    %v2241 = vunpack.c.l.b16 %v91
    %v2242 = vunpack.c.h.b16 %v91
    %v2243 = vunpack.c.l.b16 %v92
    %v2244 = vunpack.c.h.b16 %v92
    %v2245 = vunpack.c.l.b16 %v93
    %v2246 = vunpack.c.h.b16 %v93
    %v2247 = vunpack.c.l.b16 %v94
    %v2248 = vunpack.c.h.b16 %v94
    %v2249 = vunpack.c.l.b16 %v95
    %v2250 = vunpack.c.h.b16 %v95
    %v2251 = vunpack.c.l.b16 %v96
    %v2252 = vunpack.c.h.b16 %v96
    %v2253 = vunpack.c.l.b16 %v97
    %v2254 = vunpack.c.h.b16 %v97
    %v2255 = vunpack.c.l.b16 %v98
    %v2256 = vunpack.c.h.b16 %v98
    %v2257 = vunpack.c.l.b16 %v99
    %v2258 = vunpack.c.h.b16 %v99
    %v2259 = vunpack.c.l.b16 %v100
    %v2260 = vunpack.c.h.b16 %v100
    %v2261 = vunpack.c.l.b16 %v101
    %v2262 = vunpack.c.h.b16 %v101
    %v2263 = vunpack.c.l.b16 %v102
    %v2264 = vunpack.c.h.b16 %v102
    %v2265 = vunpack.c.l.b16 %v103
    %v2266 = vunpack.c.h.b16 %v103
    %v2267 = vunpack.c.l.b16 %v104
    %v2268 = vunpack.c.h.b16 %v104
    %v2269 = vunpack.c.l.b16 %v105
    %v2270 = vunpack.c.h.b16 %v105
    %v2271 = vunpack.c.l.b16 %v106
    %v2272 = vunpack.c.h.b16 %v106
    %v2273 = vunpack.c.l.b16 %v107
    %v2274 = vunpack.c.h.b16 %v107
    %v2275 = vunpack.c.l.b16 %v108
    %v2276 = vunpack.c.h.b16 %v108
    %v2277 = vunpack.c.l.b16 %v109
    %v2278 = vunpack.c.h.b16 %v109
    %v2279 = vunpack.c.l.b16 %v110
    %v2280 = vunpack.c.h.b16 %v110
    %v2281 = vunpack.c.l.b16 %v111
    %v2282 = vunpack.c.h.b16 %v111
    %v2283 = vunpack.c.l.b16 %v112
    %v2284 = vunpack.c.h.b16 %v112
    %v2285 = vunpack.c.l.b16 %v113
    %v2286 = vunpack.c.h.b16 %v113
    %v2287 = vunpack.c.l.b16 %v114
    %v2288 = vunpack.c.h.b16 %v114
    %v2289 = vunpack.c.l.b16 %v115
    %v2290 = vunpack.c.h.b16 %v115
    %v2291 = vunpack.c.l.b16 %v116
    %v2292 = vunpack.c.h.b16 %v116
    %v2293 = vunpack.c.l.b16 %v117
    %v2294 = vunpack.c.h.b16 %v117
    %v2295 = vunpack.c.l.b16 %v118
    %v2296 = vunpack.c.h.b16 %v118
    %v2297 = vunpack.c.l.b16 %v119
    %v2298 = vunpack.c.h.b16 %v119
    %v2299 = vunpack.c.l.b16 %v120
    %v2300 = vunpack.c.h.b16 %v120
    %v2301 = vunpack.c.l.b16 %v121
    %v2302 = vunpack.c.h.b16 %v121
    %v2303 = vunpack.c.l.b16 %v122
    %v2304 = vunpack.c.h.b16 %v122
    %v2305 = vunpack.c.l.b16 %v123
    %v2306 = vunpack.c.h.b16 %v123
    %v2307 = vunpack.c.l.b16 %v124
    %v2308 = vunpack.c.h.b16 %v124
    %v2309 = vunpack.c.l.b16 %v125
    %v2310 = vunpack.c.h.b16 %v125
    %v2311 = vunpack.c.l.b16 %v126
    %v2312 = vunpack.c.h.b16 %v126
    %v2313 = vunpack.c.l.b16 %v127
    %v2314 = vunpack.c.h.b16 %v127
    %v2315 = vunpack.c.l.b16 %v128
    %v2316 = vunpack.c.h.b16 %v128
    %v2317 = vunpack.c.l.b16 %v129
    %v2318 = vunpack.c.h.b16 %v129
    %v2319 = vunpack.c.l.b16 %v130
    %v2320 = vunpack.c.h.b16 %v130
    %v2321 = vunpack.c.l.b16 %v131
    %v2322 = vunpack.c.h.b16 %v131
    %v2323 = vunpack.c.l.b16 %v132
    %v2324 = vunpack.c.h.b16 %v132
    %v2325 = vunpack.c.l.b16 %v133
    %v2326 = vunpack.c.h.b16 %v133
    %v2327 = vunpack.c.l.b16 %v134
    %v2328 = vunpack.c.h.b16 %v134
    %v2329 = vunpack.c.l.b16 %v135
    %v2330 = vunpack.c.h.b16 %v135
    %v2331 = vunpack.c.l.b16 %v136
    %v2332 = vunpack.c.h.b16 %v136
    %v2333 = vunpack.c.l.b16 %v137
    %v2334 = vunpack.c.h.b16 %v137
    %v2335 = vunpack.c.l.b16 %v138
    %v2336 = vunpack.c.h.b16 %v138
    %v2337 = vunpack.c.l.b16 %v139
    %v2338 = vunpack.c.h.b16 %v139
    %v2339 = vunpack.c.l.b16 %v140
    %v2340 = vunpack.c.h.b16 %v140
    %v2341 = vunpack.c.l.b16 %v141
    %v2342 = vunpack.c.h.b16 %v141
    %v2343 = vunpack.c.l.b16 %v142
    %v2344 = vunpack.c.h.b16 %v142
    %v2345 = vunpack.c.l.b16 %v143
    %v2346 = vunpack.c.h.b16 %v143
    %v2347 = vunpack.c.l.b16 %v144
    %v2348 = vunpack.c.h.b16 %v144
    %v2349 = vunpack.c.l.b16 %v145
    %v2350 = vunpack.c.h.b16 %v145
    %v2351 = vunpack.c.l.b16 %v146
    %v2352 = vunpack.c.h.b16 %v146
    %v2353 = vunpack.c.l.b16 %v147
    %v2354 = vunpack.c.h.b16 %v147
    %v2355 = vunpack.c.l.b16 %v148
    %v2356 = vunpack.c.h.b16 %v148
    %v2357 = vunpack.c.l.b16 %v149
    %v2358 = vunpack.c.h.b16 %v149
    %v2359 = vunpack.c.l.b16 %v150
    %v2360 = vunpack.c.h.b16 %v150
    %v2361 = vunpack.c.l.b16 %v151
    %v2362 = vunpack.c.h.b16 %v151
    %v2363 = vunpack.c.l.b16 %v152
    %v2364 = vunpack.c.h.b16 %v152
    %v2365 = vunpack.c.l.b16 %v153
    %v2366 = vunpack.c.h.b16 %v153
    %v2367 = vunpack.c.l.b16 %v154
    %v2368 = vunpack.c.h.b16 %v154
    %v2369 = vunpack.c.l.b16 %v155
    %v2370 = vunpack.c.h.b16 %v155
    %v2371 = vunpack.c.l.b16 %v156
    %v2372 = vunpack.c.h.b16 %v156
    %v2373 = vunpack.c.l.b16 %v157
    %v2374 = vunpack.c.h.b16 %v157
    %v2375 = vunpack.c.l.b16 %v158
    %v2376 = vunpack.c.h.b16 %v158
    %v2377 = vunpack.c.l.b16 %v159
    %v2378 = vunpack.c.h.b16 %v159
    %v2379 = vunpack.c.l.b16 %v160
    %v2380 = vunpack.c.h.b16 %v160
    %v2381 = vunpack.c.l.b16 %v161
    %v2382 = vunpack.c.h.b16 %v161
    %v2383 = vunpack.c.l.b16 %v162
    %v2384 = vunpack.c.h.b16 %v162
    %v2385 = vunpack.c.l.b16 %v163
    %v2386 = vunpack.c.h.b16 %v163
    %v2387 = vunpack.c.l.b16 %v164
    %v2388 = vunpack.c.h.b16 %v164
    %v2389 = vunpack.c.l.b16 %v165
    %v2390 = vunpack.c.h.b16 %v165
    %v2391 = vunpack.c.l.b16 %v166
    %v2392 = vunpack.c.h.b16 %v166
    %v2393 = vunpack.c.l.b16 %v167
    %v2394 = vunpack.c.h.b16 %v167
    %v2395 = vunpack.c.l.b16 %v168
    %v2396 = vunpack.c.h.b16 %v168
    %v2397 = vunpack.c.l.b16 %v169
    %v2398 = vunpack.c.h.b16 %v169
    %v2399 = vunpack.c.l.b16 %v170
    %v2400 = vunpack.c.h.b16 %v170
    %v2401 = vunpack.c.l.b16 %v171
    %v2402 = vunpack.c.h.b16 %v171
    %v2403 = vunpack.c.l.b16 %v172
    %v2404 = vunpack.c.h.b16 %v172
    %v2405 = vunpack.c.l.b16 %v173
    %v2406 = vunpack.c.h.b16 %v173
    %v2407 = vunpack.c.l.b16 %v174
    %v2408 = vunpack.c.h.b16 %v174
    %v2409 = vunpack.c.l.b16 %v175
    %v2410 = vunpack.c.h.b16 %v175
    %v2411 = vunpack.c.l.b16 %v176
    %v2412 = vunpack.c.h.b16 %v176
    %v2413 = vunpack.c.l.b16 %v177
    %v2414 = vunpack.c.h.b16 %v177
    %v2415 = vunpack.c.l.b16 %v178
    %v2416 = vunpack.c.h.b16 %v178
    %v2417 = vunpack.c.l.b16 %v179
    %v2418 = vunpack.c.h.b16 %v179
    %v2419 = vunpack.c.l.b16 %v180
    %v2420 = vunpack.c.h.b16 %v180
    %v2421 = vunpack.c.l.b16 %v181
    %v2422 = vunpack.c.h.b16 %v181
    %v2423 = vunpack.c.l.b16 %v182
    %v2424 = vunpack.c.h.b16 %v182
    %v2425 = vunpack.c.l.b16 %v183
    %v2426 = vunpack.c.h.b16 %v183
    %v2427 = vunpack.c.l.b16 %v184
    %v2428 = vunpack.c.h.b16 %v184
    %v2429 = vunpack.c.l.b16 %v185
    %v2430 = vunpack.c.h.b16 %v185
    %v2431 = vunpack.c.l.b16 %v186
    %v2432 = vunpack.c.h.b16 %v186
    %v2433 = vunpack.c.l.b16 %v187
    %v2434 = vunpack.c.h.b16 %v187
    %v2435 = vunpack.c.l.b16 %v188
    %v2436 = vunpack.c.h.b16 %v188
    %v2437 = vunpack.c.l.b16 %v189
    %v2438 = vunpack.c.h.b16 %v189
    %v2439 = vunpack.c.l.b16 %v190
    %v2440 = vunpack.c.h.b16 %v190
    %v2441 = vunpack.c.l.b16 %v191
    %v2442 = vunpack.c.h.b16 %v191
    %v2443 = vunpack.c.l.b16 %v192
    %v2444 = vunpack.c.h.b16 %v192
    %v2445 = vunpack.c.l.b16 %v193
    %v2446 = vunpack.c.h.b16 %v193
    %v2447 = vunpack.c.l.b16 %v194
    %v2448 = vunpack.c.h.b16 %v194
    %v2449 = vunpack.c.l.b16 %v195
    %v2450 = vunpack.c.h.b16 %v195
    %v2451 = vunpack.c.l.b16 %v196
    %v2452 = vunpack.c.h.b16 %v196
    %v2453 = vunpack.c.l.b16 %v197
    %v2454 = vunpack.c.h.b16 %v197
    %v2455 = vunpack.c.l.b16 %v198
    %v2456 = vunpack.c.h.b16 %v198
    %v2457 = vunpack.c.l.b16 %v199
    %v2458 = vunpack.c.h.b16 %v199
    %v2459 = vunpack.c.l.b16 %v200
    %v2460 = vunpack.c.h.b16 %v200
    %v2461 = vunpack.c.l.b16 %v201
    %v2462 = vunpack.c.h.b16 %v201
    %v2463 = vunpack.c.l.b16 %v202
    %v2464 = vunpack.c.h.b16 %v202
    %v2465 = vunpack.c.l.b16 %v203
    %v2466 = vunpack.c.h.b16 %v203
    %v2467 = vunpack.c.l.b16 %v204
    %v2468 = vunpack.c.h.b16 %v204
    %v2469 = vunpack.c.l.b16 %v205
    %v2470 = vunpack.c.h.b16 %v205
    %v2471 = vunpack.c.l.b16 %v206
    %v2472 = vunpack.c.h.b16 %v206
    %v2473 = vunpack.c.l.b16 %v207
    %v2474 = vunpack.c.h.b16 %v207
    %v2475 = vunpack.c.l.b16 %v208
    %v2476 = vunpack.c.h.b16 %v208
    %v2477 = vunpack.c.l.b16 %v209
    %v2478 = vunpack.c.h.b16 %v209
    %v2479 = vunpack.c.l.b16 %v210
    %v2480 = vunpack.c.h.b16 %v210
    %v2481 = vunpack.c.l.b16 %v211
    %v2482 = vunpack.c.h.b16 %v211
    %v2483 = vunpack.c.l.b16 %v212
    %v2484 = vunpack.c.h.b16 %v212
    %v2485 = vunpack.c.l.b16 %v213
    %v2486 = vunpack.c.h.b16 %v213
    %v2487 = vunpack.c.l.b16 %v214
    %v2488 = vunpack.c.h.b16 %v214
    %v2489 = vunpack.c.l.b16 %v215
    %v2490 = vunpack.c.h.b16 %v215
    %v2491 = vunpack.c.l.b16 %v216
    %v2492 = vunpack.c.h.b16 %v216
    %v2493 = vunpack.c.l.b16 %v217
    %v2494 = vunpack.c.h.b16 %v217
    %v2495 = vunpack.c.l.b16 %v218
    %v2496 = vunpack.c.h.b16 %v218
    %v2497 = vunpack.c.l.b16 %v219
    %v2498 = vunpack.c.h.b16 %v219
    %v2499 = vunpack.c.l.b16 %v220
    %v2500 = vunpack.c.h.b16 %v220
    %v2501 = vunpack.c.l.b16 %v221
    %v2502 = vunpack.c.h.b16 %v221
    %v2503 = vunpack.c.l.b16 %v222
    %v2504 = vunpack.c.h.b16 %v222
    %v2505 = vunpack.c.l.b16 %v223
    %v2506 = vunpack.c.h.b16 %v223
    %v2507 = vunpack.c.l.b16 %v224
    %v2508 = vunpack.c.h.b16 %v224
    %v2509 = vunpack.c.l.b16 %v225
    %v2510 = vunpack.c.h.b16 %v225
    %v2511 = vunpack.c.l.b16 %v226
    %v2512 = vunpack.c.h.b16 %v226
    %v2513 = vunpack.c.l.b16 %v227
    %v2514 = vunpack.c.h.b16 %v227
    %v2515 = vunpack.c.l.b16 %v228
    %v2516 = vunpack.c.h.b16 %v228
    %v2517 = vunpack.c.l.b16 %v229
    %v2518 = vunpack.c.h.b16 %v229
    %v2519 = vunpack.c.l.b16 %v230
    %v2520 = vunpack.c.h.b16 %v230
    %v2521 = vunpack.c.l.b16 %v231
    %v2522 = vunpack.c.h.b16 %v231
    %v2523 = vunpack.c.l.b16 %v232
    %v2524 = vunpack.c.h.b16 %v232
    %v2525 = vunpack.c.l.b16 %v233
    %v2526 = vunpack.c.h.b16 %v233
    %v2527 = vunpack.c.l.b16 %v234
    %v2528 = vunpack.c.h.b16 %v234
    %v2529 = vunpack.c.l.b16 %v235
    %v2530 = vunpack.c.h.b16 %v235
    %v2531 = vunpack.c.l.b16 %v236
    %v2532 = vunpack.c.h.b16 %v236
    %v2533 = vunpack.c.l.b16 %v237
    %v2534 = vunpack.c.h.b16 %v237
    %v2535 = vunpack.c.l.b16 %v238
    %v2536 = vunpack.c.h.b16 %v238
    %v2537 = vunpack.c.l.b16 %v239
    %v2538 = vunpack.c.h.b16 %v239
    %v2539 = vunpack.c.l.b16 %v240
    %v2540 = vunpack.c.h.b16 %v240
    %v2541 = vunpack.c.l.b16 %v241
    %v2542 = vunpack.c.h.b16 %v241
    %v2543 = vunpack.c.l.b16 %v242
    %v2544 = vunpack.c.h.b16 %v242
    %v2545 = vunpack.c.l.b16 %v243
    %v2546 = vunpack.c.h.b16 %v243
    %v2547 = vunpack.c.l.b16 %v244
    %v2548 = vunpack.c.h.b16 %v244
    %v2549 = vunpack.c.l.b16 %v245
    %v2550 = vunpack.c.h.b16 %v245
    %v2551 = vunpack.c.l.b16 %v246
    %v2552 = vunpack.c.h.b16 %v246
    %v2553 = vunpack.c.l.b16 %v247
    %v2554 = vunpack.c.h.b16 %v247
    %v2555 = vunpack.c.l.b16 %v248
    %v2556 = vunpack.c.h.b16 %v248
    %v2557 = vunpack.c.l.b16 %v249
    %v2558 = vunpack.c.h.b16 %v249
    %v2559 = vunpack.c.l.b16 %v250
    %v2560 = vunpack.c.h.b16 %v250
    %v2561 = vunpack.c.l.b16 %v251
    %v2562 = vunpack.c.h.b16 %v251
    %v2563 = vunpack.c.l.b16 %v252
    %v2564 = vunpack.c.h.b16 %v252
    %v2565 = vunpack.c.l.b16 %v253
    %v2566 = vunpack.c.h.b16 %v253
    %v2567 = vunpack.c.l.b16 %v254
    %v2568 = vunpack.c.h.b16 %v254
    %v2569 = vunpack.c.l.b16 %v255
    %v2570 = vunpack.c.h.b16 %v255
    %v2571 = vunpack.c.l.b16 %v256
    %v2572 = vunpack.c.h.b16 %v256
    %v2573 = vunpack.c.l.b16 %v257
    %v2574 = vunpack.c.h.b16 %v257
    %v2575 = vunpack.c.l.b16 %v258
    %v2576 = vunpack.c.h.b16 %v258
    %v2577 = vunpack.c.l.b16 %v259
    %v2578 = vunpack.c.h.b16 %v259
    %v2579 = vunpack.c.l.b16 %v260
    %v2580 = vunpack.c.h.b16 %v260
    %v2581 = vunpack.c.l.b16 %v261
    %v2582 = vunpack.c.h.b16 %v261
    %v2583 = vunpack.c.l.b16 %v262
    %v2584 = vunpack.c.h.b16 %v262
    %v2585 = vunpack.c.l.b16 %v263
    %v2586 = vunpack.c.h.b16 %v263
    %v2587 = vunpack.c.l.b16 %v264
    %v2588 = vunpack.c.h.b16 %v264
    %v2589 = vunpack.c.l.b16 %v265
    %v2590 = vunpack.c.h.b16 %v265
    %v2591 = vunpack.c.l.b16 %v266
    %v2592 = vunpack.c.h.b16 %v266
    %v2593 = vunpack.c.l.b16 %v267
    %v2594 = vunpack.c.h.b16 %v267
    %v2595 = vunpack.c.l.b16 %v268
    %v2596 = vunpack.c.h.b16 %v268
    %v2597 = vunpack.c.l.b16 %v269
    %v2598 = vunpack.c.h.b16 %v269
    %v2599 = vunpack.c.l.b16 %v270
    %v2600 = vunpack.c.h.b16 %v270
    %v2601 = vunpack.c.l.b16 %v271
    %v2602 = vunpack.c.h.b16 %v271
    %v2603 = vunpack.c.l.b16 %v272
    %v2604 = vunpack.c.h.b16 %v272
    %v2605 = vunpack.c.l.b16 %v273
    %v2606 = vunpack.c.h.b16 %v273
    %v2607 = vunpack.c.l.b16 %v274
    %v2608 = vunpack.c.h.b16 %v274
    %v2609 = vunpack.c.l.b16 %v275
    %v2610 = vunpack.c.h.b16 %v275
    %v2611 = vunpack.c.l.b16 %v276
    %v2612 = vunpack.c.h.b16 %v276
    %v2613 = vunpack.c.l.b16 %v277
    %v2614 = vunpack.c.h.b16 %v277
    %v2615 = vunpack.c.l.b16 %v278
    %v2616 = vunpack.c.h.b16 %v278
    %v2617 = vunpack.c.l.b16 %v279
    %v2618 = vunpack.c.h.b16 %v279
    %v2619 = vunpack.c.l.b16 %v280
    %v2620 = vunpack.c.h.b16 %v280
    %v2621 = vunpack.c.l.b16 %v281
    %v2622 = vunpack.c.h.b16 %v281
    %v2623 = vunpack.c.l.b16 %v282
    %v2624 = vunpack.c.h.b16 %v282
    %v2625 = vunpack.c.l.b16 %v283
    %v2626 = vunpack.c.h.b16 %v283
    %v2627 = vunpack.c.l.b16 %v284
    %v2628 = vunpack.c.h.b16 %v284
    %v2629 = vunpack.c.l.b16 %v285
    %v2630 = vunpack.c.h.b16 %v285
    %v2631 = vunpack.c.l.b16 %v286
    %v2632 = vunpack.c.h.b16 %v286
    %v2633 = vunpack.c.l.b16 %v287
    %v2634 = vunpack.c.h.b16 %v287
    %v2635 = vunpack.c.l.b16 %v288
    %v2636 = vunpack.c.h.b16 %v288
    %v2637 = vunpack.c.l.b16 %v289
    %v2638 = vunpack.c.h.b16 %v289
    %v2639 = vunpack.c.l.b16 %v290
    %v2640 = vunpack.c.h.b16 %v290
    %v2641 = vunpack.c.l.b16 %v291
    %v2642 = vunpack.c.h.b16 %v291
    %v2643 = vunpack.c.l.b16 %v292
    %v2644 = vunpack.c.h.b16 %v292
    %v2645 = vunpack.c.l.b16 %v293
    %v2646 = vunpack.c.h.b16 %v293
    %v2647 = vunpack.c.l.b16 %v294
    %v2648 = vunpack.c.h.b16 %v294
    %v2649 = vunpack.c.l.b16 %v295
    %v2650 = vunpack.c.h.b16 %v295
    %v2651 = vunpack.c.l.b16 %v296
    %v2652 = vunpack.c.h.b16 %v296
    %v2653 = vunpack.c.l.b16 %v297
    %v2654 = vunpack.c.h.b16 %v297
    %v2655 = vunpack.c.l.b16 %v298
    %v2656 = vunpack.c.h.b16 %v298
    %v2657 = vunpack.c.l.b16 %v299
    %v2658 = vunpack.c.h.b16 %v299
    %v2659 = vunpack.c.l.b16 %v300
    %v2660 = vunpack.c.h.b16 %v300
    %v2661 = vunpack.c.l.b16 %v301
    %v2662 = vunpack.c.h.b16 %v301
    %v2663 = vunpack.c.l.b16 %v302
    %v2664 = vunpack.c.h.b16 %v302
    %v2665 = vunpack.c.l.b16 %v303
    %v2666 = vunpack.c.h.b16 %v303
    %v2667 = vunpack.c.l.b16 %v304
    %v2668 = vunpack.c.h.b16 %v304
    %v2669 = vunpack.c.l.b16 %v305
    %v2670 = vunpack.c.h.b16 %v305
    %v2671 = vunpack.c.l.b16 %v306
    %v2672 = vunpack.c.h.b16 %v306
    %v2673 = vunpack.c.l.b16 %v307
    %v2674 = vunpack.c.h.b16 %v307
    %v2675 = vunpack.c.l.b16 %v308
    %v2676 = vunpack.c.h.b16 %v308
    %v2677 = vunpack.c.l.b16 %v309
    %v2678 = vunpack.c.h.b16 %v309
    %v2679 = vunpack.c.l.b16 %v310
    %v2680 = vunpack.c.h.b16 %v310
    %v2681 = vunpack.c.l.b16 %v311
    %v2682 = vunpack.c.h.b16 %v311
    %v2683 = vunpack.c.l.b16 %v312
    %v2684 = vunpack.c.h.b16 %v312
    %v2685 = vunpack.c.l.b16 %v313
    %v2686 = vunpack.c.h.b16 %v313
    %v2687 = vunpack.c.l.b16 %v314
    %v2688 = vunpack.c.h.b16 %v314
    %v2689 = vunpack.c.l.b16 %v315
    %v2690 = vunpack.c.h.b16 %v315
    %v2691 = vunpack.c.l.b16 %v316
    %v2692 = vunpack.c.h.b16 %v316
    %v2693 = vunpack.c.l.b16 %v317
    %v2694 = vunpack.c.h.b16 %v317
    %v2695 = vunpack.c.l.b16 %v318
    %v2696 = vunpack.c.h.b16 %v318
    %v2697 = vunpack.c.l.b16 %v319
    %v2698 = vunpack.c.h.b16 %v319
    %v2699 = vunpack.c.l.b16 %v320
    %v2700 = vunpack.c.h.b16 %v320
    %v2701 = vunpack.c.l.b16 %v321
    %v2702 = vunpack.c.h.b16 %v321
    %v2703 = vunpack.c.l.b16 %v322
    %v2704 = vunpack.c.h.b16 %v322
    %v2705 = vunpack.c.l.b16 %v323
    %v2706 = vunpack.c.h.b16 %v323
    %v2707 = vunpack.c.l.b16 %v324
    %v2708 = vunpack.c.h.b16 %v324
    %v2709 = vunpack.c.l.b16 %v325
    %v2710 = vunpack.c.h.b16 %v325
    %v2711 = vunpack.c.l.b16 %v326
    %v2712 = vunpack.c.h.b16 %v326
    %v2713 = vunpack.c.l.b16 %v327
    %v2714 = vunpack.c.h.b16 %v327
    %v2715 = vunpack.c.l.b16 %v328
    %v2716 = vunpack.c.h.b16 %v328
    %v2717 = vunpack.c.l.b16 %v329
    %v2718 = vunpack.c.h.b16 %v329
    %v2719 = vunpack.c.l.b16 %v330
    %v2720 = vunpack.c.h.b16 %v330
    %v2721 = vunpack.c.l.b16 %v331
    %v2722 = vunpack.c.h.b16 %v331
    %v2723 = vunpack.c.l.b16 %v332
    %v2724 = vunpack.c.h.b16 %v332
    %v2725 = vunpack.c.l.b16 %v333
    %v2726 = vunpack.c.h.b16 %v333
    %v2727 = vunpack.c.l.b16 %v334
    %v2728 = vunpack.c.h.b16 %v334
    %v2729 = vunpack.c.l.b16 %v335
    %v2730 = vunpack.c.h.b16 %v335
    %v2731 = vunpack.c.l.b16 %v336
    %v2732 = vunpack.c.h.b16 %v336
    %v2733 = vunpack.c.l.b16 %v337
    %v2734 = vunpack.c.h.b16 %v337
    %v2735 = vunpack.c.l.b16 %v338
    %v2736 = vunpack.c.h.b16 %v338
    %v2737 = vunpack.c.l.b16 %v339
    %v2738 = vunpack.c.h.b16 %v339
    %v2739 = vunpack.c.l.b16 %v340
    %v2740 = vunpack.c.h.b16 %v340
    %v2741 = vunpack.c.l.b16 %v341
    %v2742 = vunpack.c.h.b16 %v341
    %v2743 = vunpack.c.l.b16 %v342
    %v2744 = vunpack.c.h.b16 %v342
    %v2745 = vunpack.c.l.b16 %v343
    %v2746 = vunpack.c.h.b16 %v343
    %v2747 = vunpack.c.l.b16 %v344
    %v2748 = vunpack.c.h.b16 %v344
    %v2749 = vunpack.c.l.b16 %v345
    %v2750 = vunpack.c.h.b16 %v345
    %v2751 = vunpack.c.l.b16 %v346
    %v2752 = vunpack.c.h.b16 %v346
    %v2753 = vunpack.c.l.b16 %v347
    %v2754 = vunpack.c.h.b16 %v347
    %v2755 = vunpack.c.l.b16 %v348
    %v2756 = vunpack.c.h.b16 %v348
    %v2757 = vunpack.c.l.b16 %v349
    %v2758 = vunpack.c.h.b16 %v349
    %v2759 = vunpack.c.l.b16 %v350
    %v2760 = vunpack.c.h.b16 %v350
    %v2761 = vunpack.c.l.b16 %v351
    %v2762 = vunpack.c.h.b16 %v351
    %v2763 = vunpack.c.l.b16 %v352
    %v2764 = vunpack.c.h.b16 %v352
    %v2765 = vunpack.c.l.b16 %v353
    %v2766 = vunpack.c.h.b16 %v353
    %v2767 = vunpack.c.l.b16 %v354
    %v2768 = vunpack.c.h.b16 %v354
    %v2769 = vunpack.c.l.b16 %v355
    %v2770 = vunpack.c.h.b16 %v355
    %v2771 = vunpack.c.l.b16 %v356
    %v2772 = vunpack.c.h.b16 %v356
    %v2773 = vunpack.c.l.b16 %v357
    %v2774 = vunpack.c.h.b16 %v357
    %v2775 = vunpack.c.l.b16 %v358
    %v2776 = vunpack.c.h.b16 %v358
    %v2777 = vunpack.c.l.b16 %v359
    %v2778 = vunpack.c.h.b16 %v359
    %v2779 = vunpack.c.l.b16 %v360
    %v2780 = vunpack.c.h.b16 %v360
    %v2781 = vunpack.c.l.b16 %v361
    %v2782 = vunpack.c.h.b16 %v361
    %v2783 = vunpack.c.l.b16 %v362
    %v2784 = vunpack.c.h.b16 %v362
    %v2785 = vunpack.c.l.b16 %v363
    %v2786 = vunpack.c.h.b16 %v363
    %v2787 = vunpack.c.l.b16 %v364
    %v2788 = vunpack.c.h.b16 %v364
    %v2789 = vunpack.c.l.b16 %v365
    %v2790 = vunpack.c.h.b16 %v365
    %v2791 = vunpack.c.l.b16 %v366
    %v2792 = vunpack.c.h.b16 %v366
    %v2793 = vunpack.c.l.b16 %v367
    %v2794 = vunpack.c.h.b16 %v367
    %v2795 = vunpack.c.l.b16 %v368
    %v2796 = vunpack.c.h.b16 %v368
    %v2797 = vunpack.c.l.b16 %v369
    %v2798 = vunpack.c.h.b16 %v369
    %v2799 = vunpack.c.l.b16 %v370
    %v2800 = vunpack.c.h.b16 %v370
    %v2801 = vunpack.c.l.b16 %v371
    %v2802 = vunpack.c.h.b16 %v371
    %v2803 = vunpack.c.l.b16 %v372
    %v2804 = vunpack.c.h.b16 %v372
    %v2805 = vunpack.c.l.b16 %v373
    %v2806 = vunpack.c.h.b16 %v373
    %v2807 = vunpack.c.l.b16 %v374
    %v2808 = vunpack.c.h.b16 %v374
    %v2809 = vunpack.c.l.b16 %v375
    %v2810 = vunpack.c.h.b16 %v375
    %v2811 = vunpack.c.l.b16 %v376
    %v2812 = vunpack.c.h.b16 %v376
    %v2813 = vunpack.c.l.b16 %v377
    %v2814 = vunpack.c.h.b16 %v377
    %v2815 = vunpack.c.l.b16 %v378
    %v2816 = vunpack.c.h.b16 %v378
    %v2817 = vunpack.c.l.b16 %v379
    %v2818 = vunpack.c.h.b16 %v379
    %v2819 = vunpack.c.l.b16 %v380
    %v2820 = vunpack.c.h.b16 %v380
    %v2821 = vunpack.c.l.b16 %v381
    %v2822 = vunpack.c.h.b16 %v381
    %v2823 = vunpack.c.l.b16 %v382
    %v2824 = vunpack.c.h.b16 %v382
    %v2825 = vunpack.c.l.b16 %v383
    %v2826 = vunpack.c.h.b16 %v383
    %v2827 = vunpack.c.l.b16 %v384
    %v2828 = vunpack.c.h.b16 %v384
    %v2829 = vunpack.c.l.b16 %v385
    %v2830 = vunpack.c.h.b16 %v385
    %v2831 = vunpack.c.l.b16 %v386
    %v2832 = vunpack.c.h.b16 %v386
    %v2833 = vunpack.c.l.b16 %v387
    %v2834 = vunpack.c.h.b16 %v387
    %v2835 = vunpack.c.l.b16 %v388
    %v2836 = vunpack.c.h.b16 %v388
    %v2837 = vunpack.c.l.b16 %v389
    %v2838 = vunpack.c.h.b16 %v389
    %v2839 = vunpack.c.l.b16 %v390
    %v2840 = vunpack.c.h.b16 %v390
    %v2841 = vunpack.c.l.b16 %v391
    %v2842 = vunpack.c.h.b16 %v391
    %v2843 = vunpack.c.l.b16 %v392
    %v2844 = vunpack.c.h.b16 %v392
    %v2845 = vunpack.c.l.b16 %v393
    %v2846 = vunpack.c.h.b16 %v393
    %v2847 = vunpack.c.l.b16 %v394
    %v2848 = vunpack.c.h.b16 %v394
    %v2849 = vunpack.c.l.b16 %v395
    %v2850 = vunpack.c.h.b16 %v395
    %v2851 = vunpack.c.l.b16 %v396
    %v2852 = vunpack.c.h.b16 %v396
    %v2853 = vunpack.c.l.b16 %v397
    %v2854 = vunpack.c.h.b16 %v397
    %v2855 = vunpack.c.l.b16 %v398
    %v2856 = vunpack.c.h.b16 %v398
    %v2857 = vunpack.c.l.b16 %v399
    %v2858 = vunpack.c.h.b16 %v399
    %v2859 = vunpack.c.l.b16 %v400
    %v2860 = vunpack.c.h.b16 %v400
    %v2861 = vunpack.c.l.b16 %v401
    %v2862 = vunpack.c.h.b16 %v401
    %v2863 = vunpack.c.l.b16 %v402
    %v2864 = vunpack.c.h.b16 %v402
    %v2865 = vunpack.c.l.b16 %v403
    %v2866 = vunpack.c.h.b16 %v403
    %v2867 = vunpack.c.l.b16 %v404
    %v2868 = vunpack.c.h.b16 %v404
    %v2869 = vunpack.c.l.b16 %v405
    %v2870 = vunpack.c.h.b16 %v405
    %v2871 = vunpack.c.l.b16 %v406
    %v2872 = vunpack.c.h.b16 %v406
    %v2873 = vunpack.c.l.b16 %v407
    %v2874 = vunpack.c.h.b16 %v407
    %v2875 = vunpack.c.l.b16 %v408
    %v2876 = vunpack.c.h.b16 %v408
    %v2877 = vunpack.c.l.b16 %v409
    %v2878 = vunpack.c.h.b16 %v409
    %v2879 = vunpack.c.l.b16 %v410
    %v2880 = vunpack.c.h.b16 %v410
    %v2881 = vunpack.c.l.b16 %v411
    %v2882 = vunpack.c.h.b16 %v411
    %v2883 = vunpack.c.l.b16 %v412
    %v2884 = vunpack.c.h.b16 %v412
    %v2885 = vunpack.c.l.b16 %v413
    %v2886 = vunpack.c.h.b16 %v413
    %v2887 = vunpack.c.l.b16 %v414
    %v2888 = vunpack.c.h.b16 %v414
    %v2889 = vunpack.c.l.b16 %v415
    %v2890 = vunpack.c.h.b16 %v415
    %v2891 = vunpack.c.l.b16 %v416
    %v2892 = vunpack.c.h.b16 %v416
    %v2893 = vunpack.c.l.b16 %v417
    %v2894 = vunpack.c.h.b16 %v417
    %v2895 = vunpack.c.l.b16 %v418
    %v2896 = vunpack.c.h.b16 %v418
    %v2897 = vunpack.c.l.b16 %v419
    %v2898 = vunpack.c.h.b16 %v419
    %v2899 = vunpack.c.l.b16 %v420
    %v2900 = vunpack.c.h.b16 %v420
    %v2901 = vunpack.c.l.b16 %v421
    %v2902 = vunpack.c.h.b16 %v421
    %v2903 = vunpack.c.l.b16 %v422
    %v2904 = vunpack.c.h.b16 %v422
    %v2905 = vunpack.c.l.b16 %v423
    %v2906 = vunpack.c.h.b16 %v423
    %v2907 = vunpack.c.l.b16 %v424
    %v2908 = vunpack.c.h.b16 %v424
    %v2909 = vunpack.c.l.b16 %v425
    %v2910 = vunpack.c.h.b16 %v425
    %v2911 = vunpack.c.l.b16 %v426
    %v2912 = vunpack.c.h.b16 %v426
    %v2913 = vunpack.c.l.b16 %v427
    %v2914 = vunpack.c.h.b16 %v427
    %v2915 = vunpack.c.l.b16 %v428
    %v2916 = vunpack.c.h.b16 %v428
    %v2917 = vunpack.c.l.b16 %v429
    %v2918 = vunpack.c.h.b16 %v429
    %v2919 = vunpack.c.l.b16 %v430
    %v2920 = vunpack.c.h.b16 %v430
    %v2921 = vunpack.c.l.b16 %v431
    %v2922 = vunpack.c.h.b16 %v431
    %v2923 = vunpack.c.l.b16 %v432
    %v2924 = vunpack.c.h.b16 %v432
    %v2925 = vunpack.c.l.b16 %v433
    %v2926 = vunpack.c.h.b16 %v433
    %v2927 = vunpack.c.l.b16 %v434
    %v2928 = vunpack.c.h.b16 %v434
    %v2929 = vunpack.c.l.b16 %v435
    %v2930 = vunpack.c.h.b16 %v435
    %v2931 = vunpack.c.l.b16 %v436
    %v2932 = vunpack.c.h.b16 %v436
    %v2933 = vunpack.c.l.b16 %v437
    %v2934 = vunpack.c.h.b16 %v437
    %v2935 = vunpack.c.l.b16 %v438
    %v2936 = vunpack.c.h.b16 %v438
    %v2937 = vunpack.c.l.b16 %v439
    %v2938 = vunpack.c.h.b16 %v439
    %v2939 = vunpack.c.l.b16 %v440
    %v2940 = vunpack.c.h.b16 %v440
    %v2941 = vunpack.c.l.b16 %v441
    %v2942 = vunpack.c.h.b16 %v441
    %v2943 = vunpack.c.l.b16 %v442
    %v2944 = vunpack.c.h.b16 %v442
    %v2945 = vunpack.c.l.b16 %v443
    %v2946 = vunpack.c.h.b16 %v443
    %v2947 = vunpack.c.l.b16 %v444
    %v2948 = vunpack.c.h.b16 %v444
    %v2949 = vunpack.c.l.b16 %v445
    %v2950 = vunpack.c.h.b16 %v445
    %v2951 = vunpack.c.l.b16 %v446
    %v2952 = vunpack.c.h.b16 %v446
    %v2953 = vunpack.c.l.b16 %v447
    %v2954 = vunpack.c.h.b16 %v447
    %v2955 = vunpack.c.l.b16 %v448
    %v2956 = vunpack.c.h.b16 %v448
    %v2957 = vunpack.c.l.b16 %v449
    %v2958 = vunpack.c.h.b16 %v449
    %v2959 = vunpack.c.l.b16 %v450
    %v2960 = vunpack.c.h.b16 %v450
    %v2961 = vunpack.c.l.b16 %v451
    %v2962 = vunpack.c.h.b16 %v451
    %v2963 = vunpack.c.l.b16 %v452
    %v2964 = vunpack.c.h.b16 %v452
    %v2965 = vunpack.c.l.b16 %v453
    %v2966 = vunpack.c.h.b16 %v453
    %v2967 = vunpack.c.l.b16 %v454
    %v2968 = vunpack.c.h.b16 %v454
    %v2969 = vunpack.c.l.b16 %v455
    %v2970 = vunpack.c.h.b16 %v455
    %v2971 = vunpack.c.l.b16 %v456
    %v2972 = vunpack.c.h.b16 %v456
    %v2973 = vunpack.c.l.b16 %v457
    %v2974 = vunpack.c.h.b16 %v457
    %v2975 = vunpack.c.l.b16 %v458
    %v2976 = vunpack.c.h.b16 %v458
    %v2977 = vunpack.c.l.b16 %v459
    %v2978 = vunpack.c.h.b16 %v459
    %v2979 = vunpack.c.l.b16 %v460
    %v2980 = vunpack.c.h.b16 %v460
    %v2981 = vunpack.c.l.b16 %v461
    %v2982 = vunpack.c.h.b16 %v461
    %v2983 = vunpack.c.l.b16 %v462
    %v2984 = vunpack.c.h.b16 %v462
    %v2985 = vunpack.c.l.b16 %v463
    %v2986 = vunpack.c.h.b16 %v463
    %v2987 = vunpack.c.l.b16 %v464
    %v2988 = vunpack.c.h.b16 %v464
    %v2989 = vunpack.c.l.b16 %v465
    %v2990 = vunpack.c.h.b16 %v465
    %v2991 = vunpack.c.l.b16 %v466
    %v2992 = vunpack.c.h.b16 %v466
    %v2993 = vunpack.c.l.b16 %v467
    %v2994 = vunpack.c.h.b16 %v467
    %v2995 = vunpack.c.l.b16 %v468
    %v2996 = vunpack.c.h.b16 %v468
    %v2997 = vunpack.c.l.b16 %v469
    %v2998 = vunpack.c.h.b16 %v469
    %v2999 = vunpack.c.l.b16 %v470
    %v3000 = vunpack.c.h.b16 %v470
    %v3001 = vunpack.c.l.b16 %v471
    %v3002 = vunpack.c.h.b16 %v471
    %v3003 = vunpack.c.l.b16 %v472
    %v3004 = vunpack.c.h.b16 %v472
    %v3005 = vunpack.c.l.b16 %v473
    %v3006 = vunpack.c.h.b16 %v473
    %v3007 = vunpack.c.l.b16 %v474
    %v3008 = vunpack.c.h.b16 %v474
    %v3009 = vunpack.c.l.b16 %v475
    %v3010 = vunpack.c.h.b16 %v475
    %v3011 = vunpack.c.l.b16 %v476
    %v3012 = vunpack.c.h.b16 %v476
    %v3013 = vunpack.c.l.b16 %v477
    %v3014 = vunpack.c.h.b16 %v477
    %v3015 = vunpack.c.l.b16 %v478
    %v3016 = vunpack.c.h.b16 %v478
    %v3017 = vunpack.c.l.b16 %v479
    %v3018 = vunpack.c.h.b16 %v479
    %v3019 = vunpack.c.l.b16 %v480
    %v3020 = vunpack.c.h.b16 %v480
    %v3021 = vunpack.c.l.b16 %v481
    %v3022 = vunpack.c.h.b16 %v481
    %v3023 = vunpack.c.l.b16 %v482
    %v3024 = vunpack.c.h.b16 %v482
    %v3025 = vunpack.c.l.b16 %v483
    %v3026 = vunpack.c.h.b16 %v483
    %v3027 = vunpack.c.l.b16 %v484
    %v3028 = vunpack.c.h.b16 %v484
    %v3029 = vunpack.c.l.b16 %v485
    %v3030 = vunpack.c.h.b16 %v485
    %v3031 = vunpack.c.l.b16 %v486
    %v3032 = vunpack.c.h.b16 %v486
    %v3033 = vunpack.c.l.b16 %v487
    %v3034 = vunpack.c.h.b16 %v487
    %v3035 = vunpack.c.l.b16 %v488
    %v3036 = vunpack.c.h.b16 %v488
    %v3037 = vunpack.c.l.b16 %v489
    %v3038 = vunpack.c.h.b16 %v489
    %v3039 = vunpack.c.l.b16 %v490
    %v3040 = vunpack.c.h.b16 %v490
    %v3041 = vunpack.c.l.b16 %v491
    %v3042 = vunpack.c.h.b16 %v491
    %v3043 = vunpack.c.l.b16 %v492
    %v3044 = vunpack.c.h.b16 %v492
    %v3045 = vunpack.c.l.b16 %v493
    %v3046 = vunpack.c.h.b16 %v493
    %v3047 = vunpack.c.l.b16 %v494
    %v3048 = vunpack.c.h.b16 %v494
    %v3049 = vunpack.c.l.b16 %v495
    %v3050 = vunpack.c.h.b16 %v495
    %v3051 = vunpack.c.l.b16 %v496
    %v3052 = vunpack.c.h.b16 %v496
    %v3053 = vunpack.c.l.b16 %v497
    %v3054 = vunpack.c.h.b16 %v497
    %v3055 = vunpack.c.l.b16 %v498
    %v3056 = vunpack.c.h.b16 %v498
    %v3057 = vunpack.c.l.b16 %v499
    %v3058 = vunpack.c.h.b16 %v499
    %v3059 = vunpack.c.l.b16 %v500
    %v3060 = vunpack.c.h.b16 %v500
    %v3061 = vunpack.c.l.b16 %v501
    %v3062 = vunpack.c.h.b16 %v501
    %v3063 = vunpack.c.l.b16 %v502
    %v3064 = vunpack.c.h.b16 %v502
    %v3065 = vunpack.c.l.b16 %v503
    %v3066 = vunpack.c.h.b16 %v503
    %v3067 = vunpack.c.l.b16 %v504
    %v3068 = vunpack.c.h.b16 %v504
    %v3069 = vunpack.c.l.b16 %v505
    %v3070 = vunpack.c.h.b16 %v505
    %v3071 = vunpack.c.l.b16 %v506
    %v3072 = vunpack.c.h.b16 %v506
    %v3073 = vunpack.c.l.b16 %v507
    %v3074 = vunpack.c.h.b16 %v507
    %v3075 = vunpack.c.l.b16 %v508
    %v3076 = vunpack.c.h.b16 %v508
    %v3077 = vunpack.c.l.b16 %v509
    %v3078 = vunpack.c.h.b16 %v509
    %v3079 = vunpack.c.l.b16 %v510
    %v3080 = vunpack.c.h.b16 %v510
    %v3081 = vunpack.c.l.b16 %v511
    %v3082 = vunpack.c.h.b16 %v511
    %v3083 = vunpack.c.l.b16 %v512
    %v3084 = vunpack.c.h.b16 %v512
    %v3085 = vunpack.c.l.b16 %v513
    %v3086 = vunpack.c.h.b16 %v513
    %v3087 = vunpack.c.l.b16 %v514
    %v3088 = vunpack.c.h.b16 %v514
    %v3089 = vunpack.c.l.b16 %v515
    %v3090 = vunpack.c.h.b16 %v515
    %v3091 = vunpack.c.l.b16 %v516
    %v3092 = vunpack.c.h.b16 %v516
    %v3093 = vunpack.c.l.b16 %v517
    %v3094 = vunpack.c.h.b16 %v517
    %v3095 = vunpack.c.l.b16 %v518
    %v3096 = vunpack.c.h.b16 %v518
    %v3097 = vunpack.c.l.b16 %v519
    %v3098 = vunpack.c.h.b16 %v519
    %v3099 = vunpack.c.l.b16 %v520
    %v3100 = vunpack.c.h.b16 %v520
    %v3101 = vunpack.c.l.b16 %v521
    %v3102 = vunpack.c.h.b16 %v521
    %v3103 = vunpack.c.l.b16 %v522
    %v3104 = vunpack.c.h.b16 %v522
    %v3105 = vunpack.c.l.b16 %v523
    %v3106 = vunpack.c.h.b16 %v523
    %v3107 = vunpack.c.l.b16 %v524
    %v3108 = vunpack.c.h.b16 %v524
    %v3109 = vunpack.c.l.b16 %v525
    %v3110 = vunpack.c.h.b16 %v525
    %v3111 = vunpack.c.l.b16 %v526
    %v3112 = vunpack.c.h.b16 %v526
    %v3113 = vunpack.c.l.b16 %v527
    %v3114 = vunpack.c.h.b16 %v527
    %v3115 = vunpack.c.l.b16 %v528
    %v3116 = vunpack.c.h.b16 %v528
    %v3117 = vunpack.c.l.b16 %v529
    %v3118 = vunpack.c.h.b16 %v529
    %v3119 = vunpack.c.l.b16 %v530
    %v3120 = vunpack.c.h.b16 %v530
    %v3121 = vunpack.c.l.b16 %v531
    %v3122 = vunpack.c.h.b16 %v531
    %v3123 = vunpack.c.l.b16 %v532
    %v3124 = vunpack.c.h.b16 %v532
    %v3125 = vunpack.c.l.b16 %v533
    %v3126 = vunpack.c.h.b16 %v533
    %v3127 = vunpack.c.l.b16 %v534
    %v3128 = vunpack.c.h.b16 %v534
    %v3129 = vunpack.c.l.b16 %v535
    %v3130 = vunpack.c.h.b16 %v535
    %v3131 = vunpack.c.l.b16 %v536
    %v3132 = vunpack.c.h.b16 %v536
    %v3133 = vunpack.c.l.b16 %v537
    %v3134 = vunpack.c.h.b16 %v537
    %v3135 = vunpack.c.l.b16 %v538
    %v3136 = vunpack.c.h.b16 %v538
    %v3137 = vunpack.c.l.b16 %v539
    %v3138 = vunpack.c.h.b16 %v539
    %v3139 = vunpack.c.l.b16 %v540
    %v3140 = vunpack.c.h.b16 %v540
    %v3141 = vunpack.c.l.b16 %v541
    %v3142 = vunpack.c.h.b16 %v541
    %v3143 = vunpack.c.l.b16 %v542
    %v3144 = vunpack.c.h.b16 %v542
    %v3145 = vunpack.c.l.b16 %v543
    %v3146 = vunpack.c.h.b16 %v543
    %v3147 = vunpack.c.l.b16 %v544
    %v3148 = vunpack.c.h.b16 %v544
    %v3149 = vunpack.c.l.b16 %v545
    %v3150 = vunpack.c.h.b16 %v545
    %v3151 = vunpack.c.l.b16 %v546
    %v3152 = vunpack.c.h.b16 %v546
    %v3153 = vunpack.c.l.b16 %v547
    %v3154 = vunpack.c.h.b16 %v547
    %v3155 = vunpack.c.l.b16 %v548
    %v3156 = vunpack.c.h.b16 %v548
    %v3157 = vunpack.c.l.b16 %v549
    %v3158 = vunpack.c.h.b16 %v549
    %v3159 = vunpack.c.l.b16 %v550
    %v3160 = vunpack.c.h.b16 %v550
    %v3161 = vunpack.c.l.b16 %v551
    %v3162 = vunpack.c.h.b16 %v551
    %v3163 = vunpack.c.l.b16 %v552
    %v3164 = vunpack.c.h.b16 %v552
    %v3165 = vunpack.c.l.b16 %v553
    %v3166 = vunpack.c.h.b16 %v553
    %v3167 = vunpack.c.l.b16 %v554
    %v3168 = vunpack.c.h.b16 %v554
    %v3169 = vunpack.c.l.b16 %v555
    %v3170 = vunpack.c.h.b16 %v555
    %v3171 = vunpack.c.l.b16 %v556
    %v3172 = vunpack.c.h.b16 %v556
    %v3173 = vunpack.c.l.b16 %v557
    %v3174 = vunpack.c.h.b16 %v557
    %v3175 = vunpack.c.l.b16 %v558
    %v3176 = vunpack.c.h.b16 %v558
    %v3177 = vunpack.c.l.b16 %v559
    %v3178 = vunpack.c.h.b16 %v559
    %v3179 = vunpack.c.l.b16 %v560
    %v3180 = vunpack.c.h.b16 %v560
    %v3181 = vunpack.c.l.b16 %v561
    %v3182 = vunpack.c.h.b16 %v561
    %v3183 = vunpack.c.l.b16 %v562
    %v3184 = vunpack.c.h.b16 %v562
    %v3185 = vunpack.c.l.b16 %v563
    %v3186 = vunpack.c.h.b16 %v563
    %v3187 = vunpack.c.l.b16 %v564
    %v3188 = vunpack.c.h.b16 %v564
    %v3189 = vunpack.c.l.b16 %v565
    %v3190 = vunpack.c.h.b16 %v565
    %v3191 = vunpack.c.l.b16 %v566
    %v3192 = vunpack.c.h.b16 %v566
    %v3193 = vunpack.c.l.b16 %v567
    %v3194 = vunpack.c.h.b16 %v567
    %v3195 = vunpack.c.l.b16 %v568
    %v3196 = vunpack.c.h.b16 %v568
    %v3197 = vunpack.c.l.b16 %v569
    %v3198 = vunpack.c.h.b16 %v569
    %v3199 = vunpack.c.l.b16 %v570
    %v3200 = vunpack.c.h.b16 %v570
    %v3201 = vunpack.c.l.b16 %v571
    %v3202 = vunpack.c.h.b16 %v571
    %v3203 = vunpack.c.l.b16 %v572
    %v3204 = vunpack.c.h.b16 %v572
    %v3205 = vunpack.c.l.b16 %v573
    %v3206 = vunpack.c.h.b16 %v573
    %v3207 = vunpack.c.l.b16 %v574
    %v3208 = vunpack.c.h.b16 %v574
    %v3209 = vunpack.c.l.b16 %v575
    %v3210 = vunpack.c.h.b16 %v575
    %v3211 = vunpack.c.l.b16 %v576
    %v3212 = vunpack.c.h.b16 %v576
    %v3213 = vunpack.c.l.b16 %v577
    %v3214 = vunpack.c.h.b16 %v577
    %v3215 = vunpack.c.l.b16 %v578
    %v3216 = vunpack.c.h.b16 %v578
    %v3217 = vunpack.c.l.b16 %v579
    %v3218 = vunpack.c.h.b16 %v579
    %v3219 = vunpack.c.l.b16 %v580
    %v3220 = vunpack.c.h.b16 %v580
    %v3221 = vunpack.c.l.b16 %v581
    %v3222 = vunpack.c.h.b16 %v581
    %v3223 = vunpack.c.l.b16 %v582
    %v3224 = vunpack.c.h.b16 %v582
    %v3225 = vunpack.c.l.b16 %v583
    %v3226 = vunpack.c.h.b16 %v583
    %v3227 = vunpack.c.l.b16 %v584
    %v3228 = vunpack.c.h.b16 %v584
    %v3229 = vunpack.c.l.b16 %v585
    %v3230 = vunpack.c.h.b16 %v585
    %v3231 = vunpack.c.l.b16 %v586
    %v3232 = vunpack.c.h.b16 %v586
    %v3233 = vunpack.c.l.b16 %v587
    %v3234 = vunpack.c.h.b16 %v587
    %v3235 = vunpack.c.l.b16 %v588
    %v3236 = vunpack.c.h.b16 %v588
    %v3237 = vunpack.c.l.b16 %v589
    %v3238 = vunpack.c.h.b16 %v589
    %v3239 = vunpack.c.l.b16 %v590
    %v3240 = vunpack.c.h.b16 %v590
    %v3241 = vunpack.c.l.b16 %v591
    %v3242 = vunpack.c.h.b16 %v591
    %v3243 = vunpack.c.l.b16 %v592
    %v3244 = vunpack.c.h.b16 %v592
    %v3245 = vunpack.c.l.b16 %v593
    %v3246 = vunpack.c.h.b16 %v593
    %v3247 = vunpack.c.l.b16 %v594
    %v3248 = vunpack.c.h.b16 %v594
    %v3249 = vunpack.c.l.b16 %v595
    %v3250 = vunpack.c.h.b16 %v595
    %v3251 = vunpack.c.l.b16 %v596
    %v3252 = vunpack.c.h.b16 %v596
    %v3253 = vunpack.c.l.b16 %v597
    %v3254 = vunpack.c.h.b16 %v597
    %v3255 = vunpack.c.l.b16 %v598
    %v3256 = vunpack.c.h.b16 %v598
    %v3257 = vunpack.c.l.b16 %v599
    %v3258 = vunpack.c.h.b16 %v599
    %v3259 = vunpack.c.l.b16 %v600
    %v3260 = vunpack.c.h.b16 %v600
    %v3261 = vunpack.c.l.b16 %v601
    %v3262 = vunpack.c.h.b16 %v601
    %v3263 = vunpack.c.l.b16 %v602
    %v3264 = vunpack.c.h.b16 %v602
    %v3265 = vunpack.c.l.b16 %v603
    %v3266 = vunpack.c.h.b16 %v603
    %v3267 = vunpack.c.l.b16 %v604
    %v3268 = vunpack.c.h.b16 %v604
    %v3269 = vunpack.c.l.b16 %v605
    %v3270 = vunpack.c.h.b16 %v605
    %v3271 = vunpack.c.l.b16 %v606
    %v3272 = vunpack.c.h.b16 %v606
    %v3273 = vunpack.c.l.b16 %v607
    %v3274 = vunpack.c.h.b16 %v607
    %v3275 = vunpack.c.l.b16 %v608
    %v3276 = vunpack.c.h.b16 %v608
    %v3277 = vunpack.c.l.b16 %v609
    %v3278 = vunpack.c.h.b16 %v609
    %v3279 = vunpack.c.l.b16 %v610
    %v3280 = vunpack.c.h.b16 %v610
    %v3281 = vunpack.c.l.b16 %v611
    %v3282 = vunpack.c.h.b16 %v611
    %v3283 = vunpack.c.l.b16 %v612
    %v3284 = vunpack.c.h.b16 %v612
    %v3285 = vunpack.c.l.b16 %v613
    %v3286 = vunpack.c.h.b16 %v613
    %v3287 = vunpack.c.l.b16 %v614
    %v3288 = vunpack.c.h.b16 %v614
    %v3289 = vunpack.c.l.b16 %v615
    %v3290 = vunpack.c.h.b16 %v615
    %v3291 = vunpack.c.l.b16 %v616
    %v3292 = vunpack.c.h.b16 %v616
    %v3293 = vunpack.c.l.b16 %v617
    %v3294 = vunpack.c.h.b16 %v617
    %v3295 = vunpack.c.l.b16 %v618
    %v3296 = vunpack.c.h.b16 %v618
    %v3297 = vunpack.c.l.b16 %v619
    %v3298 = vunpack.c.h.b16 %v619
    %v3299 = vunpack.c.l.b16 %v620
    %v3300 = vunpack.c.h.b16 %v620
    %v3301 = vunpack.c.l.b16 %v621
    %v3302 = vunpack.c.h.b16 %v621
    %v3303 = vunpack.c.l.b16 %v622
    %v3304 = vunpack.c.h.b16 %v622
    %v3305 = vunpack.c.l.b16 %v623
    %v3306 = vunpack.c.h.b16 %v623
    %v3307 = vunpack.c.l.b16 %v624
    %v3308 = vunpack.c.h.b16 %v624
    %v3309 = vunpack.c.l.b16 %v625
    %v3310 = vunpack.c.h.b16 %v625
    %v3311 = vunpack.c.l.b16 %v626
    %v3312 = vunpack.c.h.b16 %v626
    %v3313 = vunpack.c.l.b16 %v627
    %v3314 = vunpack.c.h.b16 %v627
    %v3315 = vunpack.c.l.b16 %v628
    %v3316 = vunpack.c.h.b16 %v628
    %v3317 = vunpack.c.l.b16 %v629
    %v3318 = vunpack.c.h.b16 %v629
    %v3319 = vunpack.c.l.b16 %v630
    %v3320 = vunpack.c.h.b16 %v630
    %v3321 = vunpack.c.l.b16 %v631
    %v3322 = vunpack.c.h.b16 %v631
    %v3323 = vunpack.c.l.b16 %v632
    %v3324 = vunpack.c.h.b16 %v632
    %v3325 = vunpack.c.l.b16 %v633
    %v3326 = vunpack.c.h.b16 %v633
    %v3327 = vunpack.c.l.b16 %v634
    %v3328 = vunpack.c.h.b16 %v634
    %v3329 = vunpack.c.l.b16 %v635
    %v3330 = vunpack.c.h.b16 %v635
    %v3331 = vunpack.c.l.b16 %v636
    %v3332 = vunpack.c.h.b16 %v636
    %v3333 = vunpack.c.l.b16 %v637
    %v3334 = vunpack.c.h.b16 %v637
    %v3335 = vunpack.c.l.b16 %v638
    %v3336 = vunpack.c.h.b16 %v638
    %v3337 = vunpack.c.l.b16 %v639
    %v3338 = vunpack.c.h.b16 %v639
    %v3339 = vunpack.c.l.b16 %v640
    %v3340 = vunpack.c.h.b16 %v640
    %v3341 = vunpack.c.l.b16 %v641
    %v3342 = vunpack.c.h.b16 %v641
    %v3343 = vunpack.c.l.b16 %v642
    %v3344 = vunpack.c.h.b16 %v642
    %v3345 = vunpack.c.l.b16 %v643
    %v3346 = vunpack.c.h.b16 %v643
    %v3347 = vunpack.c.l.b16 %v644
    %v3348 = vunpack.c.h.b16 %v644
    %v3349 = vunpack.c.l.b16 %v645
    %v3350 = vunpack.c.h.b16 %v645
    %v3351 = vunpack.c.l.b16 %v646
    %v3352 = vunpack.c.h.b16 %v646
    %v3353 = vunpack.c.l.b16 %v647
    %v3354 = vunpack.c.h.b16 %v647
    %v3355 = vunpack.c.l.b16 %v648
    %v3356 = vunpack.c.h.b16 %v648
    %v3357 = vunpack.c.l.b16 %v649
    %v3358 = vunpack.c.h.b16 %v649
    %v3359 = vunpack.c.l.b16 %v650
    %v3360 = vunpack.c.h.b16 %v650
    %v3361 = vunpack.c.l.b16 %v651
    %v3362 = vunpack.c.h.b16 %v651
    %v3363 = vunpack.c.l.b16 %v652
    %v3364 = vunpack.c.h.b16 %v652
    %v3365 = vunpack.c.l.b16 %v653
    %v3366 = vunpack.c.h.b16 %v653
    %v3367 = vunpack.c.l.b16 %v654
    %v3368 = vunpack.c.h.b16 %v654
    %v3369 = vunpack.c.l.b16 %v655
    %v3370 = vunpack.c.h.b16 %v655
    %v3371 = vunpack.c.l.b16 %v656
    %v3372 = vunpack.c.h.b16 %v656
    %v3373 = vunpack.c.l.b16 %v657
    %v3374 = vunpack.c.h.b16 %v657
    %v3375 = vunpack.c.l.b16 %v658
    %v3376 = vunpack.c.h.b16 %v658
    %v3377 = vunpack.c.l.b16 %v659
    %v3378 = vunpack.c.h.b16 %v659
    %v3379 = vunpack.c.l.b16 %v660
    %v3380 = vunpack.c.h.b16 %v660
    %v3381 = vunpack.c.l.b16 %v661
    %v3382 = vunpack.c.h.b16 %v661
    %v3383 = vunpack.c.l.b16 %v662
    %v3384 = vunpack.c.h.b16 %v662
    %v3385 = vunpack.c.l.b16 %v663
    %v3386 = vunpack.c.h.b16 %v663
    %v3387 = vunpack.c.l.b16 %v664
    %v3388 = vunpack.c.h.b16 %v664
    %v3389 = vunpack.c.l.b16 %v665
    %v3390 = vunpack.c.h.b16 %v665
    %v3391 = vunpack.c.l.b16 %v666
    %v3392 = vunpack.c.h.b16 %v666
    %v3393 = vunpack.c.l.b16 %v667
    %v3394 = vunpack.c.h.b16 %v667
    %v3395 = vunpack.c.l.b16 %v668
    %v3396 = vunpack.c.h.b16 %v668
    %v3397 = vunpack.c.l.b16 %v669
    %v3398 = vunpack.c.h.b16 %v669
    %v3399 = vunpack.c.l.b16 %v670
    %v3400 = vunpack.c.h.b16 %v670
    %v3401 = vunpack.c.l.b16 %v671
    %v3402 = vunpack.c.h.b16 %v671
    %v3403 = vunpack.c.l.b16 %v672
    %v3404 = vunpack.c.h.b16 %v672
    %v3405 = vunpack.c.l.b16 %v673
    %v3406 = vunpack.c.h.b16 %v673
    %v3407 = vunpack.c.l.b16 %v674
    %v3408 = vunpack.c.h.b16 %v674
    %v3409 = vunpack.c.l.b16 %v675
    %v3410 = vunpack.c.h.b16 %v675
    %v3411 = vunpack.c.l.b16 %v676
    %v3412 = vunpack.c.h.b16 %v676
    %v3413 = vunpack.c.l.b16 %v677
    %v3414 = vunpack.c.h.b16 %v677
    %v3415 = vunpack.c.l.b16 %v678
    %v3416 = vunpack.c.h.b16 %v678
    %v3417 = vunpack.c.l.b16 %v679
    %v3418 = vunpack.c.h.b16 %v679
    %v3419 = vunpack.c.l.b16 %v680
    %v3420 = vunpack.c.h.b16 %v680
    %v3421 = vunpack.c.l.b16 %v681
    %v3422 = vunpack.c.h.b16 %v681
    %v3423 = vunpack.c.l.b16 %v682
    %v3424 = vunpack.c.h.b16 %v682
    %v3425 = vunpack.c.l.b16 %v683
    %v3426 = vunpack.c.h.b16 %v683
    %v3427 = vunpack.c.l.b16 %v684
    %v3428 = vunpack.c.h.b16 %v684
    %v3429 = vunpack.c.l.b16 %v685
    %v3430 = vunpack.c.h.b16 %v685
    %v3431 = vunpack.c.l.b16 %v686
    %v3432 = vunpack.c.h.b16 %v686
    %v3433 = vunpack.c.l.b16 %v687
    %v3434 = vunpack.c.h.b16 %v687
    %v3435 = vunpack.c.l.b16 %v688
    %v3436 = vunpack.c.h.b16 %v688
    %v3437 = vunpack.c.l.b16 %v689
    %v3438 = vunpack.c.h.b16 %v689
    %v3439 = vunpack.c.l.b16 %v690
    %v3440 = vunpack.c.h.b16 %v690
    %v3441 = vunpack.c.l.b16 %v691
    %v3442 = vunpack.c.h.b16 %v691
    %v3443 = vunpack.c.l.b16 %v692
    %v3444 = vunpack.c.h.b16 %v692
    %v3445 = vunpack.c.l.b16 %v693
    %v3446 = vunpack.c.h.b16 %v693
    %v3447 = vunpack.c.l.b16 %v694
    %v3448 = vunpack.c.h.b16 %v694
    %v3449 = vunpack.c.l.b16 %v695
    %v3450 = vunpack.c.h.b16 %v695
    %v3451 = vunpack.c.l.b16 %v696
    %v3452 = vunpack.c.h.b16 %v696
    %v3453 = vunpack.c.l.b16 %v697
    %v3454 = vunpack.c.h.b16 %v697
    %v3455 = vunpack.c.l.b16 %v698
    %v3456 = vunpack.c.h.b16 %v698
    %v3457 = vunpack.c.l.b16 %v699
    %v3458 = vunpack.c.h.b16 %v699
    %v3459 = vunpack.c.l.b16 %v700
    %v3460 = vunpack.c.h.b16 %v700
    %v3461 = vunpack.c.l.b16 %v701
    %v3462 = vunpack.c.h.b16 %v701
    %v3463 = vunpack.c.l.b16 %v702
    %v3464 = vunpack.c.h.b16 %v702
    %v3465 = vunpack.c.l.b16 %v703
    %v3466 = vunpack.c.h.b16 %v703
    %v3467 = vunpack.c.l.b16 %v704
    %v3468 = vunpack.c.h.b16 %v704
    %v3469 = vunpack.c.l.b16 %v705
    %v3470 = vunpack.c.h.b16 %v705
    %v3471 = vunpack.c.l.b16 %v706
    %v3472 = vunpack.c.h.b16 %v706
    %v3473 = vunpack.c.l.b16 %v707
    %v3474 = vunpack.c.h.b16 %v707
    %v3475 = vunpack.c.l.b16 %v708
    %v3476 = vunpack.c.h.b16 %v708
    %v3477 = vunpack.c.l.b16 %v709
    %v3478 = vunpack.c.h.b16 %v709
    %v3479 = vunpack.c.l.b16 %v710
    %v3480 = vunpack.c.h.b16 %v710
    %v3481 = vunpack.c.l.b16 %v711
    %v3482 = vunpack.c.h.b16 %v711
    %v3483 = vunpack.c.l.b16 %v712
    %v3484 = vunpack.c.h.b16 %v712
    %v3485 = vunpack.c.l.b16 %v713
    %v3486 = vunpack.c.h.b16 %v713
    %v3487 = vunpack.c.l.b16 %v714
    %v3488 = vunpack.c.h.b16 %v714
    %v3489 = vunpack.c.l.b16 %v715
    %v3490 = vunpack.c.h.b16 %v715
    %v3491 = vunpack.c.l.b16 %v716
    %v3492 = vunpack.c.h.b16 %v716
    %v3493 = vunpack.c.l.b16 %v717
    %v3494 = vunpack.c.h.b16 %v717
    %v3495 = vunpack.c.l.b16 %v718
    %v3496 = vunpack.c.h.b16 %v718
    %v3497 = vunpack.c.l.b16 %v719
    %v3498 = vunpack.c.h.b16 %v719
    %v3499 = vunpack.c.l.b16 %v720
    %v3500 = vunpack.c.h.b16 %v720
    %v3501 = vunpack.c.l.b16 %v721
    %v3502 = vunpack.c.h.b16 %v721
    %v3503 = vunpack.c.l.b16 %v722
    %v3504 = vunpack.c.h.b16 %v722
    %v3505 = vunpack.c.l.b16 %v723
    %v3506 = vunpack.c.h.b16 %v723
    %v3507 = vunpack.c.l.b16 %v724
    %v3508 = vunpack.c.h.b16 %v724
    %v3509 = vunpack.c.l.b16 %v725
    %v3510 = vunpack.c.h.b16 %v725
    %v3511 = vunpack.c.l.b16 %v726
    %v3512 = vunpack.c.h.b16 %v726
    %v3513 = vunpack.c.l.b16 %v727
    %v3514 = vunpack.c.h.b16 %v727
    %v3515 = vunpack.c.l.b16 %v728
    %v3516 = vunpack.c.h.b16 %v728
    %v3517 = vunpack.c.l.b16 %v729
    %v3518 = vunpack.c.h.b16 %v729
    %v3519 = vunpack.c.l.b16 %v730
    %v3520 = vunpack.c.h.b16 %v730
    %v3521 = vunpack.c.l.b16 %v731
    %v3522 = vunpack.c.h.b16 %v731
    %v3523 = vunpack.c.l.b16 %v732
    %v3524 = vunpack.c.h.b16 %v732
    %v3525 = vunpack.c.l.b16 %v733
    %v3526 = vunpack.c.h.b16 %v733
    %v3527 = vunpack.c.l.b16 %v734
    %v3528 = vunpack.c.h.b16 %v734
    %v3529 = vunpack.c.l.b16 %v735
    %v3530 = vunpack.c.h.b16 %v735
    %v3531 = vunpack.c.l.b16 %v736
    %v3532 = vunpack.c.h.b16 %v736
    %v3533 = vunpack.c.l.b16 %v737
    %v3534 = vunpack.c.h.b16 %v737
    %v3535 = vunpack.c.l.b16 %v738
    %v3536 = vunpack.c.h.b16 %v738
    %v3537 = vunpack.c.l.b16 %v739
    %v3538 = vunpack.c.h.b16 %v739
    %v3539 = vunpack.c.l.b16 %v740
    %v3540 = vunpack.c.h.b16 %v740
    %v3541 = vunpack.c.l.b16 %v741
    %v3542 = vunpack.c.h.b16 %v741
    %v3543 = vunpack.c.l.b16 %v742
    %v3544 = vunpack.c.h.b16 %v742
    %v3545 = vunpack.c.l.b16 %v743
    %v3546 = vunpack.c.h.b16 %v743
    %v3547 = vunpack.c.l.b16 %v744
    %v3548 = vunpack.c.h.b16 %v744
    %v3549 = vunpack.c.l.b16 %v745
    %v3550 = vunpack.c.h.b16 %v745
    %v3551 = vunpack.c.l.b16 %v746
    %v3552 = vunpack.c.h.b16 %v746
    %v3553 = vunpack.c.l.b16 %v747
    %v3554 = vunpack.c.h.b16 %v747
    %v3555 = vunpack.c.l.b16 %v748
    %v3556 = vunpack.c.h.b16 %v748
    %v3557 = vunpack.c.l.b16 %v749
    %v3558 = vunpack.c.h.b16 %v749
    %v3559 = vunpack.c.l.b16 %v750
    %v3560 = vunpack.c.h.b16 %v750
    %v3561 = vunpack.c.l.b16 %v751
    %v3562 = vunpack.c.h.b16 %v751
    %v3563 = vunpack.c.l.b16 %v752
    %v3564 = vunpack.c.h.b16 %v752
    %v3565 = vunpack.c.l.b16 %v753
    %v3566 = vunpack.c.h.b16 %v753
    %v3567 = vunpack.c.l.b16 %v754
    %v3568 = vunpack.c.h.b16 %v754
    %v3569 = vunpack.c.l.b16 %v755
    %v3570 = vunpack.c.h.b16 %v755
    %v3571 = vunpack.c.l.b16 %v756
    %v3572 = vunpack.c.h.b16 %v756
    %v3573 = vunpack.c.l.b16 %v757
    %v3574 = vunpack.c.h.b16 %v757
    %v3575 = vunpack.c.l.b16 %v758
    %v3576 = vunpack.c.h.b16 %v758
    %v3577 = vunpack.c.l.b16 %v759
    %v3578 = vunpack.c.h.b16 %v759
    %v3579 = vunpack.c.l.b16 %v760
    %v3580 = vunpack.c.h.b16 %v760
    %v3581 = vunpack.c.l.b16 %v761
    %v3582 = vunpack.c.h.b16 %v761
    %v3583 = vunpack.c.l.b16 %v762
    %v3584 = vunpack.c.h.b16 %v762
    %v3585 = vunpack.c.l.b16 %v763
    %v3586 = vunpack.c.h.b16 %v763
    %v3587 = vunpack.c.l.b16 %v764
    %v3588 = vunpack.c.h.b16 %v764
    %v3589 = vunpack.c.l.b16 %v765
    %v3590 = vunpack.c.h.b16 %v765
    %v3591 = vunpack.c.l.b16 %v766
    %v3592 = vunpack.c.h.b16 %v766
    %v3593 = vunpack.c.l.b16 %v767
    %v3594 = vunpack.c.h.b16 %v767
    %v3595 = vunpack.c.l.b16 %v768
    %v3596 = vunpack.c.h.b16 %v768
    %v3597 = vunpack.c.l.b16 %v769
    %v3598 = vunpack.c.h.b16 %v769
    %v3599 = vunpack.c.l.b16 %v770
    %v3600 = vunpack.c.h.b16 %v770
    %v3601 = vunpack.c.l.b16 %v771
    %v3602 = vunpack.c.h.b16 %v771
    %v3603 = vunpack.c.l.b16 %v772
    %v3604 = vunpack.c.h.b16 %v772
    %v3605 = vunpack.c.l.b16 %v773
    %v3606 = vunpack.c.h.b16 %v773
    %v3607 = vunpack.c.l.b16 %v774
    %v3608 = vunpack.c.h.b16 %v774
    %v3609 = vunpack.c.l.b16 %v775
    %v3610 = vunpack.c.h.b16 %v775
    %v3611 = vunpack.c.l.b16 %v776
    %v3612 = vunpack.c.h.b16 %v776
    %v3613 = vunpack.c.l.b16 %v777
    %v3614 = vunpack.c.h.b16 %v777
    %v3615 = vunpack.c.l.b16 %v778
    %v3616 = vunpack.c.h.b16 %v778
    %v3617 = vunpack.c.l.b16 %v779
    %v3618 = vunpack.c.h.b16 %v779
    %v3619 = vunpack.c.l.b16 %v780
    %v3620 = vunpack.c.h.b16 %v780
    %v3621 = vunpack.c.l.b16 %v781
    %v3622 = vunpack.c.h.b16 %v781
    %v3623 = vunpack.c.l.b16 %v782
    %v3624 = vunpack.c.h.b16 %v782
    %v3625 = vunpack.c.l.b16 %v783
    %v3626 = vunpack.c.h.b16 %v783
    %v3627 = vunpack.c.l.b16 %v784
    %v3628 = vunpack.c.h.b16 %v784
    %v3629 = vunpack.c.l.b16 %v785
    %v3630 = vunpack.c.h.b16 %v785
    %v3631 = vunpack.c.l.b16 %v786
    %v3632 = vunpack.c.h.b16 %v786
    %v3633 = vunpack.c.l.b16 %v787
    %v3634 = vunpack.c.h.b16 %v787
    %v3635 = vunpack.c.l.b16 %v788
    %v3636 = vunpack.c.h.b16 %v788
    %v3637 = vunpack.c.l.b16 %v789
    %v3638 = vunpack.c.h.b16 %v789
    %v3639 = vunpack.c.l.b16 %v790
    %v3640 = vunpack.c.h.b16 %v790
    %v3641 = vunpack.c.l.b16 %v791
    %v3642 = vunpack.c.h.b16 %v791
    %v3643 = vunpack.c.l.b16 %v792
    %v3644 = vunpack.c.h.b16 %v792
    %v3645 = vunpack.c.l.b16 %v793
    %v3646 = vunpack.c.h.b16 %v793
    %v3647 = vunpack.c.l.b16 %v794
    %v3648 = vunpack.c.h.b16 %v794
    %v3649 = vunpack.c.l.b16 %v795
    %v3650 = vunpack.c.h.b16 %v795
    %v3651 = vunpack.c.l.b16 %v796
    %v3652 = vunpack.c.h.b16 %v796
    %v3653 = vunpack.c.l.b16 %v797
    %v3654 = vunpack.c.h.b16 %v797
    %v3655 = vunpack.c.l.b16 %v798
    %v3656 = vunpack.c.h.b16 %v798
    %v3657 = vunpack.c.l.b16 %v799
    %v3658 = vunpack.c.h.b16 %v799
    %v3659 = vunpack.c.l.b16 %v800
    %v3660 = vunpack.c.h.b16 %v800
    %v3661 = vunpack.c.l.b16 %v801
    %v3662 = vunpack.c.h.b16 %v801
    %v3663 = vunpack.c.l.b16 %v802
    %v3664 = vunpack.c.h.b16 %v802
    %v3665 = vunpack.c.l.b16 %v803
    %v3666 = vunpack.c.h.b16 %v803
    %v3667 = vunpack.c.l.b16 %v804
    %v3668 = vunpack.c.h.b16 %v804
    %v3669 = vunpack.c.l.b16 %v805
    %v3670 = vunpack.c.h.b16 %v805
    %v3671 = vunpack.c.l.b16 %v806
    %v3672 = vunpack.c.h.b16 %v806
    %v3673 = vunpack.c.l.b16 %v807
    %v3674 = vunpack.c.h.b16 %v807
    %v3675 = vunpack.c.l.b16 %v808
    %v3676 = vunpack.c.h.b16 %v808
    %v3677 = vunpack.c.l.b16 %v809
    %v3678 = vunpack.c.h.b16 %v809
    %v3679 = vunpack.c.l.b16 %v810
    %v3680 = vunpack.c.h.b16 %v810
    %v3681 = vunpack.c.l.b16 %v811
    %v3682 = vunpack.c.h.b16 %v811
    %v3683 = vunpack.c.l.b16 %v812
    %v3684 = vunpack.c.h.b16 %v812
    %v3685 = vunpack.c.l.b16 %v813
    %v3686 = vunpack.c.h.b16 %v813
    %v3687 = vunpack.c.l.b16 %v814
    %v3688 = vunpack.c.h.b16 %v814
    %v3689 = vunpack.c.l.b16 %v815
    %v3690 = vunpack.c.h.b16 %v815
    %v3691 = vunpack.c.l.b16 %v816
    %v3692 = vunpack.c.h.b16 %v816
    %v3693 = vunpack.c.l.b16 %v817
    %v3694 = vunpack.c.h.b16 %v817
    %v3695 = vunpack.c.l.b16 %v818
    %v3696 = vunpack.c.h.b16 %v818
    %v3697 = vunpack.c.l.b16 %v819
    %v3698 = vunpack.c.h.b16 %v819
    %v3699 = vunpack.c.l.b16 %v820
    %v3700 = vunpack.c.h.b16 %v820
    %v3701 = vunpack.c.l.b16 %v821
    %v3702 = vunpack.c.h.b16 %v821
    %v3703 = vunpack.c.l.b16 %v822
    %v3704 = vunpack.c.h.b16 %v822
    %v3705 = vunpack.c.l.b16 %v823
    %v3706 = vunpack.c.h.b16 %v823
    %v3707 = vunpack.c.l.b16 %v824
    %v3708 = vunpack.c.h.b16 %v824
    %v3709 = vunpack.c.l.b16 %v825
    %v3710 = vunpack.c.h.b16 %v825
    %v3711 = vunpack.c.l.b16 %v826
    %v3712 = vunpack.c.h.b16 %v826
    %v3713 = vunpack.c.l.b16 %v827
    %v3714 = vunpack.c.h.b16 %v827
    %v3715 = vunpack.c.l.b16 %v828
    %v3716 = vunpack.c.h.b16 %v828
    %v3717 = vunpack.c.l.b16 %v829
    %v3718 = vunpack.c.h.b16 %v829
    %v3719 = vunpack.c.l.b16 %v830
    %v3720 = vunpack.c.h.b16 %v830
    %v3721 = vunpack.c.l.b16 %v831
    %v3722 = vunpack.c.h.b16 %v831
    %v3723 = vunpack.c.l.b16 %v832
    %v3724 = vunpack.c.h.b16 %v832
    %v3725 = vunpack.c.l.b16 %v833
    %v3726 = vunpack.c.h.b16 %v833
    %v3727 = vunpack.c.l.b16 %v834
    %v3728 = vunpack.c.h.b16 %v834
    %v3729 = vunpack.c.l.b16 %v835
    %v3730 = vunpack.c.h.b16 %v835
    %v3731 = vunpack.c.l.b16 %v836
    %v3732 = vunpack.c.h.b16 %v836
    %v3733 = vunpack.c.l.b16 %v837
    %v3734 = vunpack.c.h.b16 %v837
    %v3735 = vunpack.c.l.b16 %v838
    %v3736 = vunpack.c.h.b16 %v838
    %v3737 = vunpack.c.l.b16 %v839
    %v3738 = vunpack.c.h.b16 %v839
    %v3739 = vunpack.c.l.b16 %v840
    %v3740 = vunpack.c.h.b16 %v840
    %v3741 = vunpack.c.l.b16 %v841
    %v3742 = vunpack.c.h.b16 %v841
    %v3743 = vunpack.c.l.b16 %v842
    %v3744 = vunpack.c.h.b16 %v842
    %v3745 = vunpack.c.l.b16 %v843
    %v3746 = vunpack.c.h.b16 %v843
    %v3747 = vunpack.c.l.b16 %v844
    %v3748 = vunpack.c.h.b16 %v844
    %v3749 = vunpack.c.l.b16 %v845
    %v3750 = vunpack.c.h.b16 %v845
    %v3751 = vunpack.c.l.b16 %v846
    %v3752 = vunpack.c.h.b16 %v846
    %v3753 = vunpack.c.l.b16 %v847
    %v3754 = vunpack.c.h.b16 %v847
    %v3755 = vunpack.c.l.b16 %v848
    %v3756 = vunpack.c.h.b16 %v848
    %v3757 = vunpack.c.l.b16 %v849
    %v3758 = vunpack.c.h.b16 %v849
    %v3759 = vunpack.c.l.b16 %v850
    %v3760 = vunpack.c.h.b16 %v850
    %v3761 = vunpack.c.l.b16 %v851
    %v3762 = vunpack.c.h.b16 %v851
    %v3763 = vunpack.c.l.b16 %v852
    %v3764 = vunpack.c.h.b16 %v852
    %v3765 = vunpack.c.l.b16 %v853
    %v3766 = vunpack.c.h.b16 %v853
    %v3767 = vunpack.c.l.b16 %v854
    %v3768 = vunpack.c.h.b16 %v854
    %v3769 = vunpack.c.l.b16 %v855
    %v3770 = vunpack.c.h.b16 %v855
    %v3771 = vunpack.c.l.b16 %v856
    %v3772 = vunpack.c.h.b16 %v856
    %v3773 = vunpack.c.l.b16 %v857
    %v3774 = vunpack.c.h.b16 %v857
    %v3775 = vunpack.c.l.b16 %v858
    %v3776 = vunpack.c.h.b16 %v858
    %v3777 = vunpack.c.l.b16 %v859
    %v3778 = vunpack.c.h.b16 %v859
    %v3779 = vunpack.c.l.b16 %v860
    %v3780 = vunpack.c.h.b16 %v860
    %v3781 = vunpack.c.l.b16 %v861
    %v3782 = vunpack.c.h.b16 %v861
    %v3783 = vunpack.c.l.b16 %v862
    %v3784 = vunpack.c.h.b16 %v862
    %v3785 = vunpack.c.l.b16 %v863
    %v3786 = vunpack.c.h.b16 %v863
    %v3787 = vunpack.c.l.b16 %v864
    %v3788 = vunpack.c.h.b16 %v864
    %v3789 = vunpack.c.l.b16 %v865
    %v3790 = vunpack.c.h.b16 %v865
    %v3791 = vunpack.c.l.b16 %v866
    %v3792 = vunpack.c.h.b16 %v866
    %v3793 = vunpack.c.l.b16 %v867
    %v3794 = vunpack.c.h.b16 %v867
    %v3795 = vunpack.c.l.b16 %v868
    %v3796 = vunpack.c.h.b16 %v868
    %v3797 = vunpack.c.l.b16 %v869
    %v3798 = vunpack.c.h.b16 %v869
    %v3799 = vunpack.c.l.b16 %v870
    %v3800 = vunpack.c.h.b16 %v870
    %v3801 = vunpack.c.l.b16 %v871
    %v3802 = vunpack.c.h.b16 %v871
    %v3803 = vunpack.c.l.b16 %v872
    %v3804 = vunpack.c.h.b16 %v872
    %v3805 = vunpack.c.l.b16 %v873
    %v3806 = vunpack.c.h.b16 %v873
    %v3807 = vunpack.c.l.b16 %v874
    %v3808 = vunpack.c.h.b16 %v874
    %v3809 = vunpack.c.l.b16 %v875
    %v3810 = vunpack.c.h.b16 %v875
    %v3811 = vunpack.c.l.b16 %v876
    %v3812 = vunpack.c.h.b16 %v876
    %v3813 = vunpack.c.l.b16 %v877
    %v3814 = vunpack.c.h.b16 %v877
    %v3815 = vunpack.c.l.b16 %v878
    %v3816 = vunpack.c.h.b16 %v878
    %v3817 = vunpack.c.l.b16 %v879
    %v3818 = vunpack.c.h.b16 %v879
    %v3819 = vunpack.c.l.b16 %v880
    %v3820 = vunpack.c.h.b16 %v880
    %v3821 = vunpack.c.l.b16 %v881
    %v3822 = vunpack.c.h.b16 %v881
    %v3823 = vunpack.c.l.b16 %v882
    %v3824 = vunpack.c.h.b16 %v882
    %v3825 = vunpack.c.l.b16 %v883
    %v3826 = vunpack.c.h.b16 %v883
    %v3827 = vunpack.c.l.b16 %v884
    %v3828 = vunpack.c.h.b16 %v884
    %v3829 = vunpack.c.l.b16 %v885
    %v3830 = vunpack.c.h.b16 %v885
    %v3831 = vunpack.c.l.b16 %v886
    %v3832 = vunpack.c.h.b16 %v886
    %v3833 = vunpack.c.l.b16 %v887
    %v3834 = vunpack.c.h.b16 %v887
    %v3835 = vunpack.c.l.b16 %v888
    %v3836 = vunpack.c.h.b16 %v888
    %v3837 = vunpack.c.l.b16 %v889
    %v3838 = vunpack.c.h.b16 %v889
    %v3839 = vunpack.c.l.b16 %v890
    %v3840 = vunpack.c.h.b16 %v890
    %v3841 = vunpack.c.l.b16 %v891
    %v3842 = vunpack.c.h.b16 %v891
    %v3843 = vunpack.c.l.b16 %v892
    %v3844 = vunpack.c.h.b16 %v892
    %v3845 = vunpack.c.l.b16 %v893
    %v3846 = vunpack.c.h.b16 %v893
    %v3847 = vunpack.c.l.b16 %v894
    %v3848 = vunpack.c.h.b16 %v894
    %v3849 = vunpack.c.l.b16 %v895
    %v3850 = vunpack.c.h.b16 %v895
    %v3851 = vunpack.c.l.b16 %v896
    %v3852 = vunpack.c.h.b16 %v896
    %v3853 = vunpack.c.l.b16 %v897
    %v3854 = vunpack.c.h.b16 %v897
    %v3855 = vunpack.c.l.b16 %v898
    %v3856 = vunpack.c.h.b16 %v898
    %v3857 = vunpack.c.l.b16 %v899
    %v3858 = vunpack.c.h.b16 %v899
    %v3859 = vunpack.c.l.b16 %v900
    %v3860 = vunpack.c.h.b16 %v900
    %v3861 = vunpack.c.l.b16 %v901
    %v3862 = vunpack.c.h.b16 %v901
    %v3863 = vunpack.c.l.b16 %v902
    %v3864 = vunpack.c.h.b16 %v902
    %v3865 = vunpack.c.l.b16 %v903
    %v3866 = vunpack.c.h.b16 %v903
    %v3867 = vunpack.c.l.b16 %v904
    %v3868 = vunpack.c.h.b16 %v904
    %v3869 = vunpack.c.l.b16 %v905
    %v3870 = vunpack.c.h.b16 %v905
    %v3871 = vunpack.c.l.b16 %v906
    %v3872 = vunpack.c.h.b16 %v906
    %v3873 = vunpack.c.l.b16 %v907
    %v3874 = vunpack.c.h.b16 %v907
    %v3875 = vunpack.c.l.b16 %v908
    %v3876 = vunpack.c.h.b16 %v908
    %v3877 = vunpack.c.l.b16 %v909
    %v3878 = vunpack.c.h.b16 %v909
    %v3879 = vunpack.c.l.b16 %v910
    %v3880 = vunpack.c.h.b16 %v910
    %v3881 = vunpack.c.l.b16 %v911
    %v3882 = vunpack.c.h.b16 %v911
    %v3883 = vunpack.c.l.b16 %v912
    %v3884 = vunpack.c.h.b16 %v912
    %v3885 = vunpack.c.l.b16 %v913
    %v3886 = vunpack.c.h.b16 %v913
    %v3887 = vunpack.c.l.b16 %v914
    %v3888 = vunpack.c.h.b16 %v914
    %v3889 = vunpack.c.l.b16 %v915
    %v3890 = vunpack.c.h.b16 %v915
    %v3891 = vunpack.c.l.b16 %v916
    %v3892 = vunpack.c.h.b16 %v916
    %v3893 = vunpack.c.l.b16 %v917
    %v3894 = vunpack.c.h.b16 %v917
    %v3895 = vunpack.c.l.b16 %v918
    %v3896 = vunpack.c.h.b16 %v918
    %v3897 = vunpack.c.l.b16 %v919
    %v3898 = vunpack.c.h.b16 %v919
    %v3899 = vunpack.c.l.b16 %v920
    %v3900 = vunpack.c.h.b16 %v920
    %v3901 = vunpack.c.l.b16 %v921
    %v3902 = vunpack.c.h.b16 %v921
    %v3903 = vunpack.c.l.b16 %v922
    %v3904 = vunpack.c.h.b16 %v922
    %v3905 = vunpack.c.l.b16 %v923
    %v3906 = vunpack.c.h.b16 %v923
    %v3907 = vunpack.c.l.b16 %v924
    %v3908 = vunpack.c.h.b16 %v924
    %v3909 = vunpack.c.l.b16 %v925
    %v3910 = vunpack.c.h.b16 %v925
    %v3911 = vunpack.c.l.b16 %v926
    %v3912 = vunpack.c.h.b16 %v926
    %v3913 = vunpack.c.l.b16 %v927
    %v3914 = vunpack.c.h.b16 %v927
    %v3915 = vunpack.c.l.b16 %v928
    %v3916 = vunpack.c.h.b16 %v928
    %v3917 = vunpack.c.l.b16 %v929
    %v3918 = vunpack.c.h.b16 %v929
    %v3919 = vunpack.c.l.b16 %v930
    %v3920 = vunpack.c.h.b16 %v930
    %v3921 = vunpack.c.l.b16 %v931
    %v3922 = vunpack.c.h.b16 %v931
    %v3923 = vunpack.c.l.b16 %v932
    %v3924 = vunpack.c.h.b16 %v932
    %v3925 = vunpack.c.l.b16 %v933
    %v3926 = vunpack.c.h.b16 %v933
    %v3927 = vunpack.c.l.b16 %v934
    %v3928 = vunpack.c.h.b16 %v934
    %v3929 = vunpack.c.l.b16 %v935
    %v3930 = vunpack.c.h.b16 %v935
    %v3931 = vunpack.c.l.b16 %v936
    %v3932 = vunpack.c.h.b16 %v936
    %v3933 = vunpack.c.l.b16 %v937
    %v3934 = vunpack.c.h.b16 %v937
    %v3935 = vunpack.c.l.b16 %v938
    %v3936 = vunpack.c.h.b16 %v938
    %v3937 = vunpack.c.l.b16 %v939
    %v3938 = vunpack.c.h.b16 %v939
    %v3939 = vunpack.c.l.b16 %v940
    %v3940 = vunpack.c.h.b16 %v940
    %v3941 = vunpack.c.l.b16 %v941
    %v3942 = vunpack.c.h.b16 %v941
    %v3943 = vunpack.c.l.b16 %v942
    %v3944 = vunpack.c.h.b16 %v942
    %v3945 = vunpack.c.l.b16 %v943
    %v3946 = vunpack.c.h.b16 %v943
    %v3947 = vunpack.c.l.b16 %v944
    %v3948 = vunpack.c.h.b16 %v944
    %v3949 = vunpack.c.l.b16 %v945
    %v3950 = vunpack.c.h.b16 %v945
    %v3951 = vunpack.c.l.b16 %v946
    %v3952 = vunpack.c.h.b16 %v946
    %v3953 = vunpack.c.l.b16 %v947
    %v3954 = vunpack.c.h.b16 %v947
    %v3955 = vunpack.c.l.b16 %v948
    %v3956 = vunpack.c.h.b16 %v948
    %v3957 = vunpack.c.l.b16 %v949
    %v3958 = vunpack.c.h.b16 %v949
    %v3959 = vunpack.c.l.b16 %v950
    %v3960 = vunpack.c.h.b16 %v950
    %v3961 = vunpack.c.l.b16 %v951
    %v3962 = vunpack.c.h.b16 %v951
    %v3963 = vunpack.c.l.b16 %v952
    %v3964 = vunpack.c.h.b16 %v952
    %v3965 = vunpack.c.l.b16 %v953
    %v3966 = vunpack.c.h.b16 %v953
    %v3967 = vunpack.c.l.b16 %v954
    %v3968 = vunpack.c.h.b16 %v954
    %v3969 = vunpack.c.l.b16 %v955
    %v3970 = vunpack.c.h.b16 %v955
    %v3971 = vunpack.c.l.b16 %v956
    %v3972 = vunpack.c.h.b16 %v956
    %v3973 = vunpack.c.l.b16 %v957
    %v3974 = vunpack.c.h.b16 %v957
    %v3975 = vunpack.c.l.b16 %v958
    %v3976 = vunpack.c.h.b16 %v958
    %v3977 = vunpack.c.l.b16 %v959
    %v3978 = vunpack.c.h.b16 %v959
    %v3979 = vunpack.c.l.b16 %v960
    %v3980 = vunpack.c.h.b16 %v960
    %v3981 = vunpack.c.l.b16 %v961
    %v3982 = vunpack.c.h.b16 %v961
    %v3983 = vunpack.c.l.b16 %v962
    %v3984 = vunpack.c.h.b16 %v962
    %v3985 = vunpack.c.l.b16 %v963
    %v3986 = vunpack.c.h.b16 %v963
    %v3987 = vunpack.c.l.b16 %v964
    %v3988 = vunpack.c.h.b16 %v964
    %v3989 = vunpack.c.l.b16 %v965
    %v3990 = vunpack.c.h.b16 %v965
    %v3991 = vunpack.c.l.b16 %v966
    %v3992 = vunpack.c.h.b16 %v966
    %v3993 = vunpack.c.l.b16 %v967
    %v3994 = vunpack.c.h.b16 %v967
    %v3995 = vunpack.c.l.b16 %v968
    %v3996 = vunpack.c.h.b16 %v968
    %v3997 = vunpack.c.l.b16 %v969
    %v3998 = vunpack.c.h.b16 %v969
    %v3999 = vunpack.c.l.b16 %v970
    %v4000 = vunpack.c.h.b16 %v970
    %v4001 = vunpack.c.l.b16 %v971
    %v4002 = vunpack.c.h.b16 %v971
    %v4003 = vunpack.c.l.b16 %v972
    %v4004 = vunpack.c.h.b16 %v972
    %v4005 = vunpack.c.l.b16 %v973
    %v4006 = vunpack.c.h.b16 %v973
    %v4007 = vunpack.c.l.b16 %v974
    %v4008 = vunpack.c.h.b16 %v974
    %v4009 = vunpack.c.l.b16 %v975
    %v4010 = vunpack.c.h.b16 %v975
    %v4011 = vunpack.c.l.b16 %v976
    %v4012 = vunpack.c.h.b16 %v976
    %v4013 = vunpack.c.l.b16 %v977
    %v4014 = vunpack.c.h.b16 %v977
    %v4015 = vunpack.c.l.b16 %v978
    %v4016 = vunpack.c.h.b16 %v978
    %v4017 = vunpack.c.l.b16 %v979
    %v4018 = vunpack.c.h.b16 %v979
    %v4019 = vunpack.c.l.b16 %v980
    %v4020 = vunpack.c.h.b16 %v980
    %v4021 = vunpack.c.l.b16 %v981
    %v4022 = vunpack.c.h.b16 %v981
    %v4023 = vunpack.c.l.b16 %v982
    %v4024 = vunpack.c.h.b16 %v982
    %v4025 = vunpack.c.l.b16 %v983
    %v4026 = vunpack.c.h.b16 %v983
    %v4027 = vunpack.c.l.b16 %v984
    %v4028 = vunpack.c.h.b16 %v984
    %v4029 = vunpack.c.l.b16 %v985
    %v4030 = vunpack.c.h.b16 %v985
    %v4031 = vunpack.c.l.b16 %v986
    %v4032 = vunpack.c.h.b16 %v986
    %v4033 = vunpack.c.l.b16 %v987
    %v4034 = vunpack.c.h.b16 %v987
    %v4035 = vunpack.c.l.b16 %v988
    %v4036 = vunpack.c.h.b16 %v988
    %v4037 = vunpack.c.l.b16 %v989
    %v4038 = vunpack.c.h.b16 %v989
    %v4039 = vunpack.c.l.b16 %v990
    %v4040 = vunpack.c.h.b16 %v990
    %v4041 = vunpack.c.l.b16 %v991
    %v4042 = vunpack.c.h.b16 %v991
    %v4043 = vunpack.c.l.b16 %v992
    %v4044 = vunpack.c.h.b16 %v992
    %v4045 = vunpack.c.l.b16 %v993
    %v4046 = vunpack.c.h.b16 %v993
    %v4047 = vunpack.c.l.b16 %v994
    %v4048 = vunpack.c.h.b16 %v994
    %v4049 = vunpack.c.l.b16 %v995
    %v4050 = vunpack.c.h.b16 %v995
    %v4051 = vunpack.c.l.b16 %v996
    %v4052 = vunpack.c.h.b16 %v996
    %v4053 = vunpack.c.l.b16 %v997
    %v4054 = vunpack.c.h.b16 %v997
    %v4055 = vunpack.c.l.b16 %v998
    %v4056 = vunpack.c.h.b16 %v998
    %v4057 = vunpack.c.l.b16 %v999
    %v4058 = vunpack.c.h.b16 %v999
    %v4059 = vunpack.c.l.b16 %v1000
    %v4060 = vunpack.c.h.b16 %v1000
    %v4061 = vunpack.c.l.b16 %v1001
    %v4062 = vunpack.c.h.b16 %v1001
    %v4063 = vunpack.c.l.b16 %v1002
    %v4064 = vunpack.c.h.b16 %v1002
    %v4065 = vunpack.c.l.b16 %v1003
    %v4066 = vunpack.c.h.b16 %v1003
    %v4067 = vunpack.c.l.b16 %v1004
    %v4068 = vunpack.c.h.b16 %v1004
    %v4069 = vunpack.c.l.b16 %v1005
    %v4070 = vunpack.c.h.b16 %v1005
    %v4071 = vunpack.c.l.b16 %v1006
    %v4072 = vunpack.c.h.b16 %v1006
    %v4073 = vunpack.c.l.b16 %v1007
    %v4074 = vunpack.c.h.b16 %v1007
    %v4075 = vunpack.c.l.b16 %v1008
    %v4076 = vunpack.c.h.b16 %v1008
    %v4077 = vunpack.c.l.b16 %v1009
    %v4078 = vunpack.c.h.b16 %v1009
    %v4079 = vunpack.c.l.b16 %v1010
    %v4080 = vunpack.c.h.b16 %v1010
    %v4081 = vunpack.c.l.b16 %v1011
    %v4082 = vunpack.c.h.b16 %v1011
    %v4083 = vunpack.c.l.b16 %v1012
    %v4084 = vunpack.c.h.b16 %v1012
    %v4085 = vunpack.c.l.b16 %v1013
    %v4086 = vunpack.c.h.b16 %v1013
    %v4087 = vunpack.c.l.b16 %v1014
    %v4088 = vunpack.c.h.b16 %v1014
    %v4089 = vunpack.c.l.b16 %v1015
    %v4090 = vunpack.c.h.b16 %v1015
    %v4091 = vunpack.c.l.b16 %v1016
    %v4092 = vunpack.c.h.b16 %v1016
    %v4093 = vunpack.c.l.b16 %v1017
    %v4094 = vunpack.c.h.b16 %v1017
    %v4095 = vunpack.c.l.b16 %v1018
    %v4096 = vunpack.c.h.b16 %v1018
    %v4097 = vunpack.c.l.b16 %v1019
    %v4098 = vunpack.c.h.b16 %v1019
    %v4099 = vunpack.c.l.b16 %v1020
    %v4100 = vunpack.c.h.b16 %v1020
    %v4101 = vunpack.c.l.b16 %v1021
    %v4102 = vunpack.c.h.b16 %v1021
    %v4103 = vunpack.c.l.b16 %v1022
    %v4104 = vunpack.c.h.b16 %v1022
    %v4105 = vunpack.c.l.b16 %v1023
    %v4106 = vunpack.c.h.b16 %v1023
    %v4107 = vunpack.c.l.b16 %v1024
    %v4108 = vunpack.c.h.b16 %v1024
    %v4109 = vunpack.c.l.b16 %v1025
    %v4110 = vunpack.c.h.b16 %v1025
    %v4111 = vunpack.c.l.b16 %v1026
    %v4112 = vunpack.c.h.b16 %v1026
    %v4113 = vunpack.c.l.b16 %v1027
    %v4114 = vunpack.c.h.b16 %v1027
    %v4115 = vunpack.c.l.b16 %v1028
    %v4116 = vunpack.c.h.b16 %v1028
    %v4117 = vunpack.c.l.b16 %v1029
    %v4118 = vunpack.c.h.b16 %v1029
    %v4119 = vunpack.c.l.b16 %v1030
    %v4120 = vunpack.c.h.b16 %v1030
    %v4121 = vunpack.c.l.b16 %v1031
    %v4122 = vunpack.c.h.b16 %v1031
    %v4123 = vunpack.c.l.b16 %v1032
    %v4124 = vunpack.c.h.b16 %v1032
    %v4125 = vunpack.c.l.b16 %v1033
    %v4126 = vunpack.c.h.b16 %v1033
    %v4127 = vunpack.c.l.b16 %v1034
    %v4128 = vunpack.c.h.b16 %v1034
    %v4129 = vunpack.c.l.b16 %v1035
    %v4130 = vunpack.c.h.b16 %v1035
    %v4131 = vunpack.c.l.b16 %v1036
    %v4132 = vunpack.c.h.b16 %v1036
    %v4133 = vunpack.c.l.b16 %v1037
    %v4134 = vunpack.c.h.b16 %v1037
    %v4135 = vunpack.c.l.b16 %v1038
    %v4136 = vunpack.c.h.b16 %v1038
    %v4137 = vunpack.c.l.b16 %v1039
    %v4138 = vunpack.c.h.b16 %v1039
    %v4139 = vunpack.c.l.b16 %v1040
    %v4140 = vunpack.c.h.b16 %v1040
    %v4141 = vunpack.c.l.b16 %v1041
    %v4142 = vunpack.c.h.b16 %v1041
    %v4143 = vunpack.c.l.b16 %v1042
    %v4144 = vunpack.c.h.b16 %v1042
    %v4145 = vunpack.c.l.b16 %v1043
    %v4146 = vunpack.c.h.b16 %v1043
    %v4147 = vunpack.c.l.b16 %v1044
    %v4148 = vunpack.c.h.b16 %v1044
    %v4149 = vunpack.c.l.b16 %v1045
    %v4150 = vunpack.c.h.b16 %v1045
    %v4151 = vunpack.c.l.b16 %v1046
    %v4152 = vunpack.c.h.b16 %v1046
    %v4153 = vunpack.c.l.b16 %v1047
    %v4154 = vunpack.c.h.b16 %v1047
    %v4155 = vunpack.c.l.b16 %v1048
    %v4156 = vunpack.c.h.b16 %v1048
    %v4157 = vunpack.c.l.b16 %v1049
    %v4158 = vunpack.c.h.b16 %v1049
    %v4159 = vunpack.c.l.b16 %v1050
    %v4160 = vunpack.c.h.b16 %v1050
    %v4161 = vunpack.c.l.b16 %v1051
    %v4162 = vunpack.c.h.b16 %v1051
    %v4163 = vunpack.c.l.b16 %v1052
    %v4164 = vunpack.c.h.b16 %v1052
    %v4165 = vunpack.c.l.b16 %v1053
    %v4166 = vunpack.c.h.b16 %v1053
    %v4167 = vunpack.c.l.b16 %v1054
    %v4168 = vunpack.c.h.b16 %v1054
    %v4169 = vunpack.c.l.b16 %v1055
    %v4170 = vunpack.c.h.b16 %v1055
    %v4171 = vunpack.c.l.b16 %v1056
    %v4172 = vunpack.c.h.b16 %v1056
    %v4173 = vunpack.c.l.b16 %v1057
    %v4174 = vunpack.c.h.b16 %v1057
    %v4175 = vunpack.c.l.b16 %v1058
    %v4176 = vunpack.c.h.b16 %v1058
    %v4177 = vunpack.c.l.b16 %v1059
    %v4178 = vunpack.c.h.b16 %v1059
    %v4179 = vunpack.c.l.b16 %v1060
    %v4180 = vunpack.c.h.b16 %v1060
    %v4181 = vunpack.c.l.b16 %v1061
    %v4182 = vunpack.c.h.b16 %v1061
    %v4183 = vunpack.c.l.b16 %v1062
    %v4184 = vunpack.c.h.b16 %v1062
    %v4185 = vunpack.c.l.b16 %v1063
    %v4186 = vunpack.c.h.b16 %v1063
    %v4187 = vunpack.c.l.b16 %v1064
    %v4188 = vunpack.c.h.b16 %v1064
    %v4189 = vunpack.c.l.b16 %v1065
    %v4190 = vunpack.c.h.b16 %v1065
    %v4191 = vunpack.c.l.b16 %v1066
    %v4192 = vunpack.c.h.b16 %v1066
    %v4193 = vunpack.c.l.b16 %v1067
    %v4194 = vunpack.c.h.b16 %v1067
    %v4195 = vunpack.c.l.b16 %v1068
    %v4196 = vunpack.c.h.b16 %v1068
    %v4197 = vunpack.c.l.b16 %v1069
    %v4198 = vunpack.c.h.b16 %v1069
    %v4199 = vunpack.c.l.b16 %v1070
    %v4200 = vunpack.c.h.b16 %v1070
    %v4201 = vunpack.c.l.b16 %v1071
    %v4202 = vunpack.c.h.b16 %v1071
    %v4203 = vunpack.c.l.b16 %v1072
    %v4204 = vunpack.c.h.b16 %v1072
    %v4205 = vunpack.c.l.b16 %v1073
    %v4206 = vunpack.c.h.b16 %v1073
    %v4207 = vunpack.c.l.b16 %v1074
    %v4208 = vunpack.c.h.b16 %v1074
    %v4209 = vunpack.c.l.b16 %v1075
    %v4210 = vunpack.c.h.b16 %v1075
    %v4211 = vunpack.c.l.b16 %v1076
    %v4212 = vunpack.c.h.b16 %v1076
    %v4213 = vunpack.c.l.b16 %v1077
    %v4214 = vunpack.c.h.b16 %v1077
    %v4215 = vunpack.c.l.b16 %v1078
    %v4216 = vunpack.c.h.b16 %v1078
    %v4217 = vunpack.c.l.b16 %v1079
    %v4218 = vunpack.c.h.b16 %v1079
    %v4219 = vunpack.c.l.b16 %v1080
    %v4220 = vunpack.c.h.b16 %v1080
    %v4221 = vunpack.c.l.b16 %v1081
    %v4222 = vunpack.c.h.b16 %v1081
    %v4223 = vunpack.c.l.b16 %v1082
    %v4224 = vunpack.c.h.b16 %v1082
    %v4225 = vunpack.c.l.b16 %v1083
    %v4226 = vunpack.c.h.b16 %v1083
    %v4227 = vunpack.c.l.b16 %v1084
    %v4228 = vunpack.c.h.b16 %v1084
    %v4229 = vunpack.c.l.b16 %v1085
    %v4230 = vunpack.c.h.b16 %v1085
    %v4231 = vunpack.c.l.b16 %v1086
    %v4232 = vunpack.c.h.b16 %v1086
    %v4233 = vunpack.c.l.b16 %v1087
    %v4234 = vunpack.c.h.b16 %v1087
    %v4235 = vunpack.c.l.b16 %v1088
    %v4236 = vunpack.c.h.b16 %v1088
    %v4237 = vunpack.c.l.b16 %v1089
    %v4238 = vunpack.c.h.b16 %v1089
    %v4239 = vunpack.c.l.b16 %v1090
    %v4240 = vunpack.c.h.b16 %v1090
    %v4241 = vunpack.c.l.b16 %v1091
    %v4242 = vunpack.c.h.b16 %v1091
    %v4243 = vunpack.c.l.b16 %v1092
    %v4244 = vunpack.c.h.b16 %v1092
    %v4245 = vunpack.c.l.b16 %v1093
    %v4246 = vunpack.c.h.b16 %v1093
    %v4247 = vunpack.c.l.b16 %v1094
    %v4248 = vunpack.c.h.b16 %v1094
    %v4249 = vunpack.c.l.b16 %v1095
    %v4250 = vunpack.c.h.b16 %v1095
    %v4251 = vunpack.c.l.b16 %v1096
    %v4252 = vunpack.c.h.b16 %v1096
    %v4253 = vunpack.c.l.b16 %v1097
    %v4254 = vunpack.c.h.b16 %v1097
    %v4255 = vunpack.c.l.b16 %v1098
    %v4256 = vunpack.c.h.b16 %v1098
    %v4257 = vunpack.c.l.b16 %v1099
    %v4258 = vunpack.c.h.b16 %v1099
    %v4259 = vunpack.c.l.b16 %v1100
    %v4260 = vunpack.c.h.b16 %v1100
    %v4261 = vunpack.c.l.b16 %v1101
    %v4262 = vunpack.c.h.b16 %v1101
    %v4263 = vunpack.c.l.b16 %v1102
    %v4264 = vunpack.c.h.b16 %v1102
    %v4265 = vunpack.c.l.b16 %v1103
    %v4266 = vunpack.c.h.b16 %v1103
    %v4267 = vunpack.c.l.b16 %v1104
    %v4268 = vunpack.c.h.b16 %v1104
    %v4269 = vunpack.c.l.b16 %v1105
    %v4270 = vunpack.c.h.b16 %v1105
    %v4271 = vunpack.c.l.b16 %v1106
    %v4272 = vunpack.c.h.b16 %v1106
    %v4273 = vunpack.c.l.b16 %v1107
    %v4274 = vunpack.c.h.b16 %v1107
    %v4275 = vunpack.c.l.b16 %v1108
    %v4276 = vunpack.c.h.b16 %v1108
    %v4277 = vunpack.c.l.b16 %v1109
    %v4278 = vunpack.c.h.b16 %v1109
    %v4279 = vunpack.c.l.b16 %v1110
    %v4280 = vunpack.c.h.b16 %v1110
    %v4281 = vpack.c.b16 %v2241, %v2233
    %v4282 = vpack.c.b16 %v2242, %v2234
    %v4283 = vpack.c.b16 %v2243, %v2235
    %v4284 = vpack.c.b16 %v2244, %v2236
    %v4285 = vpack.c.b16 %v2245, %v2237
    %v4286 = vpack.c.b16 %v2246, %v2238
    %v4287 = vpack.c.b16 %v2247, %v2239
    %v4288 = vpack.c.b16 %v2248, %v2240
    %v4289 = vpack.c.b16 %v2257, %v2249
    %v4290 = vpack.c.b16 %v2258, %v2250
    %v4291 = vpack.c.b16 %v2259, %v2251
    %v4292 = vpack.c.b16 %v2260, %v2252
    %v4293 = vpack.c.b16 %v2261, %v2253
    %v4294 = vpack.c.b16 %v2262, %v2254
    %v4295 = vpack.c.b16 %v2263, %v2255
    %v4296 = vpack.c.b16 %v2264, %v2256
    %v4297 = vpack.c.b16 %v2273, %v2265
    %v4298 = vpack.c.b16 %v2274, %v2266
    %v4299 = vpack.c.b16 %v2275, %v2267
    %v4300 = vpack.c.b16 %v2276, %v2268
    %v4301 = vpack.c.b16 %v2277, %v2269
    %v4302 = vpack.c.b16 %v2278, %v2270
    %v4303 = vpack.c.b16 %v2279, %v2271
    %v4304 = vpack.c.b16 %v2280, %v2272
    %v4305 = vpack.c.b16 %v2289, %v2281
    %v4306 = vpack.c.b16 %v2290, %v2282
    %v4307 = vpack.c.b16 %v2291, %v2283
    %v4308 = vpack.c.b16 %v2292, %v2284
    %v4309 = vpack.c.b16 %v2293, %v2285
    %v4310 = vpack.c.b16 %v2294, %v2286
    %v4311 = vpack.c.b16 %v2295, %v2287
    %v4312 = vpack.c.b16 %v2296, %v2288
    %v4313 = vpack.c.b16 %v2305, %v2297
    %v4314 = vpack.c.b16 %v2306, %v2298
    %v4315 = vpack.c.b16 %v2307, %v2299
    %v4316 = vpack.c.b16 %v2308, %v2300
    %v4317 = vpack.c.b16 %v2309, %v2301
    %v4318 = vpack.c.b16 %v2310, %v2302
    %v4319 = vpack.c.b16 %v2311, %v2303
    %v4320 = vpack.c.b16 %v2312, %v2304
    %v4321 = vpack.c.b16 %v2321, %v2313
    %v4322 = vpack.c.b16 %v2322, %v2314
    %v4323 = vpack.c.b16 %v2323, %v2315
    %v4324 = vpack.c.b16 %v2324, %v2316
    %v4325 = vpack.c.b16 %v2325, %v2317
    %v4326 = vpack.c.b16 %v2326, %v2318
    %v4327 = vpack.c.b16 %v2327, %v2319
    %v4328 = vpack.c.b16 %v2328, %v2320
    %v4329 = vpack.c.b16 %v2337, %v2329
    %v4330 = vpack.c.b16 %v2338, %v2330
    %v4331 = vpack.c.b16 %v2339, %v2331
    %v4332 = vpack.c.b16 %v2340, %v2332
    %v4333 = vpack.c.b16 %v2341, %v2333
    %v4334 = vpack.c.b16 %v2342, %v2334
    %v4335 = vpack.c.b16 %v2343, %v2335
    %v4336 = vpack.c.b16 %v2344, %v2336
    %v4337 = vpack.c.b16 %v2353, %v2345
    %v4338 = vpack.c.b16 %v2354, %v2346
    %v4339 = vpack.c.b16 %v2355, %v2347
    %v4340 = vpack.c.b16 %v2356, %v2348
    %v4341 = vpack.c.b16 %v2357, %v2349
    %v4342 = vpack.c.b16 %v2358, %v2350
    %v4343 = vpack.c.b16 %v2359, %v2351
    %v4344 = vpack.c.b16 %v2360, %v2352
    %v4345 = vpack.c.b16 %v2369, %v2361
    %v4346 = vpack.c.b16 %v2370, %v2362
    %v4347 = vpack.c.b16 %v2371, %v2363
    %v4348 = vpack.c.b16 %v2372, %v2364
    %v4349 = vpack.c.b16 %v2373, %v2365
    %v4350 = vpack.c.b16 %v2374, %v2366
    %v4351 = vpack.c.b16 %v2375, %v2367
    %v4352 = vpack.c.b16 %v2376, %v2368
    %v4353 = vpack.c.b16 %v2385, %v2377
    %v4354 = vpack.c.b16 %v2386, %v2378
    %v4355 = vpack.c.b16 %v2387, %v2379
    %v4356 = vpack.c.b16 %v2388, %v2380
    %v4357 = vpack.c.b16 %v2389, %v2381
    %v4358 = vpack.c.b16 %v2390, %v2382
    %v4359 = vpack.c.b16 %v2391, %v2383
    %v4360 = vpack.c.b16 %v2392, %v2384
    %v4361 = vpack.c.b16 %v2401, %v2393
    %v4362 = vpack.c.b16 %v2402, %v2394
    %v4363 = vpack.c.b16 %v2403, %v2395
    %v4364 = vpack.c.b16 %v2404, %v2396
    %v4365 = vpack.c.b16 %v2405, %v2397
    %v4366 = vpack.c.b16 %v2406, %v2398
    %v4367 = vpack.c.b16 %v2407, %v2399
    %v4368 = vpack.c.b16 %v2408, %v2400
    %v4369 = vpack.c.b16 %v2417, %v2409
    %v4370 = vpack.c.b16 %v2418, %v2410
    %v4371 = vpack.c.b16 %v2419, %v2411
    %v4372 = vpack.c.b16 %v2420, %v2412
    %v4373 = vpack.c.b16 %v2421, %v2413
    %v4374 = vpack.c.b16 %v2422, %v2414
    %v4375 = vpack.c.b16 %v2423, %v2415
    %v4376 = vpack.c.b16 %v2424, %v2416
    %v4377 = vpack.c.b16 %v2433, %v2425
    %v4378 = vpack.c.b16 %v2434, %v2426
    %v4379 = vpack.c.b16 %v2435, %v2427
    %v4380 = vpack.c.b16 %v2436, %v2428
    %v4381 = vpack.c.b16 %v2437, %v2429
    %v4382 = vpack.c.b16 %v2438, %v2430
    %v4383 = vpack.c.b16 %v2439, %v2431
    %v4384 = vpack.c.b16 %v2440, %v2432
    %v4385 = vpack.c.b16 %v2449, %v2441
    %v4386 = vpack.c.b16 %v2450, %v2442
    %v4387 = vpack.c.b16 %v2451, %v2443
    %v4388 = vpack.c.b16 %v2452, %v2444
    %v4389 = vpack.c.b16 %v2453, %v2445
    %v4390 = vpack.c.b16 %v2454, %v2446
    %v4391 = vpack.c.b16 %v2455, %v2447
    %v4392 = vpack.c.b16 %v2456, %v2448
    %v4393 = vpack.c.b16 %v2465, %v2457
    %v4394 = vpack.c.b16 %v2466, %v2458
    %v4395 = vpack.c.b16 %v2467, %v2459
    %v4396 = vpack.c.b16 %v2468, %v2460
    %v4397 = vpack.c.b16 %v2469, %v2461
    %v4398 = vpack.c.b16 %v2470, %v2462
    %v4399 = vpack.c.b16 %v2471, %v2463
    %v4400 = vpack.c.b16 %v2472, %v2464
    %v4401 = vpack.c.b16 %v2481, %v2473
    %v4402 = vpack.c.b16 %v2482, %v2474
    %v4403 = vpack.c.b16 %v2483, %v2475
    %v4404 = vpack.c.b16 %v2484, %v2476
    %v4405 = vpack.c.b16 %v2485, %v2477
    %v4406 = vpack.c.b16 %v2486, %v2478
    %v4407 = vpack.c.b16 %v2487, %v2479
    %v4408 = vpack.c.b16 %v2488, %v2480
    %v4409 = vpack.c.b16 %v2497, %v2489
    %v4410 = vpack.c.b16 %v2498, %v2490
    %v4411 = vpack.c.b16 %v2499, %v2491
    %v4412 = vpack.c.b16 %v2500, %v2492
    %v4413 = vpack.c.b16 %v2501, %v2493
    %v4414 = vpack.c.b16 %v2502, %v2494
    %v4415 = vpack.c.b16 %v2503, %v2495
    %v4416 = vpack.c.b16 %v2504, %v2496
    %v4417 = vpack.c.b16 %v2513, %v2505
    %v4418 = vpack.c.b16 %v2514, %v2506
    %v4419 = vpack.c.b16 %v2515, %v2507
    %v4420 = vpack.c.b16 %v2516, %v2508
    %v4421 = vpack.c.b16 %v2517, %v2509
    %v4422 = vpack.c.b16 %v2518, %v2510
    %v4423 = vpack.c.b16 %v2519, %v2511
    %v4424 = vpack.c.b16 %v2520, %v2512
    %v4425 = vpack.c.b16 %v2529, %v2521
    %v4426 = vpack.c.b16 %v2530, %v2522
    %v4427 = vpack.c.b16 %v2531, %v2523
    %v4428 = vpack.c.b16 %v2532, %v2524
    %v4429 = vpack.c.b16 %v2533, %v2525
    %v4430 = vpack.c.b16 %v2534, %v2526
    %v4431 = vpack.c.b16 %v2535, %v2527
    %v4432 = vpack.c.b16 %v2536, %v2528
    %v4433 = vpack.c.b16 %v2545, %v2537
    %v4434 = vpack.c.b16 %v2546, %v2538
    %v4435 = vpack.c.b16 %v2547, %v2539
    %v4436 = vpack.c.b16 %v2548, %v2540
    %v4437 = vpack.c.b16 %v2549, %v2541
    %v4438 = vpack.c.b16 %v2550, %v2542
    %v4439 = vpack.c.b16 %v2551, %v2543
    %v4440 = vpack.c.b16 %v2552, %v2544
    %v4441 = vpack.c.b16 %v2561, %v2553
    %v4442 = vpack.c.b16 %v2562, %v2554
    %v4443 = vpack.c.b16 %v2563, %v2555
    %v4444 = vpack.c.b16 %v2564, %v2556
    %v4445 = vpack.c.b16 %v2565, %v2557
    %v4446 = vpack.c.b16 %v2566, %v2558
    %v4447 = vpack.c.b16 %v2567, %v2559
    %v4448 = vpack.c.b16 %v2568, %v2560
    %v4449 = vpack.c.b16 %v2577, %v2569
    %v4450 = vpack.c.b16 %v2578, %v2570
    %v4451 = vpack.c.b16 %v2579, %v2571
    %v4452 = vpack.c.b16 %v2580, %v2572
    %v4453 = vpack.c.b16 %v2581, %v2573
    %v4454 = vpack.c.b16 %v2582, %v2574
    %v4455 = vpack.c.b16 %v2583, %v2575
    %v4456 = vpack.c.b16 %v2584, %v2576
    %v4457 = vpack.c.b16 %v2593, %v2585
    %v4458 = vpack.c.b16 %v2594, %v2586
    %v4459 = vpack.c.b16 %v2595, %v2587
    %v4460 = vpack.c.b16 %v2596, %v2588
    %v4461 = vpack.c.b16 %v2597, %v2589
    %v4462 = vpack.c.b16 %v2598, %v2590
    %v4463 = vpack.c.b16 %v2599, %v2591
    %v4464 = vpack.c.b16 %v2600, %v2592
    %v4465 = vpack.c.b16 %v2609, %v2601
    %v4466 = vpack.c.b16 %v2610, %v2602
    %v4467 = vpack.c.b16 %v2611, %v2603
    %v4468 = vpack.c.b16 %v2612, %v2604
    %v4469 = vpack.c.b16 %v2613, %v2605
    %v4470 = vpack.c.b16 %v2614, %v2606
    %v4471 = vpack.c.b16 %v2615, %v2607
    %v4472 = vpack.c.b16 %v2616, %v2608
    %v4473 = vpack.c.b16 %v2625, %v2617
    %v4474 = vpack.c.b16 %v2626, %v2618
    %v4475 = vpack.c.b16 %v2627, %v2619
    %v4476 = vpack.c.b16 %v2628, %v2620
    %v4477 = vpack.c.b16 %v2629, %v2621
    %v4478 = vpack.c.b16 %v2630, %v2622
    %v4479 = vpack.c.b16 %v2631, %v2623
    %v4480 = vpack.c.b16 %v2632, %v2624
    %v4481 = vpack.c.b16 %v2641, %v2633
    %v4482 = vpack.c.b16 %v2642, %v2634
    %v4483 = vpack.c.b16 %v2643, %v2635
    %v4484 = vpack.c.b16 %v2644, %v2636
    %v4485 = vpack.c.b16 %v2645, %v2637
    %v4486 = vpack.c.b16 %v2646, %v2638
    %v4487 = vpack.c.b16 %v2647, %v2639
    %v4488 = vpack.c.b16 %v2648, %v2640
    %v4489 = vpack.c.b16 %v2657, %v2649
    %v4490 = vpack.c.b16 %v2658, %v2650
    %v4491 = vpack.c.b16 %v2659, %v2651
    %v4492 = vpack.c.b16 %v2660, %v2652
    %v4493 = vpack.c.b16 %v2661, %v2653
    %v4494 = vpack.c.b16 %v2662, %v2654
    %v4495 = vpack.c.b16 %v2663, %v2655
    %v4496 = vpack.c.b16 %v2664, %v2656
    %v4497 = vpack.c.b16 %v2673, %v2665
    %v4498 = vpack.c.b16 %v2674, %v2666
    %v4499 = vpack.c.b16 %v2675, %v2667
    %v4500 = vpack.c.b16 %v2676, %v2668
    %v4501 = vpack.c.b16 %v2677, %v2669
    %v4502 = vpack.c.b16 %v2678, %v2670
    %v4503 = vpack.c.b16 %v2679, %v2671
    %v4504 = vpack.c.b16 %v2680, %v2672
    %v4505 = vpack.c.b16 %v2689, %v2681
    %v4506 = vpack.c.b16 %v2690, %v2682
    %v4507 = vpack.c.b16 %v2691, %v2683
    %v4508 = vpack.c.b16 %v2692, %v2684
    %v4509 = vpack.c.b16 %v2693, %v2685
    %v4510 = vpack.c.b16 %v2694, %v2686
    %v4511 = vpack.c.b16 %v2695, %v2687
    %v4512 = vpack.c.b16 %v2696, %v2688
    %v4513 = vpack.c.b16 %v2705, %v2697
    %v4514 = vpack.c.b16 %v2706, %v2698
    %v4515 = vpack.c.b16 %v2707, %v2699
    %v4516 = vpack.c.b16 %v2708, %v2700
    %v4517 = vpack.c.b16 %v2709, %v2701
    %v4518 = vpack.c.b16 %v2710, %v2702
    %v4519 = vpack.c.b16 %v2711, %v2703
    %v4520 = vpack.c.b16 %v2712, %v2704
    %v4521 = vpack.c.b16 %v2721, %v2713
    %v4522 = vpack.c.b16 %v2722, %v2714
    %v4523 = vpack.c.b16 %v2723, %v2715
    %v4524 = vpack.c.b16 %v2724, %v2716
    %v4525 = vpack.c.b16 %v2725, %v2717
    %v4526 = vpack.c.b16 %v2726, %v2718
    %v4527 = vpack.c.b16 %v2727, %v2719
    %v4528 = vpack.c.b16 %v2728, %v2720
    %v4529 = vpack.c.b16 %v2737, %v2729
    %v4530 = vpack.c.b16 %v2738, %v2730
    %v4531 = vpack.c.b16 %v2739, %v2731
    %v4532 = vpack.c.b16 %v2740, %v2732
    %v4533 = vpack.c.b16 %v2741, %v2733
    %v4534 = vpack.c.b16 %v2742, %v2734
    %v4535 = vpack.c.b16 %v2743, %v2735
    %v4536 = vpack.c.b16 %v2744, %v2736
    %v4537 = vpack.c.b16 %v2753, %v2745
    %v4538 = vpack.c.b16 %v2754, %v2746
    %v4539 = vpack.c.b16 %v2755, %v2747
    %v4540 = vpack.c.b16 %v2756, %v2748
    %v4541 = vpack.c.b16 %v2757, %v2749
    %v4542 = vpack.c.b16 %v2758, %v2750
    %v4543 = vpack.c.b16 %v2759, %v2751
    %v4544 = vpack.c.b16 %v2760, %v2752
    %v4545 = vpack.c.b16 %v2769, %v2761
    %v4546 = vpack.c.b16 %v2770, %v2762
    %v4547 = vpack.c.b16 %v2771, %v2763
    %v4548 = vpack.c.b16 %v2772, %v2764
    %v4549 = vpack.c.b16 %v2773, %v2765
    %v4550 = vpack.c.b16 %v2774, %v2766
    %v4551 = vpack.c.b16 %v2775, %v2767
    %v4552 = vpack.c.b16 %v2776, %v2768
    %v4553 = vpack.c.b16 %v2785, %v2777
    %v4554 = vpack.c.b16 %v2786, %v2778
    %v4555 = vpack.c.b16 %v2787, %v2779
    %v4556 = vpack.c.b16 %v2788, %v2780
    %v4557 = vpack.c.b16 %v2789, %v2781
    %v4558 = vpack.c.b16 %v2790, %v2782
    %v4559 = vpack.c.b16 %v2791, %v2783
    %v4560 = vpack.c.b16 %v2792, %v2784
    %v4561 = vpack.c.b16 %v2801, %v2793
    %v4562 = vpack.c.b16 %v2802, %v2794
    %v4563 = vpack.c.b16 %v2803, %v2795
    %v4564 = vpack.c.b16 %v2804, %v2796
    %v4565 = vpack.c.b16 %v2805, %v2797
    %v4566 = vpack.c.b16 %v2806, %v2798
    %v4567 = vpack.c.b16 %v2807, %v2799
    %v4568 = vpack.c.b16 %v2808, %v2800
    %v4569 = vpack.c.b16 %v2817, %v2809
    %v4570 = vpack.c.b16 %v2818, %v2810
    %v4571 = vpack.c.b16 %v2819, %v2811
    %v4572 = vpack.c.b16 %v2820, %v2812
    %v4573 = vpack.c.b16 %v2821, %v2813
    %v4574 = vpack.c.b16 %v2822, %v2814
    %v4575 = vpack.c.b16 %v2823, %v2815
    %v4576 = vpack.c.b16 %v2824, %v2816
    %v4577 = vpack.c.b16 %v2833, %v2825
    %v4578 = vpack.c.b16 %v2834, %v2826
    %v4579 = vpack.c.b16 %v2835, %v2827
    %v4580 = vpack.c.b16 %v2836, %v2828
    %v4581 = vpack.c.b16 %v2837, %v2829
    %v4582 = vpack.c.b16 %v2838, %v2830
    %v4583 = vpack.c.b16 %v2839, %v2831
    %v4584 = vpack.c.b16 %v2840, %v2832
    %v4585 = vpack.c.b16 %v2849, %v2841
    %v4586 = vpack.c.b16 %v2850, %v2842
    %v4587 = vpack.c.b16 %v2851, %v2843
    %v4588 = vpack.c.b16 %v2852, %v2844
    %v4589 = vpack.c.b16 %v2853, %v2845
    %v4590 = vpack.c.b16 %v2854, %v2846
    %v4591 = vpack.c.b16 %v2855, %v2847
    %v4592 = vpack.c.b16 %v2856, %v2848
    %v4593 = vpack.c.b16 %v2865, %v2857
    %v4594 = vpack.c.b16 %v2866, %v2858
    %v4595 = vpack.c.b16 %v2867, %v2859
    %v4596 = vpack.c.b16 %v2868, %v2860
    %v4597 = vpack.c.b16 %v2869, %v2861
    %v4598 = vpack.c.b16 %v2870, %v2862
    %v4599 = vpack.c.b16 %v2871, %v2863
    %v4600 = vpack.c.b16 %v2872, %v2864
    %v4601 = vpack.c.b16 %v2881, %v2873
    %v4602 = vpack.c.b16 %v2882, %v2874
    %v4603 = vpack.c.b16 %v2883, %v2875
    %v4604 = vpack.c.b16 %v2884, %v2876
    %v4605 = vpack.c.b16 %v2885, %v2877
    %v4606 = vpack.c.b16 %v2886, %v2878
    %v4607 = vpack.c.b16 %v2887, %v2879
    %v4608 = vpack.c.b16 %v2888, %v2880
    %v4609 = vpack.c.b16 %v2897, %v2889
    %v4610 = vpack.c.b16 %v2898, %v2890
    %v4611 = vpack.c.b16 %v2899, %v2891
    %v4612 = vpack.c.b16 %v2900, %v2892
    %v4613 = vpack.c.b16 %v2901, %v2893
    %v4614 = vpack.c.b16 %v2902, %v2894
    %v4615 = vpack.c.b16 %v2903, %v2895
    %v4616 = vpack.c.b16 %v2904, %v2896
    %v4617 = vpack.c.b16 %v2913, %v2905
    %v4618 = vpack.c.b16 %v2914, %v2906
    %v4619 = vpack.c.b16 %v2915, %v2907
    %v4620 = vpack.c.b16 %v2916, %v2908
    %v4621 = vpack.c.b16 %v2917, %v2909
    %v4622 = vpack.c.b16 %v2918, %v2910
    %v4623 = vpack.c.b16 %v2919, %v2911
    %v4624 = vpack.c.b16 %v2920, %v2912
    %v4625 = vpack.c.b16 %v2929, %v2921
    %v4626 = vpack.c.b16 %v2930, %v2922
    %v4627 = vpack.c.b16 %v2931, %v2923
    %v4628 = vpack.c.b16 %v2932, %v2924
    %v4629 = vpack.c.b16 %v2933, %v2925
    %v4630 = vpack.c.b16 %v2934, %v2926
    %v4631 = vpack.c.b16 %v2935, %v2927
    %v4632 = vpack.c.b16 %v2936, %v2928
    %v4633 = vpack.c.b16 %v2945, %v2937
    %v4634 = vpack.c.b16 %v2946, %v2938
    %v4635 = vpack.c.b16 %v2947, %v2939
    %v4636 = vpack.c.b16 %v2948, %v2940
    %v4637 = vpack.c.b16 %v2949, %v2941
    %v4638 = vpack.c.b16 %v2950, %v2942
    %v4639 = vpack.c.b16 %v2951, %v2943
    %v4640 = vpack.c.b16 %v2952, %v2944
    %v4641 = vpack.c.b16 %v2961, %v2953
    %v4642 = vpack.c.b16 %v2962, %v2954
    %v4643 = vpack.c.b16 %v2963, %v2955
    %v4644 = vpack.c.b16 %v2964, %v2956
    %v4645 = vpack.c.b16 %v2965, %v2957
    %v4646 = vpack.c.b16 %v2966, %v2958
    %v4647 = vpack.c.b16 %v2967, %v2959
    %v4648 = vpack.c.b16 %v2968, %v2960
    %v4649 = vpack.c.b16 %v2977, %v2969
    %v4650 = vpack.c.b16 %v2978, %v2970
    %v4651 = vpack.c.b16 %v2979, %v2971
    %v4652 = vpack.c.b16 %v2980, %v2972
    %v4653 = vpack.c.b16 %v2981, %v2973
    %v4654 = vpack.c.b16 %v2982, %v2974
    %v4655 = vpack.c.b16 %v2983, %v2975
    %v4656 = vpack.c.b16 %v2984, %v2976
    %v4657 = vpack.c.b16 %v2993, %v2985
    %v4658 = vpack.c.b16 %v2994, %v2986
    %v4659 = vpack.c.b16 %v2995, %v2987
    %v4660 = vpack.c.b16 %v2996, %v2988
    %v4661 = vpack.c.b16 %v2997, %v2989
    %v4662 = vpack.c.b16 %v2998, %v2990
    %v4663 = vpack.c.b16 %v2999, %v2991
    %v4664 = vpack.c.b16 %v3000, %v2992
    %v4665 = vpack.c.b16 %v3009, %v3001
    %v4666 = vpack.c.b16 %v3010, %v3002
    %v4667 = vpack.c.b16 %v3011, %v3003
    %v4668 = vpack.c.b16 %v3012, %v3004
    %v4669 = vpack.c.b16 %v3013, %v3005
    %v4670 = vpack.c.b16 %v3014, %v3006
    %v4671 = vpack.c.b16 %v3015, %v3007
    %v4672 = vpack.c.b16 %v3016, %v3008
    %v4673 = vpack.c.b16 %v3025, %v3017
    %v4674 = vpack.c.b16 %v3026, %v3018
    %v4675 = vpack.c.b16 %v3027, %v3019
    %v4676 = vpack.c.b16 %v3028, %v3020
    %v4677 = vpack.c.b16 %v3029, %v3021
    %v4678 = vpack.c.b16 %v3030, %v3022
    %v4679 = vpack.c.b16 %v3031, %v3023
    %v4680 = vpack.c.b16 %v3032, %v3024
    %v4681 = vpack.c.b16 %v3041, %v3033
    %v4682 = vpack.c.b16 %v3042, %v3034
    %v4683 = vpack.c.b16 %v3043, %v3035
    %v4684 = vpack.c.b16 %v3044, %v3036
    %v4685 = vpack.c.b16 %v3045, %v3037
    %v4686 = vpack.c.b16 %v3046, %v3038
    %v4687 = vpack.c.b16 %v3047, %v3039
    %v4688 = vpack.c.b16 %v3048, %v3040
    %v4689 = vpack.c.b16 %v3057, %v3049
    %v4690 = vpack.c.b16 %v3058, %v3050
    %v4691 = vpack.c.b16 %v3059, %v3051
    %v4692 = vpack.c.b16 %v3060, %v3052
    %v4693 = vpack.c.b16 %v3061, %v3053
    %v4694 = vpack.c.b16 %v3062, %v3054
    %v4695 = vpack.c.b16 %v3063, %v3055
    %v4696 = vpack.c.b16 %v3064, %v3056
    %v4697 = vpack.c.b16 %v3073, %v3065
    %v4698 = vpack.c.b16 %v3074, %v3066
    %v4699 = vpack.c.b16 %v3075, %v3067
    %v4700 = vpack.c.b16 %v3076, %v3068
    %v4701 = vpack.c.b16 %v3077, %v3069
    %v4702 = vpack.c.b16 %v3078, %v3070
    %v4703 = vpack.c.b16 %v3079, %v3071
    %v4704 = vpack.c.b16 %v3080, %v3072
    %v4705 = vpack.c.b16 %v3089, %v3081
    %v4706 = vpack.c.b16 %v3090, %v3082
    %v4707 = vpack.c.b16 %v3091, %v3083
    %v4708 = vpack.c.b16 %v3092, %v3084
    %v4709 = vpack.c.b16 %v3093, %v3085
    %v4710 = vpack.c.b16 %v3094, %v3086
    %v4711 = vpack.c.b16 %v3095, %v3087
    %v4712 = vpack.c.b16 %v3096, %v3088
    %v4713 = vpack.c.b16 %v3105, %v3097
    %v4714 = vpack.c.b16 %v3106, %v3098
    %v4715 = vpack.c.b16 %v3107, %v3099
    %v4716 = vpack.c.b16 %v3108, %v3100
    %v4717 = vpack.c.b16 %v3109, %v3101
    %v4718 = vpack.c.b16 %v3110, %v3102
    %v4719 = vpack.c.b16 %v3111, %v3103
    %v4720 = vpack.c.b16 %v3112, %v3104
    %v4721 = vpack.c.b16 %v3121, %v3113
    %v4722 = vpack.c.b16 %v3122, %v3114
    %v4723 = vpack.c.b16 %v3123, %v3115
    %v4724 = vpack.c.b16 %v3124, %v3116
    %v4725 = vpack.c.b16 %v3125, %v3117
    %v4726 = vpack.c.b16 %v3126, %v3118
    %v4727 = vpack.c.b16 %v3127, %v3119
    %v4728 = vpack.c.b16 %v3128, %v3120
    %v4729 = vpack.c.b16 %v3137, %v3129
    %v4730 = vpack.c.b16 %v3138, %v3130
    %v4731 = vpack.c.b16 %v3139, %v3131
    %v4732 = vpack.c.b16 %v3140, %v3132
    %v4733 = vpack.c.b16 %v3141, %v3133
    %v4734 = vpack.c.b16 %v3142, %v3134
    %v4735 = vpack.c.b16 %v3143, %v3135
    %v4736 = vpack.c.b16 %v3144, %v3136
    %v4737 = vpack.c.b16 %v3153, %v3145
    %v4738 = vpack.c.b16 %v3154, %v3146
    %v4739 = vpack.c.b16 %v3155, %v3147
    %v4740 = vpack.c.b16 %v3156, %v3148
    %v4741 = vpack.c.b16 %v3157, %v3149
    %v4742 = vpack.c.b16 %v3158, %v3150
    %v4743 = vpack.c.b16 %v3159, %v3151
    %v4744 = vpack.c.b16 %v3160, %v3152
    %v4745 = vpack.c.b16 %v3169, %v3161
    %v4746 = vpack.c.b16 %v3170, %v3162
    %v4747 = vpack.c.b16 %v3171, %v3163
    %v4748 = vpack.c.b16 %v3172, %v3164
    %v4749 = vpack.c.b16 %v3173, %v3165
    %v4750 = vpack.c.b16 %v3174, %v3166
    %v4751 = vpack.c.b16 %v3175, %v3167
    %v4752 = vpack.c.b16 %v3176, %v3168
    %v4753 = vpack.c.b16 %v3185, %v3177
    %v4754 = vpack.c.b16 %v3186, %v3178
    %v4755 = vpack.c.b16 %v3187, %v3179
    %v4756 = vpack.c.b16 %v3188, %v3180
    %v4757 = vpack.c.b16 %v3189, %v3181
    %v4758 = vpack.c.b16 %v3190, %v3182
    %v4759 = vpack.c.b16 %v3191, %v3183
    %v4760 = vpack.c.b16 %v3192, %v3184
    %v4761 = vpack.c.b16 %v3201, %v3193
    %v4762 = vpack.c.b16 %v3202, %v3194
    %v4763 = vpack.c.b16 %v3203, %v3195
    %v4764 = vpack.c.b16 %v3204, %v3196
    %v4765 = vpack.c.b16 %v3205, %v3197
    %v4766 = vpack.c.b16 %v3206, %v3198
    %v4767 = vpack.c.b16 %v3207, %v3199
    %v4768 = vpack.c.b16 %v3208, %v3200
    %v4769 = vpack.c.b16 %v3217, %v3209
    %v4770 = vpack.c.b16 %v3218, %v3210
    %v4771 = vpack.c.b16 %v3219, %v3211
    %v4772 = vpack.c.b16 %v3220, %v3212
    %v4773 = vpack.c.b16 %v3221, %v3213
    %v4774 = vpack.c.b16 %v3222, %v3214
    %v4775 = vpack.c.b16 %v3223, %v3215
    %v4776 = vpack.c.b16 %v3224, %v3216
    %v4777 = vpack.c.b16 %v3233, %v3225
    %v4778 = vpack.c.b16 %v3234, %v3226
    %v4779 = vpack.c.b16 %v3235, %v3227
    %v4780 = vpack.c.b16 %v3236, %v3228
    %v4781 = vpack.c.b16 %v3237, %v3229
    %v4782 = vpack.c.b16 %v3238, %v3230
    %v4783 = vpack.c.b16 %v3239, %v3231
    %v4784 = vpack.c.b16 %v3240, %v3232
    %v4785 = vpack.c.b16 %v3249, %v3241
    %v4786 = vpack.c.b16 %v3250, %v3242
    %v4787 = vpack.c.b16 %v3251, %v3243
    %v4788 = vpack.c.b16 %v3252, %v3244
    %v4789 = vpack.c.b16 %v3253, %v3245
    %v4790 = vpack.c.b16 %v3254, %v3246
    %v4791 = vpack.c.b16 %v3255, %v3247
    %v4792 = vpack.c.b16 %v3256, %v3248
    %v4793 = vpack.c.b16 %v3265, %v3257
    %v4794 = vpack.c.b16 %v3266, %v3258
    %v4795 = vpack.c.b16 %v3267, %v3259
    %v4796 = vpack.c.b16 %v3268, %v3260
    %v4797 = vpack.c.b16 %v3269, %v3261
    %v4798 = vpack.c.b16 %v3270, %v3262
    %v4799 = vpack.c.b16 %v3271, %v3263
    %v4800 = vpack.c.b16 %v3272, %v3264
    %v4801 = vpack.c.b16 %v3281, %v3273
    %v4802 = vpack.c.b16 %v3282, %v3274
    %v4803 = vpack.c.b16 %v3283, %v3275
    %v4804 = vpack.c.b16 %v3284, %v3276
    %v4805 = vpack.c.b16 %v3285, %v3277
    %v4806 = vpack.c.b16 %v3286, %v3278
    %v4807 = vpack.c.b16 %v3287, %v3279
    %v4808 = vpack.c.b16 %v3288, %v3280
    %v4809 = vpack.c.b16 %v3297, %v3289
    %v4810 = vpack.c.b16 %v3298, %v3290
    %v4811 = vpack.c.b16 %v3299, %v3291
    %v4812 = vpack.c.b16 %v3300, %v3292
    %v4813 = vpack.c.b16 %v3301, %v3293
    %v4814 = vpack.c.b16 %v3302, %v3294
    %v4815 = vpack.c.b16 %v3303, %v3295
    %v4816 = vpack.c.b16 %v3304, %v3296
    %v4817 = vpack.c.b16 %v3313, %v3305
    %v4818 = vpack.c.b16 %v3314, %v3306
    %v4819 = vpack.c.b16 %v3315, %v3307
    %v4820 = vpack.c.b16 %v3316, %v3308
    %v4821 = vpack.c.b16 %v3317, %v3309
    %v4822 = vpack.c.b16 %v3318, %v3310
    %v4823 = vpack.c.b16 %v3319, %v3311
    %v4824 = vpack.c.b16 %v3320, %v3312
    %v4825 = vpack.c.b16 %v3329, %v3321
    %v4826 = vpack.c.b16 %v3330, %v3322
    %v4827 = vpack.c.b16 %v3331, %v3323
    %v4828 = vpack.c.b16 %v3332, %v3324
    %v4829 = vpack.c.b16 %v3333, %v3325
    %v4830 = vpack.c.b16 %v3334, %v3326
    %v4831 = vpack.c.b16 %v3335, %v3327
    %v4832 = vpack.c.b16 %v3336, %v3328
    %v4833 = vpack.c.b16 %v3345, %v3337
    %v4834 = vpack.c.b16 %v3346, %v3338
    %v4835 = vpack.c.b16 %v3347, %v3339
    %v4836 = vpack.c.b16 %v3348, %v3340
    %v4837 = vpack.c.b16 %v3349, %v3341
    %v4838 = vpack.c.b16 %v3350, %v3342
    %v4839 = vpack.c.b16 %v3351, %v3343
    %v4840 = vpack.c.b16 %v3352, %v3344
    %v4841 = vpack.c.b16 %v3361, %v3353
    %v4842 = vpack.c.b16 %v3362, %v3354
    %v4843 = vpack.c.b16 %v3363, %v3355
    %v4844 = vpack.c.b16 %v3364, %v3356
    %v4845 = vpack.c.b16 %v3365, %v3357
    %v4846 = vpack.c.b16 %v3366, %v3358
    %v4847 = vpack.c.b16 %v3367, %v3359
    %v4848 = vpack.c.b16 %v3368, %v3360
    %v4849 = vpack.c.b16 %v3377, %v3369
    %v4850 = vpack.c.b16 %v3378, %v3370
    %v4851 = vpack.c.b16 %v3379, %v3371
    %v4852 = vpack.c.b16 %v3380, %v3372
    %v4853 = vpack.c.b16 %v3381, %v3373
    %v4854 = vpack.c.b16 %v3382, %v3374
    %v4855 = vpack.c.b16 %v3383, %v3375
    %v4856 = vpack.c.b16 %v3384, %v3376
    %v4857 = vpack.c.b16 %v3393, %v3385
    %v4858 = vpack.c.b16 %v3394, %v3386
    %v4859 = vpack.c.b16 %v3395, %v3387
    %v4860 = vpack.c.b16 %v3396, %v3388
    %v4861 = vpack.c.b16 %v3397, %v3389
    %v4862 = vpack.c.b16 %v3398, %v3390
    %v4863 = vpack.c.b16 %v3399, %v3391
    %v4864 = vpack.c.b16 %v3400, %v3392
    %v4865 = vpack.c.b16 %v3409, %v3401
    %v4866 = vpack.c.b16 %v3410, %v3402
    %v4867 = vpack.c.b16 %v3411, %v3403
    %v4868 = vpack.c.b16 %v3412, %v3404
    %v4869 = vpack.c.b16 %v3413, %v3405
    %v4870 = vpack.c.b16 %v3414, %v3406
    %v4871 = vpack.c.b16 %v3415, %v3407
    %v4872 = vpack.c.b16 %v3416, %v3408
    %v4873 = vpack.c.b16 %v3425, %v3417
    %v4874 = vpack.c.b16 %v3426, %v3418
    %v4875 = vpack.c.b16 %v3427, %v3419
    %v4876 = vpack.c.b16 %v3428, %v3420
    %v4877 = vpack.c.b16 %v3429, %v3421
    %v4878 = vpack.c.b16 %v3430, %v3422
    %v4879 = vpack.c.b16 %v3431, %v3423
    %v4880 = vpack.c.b16 %v3432, %v3424
    %v4881 = vpack.c.b16 %v3441, %v3433
    %v4882 = vpack.c.b16 %v3442, %v3434
    %v4883 = vpack.c.b16 %v3443, %v3435
    %v4884 = vpack.c.b16 %v3444, %v3436
    %v4885 = vpack.c.b16 %v3445, %v3437
    %v4886 = vpack.c.b16 %v3446, %v3438
    %v4887 = vpack.c.b16 %v3447, %v3439
    %v4888 = vpack.c.b16 %v3448, %v3440
    %v4889 = vpack.c.b16 %v3457, %v3449
    %v4890 = vpack.c.b16 %v3458, %v3450
    %v4891 = vpack.c.b16 %v3459, %v3451
    %v4892 = vpack.c.b16 %v3460, %v3452
    %v4893 = vpack.c.b16 %v3461, %v3453
    %v4894 = vpack.c.b16 %v3462, %v3454
    %v4895 = vpack.c.b16 %v3463, %v3455
    %v4896 = vpack.c.b16 %v3464, %v3456
    %v4897 = vpack.c.b16 %v3473, %v3465
    %v4898 = vpack.c.b16 %v3474, %v3466
    %v4899 = vpack.c.b16 %v3475, %v3467
    %v4900 = vpack.c.b16 %v3476, %v3468
    %v4901 = vpack.c.b16 %v3477, %v3469
    %v4902 = vpack.c.b16 %v3478, %v3470
    %v4903 = vpack.c.b16 %v3479, %v3471
    %v4904 = vpack.c.b16 %v3480, %v3472
    %v4905 = vpack.c.b16 %v3489, %v3481
    %v4906 = vpack.c.b16 %v3490, %v3482
    %v4907 = vpack.c.b16 %v3491, %v3483
    %v4908 = vpack.c.b16 %v3492, %v3484
    %v4909 = vpack.c.b16 %v3493, %v3485
    %v4910 = vpack.c.b16 %v3494, %v3486
    %v4911 = vpack.c.b16 %v3495, %v3487
    %v4912 = vpack.c.b16 %v3496, %v3488
    %v4913 = vpack.c.b16 %v3505, %v3497
    %v4914 = vpack.c.b16 %v3506, %v3498
    %v4915 = vpack.c.b16 %v3507, %v3499
    %v4916 = vpack.c.b16 %v3508, %v3500
    %v4917 = vpack.c.b16 %v3509, %v3501
    %v4918 = vpack.c.b16 %v3510, %v3502
    %v4919 = vpack.c.b16 %v3511, %v3503
    %v4920 = vpack.c.b16 %v3512, %v3504
    %v4921 = vpack.c.b16 %v3521, %v3513
    %v4922 = vpack.c.b16 %v3522, %v3514
    %v4923 = vpack.c.b16 %v3523, %v3515
    %v4924 = vpack.c.b16 %v3524, %v3516
    %v4925 = vpack.c.b16 %v3525, %v3517
    %v4926 = vpack.c.b16 %v3526, %v3518
    %v4927 = vpack.c.b16 %v3527, %v3519
    %v4928 = vpack.c.b16 %v3528, %v3520
    %v4929 = vpack.c.b16 %v3537, %v3529
    %v4930 = vpack.c.b16 %v3538, %v3530
    %v4931 = vpack.c.b16 %v3539, %v3531
    %v4932 = vpack.c.b16 %v3540, %v3532
    %v4933 = vpack.c.b16 %v3541, %v3533
    %v4934 = vpack.c.b16 %v3542, %v3534
    %v4935 = vpack.c.b16 %v3543, %v3535
    %v4936 = vpack.c.b16 %v3544, %v3536
    %v4937 = vpack.c.b16 %v3553, %v3545
    %v4938 = vpack.c.b16 %v3554, %v3546
    %v4939 = vpack.c.b16 %v3555, %v3547
    %v4940 = vpack.c.b16 %v3556, %v3548
    %v4941 = vpack.c.b16 %v3557, %v3549
    %v4942 = vpack.c.b16 %v3558, %v3550
    %v4943 = vpack.c.b16 %v3559, %v3551
    %v4944 = vpack.c.b16 %v3560, %v3552
    %v4945 = vpack.c.b16 %v3569, %v3561
    %v4946 = vpack.c.b16 %v3570, %v3562
    %v4947 = vpack.c.b16 %v3571, %v3563
    %v4948 = vpack.c.b16 %v3572, %v3564
    %v4949 = vpack.c.b16 %v3573, %v3565
    %v4950 = vpack.c.b16 %v3574, %v3566
    %v4951 = vpack.c.b16 %v3575, %v3567
    %v4952 = vpack.c.b16 %v3576, %v3568
    %v4953 = vpack.c.b16 %v3585, %v3577
    %v4954 = vpack.c.b16 %v3586, %v3578
    %v4955 = vpack.c.b16 %v3587, %v3579
    %v4956 = vpack.c.b16 %v3588, %v3580
    %v4957 = vpack.c.b16 %v3589, %v3581
    %v4958 = vpack.c.b16 %v3590, %v3582
    %v4959 = vpack.c.b16 %v3591, %v3583
    %v4960 = vpack.c.b16 %v3592, %v3584
    %v4961 = vpack.c.b16 %v3601, %v3593
    %v4962 = vpack.c.b16 %v3602, %v3594
    %v4963 = vpack.c.b16 %v3603, %v3595
    %v4964 = vpack.c.b16 %v3604, %v3596
    %v4965 = vpack.c.b16 %v3605, %v3597
    %v4966 = vpack.c.b16 %v3606, %v3598
    %v4967 = vpack.c.b16 %v3607, %v3599
    %v4968 = vpack.c.b16 %v3608, %v3600
    %v4969 = vpack.c.b16 %v3617, %v3609
    %v4970 = vpack.c.b16 %v3618, %v3610
    %v4971 = vpack.c.b16 %v3619, %v3611
    %v4972 = vpack.c.b16 %v3620, %v3612
    %v4973 = vpack.c.b16 %v3621, %v3613
    %v4974 = vpack.c.b16 %v3622, %v3614
    %v4975 = vpack.c.b16 %v3623, %v3615
    %v4976 = vpack.c.b16 %v3624, %v3616
    %v4977 = vpack.c.b16 %v3633, %v3625
    %v4978 = vpack.c.b16 %v3634, %v3626
    %v4979 = vpack.c.b16 %v3635, %v3627
    %v4980 = vpack.c.b16 %v3636, %v3628
    %v4981 = vpack.c.b16 %v3637, %v3629
    %v4982 = vpack.c.b16 %v3638, %v3630
    %v4983 = vpack.c.b16 %v3639, %v3631
    %v4984 = vpack.c.b16 %v3640, %v3632
    %v4985 = vpack.c.b16 %v3649, %v3641
    %v4986 = vpack.c.b16 %v3650, %v3642
    %v4987 = vpack.c.b16 %v3651, %v3643
    %v4988 = vpack.c.b16 %v3652, %v3644
    %v4989 = vpack.c.b16 %v3653, %v3645
    %v4990 = vpack.c.b16 %v3654, %v3646
    %v4991 = vpack.c.b16 %v3655, %v3647
    %v4992 = vpack.c.b16 %v3656, %v3648
    %v4993 = vpack.c.b16 %v3665, %v3657
    %v4994 = vpack.c.b16 %v3666, %v3658
    %v4995 = vpack.c.b16 %v3667, %v3659
    %v4996 = vpack.c.b16 %v3668, %v3660
    %v4997 = vpack.c.b16 %v3669, %v3661
    %v4998 = vpack.c.b16 %v3670, %v3662
    %v4999 = vpack.c.b16 %v3671, %v3663
    %v5000 = vpack.c.b16 %v3672, %v3664
    %v5001 = vpack.c.b16 %v3681, %v3673
    %v5002 = vpack.c.b16 %v3682, %v3674
    %v5003 = vpack.c.b16 %v3683, %v3675
    %v5004 = vpack.c.b16 %v3684, %v3676
    %v5005 = vpack.c.b16 %v3685, %v3677
    %v5006 = vpack.c.b16 %v3686, %v3678
    %v5007 = vpack.c.b16 %v3687, %v3679
    %v5008 = vpack.c.b16 %v3688, %v3680
    %v5009 = vpack.c.b16 %v3697, %v3689
    %v5010 = vpack.c.b16 %v3698, %v3690
    %v5011 = vpack.c.b16 %v3699, %v3691
    %v5012 = vpack.c.b16 %v3700, %v3692
    %v5013 = vpack.c.b16 %v3701, %v3693
    %v5014 = vpack.c.b16 %v3702, %v3694
    %v5015 = vpack.c.b16 %v3703, %v3695
    %v5016 = vpack.c.b16 %v3704, %v3696
    %v5017 = vpack.c.b16 %v3713, %v3705
    %v5018 = vpack.c.b16 %v3714, %v3706
    %v5019 = vpack.c.b16 %v3715, %v3707
    %v5020 = vpack.c.b16 %v3716, %v3708
    %v5021 = vpack.c.b16 %v3717, %v3709
    %v5022 = vpack.c.b16 %v3718, %v3710
    %v5023 = vpack.c.b16 %v3719, %v3711
    %v5024 = vpack.c.b16 %v3720, %v3712
    %v5025 = vpack.c.b16 %v3729, %v3721
    %v5026 = vpack.c.b16 %v3730, %v3722
    %v5027 = vpack.c.b16 %v3731, %v3723
    %v5028 = vpack.c.b16 %v3732, %v3724
    %v5029 = vpack.c.b16 %v3733, %v3725
    %v5030 = vpack.c.b16 %v3734, %v3726
    %v5031 = vpack.c.b16 %v3735, %v3727
    %v5032 = vpack.c.b16 %v3736, %v3728
    %v5033 = vpack.c.b16 %v3745, %v3737
    %v5034 = vpack.c.b16 %v3746, %v3738
    %v5035 = vpack.c.b16 %v3747, %v3739
    %v5036 = vpack.c.b16 %v3748, %v3740
    %v5037 = vpack.c.b16 %v3749, %v3741
    %v5038 = vpack.c.b16 %v3750, %v3742
    %v5039 = vpack.c.b16 %v3751, %v3743
    %v5040 = vpack.c.b16 %v3752, %v3744
    %v5041 = vpack.c.b16 %v3761, %v3753
    %v5042 = vpack.c.b16 %v3762, %v3754
    %v5043 = vpack.c.b16 %v3763, %v3755
    %v5044 = vpack.c.b16 %v3764, %v3756
    %v5045 = vpack.c.b16 %v3765, %v3757
    %v5046 = vpack.c.b16 %v3766, %v3758
    %v5047 = vpack.c.b16 %v3767, %v3759
    %v5048 = vpack.c.b16 %v3768, %v3760
    %v5049 = vpack.c.b16 %v3777, %v3769
    %v5050 = vpack.c.b16 %v3778, %v3770
    %v5051 = vpack.c.b16 %v3779, %v3771
    %v5052 = vpack.c.b16 %v3780, %v3772
    %v5053 = vpack.c.b16 %v3781, %v3773
    %v5054 = vpack.c.b16 %v3782, %v3774
    %v5055 = vpack.c.b16 %v3783, %v3775
    %v5056 = vpack.c.b16 %v3784, %v3776
    %v5057 = vpack.c.b16 %v3793, %v3785
    %v5058 = vpack.c.b16 %v3794, %v3786
    %v5059 = vpack.c.b16 %v3795, %v3787
    %v5060 = vpack.c.b16 %v3796, %v3788
    %v5061 = vpack.c.b16 %v3797, %v3789
    %v5062 = vpack.c.b16 %v3798, %v3790
    %v5063 = vpack.c.b16 %v3799, %v3791
    %v5064 = vpack.c.b16 %v3800, %v3792
    %v5065 = vpack.c.b16 %v3809, %v3801
    %v5066 = vpack.c.b16 %v3810, %v3802
    %v5067 = vpack.c.b16 %v3811, %v3803
    %v5068 = vpack.c.b16 %v3812, %v3804
    %v5069 = vpack.c.b16 %v3813, %v3805
    %v5070 = vpack.c.b16 %v3814, %v3806
    %v5071 = vpack.c.b16 %v3815, %v3807
    %v5072 = vpack.c.b16 %v3816, %v3808
    %v5073 = vpack.c.b16 %v3825, %v3817
    %v5074 = vpack.c.b16 %v3826, %v3818
    %v5075 = vpack.c.b16 %v3827, %v3819
    %v5076 = vpack.c.b16 %v3828, %v3820
    %v5077 = vpack.c.b16 %v3829, %v3821
    %v5078 = vpack.c.b16 %v3830, %v3822
    %v5079 = vpack.c.b16 %v3831, %v3823
    %v5080 = vpack.c.b16 %v3832, %v3824
    %v5081 = vpack.c.b16 %v3841, %v3833
    %v5082 = vpack.c.b16 %v3842, %v3834
    %v5083 = vpack.c.b16 %v3843, %v3835
    %v5084 = vpack.c.b16 %v3844, %v3836
    %v5085 = vpack.c.b16 %v3845, %v3837
    %v5086 = vpack.c.b16 %v3846, %v3838
    %v5087 = vpack.c.b16 %v3847, %v3839
    %v5088 = vpack.c.b16 %v3848, %v3840
    %v5089 = vpack.c.b16 %v3857, %v3849
    %v5090 = vpack.c.b16 %v3858, %v3850
    %v5091 = vpack.c.b16 %v3859, %v3851
    %v5092 = vpack.c.b16 %v3860, %v3852
    %v5093 = vpack.c.b16 %v3861, %v3853
    %v5094 = vpack.c.b16 %v3862, %v3854
    %v5095 = vpack.c.b16 %v3863, %v3855
    %v5096 = vpack.c.b16 %v3864, %v3856
    %v5097 = vpack.c.b16 %v3873, %v3865
    %v5098 = vpack.c.b16 %v3874, %v3866
    %v5099 = vpack.c.b16 %v3875, %v3867
    %v5100 = vpack.c.b16 %v3876, %v3868
    %v5101 = vpack.c.b16 %v3877, %v3869
    %v5102 = vpack.c.b16 %v3878, %v3870
    %v5103 = vpack.c.b16 %v3879, %v3871
    %v5104 = vpack.c.b16 %v3880, %v3872
    %v5105 = vpack.c.b16 %v3889, %v3881
    %v5106 = vpack.c.b16 %v3890, %v3882
    %v5107 = vpack.c.b16 %v3891, %v3883
    %v5108 = vpack.c.b16 %v3892, %v3884
    %v5109 = vpack.c.b16 %v3893, %v3885
    %v5110 = vpack.c.b16 %v3894, %v3886
    %v5111 = vpack.c.b16 %v3895, %v3887
    %v5112 = vpack.c.b16 %v3896, %v3888
    %v5113 = vpack.c.b16 %v3905, %v3897
    %v5114 = vpack.c.b16 %v3906, %v3898
    %v5115 = vpack.c.b16 %v3907, %v3899
    %v5116 = vpack.c.b16 %v3908, %v3900
    %v5117 = vpack.c.b16 %v3909, %v3901
    %v5118 = vpack.c.b16 %v3910, %v3902
    %v5119 = vpack.c.b16 %v3911, %v3903
    %v5120 = vpack.c.b16 %v3912, %v3904
    %v5121 = vpack.c.b16 %v3921, %v3913
    %v5122 = vpack.c.b16 %v3922, %v3914
    %v5123 = vpack.c.b16 %v3923, %v3915
    %v5124 = vpack.c.b16 %v3924, %v3916
    %v5125 = vpack.c.b16 %v3925, %v3917
    %v5126 = vpack.c.b16 %v3926, %v3918
    %v5127 = vpack.c.b16 %v3927, %v3919
    %v5128 = vpack.c.b16 %v3928, %v3920
    %v5129 = vpack.c.b16 %v3937, %v3929
    %v5130 = vpack.c.b16 %v3938, %v3930
    %v5131 = vpack.c.b16 %v3939, %v3931
    %v5132 = vpack.c.b16 %v3940, %v3932
    %v5133 = vpack.c.b16 %v3941, %v3933
    %v5134 = vpack.c.b16 %v3942, %v3934
    %v5135 = vpack.c.b16 %v3943, %v3935
    %v5136 = vpack.c.b16 %v3944, %v3936
    %v5137 = vpack.c.b16 %v3953, %v3945
    %v5138 = vpack.c.b16 %v3954, %v3946
    %v5139 = vpack.c.b16 %v3955, %v3947
    %v5140 = vpack.c.b16 %v3956, %v3948
    %v5141 = vpack.c.b16 %v3957, %v3949
    %v5142 = vpack.c.b16 %v3958, %v3950
    %v5143 = vpack.c.b16 %v3959, %v3951
    %v5144 = vpack.c.b16 %v3960, %v3952
    %v5145 = vpack.c.b16 %v3969, %v3961
    %v5146 = vpack.c.b16 %v3970, %v3962
    %v5147 = vpack.c.b16 %v3971, %v3963
    %v5148 = vpack.c.b16 %v3972, %v3964
    %v5149 = vpack.c.b16 %v3973, %v3965
    %v5150 = vpack.c.b16 %v3974, %v3966
    %v5151 = vpack.c.b16 %v3975, %v3967
    %v5152 = vpack.c.b16 %v3976, %v3968
    %v5153 = vpack.c.b16 %v3985, %v3977
    %v5154 = vpack.c.b16 %v3986, %v3978
    %v5155 = vpack.c.b16 %v3987, %v3979
    %v5156 = vpack.c.b16 %v3988, %v3980
    %v5157 = vpack.c.b16 %v3989, %v3981
    %v5158 = vpack.c.b16 %v3990, %v3982
    %v5159 = vpack.c.b16 %v3991, %v3983
    %v5160 = vpack.c.b16 %v3992, %v3984
    %v5161 = vpack.c.b16 %v4001, %v3993
    %v5162 = vpack.c.b16 %v4002, %v3994
    %v5163 = vpack.c.b16 %v4003, %v3995
    %v5164 = vpack.c.b16 %v4004, %v3996
    %v5165 = vpack.c.b16 %v4005, %v3997
    %v5166 = vpack.c.b16 %v4006, %v3998
    %v5167 = vpack.c.b16 %v4007, %v3999
    %v5168 = vpack.c.b16 %v4008, %v4000
    %v5169 = vpack.c.b16 %v4017, %v4009
    %v5170 = vpack.c.b16 %v4018, %v4010
    %v5171 = vpack.c.b16 %v4019, %v4011
    %v5172 = vpack.c.b16 %v4020, %v4012
    %v5173 = vpack.c.b16 %v4021, %v4013
    %v5174 = vpack.c.b16 %v4022, %v4014
    %v5175 = vpack.c.b16 %v4023, %v4015
    %v5176 = vpack.c.b16 %v4024, %v4016
    %v5177 = vpack.c.b16 %v4033, %v4025
    %v5178 = vpack.c.b16 %v4034, %v4026
    %v5179 = vpack.c.b16 %v4035, %v4027
    %v5180 = vpack.c.b16 %v4036, %v4028
    %v5181 = vpack.c.b16 %v4037, %v4029
    %v5182 = vpack.c.b16 %v4038, %v4030
    %v5183 = vpack.c.b16 %v4039, %v4031
    %v5184 = vpack.c.b16 %v4040, %v4032
    %v5185 = vpack.c.b16 %v4049, %v4041
    %v5186 = vpack.c.b16 %v4050, %v4042
    %v5187 = vpack.c.b16 %v4051, %v4043
    %v5188 = vpack.c.b16 %v4052, %v4044
    %v5189 = vpack.c.b16 %v4053, %v4045
    %v5190 = vpack.c.b16 %v4054, %v4046
    %v5191 = vpack.c.b16 %v4055, %v4047
    %v5192 = vpack.c.b16 %v4056, %v4048
    %v5193 = vpack.c.b16 %v4065, %v4057
    %v5194 = vpack.c.b16 %v4066, %v4058
    %v5195 = vpack.c.b16 %v4067, %v4059
    %v5196 = vpack.c.b16 %v4068, %v4060
    %v5197 = vpack.c.b16 %v4069, %v4061
    %v5198 = vpack.c.b16 %v4070, %v4062
    %v5199 = vpack.c.b16 %v4071, %v4063
    %v5200 = vpack.c.b16 %v4072, %v4064
    %v5201 = vpack.c.b16 %v4081, %v4073
    %v5202 = vpack.c.b16 %v4082, %v4074
    %v5203 = vpack.c.b16 %v4083, %v4075
    %v5204 = vpack.c.b16 %v4084, %v4076
    %v5205 = vpack.c.b16 %v4085, %v4077
    %v5206 = vpack.c.b16 %v4086, %v4078
    %v5207 = vpack.c.b16 %v4087, %v4079
    %v5208 = vpack.c.b16 %v4088, %v4080
    %v5209 = vpack.c.b16 %v4097, %v4089
    %v5210 = vpack.c.b16 %v4098, %v4090
    %v5211 = vpack.c.b16 %v4099, %v4091
    %v5212 = vpack.c.b16 %v4100, %v4092
    %v5213 = vpack.c.b16 %v4101, %v4093
    %v5214 = vpack.c.b16 %v4102, %v4094
    %v5215 = vpack.c.b16 %v4103, %v4095
    %v5216 = vpack.c.b16 %v4104, %v4096
    %v5217 = vpack.c.b16 %v4113, %v4105
    %v5218 = vpack.c.b16 %v4114, %v4106
    %v5219 = vpack.c.b16 %v4115, %v4107
    %v5220 = vpack.c.b16 %v4116, %v4108
    %v5221 = vpack.c.b16 %v4117, %v4109
    %v5222 = vpack.c.b16 %v4118, %v4110
    %v5223 = vpack.c.b16 %v4119, %v4111
    %v5224 = vpack.c.b16 %v4120, %v4112
    %v5225 = vpack.c.b16 %v4129, %v4121
    %v5226 = vpack.c.b16 %v4130, %v4122
    %v5227 = vpack.c.b16 %v4131, %v4123
    %v5228 = vpack.c.b16 %v4132, %v4124
    %v5229 = vpack.c.b16 %v4133, %v4125
    %v5230 = vpack.c.b16 %v4134, %v4126
    %v5231 = vpack.c.b16 %v4135, %v4127
    %v5232 = vpack.c.b16 %v4136, %v4128
    %v5233 = vpack.c.b16 %v4145, %v4137
    %v5234 = vpack.c.b16 %v4146, %v4138
    %v5235 = vpack.c.b16 %v4147, %v4139
    %v5236 = vpack.c.b16 %v4148, %v4140
    %v5237 = vpack.c.b16 %v4149, %v4141
    %v5238 = vpack.c.b16 %v4150, %v4142
    %v5239 = vpack.c.b16 %v4151, %v4143
    %v5240 = vpack.c.b16 %v4152, %v4144
    %v5241 = vpack.c.b16 %v4161, %v4153
    %v5242 = vpack.c.b16 %v4162, %v4154
    %v5243 = vpack.c.b16 %v4163, %v4155
    %v5244 = vpack.c.b16 %v4164, %v4156
    %v5245 = vpack.c.b16 %v4165, %v4157
    %v5246 = vpack.c.b16 %v4166, %v4158
    %v5247 = vpack.c.b16 %v4167, %v4159
    %v5248 = vpack.c.b16 %v4168, %v4160
    %v5249 = vpack.c.b16 %v4177, %v4169
    %v5250 = vpack.c.b16 %v4178, %v4170
    %v5251 = vpack.c.b16 %v4179, %v4171
    %v5252 = vpack.c.b16 %v4180, %v4172
    %v5253 = vpack.c.b16 %v4181, %v4173
    %v5254 = vpack.c.b16 %v4182, %v4174
    %v5255 = vpack.c.b16 %v4183, %v4175
    %v5256 = vpack.c.b16 %v4184, %v4176
    %v5257 = vpack.c.b16 %v4193, %v4185
    %v5258 = vpack.c.b16 %v4194, %v4186
    %v5259 = vpack.c.b16 %v4195, %v4187
    %v5260 = vpack.c.b16 %v4196, %v4188
    %v5261 = vpack.c.b16 %v4197, %v4189
    %v5262 = vpack.c.b16 %v4198, %v4190
    %v5263 = vpack.c.b16 %v4199, %v4191
    %v5264 = vpack.c.b16 %v4200, %v4192
    %v5265 = vpack.c.b16 %v4209, %v4201
    %v5266 = vpack.c.b16 %v4210, %v4202
    %v5267 = vpack.c.b16 %v4211, %v4203
    %v5268 = vpack.c.b16 %v4212, %v4204
    %v5269 = vpack.c.b16 %v4213, %v4205
    %v5270 = vpack.c.b16 %v4214, %v4206
    %v5271 = vpack.c.b16 %v4215, %v4207
    %v5272 = vpack.c.b16 %v4216, %v4208
    %v5273 = vpack.c.b16 %v4225, %v4217
    %v5274 = vpack.c.b16 %v4226, %v4218
    %v5275 = vpack.c.b16 %v4227, %v4219
    %v5276 = vpack.c.b16 %v4228, %v4220
    %v5277 = vpack.c.b16 %v4229, %v4221
    %v5278 = vpack.c.b16 %v4230, %v4222
    %v5279 = vpack.c.b16 %v4231, %v4223
    %v5280 = vpack.c.b16 %v4232, %v4224
    %v5281 = vpack.c.b16 %v4241, %v4233
    %v5282 = vpack.c.b16 %v4242, %v4234
    %v5283 = vpack.c.b16 %v4243, %v4235
    %v5284 = vpack.c.b16 %v4244, %v4236
    %v5285 = vpack.c.b16 %v4245, %v4237
    %v5286 = vpack.c.b16 %v4246, %v4238
    %v5287 = vpack.c.b16 %v4247, %v4239
    %v5288 = vpack.c.b16 %v4248, %v4240
    %v5289 = vpack.c.b16 %v4257, %v4249
    %v5290 = vpack.c.b16 %v4258, %v4250
    %v5291 = vpack.c.b16 %v4259, %v4251
    %v5292 = vpack.c.b16 %v4260, %v4252
    %v5293 = vpack.c.b16 %v4261, %v4253
    %v5294 = vpack.c.b16 %v4262, %v4254
    %v5295 = vpack.c.b16 %v4263, %v4255
    %v5296 = vpack.c.b16 %v4264, %v4256
    %v5297 = vpack.c.b16 %v4273, %v4265
    %v5298 = vpack.c.b16 %v4274, %v4266
    %v5299 = vpack.c.b16 %v4275, %v4267
    %v5300 = vpack.c.b16 %v4276, %v4268
    %v5301 = vpack.c.b16 %v4277, %v4269
    %v5302 = vpack.c.b16 %v4278, %v4270
    %v5303 = vpack.c.b16 %v4279, %v4271
    %v5304 = vpack.c.b16 %v4280, %v4272
    %6329 = vmatprep.subr.bf16.mxu0 %v4338
    %6330 = vmatpush1.bf16.msra.mxu0 %v4337
    %6331 = vmatprep.subr.bf16.mxu0 %v4330
    %6332 = vmatpush1.bf16.msra.mxu0 %v4329
    %6333 = vmatprep.subr.bf16.mxu0 %v4322
    %6334 = vmatpush1.bf16.msra.mxu0 %v4321
    %6335 = vmatprep.subr.bf16.mxu0 %v4314
    %6336 = vmatpush1.bf16.msra.mxu0 %v4313
    %6337 = vmatprep.subr.bf16.mxu0 %v4306
    %6338 = vmatpush1.bf16.msra.mxu0 %v4305
    %6339 = vmatprep.subr.bf16.mxu0 %v4298
    %6340 = vmatpush1.bf16.msra.mxu0 %v4297
    %6341 = vmatprep.subr.bf16.mxu0 %v4290
    %6342 = vmatpush1.bf16.msra.mxu0 %v4289
    %6343 = vmatprep.subr.bf16.mxu0 %v4282
    %6344 = vmatpush1.bf16.msra.mxu0 %v4281
    %6345 = vmatprep.subr.bf16.mxu0 %v4402
    %6346 = vmatpush2.bf16.msra.mxu0 %v4401
    %6347 = vmatprep.subr.bf16.mxu0 %v4394
    %6348 = vmatpush2.bf16.msra.mxu0 %v4393
    %6349 = vmatprep.subr.bf16.mxu0 %v4386
    %6350 = vmatpush2.bf16.msra.mxu0 %v4385
    %6351 = vmatprep.subr.bf16.mxu0 %v4378
    %6352 = vmatpush2.bf16.msra.mxu0 %v4377
    %6353 = vmatprep.subr.bf16.mxu0 %v4370
    %6354 = vmatpush2.bf16.msra.mxu0 %v4369
    %6355 = vmatprep.subr.bf16.mxu0 %v4362
    %6356 = vmatpush2.bf16.msra.mxu0 %v4361
    %6357 = vmatprep.subr.bf16.mxu0 %v4354
    %6358 = vmatpush2.bf16.msra.mxu0 %v4353
    %6359 = vmatprep.subr.bf16.mxu0 %v4346
    %6360 = vmatpush2.bf16.msra.mxu0 %v4345
    %6361 = vmatprep.mubr.bf16.mxu0 %v1178
    %6362 = vmatmul.mubr.bf16.gmra.mxu0 %v1177
    %v6363 = vpop.f32.mrf.mxu0
    %v6364 = vadd.f32 %v1116, %v6363
    %v6365 = vpop.f32.mrf.mxu0
    %v6366 = vadd.f32 %v1120, %v6365
    %v6367 = vpop.f32.mrf.mxu0
    %v6368 = vpop.f32.mrf.mxu0
    %6369 = vdwg.mxu0
    %6370 = vmatprep.subr.bf16.mxu0 %v4466
    %6371 = vmatpush1.bf16.msra.mxu0 %v4465
    %6372 = vmatprep.subr.bf16.mxu0 %v4458
    %6373 = vmatpush1.bf16.msra.mxu0 %v4457
    %6374 = vmatprep.subr.bf16.mxu0 %v4450
    %6375 = vmatpush1.bf16.msra.mxu0 %v4449
    %6376 = vmatprep.subr.bf16.mxu0 %v4442
    %6377 = vmatpush1.bf16.msra.mxu0 %v4441
    %6378 = vmatprep.subr.bf16.mxu0 %v4434
    %6379 = vmatpush1.bf16.msra.mxu0 %v4433
    %6380 = vmatprep.subr.bf16.mxu0 %v4426
    %6381 = vmatpush1.bf16.msra.mxu0 %v4425
    %6382 = vmatprep.subr.bf16.mxu0 %v4418
    %6383 = vmatpush1.bf16.msra.mxu0 %v4417
    %6384 = vmatprep.subr.bf16.mxu0 %v4410
    %6385 = vmatpush1.bf16.msra.mxu0 %v4409
    %6386 = vmatprep.subr.bf16.mxu0 %v4530
    %6387 = vmatpush2.bf16.msra.mxu0 %v4529
    %6388 = vmatprep.subr.bf16.mxu0 %v4522
    %6389 = vmatpush2.bf16.msra.mxu0 %v4521
    %6390 = vmatprep.subr.bf16.mxu0 %v4514
    %6391 = vmatpush2.bf16.msra.mxu0 %v4513
    %6392 = vmatprep.subr.bf16.mxu0 %v4506
    %6393 = vmatpush2.bf16.msra.mxu0 %v4505
    %6394 = vmatprep.subr.bf16.mxu0 %v4498
    %6395 = vmatpush2.bf16.msra.mxu0 %v4497
    %6396 = vmatprep.subr.bf16.mxu0 %v4490
    %6397 = vmatpush2.bf16.msra.mxu0 %v4489
    %6398 = vmatprep.subr.bf16.mxu0 %v4482
    %6399 = vmatpush2.bf16.msra.mxu0 %v4481
    %6400 = vmatprep.subr.bf16.mxu0 %v4474
    %6401 = vmatpush2.bf16.msra.mxu0 %v4473
    %6402 = vmatprep.mubr.bf16.mxu0 %v1180
    %6403 = vmatmul.mubr.bf16.gmra.mxu0 %v1179
    %v6404 = vpop.f32.mrf.mxu0
    %v6405 = vadd.f32 %v6364, %v6404
    %v6406 = vpop.f32.mrf.mxu0
    %v6407 = vadd.f32 %v6366, %v6406
    %v6408 = vpop.f32.mrf.mxu0
    %v6409 = vpop.f32.mrf.mxu0
    %6410 = vdwg.mxu0
    %6411 = vmatprep.subr.bf16.mxu0 %v4594
    %6412 = vmatpush1.bf16.msra.mxu0 %v4593
    %6413 = vmatprep.subr.bf16.mxu0 %v4586
    %6414 = vmatpush1.bf16.msra.mxu0 %v4585
    %6415 = vmatprep.subr.bf16.mxu0 %v4578
    %6416 = vmatpush1.bf16.msra.mxu0 %v4577
    %6417 = vmatprep.subr.bf16.mxu0 %v4570
    %6418 = vmatpush1.bf16.msra.mxu0 %v4569
    %6419 = vmatprep.subr.bf16.mxu0 %v4562
    %6420 = vmatpush1.bf16.msra.mxu0 %v4561
    %6421 = vmatprep.subr.bf16.mxu0 %v4554
    %6422 = vmatpush1.bf16.msra.mxu0 %v4553
    %6423 = vmatprep.subr.bf16.mxu0 %v4546
    %6424 = vmatpush1.bf16.msra.mxu0 %v4545
    %6425 = vmatprep.subr.bf16.mxu0 %v4538
    %6426 = vmatpush1.bf16.msra.mxu0 %v4537
    %6427 = vmatprep.subr.bf16.mxu0 %v4658
    %6428 = vmatpush2.bf16.msra.mxu0 %v4657
    %6429 = vmatprep.subr.bf16.mxu0 %v4650
    %6430 = vmatpush2.bf16.msra.mxu0 %v4649
    %6431 = vmatprep.subr.bf16.mxu0 %v4642
    %6432 = vmatpush2.bf16.msra.mxu0 %v4641
    %6433 = vmatprep.subr.bf16.mxu0 %v4634
    %6434 = vmatpush2.bf16.msra.mxu0 %v4633
    %6435 = vmatprep.subr.bf16.mxu0 %v4626
    %6436 = vmatpush2.bf16.msra.mxu0 %v4625
    %6437 = vmatprep.subr.bf16.mxu0 %v4618
    %6438 = vmatpush2.bf16.msra.mxu0 %v4617
    %6439 = vmatprep.subr.bf16.mxu0 %v4610
    %6440 = vmatpush2.bf16.msra.mxu0 %v4609
    %6441 = vmatprep.subr.bf16.mxu0 %v4602
    %6442 = vmatpush2.bf16.msra.mxu0 %v4601
    %6443 = vmatprep.mubr.bf16.mxu0 %v1182
    %6444 = vmatmul.mubr.bf16.gmra.mxu0 %v1181
    %v6445 = vpop.f32.mrf.mxu0
    %v6446 = vadd.f32 %v6405, %v6445
    %v6447 = vpop.f32.mrf.mxu0
    %v6448 = vadd.f32 %v6407, %v6447
    %v6449 = vpop.f32.mrf.mxu0
    %v6450 = vpop.f32.mrf.mxu0
    %6451 = vdwg.mxu0
    %6452 = vmatprep.subr.bf16.mxu0 %v4722
    %6453 = vmatpush1.bf16.msra.mxu0 %v4721
    %6454 = vmatprep.subr.bf16.mxu0 %v4714
    %6455 = vmatpush1.bf16.msra.mxu0 %v4713
    %6456 = vmatprep.subr.bf16.mxu0 %v4706
    %6457 = vmatpush1.bf16.msra.mxu0 %v4705
    %6458 = vmatprep.subr.bf16.mxu0 %v4698
    %6459 = vmatpush1.bf16.msra.mxu0 %v4697
    %6460 = vmatprep.subr.bf16.mxu0 %v4690
    %6461 = vmatpush1.bf16.msra.mxu0 %v4689
    %6462 = vmatprep.subr.bf16.mxu0 %v4682
    %6463 = vmatpush1.bf16.msra.mxu0 %v4681
    %6464 = vmatprep.subr.bf16.mxu0 %v4674
    %6465 = vmatpush1.bf16.msra.mxu0 %v4673
    %6466 = vmatprep.subr.bf16.mxu0 %v4666
    %6467 = vmatpush1.bf16.msra.mxu0 %v4665
    %6468 = vmatprep.subr.bf16.mxu0 %v4786
    %6469 = vmatpush2.bf16.msra.mxu0 %v4785
    %6470 = vmatprep.subr.bf16.mxu0 %v4778
    %6471 = vmatpush2.bf16.msra.mxu0 %v4777
    %6472 = vmatprep.subr.bf16.mxu0 %v4770
    %6473 = vmatpush2.bf16.msra.mxu0 %v4769
    %6474 = vmatprep.subr.bf16.mxu0 %v4762
    %6475 = vmatpush2.bf16.msra.mxu0 %v4761
    %6476 = vmatprep.subr.bf16.mxu0 %v4754
    %6477 = vmatpush2.bf16.msra.mxu0 %v4753
    %6478 = vmatprep.subr.bf16.mxu0 %v4746
    %6479 = vmatpush2.bf16.msra.mxu0 %v4745
    %6480 = vmatprep.subr.bf16.mxu0 %v4738
    %6481 = vmatpush2.bf16.msra.mxu0 %v4737
    %6482 = vmatprep.subr.bf16.mxu0 %v4730
    %6483 = vmatpush2.bf16.msra.mxu0 %v4729
    %6484 = vmatprep.mubr.bf16.mxu0 %v1184
    %6485 = vmatmul.mubr.bf16.gmra.mxu0 %v1183
    %v6486 = vpop.f32.mrf.mxu0
    %v6487 = vadd.f32 %v6446, %v6486
    %v6488 = vpop.f32.mrf.mxu0
    %v6489 = vadd.f32 %v6448, %v6488
    %v6490 = vpop.f32.mrf.mxu0
    %v6491 = vpop.f32.mrf.mxu0
    %6492 = vdwg.mxu0
    %6493 = vmatprep.subr.bf16.mxu0 %v4850
    %6494 = vmatpush1.bf16.msra.mxu0 %v4849
    %6495 = vmatprep.subr.bf16.mxu0 %v4842
    %6496 = vmatpush1.bf16.msra.mxu0 %v4841
    %6497 = vmatprep.subr.bf16.mxu0 %v4834
    %6498 = vmatpush1.bf16.msra.mxu0 %v4833
    %6499 = vmatprep.subr.bf16.mxu0 %v4826
    %6500 = vmatpush1.bf16.msra.mxu0 %v4825
    %6501 = vmatprep.subr.bf16.mxu0 %v4818
    %6502 = vmatpush1.bf16.msra.mxu0 %v4817
    %6503 = vmatprep.subr.bf16.mxu0 %v4810
    %6504 = vmatpush1.bf16.msra.mxu0 %v4809
    %6505 = vmatprep.subr.bf16.mxu0 %v4802
    %6506 = vmatpush1.bf16.msra.mxu0 %v4801
    %6507 = vmatprep.subr.bf16.mxu0 %v4794
    %6508 = vmatpush1.bf16.msra.mxu0 %v4793
    %6509 = vmatprep.subr.bf16.mxu0 %v4914
    %6510 = vmatpush2.bf16.msra.mxu0 %v4913
    %6511 = vmatprep.subr.bf16.mxu0 %v4906
    %6512 = vmatpush2.bf16.msra.mxu0 %v4905
    %6513 = vmatprep.subr.bf16.mxu0 %v4898
    %6514 = vmatpush2.bf16.msra.mxu0 %v4897
    %6515 = vmatprep.subr.bf16.mxu0 %v4890
    %6516 = vmatpush2.bf16.msra.mxu0 %v4889
    %6517 = vmatprep.subr.bf16.mxu0 %v4882
    %6518 = vmatpush2.bf16.msra.mxu0 %v4881
    %6519 = vmatprep.subr.bf16.mxu0 %v4874
    %6520 = vmatpush2.bf16.msra.mxu0 %v4873
    %6521 = vmatprep.subr.bf16.mxu0 %v4866
    %6522 = vmatpush2.bf16.msra.mxu0 %v4865
    %6523 = vmatprep.subr.bf16.mxu0 %v4858
    %6524 = vmatpush2.bf16.msra.mxu0 %v4857
    %6525 = vmatprep.mubr.bf16.mxu0 %v1186
    %6526 = vmatmul.mubr.bf16.gmra.mxu0 %v1185
    %v6527 = vpop.f32.mrf.mxu0
    %v6528 = vadd.f32 %v6487, %v6527
    %v6529 = vpop.f32.mrf.mxu0
    %v6530 = vadd.f32 %v6489, %v6529
    %v6531 = vpop.f32.mrf.mxu0
    %v6532 = vpop.f32.mrf.mxu0
    %6533 = vdwg.mxu0
    %6534 = vmatprep.subr.bf16.mxu0 %v4978
    %6535 = vmatpush1.bf16.msra.mxu0 %v4977
    %6536 = vmatprep.subr.bf16.mxu0 %v4970
    %6537 = vmatpush1.bf16.msra.mxu0 %v4969
    %6538 = vmatprep.subr.bf16.mxu0 %v4962
    %6539 = vmatpush1.bf16.msra.mxu0 %v4961
    %6540 = vmatprep.subr.bf16.mxu0 %v4954
    %6541 = vmatpush1.bf16.msra.mxu0 %v4953
    %6542 = vmatprep.subr.bf16.mxu0 %v4946
    %6543 = vmatpush1.bf16.msra.mxu0 %v4945
    %6544 = vmatprep.subr.bf16.mxu0 %v4938
    %6545 = vmatpush1.bf16.msra.mxu0 %v4937
    %6546 = vmatprep.subr.bf16.mxu0 %v4930
    %6547 = vmatpush1.bf16.msra.mxu0 %v4929
    %6548 = vmatprep.subr.bf16.mxu0 %v4922
    %6549 = vmatpush1.bf16.msra.mxu0 %v4921
    %6550 = vmatprep.subr.bf16.mxu0 %v5042
    %6551 = vmatpush2.bf16.msra.mxu0 %v5041
    %6552 = vmatprep.subr.bf16.mxu0 %v5034
    %6553 = vmatpush2.bf16.msra.mxu0 %v5033
    %6554 = vmatprep.subr.bf16.mxu0 %v5026
    %6555 = vmatpush2.bf16.msra.mxu0 %v5025
    %6556 = vmatprep.subr.bf16.mxu0 %v5018
    %6557 = vmatpush2.bf16.msra.mxu0 %v5017
    %6558 = vmatprep.subr.bf16.mxu0 %v5010
    %6559 = vmatpush2.bf16.msra.mxu0 %v5009
    %6560 = vmatprep.subr.bf16.mxu0 %v5002
    %6561 = vmatpush2.bf16.msra.mxu0 %v5001
    %6562 = vmatprep.subr.bf16.mxu0 %v4994
    %6563 = vmatpush2.bf16.msra.mxu0 %v4993
    %6564 = vmatprep.subr.bf16.mxu0 %v4986
    %6565 = vmatpush2.bf16.msra.mxu0 %v4985
    %6566 = vmatprep.mubr.bf16.mxu0 %v1188
    %6567 = vmatmul.mubr.bf16.gmra.mxu0 %v1187
    %v6568 = vpop.f32.mrf.mxu0
    %v6569 = vadd.f32 %v6528, %v6568
    %v6570 = vpop.f32.mrf.mxu0
    %v6571 = vadd.f32 %v6530, %v6570
    %v6572 = vpop.f32.mrf.mxu0
    %v6573 = vpop.f32.mrf.mxu0
    %6574 = vdwg.mxu0
    %6575 = vmatprep.subr.bf16.mxu0 %v5106
    %6576 = vmatpush1.bf16.msra.mxu0 %v5105
    %6577 = vmatprep.subr.bf16.mxu0 %v5098
    %6578 = vmatpush1.bf16.msra.mxu0 %v5097
    %6579 = vmatprep.subr.bf16.mxu0 %v5090
    %6580 = vmatpush1.bf16.msra.mxu0 %v5089
    %6581 = vmatprep.subr.bf16.mxu0 %v5082
    %6582 = vmatpush1.bf16.msra.mxu0 %v5081
    %6583 = vmatprep.subr.bf16.mxu0 %v5074
    %6584 = vmatpush1.bf16.msra.mxu0 %v5073
    %6585 = vmatprep.subr.bf16.mxu0 %v5066
    %6586 = vmatpush1.bf16.msra.mxu0 %v5065
    %6587 = vmatprep.subr.bf16.mxu0 %v5058
    %6588 = vmatpush1.bf16.msra.mxu0 %v5057
    %6589 = vmatprep.subr.bf16.mxu0 %v5050
    %6590 = vmatpush1.bf16.msra.mxu0 %v5049
    %6591 = vmatprep.subr.bf16.mxu0 %v5170
    %6592 = vmatpush2.bf16.msra.mxu0 %v5169
    %6593 = vmatprep.subr.bf16.mxu0 %v5162
    %6594 = vmatpush2.bf16.msra.mxu0 %v5161
    %6595 = vmatprep.subr.bf16.mxu0 %v5154
    %6596 = vmatpush2.bf16.msra.mxu0 %v5153
    %6597 = vmatprep.subr.bf16.mxu0 %v5146
    %6598 = vmatpush2.bf16.msra.mxu0 %v5145
    %6599 = vmatprep.subr.bf16.mxu0 %v5138
    %6600 = vmatpush2.bf16.msra.mxu0 %v5137
    %6601 = vmatprep.subr.bf16.mxu0 %v5130
    %6602 = vmatpush2.bf16.msra.mxu0 %v5129
    %6603 = vmatprep.subr.bf16.mxu0 %v5122
    %6604 = vmatpush2.bf16.msra.mxu0 %v5121
    %6605 = vmatprep.subr.bf16.mxu0 %v5114
    %6606 = vmatpush2.bf16.msra.mxu0 %v5113
    %6607 = vmatprep.mubr.bf16.mxu0 %v1190
    %6608 = vmatmul.mubr.bf16.gmra.mxu0 %v1189
    %v6609 = vpop.f32.mrf.mxu0
    %v6610 = vadd.f32 %v6569, %v6609
    %v6611 = vpop.f32.mrf.mxu0
    %v6612 = vadd.f32 %v6571, %v6611
    %v6613 = vpop.f32.mrf.mxu0
    %v6614 = vpop.f32.mrf.mxu0
    %6615 = vdwg.mxu0
    %6616 = vmatprep.subr.bf16.mxu0 %v5234
    %6617 = vmatpush1.bf16.msra.mxu0 %v5233
    %6618 = vmatprep.subr.bf16.mxu0 %v5226
    %6619 = vmatpush1.bf16.msra.mxu0 %v5225
    %6620 = vmatprep.subr.bf16.mxu0 %v5218
    %6621 = vmatpush1.bf16.msra.mxu0 %v5217
    %6622 = vmatprep.subr.bf16.mxu0 %v5210
    %6623 = vmatpush1.bf16.msra.mxu0 %v5209
    %6624 = vmatprep.subr.bf16.mxu0 %v5202
    %6625 = vmatpush1.bf16.msra.mxu0 %v5201
    %6626 = vmatprep.subr.bf16.mxu0 %v5194
    %6627 = vmatpush1.bf16.msra.mxu0 %v5193
    %6628 = vmatprep.subr.bf16.mxu0 %v5186
    %6629 = vmatpush1.bf16.msra.mxu0 %v5185
    %6630 = vmatprep.subr.bf16.mxu0 %v5178
    %6631 = vmatpush1.bf16.msra.mxu0 %v5177
    %6632 = vmatprep.subr.bf16.mxu0 %v5298
    %6633 = vmatpush2.bf16.msra.mxu0 %v5297
    %6634 = vmatprep.subr.bf16.mxu0 %v5290
    %6635 = vmatpush2.bf16.msra.mxu0 %v5289
    %6636 = vmatprep.subr.bf16.mxu0 %v5282
    %6637 = vmatpush2.bf16.msra.mxu0 %v5281
    %6638 = vmatprep.subr.bf16.mxu0 %v5274
    %6639 = vmatpush2.bf16.msra.mxu0 %v5273
    %6640 = vmatprep.subr.bf16.mxu0 %v5266
    %6641 = vmatpush2.bf16.msra.mxu0 %v5265
    %6642 = vmatprep.subr.bf16.mxu0 %v5258
    %6643 = vmatpush2.bf16.msra.mxu0 %v5257
    %6644 = vmatprep.subr.bf16.mxu0 %v5250
    %6645 = vmatpush2.bf16.msra.mxu0 %v5249
    %6646 = vmatprep.subr.bf16.mxu0 %v5242
    %6647 = vmatpush2.bf16.msra.mxu0 %v5241
    %6648 = vmatprep.mubr.bf16.mxu0 %v1192
    %6649 = vmatmul.mubr.bf16.gmra.mxu0 %v1191
    %v6650 = vpop.f32.mrf.mxu0
    %v6651 = vadd.f32 %v6610, %v6650
    %v6652 = vpop.f32.mrf.mxu0
    %v6653 = vadd.f32 %v6612, %v6652
    %v6654 = vpop.f32.mrf.mxu0
    %v6655 = vpop.f32.mrf.mxu0
    %6656 = vdwg.mxu0
    %6657 = vmatprep.subr.bf16.mxu0 %v4340
    %6658 = vmatpush1.bf16.msra.mxu0 %v4339
    %6659 = vmatprep.subr.bf16.mxu0 %v4332
    %6660 = vmatpush1.bf16.msra.mxu0 %v4331
    %6661 = vmatprep.subr.bf16.mxu0 %v4324
    %6662 = vmatpush1.bf16.msra.mxu0 %v4323
    %6663 = vmatprep.subr.bf16.mxu0 %v4316
    %6664 = vmatpush1.bf16.msra.mxu0 %v4315
    %6665 = vmatprep.subr.bf16.mxu0 %v4308
    %6666 = vmatpush1.bf16.msra.mxu0 %v4307
    %6667 = vmatprep.subr.bf16.mxu0 %v4300
    %6668 = vmatpush1.bf16.msra.mxu0 %v4299
    %6669 = vmatprep.subr.bf16.mxu0 %v4292
    %6670 = vmatpush1.bf16.msra.mxu0 %v4291
    %6671 = vmatprep.subr.bf16.mxu0 %v4284
    %6672 = vmatpush1.bf16.msra.mxu0 %v4283
    %6673 = vmatprep.subr.bf16.mxu0 %v4404
    %6674 = vmatpush2.bf16.msra.mxu0 %v4403
    %6675 = vmatprep.subr.bf16.mxu0 %v4396
    %6676 = vmatpush2.bf16.msra.mxu0 %v4395
    %6677 = vmatprep.subr.bf16.mxu0 %v4388
    %6678 = vmatpush2.bf16.msra.mxu0 %v4387
    %6679 = vmatprep.subr.bf16.mxu0 %v4380
    %6680 = vmatpush2.bf16.msra.mxu0 %v4379
    %6681 = vmatprep.subr.bf16.mxu0 %v4372
    %6682 = vmatpush2.bf16.msra.mxu0 %v4371
    %6683 = vmatprep.subr.bf16.mxu0 %v4364
    %6684 = vmatpush2.bf16.msra.mxu0 %v4363
    %6685 = vmatprep.subr.bf16.mxu0 %v4356
    %6686 = vmatpush2.bf16.msra.mxu0 %v4355
    %6687 = vmatprep.subr.bf16.mxu0 %v4348
    %6688 = vmatpush2.bf16.msra.mxu0 %v4347
    %6689 = vmatprep.mubr.bf16.mxu0 %v1178
    %6690 = vmatmul.mubr.bf16.gmra.mxu0 %v1177
    %v6691 = vpop.f32.mrf.mxu0
    %v6692 = vadd.f32 %v1124, %v6691
    %v6693 = vpop.f32.mrf.mxu0
    %v6694 = vadd.f32 %v1128, %v6693
    %v6695 = vpop.f32.mrf.mxu0
    %v6696 = vpop.f32.mrf.mxu0
    %6697 = vdwg.mxu0
    %6698 = vmatprep.subr.bf16.mxu0 %v4468
    %6699 = vmatpush1.bf16.msra.mxu0 %v4467
    %6700 = vmatprep.subr.bf16.mxu0 %v4460
    %6701 = vmatpush1.bf16.msra.mxu0 %v4459
    %6702 = vmatprep.subr.bf16.mxu0 %v4452
    %6703 = vmatpush1.bf16.msra.mxu0 %v4451
    %6704 = vmatprep.subr.bf16.mxu0 %v4444
    %6705 = vmatpush1.bf16.msra.mxu0 %v4443
    %6706 = vmatprep.subr.bf16.mxu0 %v4436
    %6707 = vmatpush1.bf16.msra.mxu0 %v4435
    %6708 = vmatprep.subr.bf16.mxu0 %v4428
    %6709 = vmatpush1.bf16.msra.mxu0 %v4427
    %6710 = vmatprep.subr.bf16.mxu0 %v4420
    %6711 = vmatpush1.bf16.msra.mxu0 %v4419
    %6712 = vmatprep.subr.bf16.mxu0 %v4412
    %6713 = vmatpush1.bf16.msra.mxu0 %v4411
    %6714 = vmatprep.subr.bf16.mxu0 %v4532
    %6715 = vmatpush2.bf16.msra.mxu0 %v4531
    %6716 = vmatprep.subr.bf16.mxu0 %v4524
    %6717 = vmatpush2.bf16.msra.mxu0 %v4523
    %6718 = vmatprep.subr.bf16.mxu0 %v4516
    %6719 = vmatpush2.bf16.msra.mxu0 %v4515
    %6720 = vmatprep.subr.bf16.mxu0 %v4508
    %6721 = vmatpush2.bf16.msra.mxu0 %v4507
    %6722 = vmatprep.subr.bf16.mxu0 %v4500
    %6723 = vmatpush2.bf16.msra.mxu0 %v4499
    %6724 = vmatprep.subr.bf16.mxu0 %v4492
    %6725 = vmatpush2.bf16.msra.mxu0 %v4491
    %6726 = vmatprep.subr.bf16.mxu0 %v4484
    %6727 = vmatpush2.bf16.msra.mxu0 %v4483
    %6728 = vmatprep.subr.bf16.mxu0 %v4476
    %6729 = vmatpush2.bf16.msra.mxu0 %v4475
    %6730 = vmatprep.mubr.bf16.mxu0 %v1180
    %6731 = vmatmul.mubr.bf16.gmra.mxu0 %v1179
    %v6732 = vpop.f32.mrf.mxu0
    %v6733 = vadd.f32 %v6692, %v6732
    %v6734 = vpop.f32.mrf.mxu0
    %v6735 = vadd.f32 %v6694, %v6734
    %v6736 = vpop.f32.mrf.mxu0
    %v6737 = vpop.f32.mrf.mxu0
    %6738 = vdwg.mxu0
    %6739 = vmatprep.subr.bf16.mxu0 %v4596
    %6740 = vmatpush1.bf16.msra.mxu0 %v4595
    %6741 = vmatprep.subr.bf16.mxu0 %v4588
    %6742 = vmatpush1.bf16.msra.mxu0 %v4587
    %6743 = vmatprep.subr.bf16.mxu0 %v4580
    %6744 = vmatpush1.bf16.msra.mxu0 %v4579
    %6745 = vmatprep.subr.bf16.mxu0 %v4572
    %6746 = vmatpush1.bf16.msra.mxu0 %v4571
    %6747 = vmatprep.subr.bf16.mxu0 %v4564
    %6748 = vmatpush1.bf16.msra.mxu0 %v4563
    %6749 = vmatprep.subr.bf16.mxu0 %v4556
    %6750 = vmatpush1.bf16.msra.mxu0 %v4555
    %6751 = vmatprep.subr.bf16.mxu0 %v4548
    %6752 = vmatpush1.bf16.msra.mxu0 %v4547
    %6753 = vmatprep.subr.bf16.mxu0 %v4540
    %6754 = vmatpush1.bf16.msra.mxu0 %v4539
    %6755 = vmatprep.subr.bf16.mxu0 %v4660
    %6756 = vmatpush2.bf16.msra.mxu0 %v4659
    %6757 = vmatprep.subr.bf16.mxu0 %v4652
    %6758 = vmatpush2.bf16.msra.mxu0 %v4651
    %6759 = vmatprep.subr.bf16.mxu0 %v4644
    %6760 = vmatpush2.bf16.msra.mxu0 %v4643
    %6761 = vmatprep.subr.bf16.mxu0 %v4636
    %6762 = vmatpush2.bf16.msra.mxu0 %v4635
    %6763 = vmatprep.subr.bf16.mxu0 %v4628
    %6764 = vmatpush2.bf16.msra.mxu0 %v4627
    %6765 = vmatprep.subr.bf16.mxu0 %v4620
    %6766 = vmatpush2.bf16.msra.mxu0 %v4619
    %6767 = vmatprep.subr.bf16.mxu0 %v4612
    %6768 = vmatpush2.bf16.msra.mxu0 %v4611
    %6769 = vmatprep.subr.bf16.mxu0 %v4604
    %6770 = vmatpush2.bf16.msra.mxu0 %v4603
    %6771 = vmatprep.mubr.bf16.mxu0 %v1182
    %6772 = vmatmul.mubr.bf16.gmra.mxu0 %v1181
    %v6773 = vpop.f32.mrf.mxu0
    %v6774 = vadd.f32 %v6733, %v6773
    %v6775 = vpop.f32.mrf.mxu0
    %v6776 = vadd.f32 %v6735, %v6775
    %v6777 = vpop.f32.mrf.mxu0
    %v6778 = vpop.f32.mrf.mxu0
    %6779 = vdwg.mxu0
    %6780 = vmatprep.subr.bf16.mxu0 %v4724
    %6781 = vmatpush1.bf16.msra.mxu0 %v4723
    %6782 = vmatprep.subr.bf16.mxu0 %v4716
    %6783 = vmatpush1.bf16.msra.mxu0 %v4715
    %6784 = vmatprep.subr.bf16.mxu0 %v4708
    %6785 = vmatpush1.bf16.msra.mxu0 %v4707
    %6786 = vmatprep.subr.bf16.mxu0 %v4700
    %6787 = vmatpush1.bf16.msra.mxu0 %v4699
    %6788 = vmatprep.subr.bf16.mxu0 %v4692
    %6789 = vmatpush1.bf16.msra.mxu0 %v4691
    %6790 = vmatprep.subr.bf16.mxu0 %v4684
    %6791 = vmatpush1.bf16.msra.mxu0 %v4683
    %6792 = vmatprep.subr.bf16.mxu0 %v4676
    %6793 = vmatpush1.bf16.msra.mxu0 %v4675
    %6794 = vmatprep.subr.bf16.mxu0 %v4668
    %6795 = vmatpush1.bf16.msra.mxu0 %v4667
    %6796 = vmatprep.subr.bf16.mxu0 %v4788
    %6797 = vmatpush2.bf16.msra.mxu0 %v4787
    %6798 = vmatprep.subr.bf16.mxu0 %v4780
    %6799 = vmatpush2.bf16.msra.mxu0 %v4779
    %6800 = vmatprep.subr.bf16.mxu0 %v4772
    %6801 = vmatpush2.bf16.msra.mxu0 %v4771
    %6802 = vmatprep.subr.bf16.mxu0 %v4764
    %6803 = vmatpush2.bf16.msra.mxu0 %v4763
    %6804 = vmatprep.subr.bf16.mxu0 %v4756
    %6805 = vmatpush2.bf16.msra.mxu0 %v4755
    %6806 = vmatprep.subr.bf16.mxu0 %v4748
    %6807 = vmatpush2.bf16.msra.mxu0 %v4747
    %6808 = vmatprep.subr.bf16.mxu0 %v4740
    %6809 = vmatpush2.bf16.msra.mxu0 %v4739
    %6810 = vmatprep.subr.bf16.mxu0 %v4732
    %6811 = vmatpush2.bf16.msra.mxu0 %v4731
    %6812 = vmatprep.mubr.bf16.mxu0 %v1184
    %6813 = vmatmul.mubr.bf16.gmra.mxu0 %v1183
    %v6814 = vpop.f32.mrf.mxu0
    %v6815 = vadd.f32 %v6774, %v6814
    %v6816 = vpop.f32.mrf.mxu0
    %v6817 = vadd.f32 %v6776, %v6816
    %v6818 = vpop.f32.mrf.mxu0
    %v6819 = vpop.f32.mrf.mxu0
    %6820 = vdwg.mxu0
    %6821 = vmatprep.subr.bf16.mxu0 %v4852
    %6822 = vmatpush1.bf16.msra.mxu0 %v4851
    %6823 = vmatprep.subr.bf16.mxu0 %v4844
    %6824 = vmatpush1.bf16.msra.mxu0 %v4843
    %6825 = vmatprep.subr.bf16.mxu0 %v4836
    %6826 = vmatpush1.bf16.msra.mxu0 %v4835
    %6827 = vmatprep.subr.bf16.mxu0 %v4828
    %6828 = vmatpush1.bf16.msra.mxu0 %v4827
    %6829 = vmatprep.subr.bf16.mxu0 %v4820
    %6830 = vmatpush1.bf16.msra.mxu0 %v4819
    %6831 = vmatprep.subr.bf16.mxu0 %v4812
    %6832 = vmatpush1.bf16.msra.mxu0 %v4811
    %6833 = vmatprep.subr.bf16.mxu0 %v4804
    %6834 = vmatpush1.bf16.msra.mxu0 %v4803
    %6835 = vmatprep.subr.bf16.mxu0 %v4796
    %6836 = vmatpush1.bf16.msra.mxu0 %v4795
    %6837 = vmatprep.subr.bf16.mxu0 %v4916
    %6838 = vmatpush2.bf16.msra.mxu0 %v4915
    %6839 = vmatprep.subr.bf16.mxu0 %v4908
    %6840 = vmatpush2.bf16.msra.mxu0 %v4907
    %6841 = vmatprep.subr.bf16.mxu0 %v4900
    %6842 = vmatpush2.bf16.msra.mxu0 %v4899
    %6843 = vmatprep.subr.bf16.mxu0 %v4892
    %6844 = vmatpush2.bf16.msra.mxu0 %v4891
    %6845 = vmatprep.subr.bf16.mxu0 %v4884
    %6846 = vmatpush2.bf16.msra.mxu0 %v4883
    %6847 = vmatprep.subr.bf16.mxu0 %v4876
    %6848 = vmatpush2.bf16.msra.mxu0 %v4875
    %6849 = vmatprep.subr.bf16.mxu0 %v4868
    %6850 = vmatpush2.bf16.msra.mxu0 %v4867
    %6851 = vmatprep.subr.bf16.mxu0 %v4860
    %6852 = vmatpush2.bf16.msra.mxu0 %v4859
    %6853 = vmatprep.mubr.bf16.mxu0 %v1186
    %6854 = vmatmul.mubr.bf16.gmra.mxu0 %v1185
    %v6855 = vpop.f32.mrf.mxu0
    %v6856 = vadd.f32 %v6815, %v6855
    %v6857 = vpop.f32.mrf.mxu0
    %v6858 = vadd.f32 %v6817, %v6857
    %v6859 = vpop.f32.mrf.mxu0
    %v6860 = vpop.f32.mrf.mxu0
    %6861 = vdwg.mxu0
    %6862 = vmatprep.subr.bf16.mxu0 %v4980
    %6863 = vmatpush1.bf16.msra.mxu0 %v4979
    %6864 = vmatprep.subr.bf16.mxu0 %v4972
    %6865 = vmatpush1.bf16.msra.mxu0 %v4971
    %6866 = vmatprep.subr.bf16.mxu0 %v4964
    %6867 = vmatpush1.bf16.msra.mxu0 %v4963
    %6868 = vmatprep.subr.bf16.mxu0 %v4956
    %6869 = vmatpush1.bf16.msra.mxu0 %v4955
    %6870 = vmatprep.subr.bf16.mxu0 %v4948
    %6871 = vmatpush1.bf16.msra.mxu0 %v4947
    %6872 = vmatprep.subr.bf16.mxu0 %v4940
    %6873 = vmatpush1.bf16.msra.mxu0 %v4939
    %6874 = vmatprep.subr.bf16.mxu0 %v4932
    %6875 = vmatpush1.bf16.msra.mxu0 %v4931
    %6876 = vmatprep.subr.bf16.mxu0 %v4924
    %6877 = vmatpush1.bf16.msra.mxu0 %v4923
    %6878 = vmatprep.subr.bf16.mxu0 %v5044
    %6879 = vmatpush2.bf16.msra.mxu0 %v5043
    %6880 = vmatprep.subr.bf16.mxu0 %v5036
    %6881 = vmatpush2.bf16.msra.mxu0 %v5035
    %6882 = vmatprep.subr.bf16.mxu0 %v5028
    %6883 = vmatpush2.bf16.msra.mxu0 %v5027
    %6884 = vmatprep.subr.bf16.mxu0 %v5020
    %6885 = vmatpush2.bf16.msra.mxu0 %v5019
    %6886 = vmatprep.subr.bf16.mxu0 %v5012
    %6887 = vmatpush2.bf16.msra.mxu0 %v5011
    %6888 = vmatprep.subr.bf16.mxu0 %v5004
    %6889 = vmatpush2.bf16.msra.mxu0 %v5003
    %6890 = vmatprep.subr.bf16.mxu0 %v4996
    %6891 = vmatpush2.bf16.msra.mxu0 %v4995
    %6892 = vmatprep.subr.bf16.mxu0 %v4988
    %6893 = vmatpush2.bf16.msra.mxu0 %v4987
    %6894 = vmatprep.mubr.bf16.mxu0 %v1188
    %6895 = vmatmul.mubr.bf16.gmra.mxu0 %v1187
    %v6896 = vpop.f32.mrf.mxu0
    %v6897 = vadd.f32 %v6856, %v6896
    %v6898 = vpop.f32.mrf.mxu0
    %v6899 = vadd.f32 %v6858, %v6898
    %v6900 = vpop.f32.mrf.mxu0
    %v6901 = vpop.f32.mrf.mxu0
    %6902 = vdwg.mxu0
    %6903 = vmatprep.subr.bf16.mxu0 %v5108
    %6904 = vmatpush1.bf16.msra.mxu0 %v5107
    %6905 = vmatprep.subr.bf16.mxu0 %v5100
    %6906 = vmatpush1.bf16.msra.mxu0 %v5099
    %6907 = vmatprep.subr.bf16.mxu0 %v5092
    %6908 = vmatpush1.bf16.msra.mxu0 %v5091
    %6909 = vmatprep.subr.bf16.mxu0 %v5084
    %6910 = vmatpush1.bf16.msra.mxu0 %v5083
    %6911 = vmatprep.subr.bf16.mxu0 %v5076
    %6912 = vmatpush1.bf16.msra.mxu0 %v5075
    %6913 = vmatprep.subr.bf16.mxu0 %v5068
    %6914 = vmatpush1.bf16.msra.mxu0 %v5067
    %6915 = vmatprep.subr.bf16.mxu0 %v5060
    %6916 = vmatpush1.bf16.msra.mxu0 %v5059
    %6917 = vmatprep.subr.bf16.mxu0 %v5052
    %6918 = vmatpush1.bf16.msra.mxu0 %v5051
    %6919 = vmatprep.subr.bf16.mxu0 %v5172
    %6920 = vmatpush2.bf16.msra.mxu0 %v5171
    %6921 = vmatprep.subr.bf16.mxu0 %v5164
    %6922 = vmatpush2.bf16.msra.mxu0 %v5163
    %6923 = vmatprep.subr.bf16.mxu0 %v5156
    %6924 = vmatpush2.bf16.msra.mxu0 %v5155
    %6925 = vmatprep.subr.bf16.mxu0 %v5148
    %6926 = vmatpush2.bf16.msra.mxu0 %v5147
    %6927 = vmatprep.subr.bf16.mxu0 %v5140
    %6928 = vmatpush2.bf16.msra.mxu0 %v5139
    %6929 = vmatprep.subr.bf16.mxu0 %v5132
    %6930 = vmatpush2.bf16.msra.mxu0 %v5131
    %6931 = vmatprep.subr.bf16.mxu0 %v5124
    %6932 = vmatpush2.bf16.msra.mxu0 %v5123
    %6933 = vmatprep.subr.bf16.mxu0 %v5116
    %6934 = vmatpush2.bf16.msra.mxu0 %v5115
    %6935 = vmatprep.mubr.bf16.mxu0 %v1190
    %6936 = vmatmul.mubr.bf16.gmra.mxu0 %v1189
    %v6937 = vpop.f32.mrf.mxu0
    %v6938 = vadd.f32 %v6897, %v6937
    %v6939 = vpop.f32.mrf.mxu0
    %v6940 = vadd.f32 %v6899, %v6939
    %v6941 = vpop.f32.mrf.mxu0
    %v6942 = vpop.f32.mrf.mxu0
    %6943 = vdwg.mxu0
    %6944 = vmatprep.subr.bf16.mxu0 %v5236
    %6945 = vmatpush1.bf16.msra.mxu0 %v5235
    %6946 = vmatprep.subr.bf16.mxu0 %v5228
    %6947 = vmatpush1.bf16.msra.mxu0 %v5227
    %6948 = vmatprep.subr.bf16.mxu0 %v5220
    %6949 = vmatpush1.bf16.msra.mxu0 %v5219
    %6950 = vmatprep.subr.bf16.mxu0 %v5212
    %6951 = vmatpush1.bf16.msra.mxu0 %v5211
    %6952 = vmatprep.subr.bf16.mxu0 %v5204
    %6953 = vmatpush1.bf16.msra.mxu0 %v5203
    %6954 = vmatprep.subr.bf16.mxu0 %v5196
    %6955 = vmatpush1.bf16.msra.mxu0 %v5195
    %6956 = vmatprep.subr.bf16.mxu0 %v5188
    %6957 = vmatpush1.bf16.msra.mxu0 %v5187
    %6958 = vmatprep.subr.bf16.mxu0 %v5180
    %6959 = vmatpush1.bf16.msra.mxu0 %v5179
    %6960 = vmatprep.subr.bf16.mxu0 %v5300
    %6961 = vmatpush2.bf16.msra.mxu0 %v5299
    %6962 = vmatprep.subr.bf16.mxu0 %v5292
    %6963 = vmatpush2.bf16.msra.mxu0 %v5291
    %6964 = vmatprep.subr.bf16.mxu0 %v5284
    %6965 = vmatpush2.bf16.msra.mxu0 %v5283
    %6966 = vmatprep.subr.bf16.mxu0 %v5276
    %6967 = vmatpush2.bf16.msra.mxu0 %v5275
    %6968 = vmatprep.subr.bf16.mxu0 %v5268
    %6969 = vmatpush2.bf16.msra.mxu0 %v5267
    %6970 = vmatprep.subr.bf16.mxu0 %v5260
    %6971 = vmatpush2.bf16.msra.mxu0 %v5259
    %6972 = vmatprep.subr.bf16.mxu0 %v5252
    %6973 = vmatpush2.bf16.msra.mxu0 %v5251
    %6974 = vmatprep.subr.bf16.mxu0 %v5244
    %6975 = vmatpush2.bf16.msra.mxu0 %v5243
    %6976 = vmatprep.mubr.bf16.mxu0 %v1192
    %6977 = vmatmul.mubr.bf16.gmra.mxu0 %v1191
    %v6978 = vpop.f32.mrf.mxu0
    %v6979 = vadd.f32 %v6938, %v6978
    %v6980 = vpop.f32.mrf.mxu0
    %v6981 = vadd.f32 %v6940, %v6980
    %v6982 = vpop.f32.mrf.mxu0
    %v6983 = vpop.f32.mrf.mxu0
    %6984 = vdwg.mxu0
    %6985 = vmatprep.subr.bf16.mxu0 %v4342
    %6986 = vmatpush1.bf16.msra.mxu0 %v4341
    %6987 = vmatprep.subr.bf16.mxu0 %v4334
    %6988 = vmatpush1.bf16.msra.mxu0 %v4333
    %6989 = vmatprep.subr.bf16.mxu0 %v4326
    %6990 = vmatpush1.bf16.msra.mxu0 %v4325
    %6991 = vmatprep.subr.bf16.mxu0 %v4318
    %6992 = vmatpush1.bf16.msra.mxu0 %v4317
    %6993 = vmatprep.subr.bf16.mxu0 %v4310
    %6994 = vmatpush1.bf16.msra.mxu0 %v4309
    %6995 = vmatprep.subr.bf16.mxu0 %v4302
    %6996 = vmatpush1.bf16.msra.mxu0 %v4301
    %6997 = vmatprep.subr.bf16.mxu0 %v4294
    %6998 = vmatpush1.bf16.msra.mxu0 %v4293
    %6999 = vmatprep.subr.bf16.mxu0 %v4286
    %7000 = vmatpush1.bf16.msra.mxu0 %v4285
    %7001 = vmatprep.subr.bf16.mxu0 %v4406
    %7002 = vmatpush2.bf16.msra.mxu0 %v4405
    %7003 = vmatprep.subr.bf16.mxu0 %v4398
    %7004 = vmatpush2.bf16.msra.mxu0 %v4397
    %7005 = vmatprep.subr.bf16.mxu0 %v4390
    %7006 = vmatpush2.bf16.msra.mxu0 %v4389
    %7007 = vmatprep.subr.bf16.mxu0 %v4382
    %7008 = vmatpush2.bf16.msra.mxu0 %v4381
    %7009 = vmatprep.subr.bf16.mxu0 %v4374
    %7010 = vmatpush2.bf16.msra.mxu0 %v4373
    %7011 = vmatprep.subr.bf16.mxu0 %v4366
    %7012 = vmatpush2.bf16.msra.mxu0 %v4365
    %7013 = vmatprep.subr.bf16.mxu0 %v4358
    %7014 = vmatpush2.bf16.msra.mxu0 %v4357
    %7015 = vmatprep.subr.bf16.mxu0 %v4350
    %7016 = vmatpush2.bf16.msra.mxu0 %v4349
    %7017 = vmatprep.mubr.bf16.mxu0 %v1178
    %7018 = vmatmul.mubr.bf16.gmra.mxu0 %v1177
    %v7019 = vpop.f32.mrf.mxu0
    %v7020 = vadd.f32 %v1132, %v7019
    %v7021 = vpop.f32.mrf.mxu0
    %v7022 = vadd.f32 %v1136, %v7021
    %v7023 = vpop.f32.mrf.mxu0
    %v7024 = vpop.f32.mrf.mxu0
    %7025 = vdwg.mxu0
    %7026 = vmatprep.subr.bf16.mxu0 %v4470
    %7027 = vmatpush1.bf16.msra.mxu0 %v4469
    %7028 = vmatprep.subr.bf16.mxu0 %v4462
    %7029 = vmatpush1.bf16.msra.mxu0 %v4461
    %7030 = vmatprep.subr.bf16.mxu0 %v4454
    %7031 = vmatpush1.bf16.msra.mxu0 %v4453
    %7032 = vmatprep.subr.bf16.mxu0 %v4446
    %7033 = vmatpush1.bf16.msra.mxu0 %v4445
    %7034 = vmatprep.subr.bf16.mxu0 %v4438
    %7035 = vmatpush1.bf16.msra.mxu0 %v4437
    %7036 = vmatprep.subr.bf16.mxu0 %v4430
    %7037 = vmatpush1.bf16.msra.mxu0 %v4429
    %7038 = vmatprep.subr.bf16.mxu0 %v4422
    %7039 = vmatpush1.bf16.msra.mxu0 %v4421
    %7040 = vmatprep.subr.bf16.mxu0 %v4414
    %7041 = vmatpush1.bf16.msra.mxu0 %v4413
    %7042 = vmatprep.subr.bf16.mxu0 %v4534
    %7043 = vmatpush2.bf16.msra.mxu0 %v4533
    %7044 = vmatprep.subr.bf16.mxu0 %v4526
    %7045 = vmatpush2.bf16.msra.mxu0 %v4525
    %7046 = vmatprep.subr.bf16.mxu0 %v4518
    %7047 = vmatpush2.bf16.msra.mxu0 %v4517
    %7048 = vmatprep.subr.bf16.mxu0 %v4510
    %7049 = vmatpush2.bf16.msra.mxu0 %v4509
    %7050 = vmatprep.subr.bf16.mxu0 %v4502
    %7051 = vmatpush2.bf16.msra.mxu0 %v4501
    %7052 = vmatprep.subr.bf16.mxu0 %v4494
    %7053 = vmatpush2.bf16.msra.mxu0 %v4493
    %7054 = vmatprep.subr.bf16.mxu0 %v4486
    %7055 = vmatpush2.bf16.msra.mxu0 %v4485
    %7056 = vmatprep.subr.bf16.mxu0 %v4478
    %7057 = vmatpush2.bf16.msra.mxu0 %v4477
    %7058 = vmatprep.mubr.bf16.mxu0 %v1180
    %7059 = vmatmul.mubr.bf16.gmra.mxu0 %v1179
    %v7060 = vpop.f32.mrf.mxu0
    %v7061 = vadd.f32 %v7020, %v7060
    %v7062 = vpop.f32.mrf.mxu0
    %v7063 = vadd.f32 %v7022, %v7062
    %v7064 = vpop.f32.mrf.mxu0
    %v7065 = vpop.f32.mrf.mxu0
    %7066 = vdwg.mxu0
    %7067 = vmatprep.subr.bf16.mxu0 %v4598
    %7068 = vmatpush1.bf16.msra.mxu0 %v4597
    %7069 = vmatprep.subr.bf16.mxu0 %v4590
    %7070 = vmatpush1.bf16.msra.mxu0 %v4589
    %7071 = vmatprep.subr.bf16.mxu0 %v4582
    %7072 = vmatpush1.bf16.msra.mxu0 %v4581
    %7073 = vmatprep.subr.bf16.mxu0 %v4574
    %7074 = vmatpush1.bf16.msra.mxu0 %v4573
    %7075 = vmatprep.subr.bf16.mxu0 %v4566
    %7076 = vmatpush1.bf16.msra.mxu0 %v4565
    %7077 = vmatprep.subr.bf16.mxu0 %v4558
    %7078 = vmatpush1.bf16.msra.mxu0 %v4557
    %7079 = vmatprep.subr.bf16.mxu0 %v4550
    %7080 = vmatpush1.bf16.msra.mxu0 %v4549
    %7081 = vmatprep.subr.bf16.mxu0 %v4542
    %7082 = vmatpush1.bf16.msra.mxu0 %v4541
    %7083 = vmatprep.subr.bf16.mxu0 %v4662
    %7084 = vmatpush2.bf16.msra.mxu0 %v4661
    %7085 = vmatprep.subr.bf16.mxu0 %v4654
    %7086 = vmatpush2.bf16.msra.mxu0 %v4653
    %7087 = vmatprep.subr.bf16.mxu0 %v4646
    %7088 = vmatpush2.bf16.msra.mxu0 %v4645
    %7089 = vmatprep.subr.bf16.mxu0 %v4638
    %7090 = vmatpush2.bf16.msra.mxu0 %v4637
    %7091 = vmatprep.subr.bf16.mxu0 %v4630
    %7092 = vmatpush2.bf16.msra.mxu0 %v4629
    %7093 = vmatprep.subr.bf16.mxu0 %v4622
    %7094 = vmatpush2.bf16.msra.mxu0 %v4621
    %7095 = vmatprep.subr.bf16.mxu0 %v4614
    %7096 = vmatpush2.bf16.msra.mxu0 %v4613
    %7097 = vmatprep.subr.bf16.mxu0 %v4606
    %7098 = vmatpush2.bf16.msra.mxu0 %v4605
    %7099 = vmatprep.mubr.bf16.mxu0 %v1182
    %7100 = vmatmul.mubr.bf16.gmra.mxu0 %v1181
    %v7101 = vpop.f32.mrf.mxu0
    %v7102 = vadd.f32 %v7061, %v7101
    %v7103 = vpop.f32.mrf.mxu0
    %v7104 = vadd.f32 %v7063, %v7103
    %v7105 = vpop.f32.mrf.mxu0
    %v7106 = vpop.f32.mrf.mxu0
    %7107 = vdwg.mxu0
    %7108 = vmatprep.subr.bf16.mxu0 %v4726
    %7109 = vmatpush1.bf16.msra.mxu0 %v4725
    %7110 = vmatprep.subr.bf16.mxu0 %v4718
    %7111 = vmatpush1.bf16.msra.mxu0 %v4717
    %7112 = vmatprep.subr.bf16.mxu0 %v4710
    %7113 = vmatpush1.bf16.msra.mxu0 %v4709
    %7114 = vmatprep.subr.bf16.mxu0 %v4702
    %7115 = vmatpush1.bf16.msra.mxu0 %v4701
    %7116 = vmatprep.subr.bf16.mxu0 %v4694
    %7117 = vmatpush1.bf16.msra.mxu0 %v4693
    %7118 = vmatprep.subr.bf16.mxu0 %v4686
    %7119 = vmatpush1.bf16.msra.mxu0 %v4685
    %7120 = vmatprep.subr.bf16.mxu0 %v4678
    %7121 = vmatpush1.bf16.msra.mxu0 %v4677
    %7122 = vmatprep.subr.bf16.mxu0 %v4670
    %7123 = vmatpush1.bf16.msra.mxu0 %v4669
    %7124 = vmatprep.subr.bf16.mxu0 %v4790
    %7125 = vmatpush2.bf16.msra.mxu0 %v4789
    %7126 = vmatprep.subr.bf16.mxu0 %v4782
    %7127 = vmatpush2.bf16.msra.mxu0 %v4781
    %7128 = vmatprep.subr.bf16.mxu0 %v4774
    %7129 = vmatpush2.bf16.msra.mxu0 %v4773
    %7130 = vmatprep.subr.bf16.mxu0 %v4766
    %7131 = vmatpush2.bf16.msra.mxu0 %v4765
    %7132 = vmatprep.subr.bf16.mxu0 %v4758
    %7133 = vmatpush2.bf16.msra.mxu0 %v4757
    %7134 = vmatprep.subr.bf16.mxu0 %v4750
    %7135 = vmatpush2.bf16.msra.mxu0 %v4749
    %7136 = vmatprep.subr.bf16.mxu0 %v4742
    %7137 = vmatpush2.bf16.msra.mxu0 %v4741
    %7138 = vmatprep.subr.bf16.mxu0 %v4734
    %7139 = vmatpush2.bf16.msra.mxu0 %v4733
    %7140 = vmatprep.mubr.bf16.mxu0 %v1184
    %7141 = vmatmul.mubr.bf16.gmra.mxu0 %v1183
    %v7142 = vpop.f32.mrf.mxu0
    %v7143 = vadd.f32 %v7102, %v7142
    %v7144 = vpop.f32.mrf.mxu0
    %v7145 = vadd.f32 %v7104, %v7144
    %v7146 = vpop.f32.mrf.mxu0
    %v7147 = vpop.f32.mrf.mxu0
    %7148 = vdwg.mxu0
    %7149 = vmatprep.subr.bf16.mxu0 %v4854
    %7150 = vmatpush1.bf16.msra.mxu0 %v4853
    %7151 = vmatprep.subr.bf16.mxu0 %v4846
    %7152 = vmatpush1.bf16.msra.mxu0 %v4845
    %7153 = vmatprep.subr.bf16.mxu0 %v4838
    %7154 = vmatpush1.bf16.msra.mxu0 %v4837
    %7155 = vmatprep.subr.bf16.mxu0 %v4830
    %7156 = vmatpush1.bf16.msra.mxu0 %v4829
    %7157 = vmatprep.subr.bf16.mxu0 %v4822
    %7158 = vmatpush1.bf16.msra.mxu0 %v4821
    %7159 = vmatprep.subr.bf16.mxu0 %v4814
    %7160 = vmatpush1.bf16.msra.mxu0 %v4813
    %7161 = vmatprep.subr.bf16.mxu0 %v4806
    %7162 = vmatpush1.bf16.msra.mxu0 %v4805
    %7163 = vmatprep.subr.bf16.mxu0 %v4798
    %7164 = vmatpush1.bf16.msra.mxu0 %v4797
    %7165 = vmatprep.subr.bf16.mxu0 %v4918
    %7166 = vmatpush2.bf16.msra.mxu0 %v4917
    %7167 = vmatprep.subr.bf16.mxu0 %v4910
    %7168 = vmatpush2.bf16.msra.mxu0 %v4909
    %7169 = vmatprep.subr.bf16.mxu0 %v4902
    %7170 = vmatpush2.bf16.msra.mxu0 %v4901
    %7171 = vmatprep.subr.bf16.mxu0 %v4894
    %7172 = vmatpush2.bf16.msra.mxu0 %v4893
    %7173 = vmatprep.subr.bf16.mxu0 %v4886
    %7174 = vmatpush2.bf16.msra.mxu0 %v4885
    %7175 = vmatprep.subr.bf16.mxu0 %v4878
    %7176 = vmatpush2.bf16.msra.mxu0 %v4877
    %7177 = vmatprep.subr.bf16.mxu0 %v4870
    %7178 = vmatpush2.bf16.msra.mxu0 %v4869
    %7179 = vmatprep.subr.bf16.mxu0 %v4862
    %7180 = vmatpush2.bf16.msra.mxu0 %v4861
    %7181 = vmatprep.mubr.bf16.mxu0 %v1186
    %7182 = vmatmul.mubr.bf16.gmra.mxu0 %v1185
    %v7183 = vpop.f32.mrf.mxu0
    %v7184 = vadd.f32 %v7143, %v7183
    %v7185 = vpop.f32.mrf.mxu0
    %v7186 = vadd.f32 %v7145, %v7185
    %v7187 = vpop.f32.mrf.mxu0
    %v7188 = vpop.f32.mrf.mxu0
    %7189 = vdwg.mxu0
    %7190 = vmatprep.subr.bf16.mxu0 %v4982
    %7191 = vmatpush1.bf16.msra.mxu0 %v4981
    %7192 = vmatprep.subr.bf16.mxu0 %v4974
    %7193 = vmatpush1.bf16.msra.mxu0 %v4973
    %7194 = vmatprep.subr.bf16.mxu0 %v4966
    %7195 = vmatpush1.bf16.msra.mxu0 %v4965
    %7196 = vmatprep.subr.bf16.mxu0 %v4958
    %7197 = vmatpush1.bf16.msra.mxu0 %v4957
    %7198 = vmatprep.subr.bf16.mxu0 %v4950
    %7199 = vmatpush1.bf16.msra.mxu0 %v4949
    %7200 = vmatprep.subr.bf16.mxu0 %v4942
    %7201 = vmatpush1.bf16.msra.mxu0 %v4941
    %7202 = vmatprep.subr.bf16.mxu0 %v4934
    %7203 = vmatpush1.bf16.msra.mxu0 %v4933
    %7204 = vmatprep.subr.bf16.mxu0 %v4926
    %7205 = vmatpush1.bf16.msra.mxu0 %v4925
    %7206 = vmatprep.subr.bf16.mxu0 %v5046
    %7207 = vmatpush2.bf16.msra.mxu0 %v5045
    %7208 = vmatprep.subr.bf16.mxu0 %v5038
    %7209 = vmatpush2.bf16.msra.mxu0 %v5037
    %7210 = vmatprep.subr.bf16.mxu0 %v5030
    %7211 = vmatpush2.bf16.msra.mxu0 %v5029
    %7212 = vmatprep.subr.bf16.mxu0 %v5022
    %7213 = vmatpush2.bf16.msra.mxu0 %v5021
    %7214 = vmatprep.subr.bf16.mxu0 %v5014
    %7215 = vmatpush2.bf16.msra.mxu0 %v5013
    %7216 = vmatprep.subr.bf16.mxu0 %v5006
    %7217 = vmatpush2.bf16.msra.mxu0 %v5005
    %7218 = vmatprep.subr.bf16.mxu0 %v4998
    %7219 = vmatpush2.bf16.msra.mxu0 %v4997
    %7220 = vmatprep.subr.bf16.mxu0 %v4990
    %7221 = vmatpush2.bf16.msra.mxu0 %v4989
    %7222 = vmatprep.mubr.bf16.mxu0 %v1188
    %7223 = vmatmul.mubr.bf16.gmra.mxu0 %v1187
    %v7224 = vpop.f32.mrf.mxu0
    %v7225 = vadd.f32 %v7184, %v7224
    %v7226 = vpop.f32.mrf.mxu0
    %v7227 = vadd.f32 %v7186, %v7226
    %v7228 = vpop.f32.mrf.mxu0
    %v7229 = vpop.f32.mrf.mxu0
    %7230 = vdwg.mxu0
    %7231 = vmatprep.subr.bf16.mxu0 %v5110
    %7232 = vmatpush1.bf16.msra.mxu0 %v5109
    %7233 = vmatprep.subr.bf16.mxu0 %v5102
    %7234 = vmatpush1.bf16.msra.mxu0 %v5101
    %7235 = vmatprep.subr.bf16.mxu0 %v5094
    %7236 = vmatpush1.bf16.msra.mxu0 %v5093
    %7237 = vmatprep.subr.bf16.mxu0 %v5086
    %7238 = vmatpush1.bf16.msra.mxu0 %v5085
    %7239 = vmatprep.subr.bf16.mxu0 %v5078
    %7240 = vmatpush1.bf16.msra.mxu0 %v5077
    %7241 = vmatprep.subr.bf16.mxu0 %v5070
    %7242 = vmatpush1.bf16.msra.mxu0 %v5069
    %7243 = vmatprep.subr.bf16.mxu0 %v5062
    %7244 = vmatpush1.bf16.msra.mxu0 %v5061
    %7245 = vmatprep.subr.bf16.mxu0 %v5054
    %7246 = vmatpush1.bf16.msra.mxu0 %v5053
    %7247 = vmatprep.subr.bf16.mxu0 %v5174
    %7248 = vmatpush2.bf16.msra.mxu0 %v5173
    %7249 = vmatprep.subr.bf16.mxu0 %v5166
    %7250 = vmatpush2.bf16.msra.mxu0 %v5165
    %7251 = vmatprep.subr.bf16.mxu0 %v5158
    %7252 = vmatpush2.bf16.msra.mxu0 %v5157
    %7253 = vmatprep.subr.bf16.mxu0 %v5150
    %7254 = vmatpush2.bf16.msra.mxu0 %v5149
    %7255 = vmatprep.subr.bf16.mxu0 %v5142
    %7256 = vmatpush2.bf16.msra.mxu0 %v5141
    %7257 = vmatprep.subr.bf16.mxu0 %v5134
    %7258 = vmatpush2.bf16.msra.mxu0 %v5133
    %7259 = vmatprep.subr.bf16.mxu0 %v5126
    %7260 = vmatpush2.bf16.msra.mxu0 %v5125
    %7261 = vmatprep.subr.bf16.mxu0 %v5118
    %7262 = vmatpush2.bf16.msra.mxu0 %v5117
    %7263 = vmatprep.mubr.bf16.mxu0 %v1190
    %7264 = vmatmul.mubr.bf16.gmra.mxu0 %v1189
    %v7265 = vpop.f32.mrf.mxu0
    %v7266 = vadd.f32 %v7225, %v7265
    %v7267 = vpop.f32.mrf.mxu0
    %v7268 = vadd.f32 %v7227, %v7267
    %v7269 = vpop.f32.mrf.mxu0
    %v7270 = vpop.f32.mrf.mxu0
    %7271 = vdwg.mxu0
    %7272 = vmatprep.subr.bf16.mxu0 %v5238
    %7273 = vmatpush1.bf16.msra.mxu0 %v5237
    %7274 = vmatprep.subr.bf16.mxu0 %v5230
    %7275 = vmatpush1.bf16.msra.mxu0 %v5229
    %7276 = vmatprep.subr.bf16.mxu0 %v5222
    %7277 = vmatpush1.bf16.msra.mxu0 %v5221
    %7278 = vmatprep.subr.bf16.mxu0 %v5214
    %7279 = vmatpush1.bf16.msra.mxu0 %v5213
    %7280 = vmatprep.subr.bf16.mxu0 %v5206
    %7281 = vmatpush1.bf16.msra.mxu0 %v5205
    %7282 = vmatprep.subr.bf16.mxu0 %v5198
    %7283 = vmatpush1.bf16.msra.mxu0 %v5197
    %7284 = vmatprep.subr.bf16.mxu0 %v5190
    %7285 = vmatpush1.bf16.msra.mxu0 %v5189
    %7286 = vmatprep.subr.bf16.mxu0 %v5182
    %7287 = vmatpush1.bf16.msra.mxu0 %v5181
    %7288 = vmatprep.subr.bf16.mxu0 %v5302
    %7289 = vmatpush2.bf16.msra.mxu0 %v5301
    %7290 = vmatprep.subr.bf16.mxu0 %v5294
    %7291 = vmatpush2.bf16.msra.mxu0 %v5293
    %7292 = vmatprep.subr.bf16.mxu0 %v5286
    %7293 = vmatpush2.bf16.msra.mxu0 %v5285
    %7294 = vmatprep.subr.bf16.mxu0 %v5278
    %7295 = vmatpush2.bf16.msra.mxu0 %v5277
    %7296 = vmatprep.subr.bf16.mxu0 %v5270
    %7297 = vmatpush2.bf16.msra.mxu0 %v5269
    %7298 = vmatprep.subr.bf16.mxu0 %v5262
    %7299 = vmatpush2.bf16.msra.mxu0 %v5261
    %7300 = vmatprep.subr.bf16.mxu0 %v5254
    %7301 = vmatpush2.bf16.msra.mxu0 %v5253
    %7302 = vmatprep.subr.bf16.mxu0 %v5246
    %7303 = vmatpush2.bf16.msra.mxu0 %v5245
    %7304 = vmatprep.mubr.bf16.mxu0 %v1192
    %7305 = vmatmul.mubr.bf16.gmra.mxu0 %v1191
    %v7306 = vpop.f32.mrf.mxu0
    %v7307 = vadd.f32 %v7266, %v7306
    %v7308 = vpop.f32.mrf.mxu0
    %v7309 = vadd.f32 %v7268, %v7308
    %v7310 = vpop.f32.mrf.mxu0
    %v7311 = vpop.f32.mrf.mxu0
    %7312 = vdwg.mxu0
    %7313 = vmatprep.subr.bf16.mxu0 %v4344
    %7314 = vmatpush1.bf16.msra.mxu0 %v4343
    %7315 = vmatprep.subr.bf16.mxu0 %v4336
    %7316 = vmatpush1.bf16.msra.mxu0 %v4335
    %7317 = vmatprep.subr.bf16.mxu0 %v4328
    %7318 = vmatpush1.bf16.msra.mxu0 %v4327
    %7319 = vmatprep.subr.bf16.mxu0 %v4320
    %7320 = vmatpush1.bf16.msra.mxu0 %v4319
    %7321 = vmatprep.subr.bf16.mxu0 %v4312
    %7322 = vmatpush1.bf16.msra.mxu0 %v4311
    %7323 = vmatprep.subr.bf16.mxu0 %v4304
    %7324 = vmatpush1.bf16.msra.mxu0 %v4303
    %7325 = vmatprep.subr.bf16.mxu0 %v4296
    %7326 = vmatpush1.bf16.msra.mxu0 %v4295
    %7327 = vmatprep.subr.bf16.mxu0 %v4288
    %7328 = vmatpush1.bf16.msra.mxu0 %v4287
    %7329 = vmatprep.subr.bf16.mxu0 %v4408
    %7330 = vmatpush2.bf16.msra.mxu0 %v4407
    %7331 = vmatprep.subr.bf16.mxu0 %v4400
    %7332 = vmatpush2.bf16.msra.mxu0 %v4399
    %7333 = vmatprep.subr.bf16.mxu0 %v4392
    %7334 = vmatpush2.bf16.msra.mxu0 %v4391
    %7335 = vmatprep.subr.bf16.mxu0 %v4384
    %7336 = vmatpush2.bf16.msra.mxu0 %v4383
    %7337 = vmatprep.subr.bf16.mxu0 %v4376
    %7338 = vmatpush2.bf16.msra.mxu0 %v4375
    %7339 = vmatprep.subr.bf16.mxu0 %v4368
    %7340 = vmatpush2.bf16.msra.mxu0 %v4367
    %7341 = vmatprep.subr.bf16.mxu0 %v4360
    %7342 = vmatpush2.bf16.msra.mxu0 %v4359
    %7343 = vmatprep.subr.bf16.mxu0 %v4352
    %7344 = vmatpush2.bf16.msra.mxu0 %v4351
    %7345 = vmatprep.mubr.bf16.mxu0 %v1178
    %7346 = vmatmul.mubr.bf16.gmra.mxu0 %v1177
    %v7347 = vpop.f32.mrf.mxu0
    %v7348 = vadd.f32 %v1140, %v7347
    %v7349 = vpop.f32.mrf.mxu0
    %v7350 = vadd.f32 %v1144, %v7349
    %v7351 = vpop.f32.mrf.mxu0
    %v7352 = vpop.f32.mrf.mxu0
    %7353 = vdwg.mxu0
    %7354 = vmatprep.subr.bf16.mxu0 %v4472
    %7355 = vmatpush1.bf16.msra.mxu0 %v4471
    %7356 = vmatprep.subr.bf16.mxu0 %v4464
    %7357 = vmatpush1.bf16.msra.mxu0 %v4463
    %7358 = vmatprep.subr.bf16.mxu0 %v4456
    %7359 = vmatpush1.bf16.msra.mxu0 %v4455
    %7360 = vmatprep.subr.bf16.mxu0 %v4448
    %7361 = vmatpush1.bf16.msra.mxu0 %v4447
    %7362 = vmatprep.subr.bf16.mxu0 %v4440
    %7363 = vmatpush1.bf16.msra.mxu0 %v4439
    %7364 = vmatprep.subr.bf16.mxu0 %v4432
    %7365 = vmatpush1.bf16.msra.mxu0 %v4431
    %7366 = vmatprep.subr.bf16.mxu0 %v4424
    %7367 = vmatpush1.bf16.msra.mxu0 %v4423
    %7368 = vmatprep.subr.bf16.mxu0 %v4416
    %7369 = vmatpush1.bf16.msra.mxu0 %v4415
    %7370 = vmatprep.subr.bf16.mxu0 %v4536
    %7371 = vmatpush2.bf16.msra.mxu0 %v4535
    %7372 = vmatprep.subr.bf16.mxu0 %v4528
    %7373 = vmatpush2.bf16.msra.mxu0 %v4527
    %7374 = vmatprep.subr.bf16.mxu0 %v4520
    %7375 = vmatpush2.bf16.msra.mxu0 %v4519
    %7376 = vmatprep.subr.bf16.mxu0 %v4512
    %7377 = vmatpush2.bf16.msra.mxu0 %v4511
    %7378 = vmatprep.subr.bf16.mxu0 %v4504
    %7379 = vmatpush2.bf16.msra.mxu0 %v4503
    %7380 = vmatprep.subr.bf16.mxu0 %v4496
    %7381 = vmatpush2.bf16.msra.mxu0 %v4495
    %7382 = vmatprep.subr.bf16.mxu0 %v4488
    %7383 = vmatpush2.bf16.msra.mxu0 %v4487
    %7384 = vmatprep.subr.bf16.mxu0 %v4480
    %7385 = vmatpush2.bf16.msra.mxu0 %v4479
    %7386 = vmatprep.mubr.bf16.mxu0 %v1180
    %7387 = vmatmul.mubr.bf16.gmra.mxu0 %v1179
    %v7388 = vpop.f32.mrf.mxu0
    %v7389 = vadd.f32 %v7348, %v7388
    %v7390 = vpop.f32.mrf.mxu0
    %v7391 = vadd.f32 %v7350, %v7390
    %v7392 = vpop.f32.mrf.mxu0
    %v7393 = vpop.f32.mrf.mxu0
    %7394 = vdwg.mxu0
    %7395 = vmatprep.subr.bf16.mxu0 %v4600
    %7396 = vmatpush1.bf16.msra.mxu0 %v4599
    %7397 = vmatprep.subr.bf16.mxu0 %v4592
    %7398 = vmatpush1.bf16.msra.mxu0 %v4591
    %7399 = vmatprep.subr.bf16.mxu0 %v4584
    %7400 = vmatpush1.bf16.msra.mxu0 %v4583
    %7401 = vmatprep.subr.bf16.mxu0 %v4576
    %7402 = vmatpush1.bf16.msra.mxu0 %v4575
    %7403 = vmatprep.subr.bf16.mxu0 %v4568
    %7404 = vmatpush1.bf16.msra.mxu0 %v4567
    %7405 = vmatprep.subr.bf16.mxu0 %v4560
    %7406 = vmatpush1.bf16.msra.mxu0 %v4559
    %7407 = vmatprep.subr.bf16.mxu0 %v4552
    %7408 = vmatpush1.bf16.msra.mxu0 %v4551
    %7409 = vmatprep.subr.bf16.mxu0 %v4544
    %7410 = vmatpush1.bf16.msra.mxu0 %v4543
    %7411 = vmatprep.subr.bf16.mxu0 %v4664
    %7412 = vmatpush2.bf16.msra.mxu0 %v4663
    %7413 = vmatprep.subr.bf16.mxu0 %v4656
    %7414 = vmatpush2.bf16.msra.mxu0 %v4655
    %7415 = vmatprep.subr.bf16.mxu0 %v4648
    %7416 = vmatpush2.bf16.msra.mxu0 %v4647
    %7417 = vmatprep.subr.bf16.mxu0 %v4640
    %7418 = vmatpush2.bf16.msra.mxu0 %v4639
    %7419 = vmatprep.subr.bf16.mxu0 %v4632
    %7420 = vmatpush2.bf16.msra.mxu0 %v4631
    %7421 = vmatprep.subr.bf16.mxu0 %v4624
    %7422 = vmatpush2.bf16.msra.mxu0 %v4623
    %7423 = vmatprep.subr.bf16.mxu0 %v4616
    %7424 = vmatpush2.bf16.msra.mxu0 %v4615
    %7425 = vmatprep.subr.bf16.mxu0 %v4608
    %7426 = vmatpush2.bf16.msra.mxu0 %v4607
    %7427 = vmatprep.mubr.bf16.mxu0 %v1182
    %7428 = vmatmul.mubr.bf16.gmra.mxu0 %v1181
    %v7429 = vpop.f32.mrf.mxu0
    %v7430 = vadd.f32 %v7389, %v7429
    %v7431 = vpop.f32.mrf.mxu0
    %v7432 = vadd.f32 %v7391, %v7431
    %v7433 = vpop.f32.mrf.mxu0
    %v7434 = vpop.f32.mrf.mxu0
    %7435 = vdwg.mxu0
    %7436 = vmatprep.subr.bf16.mxu0 %v4728
    %7437 = vmatpush1.bf16.msra.mxu0 %v4727
    %7438 = vmatprep.subr.bf16.mxu0 %v4720
    %7439 = vmatpush1.bf16.msra.mxu0 %v4719
    %7440 = vmatprep.subr.bf16.mxu0 %v4712
    %7441 = vmatpush1.bf16.msra.mxu0 %v4711
    %7442 = vmatprep.subr.bf16.mxu0 %v4704
    %7443 = vmatpush1.bf16.msra.mxu0 %v4703
    %7444 = vmatprep.subr.bf16.mxu0 %v4696
    %7445 = vmatpush1.bf16.msra.mxu0 %v4695
    %7446 = vmatprep.subr.bf16.mxu0 %v4688
    %7447 = vmatpush1.bf16.msra.mxu0 %v4687
    %7448 = vmatprep.subr.bf16.mxu0 %v4680
    %7449 = vmatpush1.bf16.msra.mxu0 %v4679
    %7450 = vmatprep.subr.bf16.mxu0 %v4672
    %7451 = vmatpush1.bf16.msra.mxu0 %v4671
    %7452 = vmatprep.subr.bf16.mxu0 %v4792
    %7453 = vmatpush2.bf16.msra.mxu0 %v4791
    %7454 = vmatprep.subr.bf16.mxu0 %v4784
    %7455 = vmatpush2.bf16.msra.mxu0 %v4783
    %7456 = vmatprep.subr.bf16.mxu0 %v4776
    %7457 = vmatpush2.bf16.msra.mxu0 %v4775
    %7458 = vmatprep.subr.bf16.mxu0 %v4768
    %7459 = vmatpush2.bf16.msra.mxu0 %v4767
    %7460 = vmatprep.subr.bf16.mxu0 %v4760
    %7461 = vmatpush2.bf16.msra.mxu0 %v4759
    %7462 = vmatprep.subr.bf16.mxu0 %v4752
    %7463 = vmatpush2.bf16.msra.mxu0 %v4751
    %7464 = vmatprep.subr.bf16.mxu0 %v4744
    %7465 = vmatpush2.bf16.msra.mxu0 %v4743
    %7466 = vmatprep.subr.bf16.mxu0 %v4736
    %7467 = vmatpush2.bf16.msra.mxu0 %v4735
    %7468 = vmatprep.mubr.bf16.mxu0 %v1184
    %7469 = vmatmul.mubr.bf16.gmra.mxu0 %v1183
    %v7470 = vpop.f32.mrf.mxu0
    %v7471 = vadd.f32 %v7430, %v7470
    %v7472 = vpop.f32.mrf.mxu0
    %v7473 = vadd.f32 %v7432, %v7472
    %v7474 = vpop.f32.mrf.mxu0
    %v7475 = vpop.f32.mrf.mxu0
    %7476 = vdwg.mxu0
    %7477 = vmatprep.subr.bf16.mxu0 %v4856
    %7478 = vmatpush1.bf16.msra.mxu0 %v4855
    %7479 = vmatprep.subr.bf16.mxu0 %v4848
    %7480 = vmatpush1.bf16.msra.mxu0 %v4847
    %7481 = vmatprep.subr.bf16.mxu0 %v4840
    %7482 = vmatpush1.bf16.msra.mxu0 %v4839
    %7483 = vmatprep.subr.bf16.mxu0 %v4832
    %7484 = vmatpush1.bf16.msra.mxu0 %v4831
    %7485 = vmatprep.subr.bf16.mxu0 %v4824
    %7486 = vmatpush1.bf16.msra.mxu0 %v4823
    %7487 = vmatprep.subr.bf16.mxu0 %v4816
    %7488 = vmatpush1.bf16.msra.mxu0 %v4815
    %7489 = vmatprep.subr.bf16.mxu0 %v4808
    %7490 = vmatpush1.bf16.msra.mxu0 %v4807
    %7491 = vmatprep.subr.bf16.mxu0 %v4800
    %7492 = vmatpush1.bf16.msra.mxu0 %v4799
    %7493 = vmatprep.subr.bf16.mxu0 %v4920
    %7494 = vmatpush2.bf16.msra.mxu0 %v4919
    %7495 = vmatprep.subr.bf16.mxu0 %v4912
    %7496 = vmatpush2.bf16.msra.mxu0 %v4911
    %7497 = vmatprep.subr.bf16.mxu0 %v4904
    %7498 = vmatpush2.bf16.msra.mxu0 %v4903
    %7499 = vmatprep.subr.bf16.mxu0 %v4896
    %7500 = vmatpush2.bf16.msra.mxu0 %v4895
    %7501 = vmatprep.subr.bf16.mxu0 %v4888
    %7502 = vmatpush2.bf16.msra.mxu0 %v4887
    %7503 = vmatprep.subr.bf16.mxu0 %v4880
    %7504 = vmatpush2.bf16.msra.mxu0 %v4879
    %7505 = vmatprep.subr.bf16.mxu0 %v4872
    %7506 = vmatpush2.bf16.msra.mxu0 %v4871
    %7507 = vmatprep.subr.bf16.mxu0 %v4864
    %7508 = vmatpush2.bf16.msra.mxu0 %v4863
    %7509 = vmatprep.mubr.bf16.mxu0 %v1186
    %7510 = vmatmul.mubr.bf16.gmra.mxu0 %v1185
    %v7511 = vpop.f32.mrf.mxu0
    %v7512 = vadd.f32 %v7471, %v7511
    %v7513 = vpop.f32.mrf.mxu0
    %v7514 = vadd.f32 %v7473, %v7513
    %v7515 = vpop.f32.mrf.mxu0
    %v7516 = vpop.f32.mrf.mxu0
    %7517 = vdwg.mxu0
    %7518 = vmatprep.subr.bf16.mxu0 %v4984
    %7519 = vmatpush1.bf16.msra.mxu0 %v4983
    %7520 = vmatprep.subr.bf16.mxu0 %v4976
    %7521 = vmatpush1.bf16.msra.mxu0 %v4975
    %7522 = vmatprep.subr.bf16.mxu0 %v4968
    %7523 = vmatpush1.bf16.msra.mxu0 %v4967
    %7524 = vmatprep.subr.bf16.mxu0 %v4960
    %7525 = vmatpush1.bf16.msra.mxu0 %v4959
    %7526 = vmatprep.subr.bf16.mxu0 %v4952
    %7527 = vmatpush1.bf16.msra.mxu0 %v4951
    %7528 = vmatprep.subr.bf16.mxu0 %v4944
    %7529 = vmatpush1.bf16.msra.mxu0 %v4943
    %7530 = vmatprep.subr.bf16.mxu0 %v4936
    %7531 = vmatpush1.bf16.msra.mxu0 %v4935
    %7532 = vmatprep.subr.bf16.mxu0 %v4928
    %7533 = vmatpush1.bf16.msra.mxu0 %v4927
    %7534 = vmatprep.subr.bf16.mxu0 %v5048
    %7535 = vmatpush2.bf16.msra.mxu0 %v5047
    %7536 = vmatprep.subr.bf16.mxu0 %v5040
    %7537 = vmatpush2.bf16.msra.mxu0 %v5039
    %7538 = vmatprep.subr.bf16.mxu0 %v5032
    %7539 = vmatpush2.bf16.msra.mxu0 %v5031
    %7540 = vmatprep.subr.bf16.mxu0 %v5024
    %7541 = vmatpush2.bf16.msra.mxu0 %v5023
    %7542 = vmatprep.subr.bf16.mxu0 %v5016
    %7543 = vmatpush2.bf16.msra.mxu0 %v5015
    %7544 = vmatprep.subr.bf16.mxu0 %v5008
    %7545 = vmatpush2.bf16.msra.mxu0 %v5007
    %7546 = vmatprep.subr.bf16.mxu0 %v5000
    %7547 = vmatpush2.bf16.msra.mxu0 %v4999
    %7548 = vmatprep.subr.bf16.mxu0 %v4992
    %7549 = vmatpush2.bf16.msra.mxu0 %v4991
    %7550 = vmatprep.mubr.bf16.mxu0 %v1188
    %7551 = vmatmul.mubr.bf16.gmra.mxu0 %v1187
    %v7552 = vpop.f32.mrf.mxu0
    %v7553 = vadd.f32 %v7512, %v7552
    %v7554 = vpop.f32.mrf.mxu0
    %v7555 = vadd.f32 %v7514, %v7554
    %v7556 = vpop.f32.mrf.mxu0
    %v7557 = vpop.f32.mrf.mxu0
    %7558 = vdwg.mxu0
    %7559 = vmatprep.subr.bf16.mxu0 %v5112
    %7560 = vmatpush1.bf16.msra.mxu0 %v5111
    %7561 = vmatprep.subr.bf16.mxu0 %v5104
    %7562 = vmatpush1.bf16.msra.mxu0 %v5103
    %7563 = vmatprep.subr.bf16.mxu0 %v5096
    %7564 = vmatpush1.bf16.msra.mxu0 %v5095
    %7565 = vmatprep.subr.bf16.mxu0 %v5088
    %7566 = vmatpush1.bf16.msra.mxu0 %v5087
    %7567 = vmatprep.subr.bf16.mxu0 %v5080
    %7568 = vmatpush1.bf16.msra.mxu0 %v5079
    %7569 = vmatprep.subr.bf16.mxu0 %v5072
    %7570 = vmatpush1.bf16.msra.mxu0 %v5071
    %7571 = vmatprep.subr.bf16.mxu0 %v5064
    %7572 = vmatpush1.bf16.msra.mxu0 %v5063
    %7573 = vmatprep.subr.bf16.mxu0 %v5056
    %7574 = vmatpush1.bf16.msra.mxu0 %v5055
    %7575 = vmatprep.subr.bf16.mxu0 %v5176
    %7576 = vmatpush2.bf16.msra.mxu0 %v5175
    %7577 = vmatprep.subr.bf16.mxu0 %v5168
    %7578 = vmatpush2.bf16.msra.mxu0 %v5167
    %7579 = vmatprep.subr.bf16.mxu0 %v5160
    %7580 = vmatpush2.bf16.msra.mxu0 %v5159
    %7581 = vmatprep.subr.bf16.mxu0 %v5152
    %7582 = vmatpush2.bf16.msra.mxu0 %v5151
    %7583 = vmatprep.subr.bf16.mxu0 %v5144
    %7584 = vmatpush2.bf16.msra.mxu0 %v5143
    %7585 = vmatprep.subr.bf16.mxu0 %v5136
    %7586 = vmatpush2.bf16.msra.mxu0 %v5135
    %7587 = vmatprep.subr.bf16.mxu0 %v5128
    %7588 = vmatpush2.bf16.msra.mxu0 %v5127
    %7589 = vmatprep.subr.bf16.mxu0 %v5120
    %7590 = vmatpush2.bf16.msra.mxu0 %v5119
    %7591 = vmatprep.mubr.bf16.mxu0 %v1190
    %7592 = vmatmul.mubr.bf16.gmra.mxu0 %v1189
    %v7593 = vpop.f32.mrf.mxu0
    %v7594 = vadd.f32 %v7553, %v7593
    %v7595 = vpop.f32.mrf.mxu0
    %v7596 = vadd.f32 %v7555, %v7595
    %v7597 = vpop.f32.mrf.mxu0
    %v7598 = vpop.f32.mrf.mxu0
    %7599 = vdwg.mxu0
    %7600 = vmatprep.subr.bf16.mxu0 %v5240
    %7601 = vmatpush1.bf16.msra.mxu0 %v5239
    %7602 = vmatprep.subr.bf16.mxu0 %v5232
    %7603 = vmatpush1.bf16.msra.mxu0 %v5231
    %7604 = vmatprep.subr.bf16.mxu0 %v5224
    %7605 = vmatpush1.bf16.msra.mxu0 %v5223
    %7606 = vmatprep.subr.bf16.mxu0 %v5216
    %7607 = vmatpush1.bf16.msra.mxu0 %v5215
    %7608 = vmatprep.subr.bf16.mxu0 %v5208
    %7609 = vmatpush1.bf16.msra.mxu0 %v5207
    %7610 = vmatprep.subr.bf16.mxu0 %v5200
    %7611 = vmatpush1.bf16.msra.mxu0 %v5199
    %7612 = vmatprep.subr.bf16.mxu0 %v5192
    %7613 = vmatpush1.bf16.msra.mxu0 %v5191
    %7614 = vmatprep.subr.bf16.mxu0 %v5184
    %7615 = vmatpush1.bf16.msra.mxu0 %v5183
    %7616 = vmatprep.subr.bf16.mxu0 %v5304
    %7617 = vmatpush2.bf16.msra.mxu0 %v5303
    %7618 = vmatprep.subr.bf16.mxu0 %v5296
    %7619 = vmatpush2.bf16.msra.mxu0 %v5295
    %7620 = vmatprep.subr.bf16.mxu0 %v5288
    %7621 = vmatpush2.bf16.msra.mxu0 %v5287
    %7622 = vmatprep.subr.bf16.mxu0 %v5280
    %7623 = vmatpush2.bf16.msra.mxu0 %v5279
    %7624 = vmatprep.subr.bf16.mxu0 %v5272
    %7625 = vmatpush2.bf16.msra.mxu0 %v5271
    %7626 = vmatprep.subr.bf16.mxu0 %v5264
    %7627 = vmatpush2.bf16.msra.mxu0 %v5263
    %7628 = vmatprep.subr.bf16.mxu0 %v5256
    %7629 = vmatpush2.bf16.msra.mxu0 %v5255
    %7630 = vmatprep.subr.bf16.mxu0 %v5248
    %7631 = vmatpush2.bf16.msra.mxu0 %v5247
    %7632 = vmatprep.mubr.bf16.mxu0 %v1192
    %7633 = vmatmul.mubr.bf16.gmra.mxu0 %v1191
    %v7634 = vpop.f32.mrf.mxu0
    %v7635 = vadd.f32 %v7594, %v7634
    %v7636 = vpop.f32.mrf.mxu0
    %v7637 = vadd.f32 %v7596, %v7636
    %v7638 = vpop.f32.mrf.mxu0
    %v7639 = vpop.f32.mrf.mxu0
    %7640 = vdwg.mxu0
    %v7641 = vmax.f32 %v6651, 0.0
    %v7642 = vmax.f32 %v6653, 0.0
    %v7643 = vmax.f32 %v6979, 0.0
    %v7644 = vmax.f32 %v6981, 0.0
    %v7645 = vmax.f32 %v7307, 0.0
    %v7646 = vmax.f32 %v7309, 0.0
    %v7647 = vmax.f32 %v7635, 0.0
    %v7648 = vmax.f32 %v7637, 0.0
    %v7649 = vpack.c.bf16 %v7641, %v7641
    %v7650 = vpack.c.bf16 %v7642, %v7642
    %v7651 = vpack.c.bf16 %v7643, %v7643
    %v7652 = vpack.c.bf16 %v7644, %v7644
    %v7653 = vpack.c.bf16 %v7645, %v7645
    %v7654 = vpack.c.bf16 %v7646, %v7646
    %v7655 = vpack.c.bf16 %v7647, %v7647
    %v7656 = vpack.c.bf16 %v7648, %v7648
    %v7657 = vld [vmem:[#allocation7] sm:$0xff]
    %v7658 = vld [vmem:[#allocation7 + $0x8] sm:$0xff]
    %v7659 = vld [vmem:[#allocation7 + $0x10] sm:$0xff]
    %v7660 = vld [vmem:[#allocation7 + $0x18] sm:$0xff]
    %v7661 = vld [vmem:[#allocation7 + $0x20] sm:$0xff]
    %v7662 = vld [vmem:[#allocation7 + $0x28] sm:$0xff]
    %v7663 = vld [vmem:[#allocation7 + $0x30] sm:$0xff]
    %v7664 = vld [vmem:[#allocation7 + $0x38] sm:$0xff]
    %v7665 = vld [vmem:[#allocation7 + $0x40] sm:$0xff]
    %v7666 = vld [vmem:[#allocation7 + $0x48] sm:$0xff]
    %v7667 = vld [vmem:[#allocation7 + $0x50] sm:$0xff]
    %v7668 = vld [vmem:[#allocation7 + $0x58] sm:$0xff]
    %v7669 = vld [vmem:[#allocation7 + $0x60] sm:$0xff]
    %v7670 = vld [vmem:[#allocation7 + $0x68] sm:$0xff]
    %v7671 = vld [vmem:[#allocation7 + $0x70] sm:$0xff]
    %v7672 = vld [vmem:[#allocation7 + $0x78] sm:$0xff]
    %v7673 = vld [vmem:[#allocation7 + $0x80] sm:$0xff]
    %v7674 = vld [vmem:[#allocation7 + $0x88] sm:$0xff]
    %v7675 = vld [vmem:[#allocation7 + $0x90] sm:$0xff]
    %v7676 = vld [vmem:[#allocation7 + $0x98] sm:$0xff]
    %v7677 = vld [vmem:[#allocation7 + $0xa0] sm:$0xff]
    %v7678 = vld [vmem:[#allocation7 + $0xa8] sm:$0xff]
    %v7679 = vld [vmem:[#allocation7 + $0xb0] sm:$0xff]
    %v7680 = vld [vmem:[#allocation7 + $0xb8] sm:$0xff]
    %v7681 = vld [vmem:[#allocation7 + $0xc0] sm:$0xff]
    %v7682 = vld [vmem:[#allocation7 + $0xc8] sm:$0xff]
    %v7683 = vld [vmem:[#allocation7 + $0xd0] sm:$0xff]
    %v7684 = vld [vmem:[#allocation7 + $0xd8] sm:$0xff]
    %v7685 = vld [vmem:[#allocation7 + $0xe0] sm:$0xff]
    %v7686 = vld [vmem:[#allocation7 + $0xe8] sm:$0xff]
    %v7687 = vld [vmem:[#allocation7 + $0xf0] sm:$0xff]
    %v7688 = vld [vmem:[#allocation7 + $0xf8] sm:$0xff]
    %v7689 = vld [vmem:[#allocation7 + $0x100] sm:$0xff]
    %v7690 = vld [vmem:[#allocation7 + $0x108] sm:$0xff]
    %v7691 = vld [vmem:[#allocation7 + $0x110] sm:$0xff]
    %v7692 = vld [vmem:[#allocation7 + $0x118] sm:$0xff]
    %v7693 = vld [vmem:[#allocation7 + $0x120] sm:$0xff]
    %v7694 = vld [vmem:[#allocation7 + $0x128] sm:$0xff]
    %v7695 = vld [vmem:[#allocation7 + $0x130] sm:$0xff]
    %v7696 = vld [vmem:[#allocation7 + $0x138] sm:$0xff]
    %v7697 = vld [vmem:[#allocation7 + $0x140] sm:$0xff]
    %v7698 = vld [vmem:[#allocation7 + $0x148] sm:$0xff]
    %v7699 = vld [vmem:[#allocation7 + $0x150] sm:$0xff]
    %v7700 = vld [vmem:[#allocation7 + $0x158] sm:$0xff]
    %v7701 = vld [vmem:[#allocation7 + $0x160] sm:$0xff]
    %v7702 = vld [vmem:[#allocation7 + $0x168] sm:$0xff]
    %v7703 = vld [vmem:[#allocation7 + $0x170] sm:$0xff]
    %v7704 = vld [vmem:[#allocation7 + $0x178] sm:$0xff]
    %v7705 = vld [vmem:[#allocation7 + $0x180] sm:$0xff]
    %v7706 = vld [vmem:[#allocation7 + $0x188] sm:$0xff]
    %v7707 = vld [vmem:[#allocation7 + $0x190] sm:$0xff]
    %v7708 = vld [vmem:[#allocation7 + $0x198] sm:$0xff]
    %v7709 = vld [vmem:[#allocation7 + $0x1a0] sm:$0xff]
    %v7710 = vld [vmem:[#allocation7 + $0x1a8] sm:$0xff]
    %v7711 = vld [vmem:[#allocation7 + $0x1b0] sm:$0xff]
    %v7712 = vld [vmem:[#allocation7 + $0x1b8] sm:$0xff]
    %v7713 = vld [vmem:[#allocation7 + $0x1c0] sm:$0xff]
    %v7714 = vld [vmem:[#allocation7 + $0x1c8] sm:$0xff]
    %v7715 = vld [vmem:[#allocation7 + $0x1d0] sm:$0xff]
    %v7716 = vld [vmem:[#allocation7 + $0x1d8] sm:$0xff]
    %v7717 = vld [vmem:[#allocation7 + $0x1e0] sm:$0xff]
    %v7718 = vld [vmem:[#allocation7 + $0x1e8] sm:$0xff]
    %v7719 = vld [vmem:[#allocation7 + $0x1f0] sm:$0xff]
    %v7720 = vld [vmem:[#allocation7 + $0x1f8] sm:$0xff]
    %v7721 = vld [vmem:[#allocation7 + $0x200] sm:$0xff]
    %v7722 = vld [vmem:[#allocation7 + $0x208] sm:$0xff]
    %v7723 = vld [vmem:[#allocation7 + $0x210] sm:$0xff]
    %v7724 = vld [vmem:[#allocation7 + $0x218] sm:$0xff]
    %v7725 = vld [vmem:[#allocation7 + $0x220] sm:$0xff]
    %v7726 = vld [vmem:[#allocation7 + $0x228] sm:$0xff]
    %v7727 = vld [vmem:[#allocation7 + $0x230] sm:$0xff]
    %v7728 = vld [vmem:[#allocation7 + $0x238] sm:$0xff]
    %v7729 = vld [vmem:[#allocation7 + $0x240] sm:$0xff]
    %v7730 = vld [vmem:[#allocation7 + $0x248] sm:$0xff]
    %v7731 = vld [vmem:[#allocation7 + $0x250] sm:$0xff]
    %v7732 = vld [vmem:[#allocation7 + $0x258] sm:$0xff]
    %v7733 = vld [vmem:[#allocation7 + $0x260] sm:$0xff]
    %v7734 = vld [vmem:[#allocation7 + $0x268] sm:$0xff]
    %v7735 = vld [vmem:[#allocation7 + $0x270] sm:$0xff]
    %v7736 = vld [vmem:[#allocation7 + $0x278] sm:$0xff]
    %v7737 = vld [vmem:[#allocation7 + $0x280] sm:$0xff]
    %v7738 = vld [vmem:[#allocation7 + $0x288] sm:$0xff]
    %v7739 = vld [vmem:[#allocation7 + $0x290] sm:$0xff]
    %v7740 = vld [vmem:[#allocation7 + $0x298] sm:$0xff]
    %v7741 = vld [vmem:[#allocation7 + $0x2a0] sm:$0xff]
    %v7742 = vld [vmem:[#allocation7 + $0x2a8] sm:$0xff]
    %v7743 = vld [vmem:[#allocation7 + $0x2b0] sm:$0xff]
    %v7744 = vld [vmem:[#allocation7 + $0x2b8] sm:$0xff]
    %v7745 = vld [vmem:[#allocation7 + $0x2c0] sm:$0xff]
    %v7746 = vld [vmem:[#allocation7 + $0x2c8] sm:$0xff]
    %v7747 = vld [vmem:[#allocation7 + $0x2d0] sm:$0xff]
    %v7748 = vld [vmem:[#allocation7 + $0x2d8] sm:$0xff]
    %v7749 = vld [vmem:[#allocation7 + $0x2e0] sm:$0xff]
    %v7750 = vld [vmem:[#allocation7 + $0x2e8] sm:$0xff]
    %v7751 = vld [vmem:[#allocation7 + $0x2f0] sm:$0xff]
    %v7752 = vld [vmem:[#allocation7 + $0x2f8] sm:$0xff]
    %v7753 = vld [vmem:[#allocation7 + $0x300] sm:$0xff]
    %v7754 = vld [vmem:[#allocation7 + $0x308] sm:$0xff]
    %v7755 = vld [vmem:[#allocation7 + $0x310] sm:$0xff]
    %v7756 = vld [vmem:[#allocation7 + $0x318] sm:$0xff]
    %v7757 = vld [vmem:[#allocation7 + $0x320] sm:$0xff]
    %v7758 = vld [vmem:[#allocation7 + $0x328] sm:$0xff]
    %v7759 = vld [vmem:[#allocation7 + $0x330] sm:$0xff]
    %v7760 = vld [vmem:[#allocation7 + $0x338] sm:$0xff]
    %v7761 = vld [vmem:[#allocation7 + $0x340] sm:$0xff]
    %v7762 = vld [vmem:[#allocation7 + $0x348] sm:$0xff]
    %v7763 = vld [vmem:[#allocation7 + $0x350] sm:$0xff]
    %v7764 = vld [vmem:[#allocation7 + $0x358] sm:$0xff]
    %v7765 = vld [vmem:[#allocation7 + $0x360] sm:$0xff]
    %v7766 = vld [vmem:[#allocation7 + $0x368] sm:$0xff]
    %v7767 = vld [vmem:[#allocation7 + $0x370] sm:$0xff]
    %v7768 = vld [vmem:[#allocation7 + $0x378] sm:$0xff]
    %v7769 = vld [vmem:[#allocation7 + $0x380] sm:$0xff]
    %v7770 = vld [vmem:[#allocation7 + $0x388] sm:$0xff]
    %v7771 = vld [vmem:[#allocation7 + $0x390] sm:$0xff]
    %v7772 = vld [vmem:[#allocation7 + $0x398] sm:$0xff]
    %v7773 = vld [vmem:[#allocation7 + $0x3a0] sm:$0xff]
    %v7774 = vld [vmem:[#allocation7 + $0x3a8] sm:$0xff]
    %v7775 = vld [vmem:[#allocation7 + $0x3b0] sm:$0xff]
    %v7776 = vld [vmem:[#allocation7 + $0x3b8] sm:$0xff]
    %v7777 = vld [vmem:[#allocation7 + $0x3c0] sm:$0xff]
    %v7778 = vld [vmem:[#allocation7 + $0x3c8] sm:$0xff]
    %v7779 = vld [vmem:[#allocation7 + $0x3d0] sm:$0xff]
    %v7780 = vld [vmem:[#allocation7 + $0x3d8] sm:$0xff]
    %v7781 = vld [vmem:[#allocation7 + $0x3e0] sm:$0xff]
    %v7782 = vld [vmem:[#allocation7 + $0x3e8] sm:$0xff]
    %v7783 = vld [vmem:[#allocation7 + $0x3f0] sm:$0xff]
    %v7784 = vld [vmem:[#allocation7 + $0x3f8] sm:$0xff]
    %v7785 = vld [vmem:[#allocation7 + $0x400] sm:$0xff]
    %v7786 = vld [vmem:[#allocation7 + $0x408] sm:$0xff]
    %v7787 = vld [vmem:[#allocation7 + $0x410] sm:$0xff]
    %v7788 = vld [vmem:[#allocation7 + $0x418] sm:$0xff]
    %v7789 = vld [vmem:[#allocation7 + $0x420] sm:$0xff]
    %v7790 = vld [vmem:[#allocation7 + $0x428] sm:$0xff]
    %v7791 = vld [vmem:[#allocation7 + $0x430] sm:$0xff]
    %v7792 = vld [vmem:[#allocation7 + $0x438] sm:$0xff]
    %v7793 = vld [vmem:[#allocation7 + $0x440] sm:$0xff]
    %v7794 = vld [vmem:[#allocation7 + $0x448] sm:$0xff]
    %v7795 = vld [vmem:[#allocation7 + $0x450] sm:$0xff]
    %v7796 = vld [vmem:[#allocation7 + $0x458] sm:$0xff]
    %v7797 = vld [vmem:[#allocation7 + $0x460] sm:$0xff]
    %v7798 = vld [vmem:[#allocation7 + $0x468] sm:$0xff]
    %v7799 = vld [vmem:[#allocation7 + $0x470] sm:$0xff]
    %v7800 = vld [vmem:[#allocation7 + $0x478] sm:$0xff]
    %v7801 = vld [vmem:[#allocation7 + $0x480] sm:$0xff]
    %v7802 = vld [vmem:[#allocation7 + $0x488] sm:$0xff]
    %v7803 = vld [vmem:[#allocation7 + $0x490] sm:$0xff]
    %v7804 = vld [vmem:[#allocation7 + $0x498] sm:$0xff]
    %v7805 = vld [vmem:[#allocation7 + $0x4a0] sm:$0xff]
    %v7806 = vld [vmem:[#allocation7 + $0x4a8] sm:$0xff]
    %v7807 = vld [vmem:[#allocation7 + $0x4b0] sm:$0xff]
    %v7808 = vld [vmem:[#allocation7 + $0x4b8] sm:$0xff]
    %v7809 = vld [vmem:[#allocation7 + $0x4c0] sm:$0xff]
    %v7810 = vld [vmem:[#allocation7 + $0x4c8] sm:$0xff]
    %v7811 = vld [vmem:[#allocation7 + $0x4d0] sm:$0xff]
    %v7812 = vld [vmem:[#allocation7 + $0x4d8] sm:$0xff]
    %v7813 = vld [vmem:[#allocation7 + $0x4e0] sm:$0xff]
    %v7814 = vld [vmem:[#allocation7 + $0x4e8] sm:$0xff]
    %v7815 = vld [vmem:[#allocation7 + $0x4f0] sm:$0xff]
    %v7816 = vld [vmem:[#allocation7 + $0x4f8] sm:$0xff]
    %v7817 = vld [vmem:[#allocation7 + $0x500] sm:$0xff]
    %v7818 = vld [vmem:[#allocation7 + $0x508] sm:$0xff]
    %v7819 = vld [vmem:[#allocation7 + $0x510] sm:$0xff]
    %v7820 = vld [vmem:[#allocation7 + $0x518] sm:$0xff]
    %v7821 = vld [vmem:[#allocation7 + $0x520] sm:$0xff]
    %v7822 = vld [vmem:[#allocation7 + $0x528] sm:$0xff]
    %v7823 = vld [vmem:[#allocation7 + $0x530] sm:$0xff]
    %v7824 = vld [vmem:[#allocation7 + $0x538] sm:$0xff]
    %v7825 = vld [vmem:[#allocation7 + $0x540] sm:$0xff]
    %v7826 = vld [vmem:[#allocation7 + $0x548] sm:$0xff]
    %v7827 = vld [vmem:[#allocation7 + $0x550] sm:$0xff]
    %v7828 = vld [vmem:[#allocation7 + $0x558] sm:$0xff]
    %v7829 = vld [vmem:[#allocation7 + $0x560] sm:$0xff]
    %v7830 = vld [vmem:[#allocation7 + $0x568] sm:$0xff]
    %v7831 = vld [vmem:[#allocation7 + $0x570] sm:$0xff]
    %v7832 = vld [vmem:[#allocation7 + $0x578] sm:$0xff]
    %v7833 = vld [vmem:[#allocation7 + $0x580] sm:$0xff]
    %v7834 = vld [vmem:[#allocation7 + $0x588] sm:$0xff]
    %v7835 = vld [vmem:[#allocation7 + $0x590] sm:$0xff]
    %v7836 = vld [vmem:[#allocation7 + $0x598] sm:$0xff]
    %v7837 = vld [vmem:[#allocation7 + $0x5a0] sm:$0xff]
    %v7838 = vld [vmem:[#allocation7 + $0x5a8] sm:$0xff]
    %v7839 = vld [vmem:[#allocation7 + $0x5b0] sm:$0xff]
    %v7840 = vld [vmem:[#allocation7 + $0x5b8] sm:$0xff]
    %v7841 = vld [vmem:[#allocation7 + $0x5c0] sm:$0xff]
    %v7842 = vld [vmem:[#allocation7 + $0x5c8] sm:$0xff]
    %v7843 = vld [vmem:[#allocation7 + $0x5d0] sm:$0xff]
    %v7844 = vld [vmem:[#allocation7 + $0x5d8] sm:$0xff]
    %v7845 = vld [vmem:[#allocation7 + $0x5e0] sm:$0xff]
    %v7846 = vld [vmem:[#allocation7 + $0x5e8] sm:$0xff]
    %v7847 = vld [vmem:[#allocation7 + $0x5f0] sm:$0xff]
    %v7848 = vld [vmem:[#allocation7 + $0x5f8] sm:$0xff]
    %v7849 = vld [vmem:[#allocation7 + $0x600] sm:$0xff]
    %v7850 = vld [vmem:[#allocation7 + $0x608] sm:$0xff]
    %v7851 = vld [vmem:[#allocation7 + $0x610] sm:$0xff]
    %v7852 = vld [vmem:[#allocation7 + $0x618] sm:$0xff]
    %v7853 = vld [vmem:[#allocation7 + $0x620] sm:$0xff]
    %v7854 = vld [vmem:[#allocation7 + $0x628] sm:$0xff]
    %v7855 = vld [vmem:[#allocation7 + $0x630] sm:$0xff]
    %v7856 = vld [vmem:[#allocation7 + $0x638] sm:$0xff]
    %v7857 = vld [vmem:[#allocation7 + $0x640] sm:$0xff]
    %v7858 = vld [vmem:[#allocation7 + $0x648] sm:$0xff]
    %v7859 = vld [vmem:[#allocation7 + $0x650] sm:$0xff]
    %v7860 = vld [vmem:[#allocation7 + $0x658] sm:$0xff]
    %v7861 = vld [vmem:[#allocation7 + $0x660] sm:$0xff]
    %v7862 = vld [vmem:[#allocation7 + $0x668] sm:$0xff]
    %v7863 = vld [vmem:[#allocation7 + $0x670] sm:$0xff]
    %v7864 = vld [vmem:[#allocation7 + $0x678] sm:$0xff]
    %v7865 = vld [vmem:[#allocation7 + $0x680] sm:$0xff]
    %v7866 = vld [vmem:[#allocation7 + $0x688] sm:$0xff]
    %v7867 = vld [vmem:[#allocation7 + $0x690] sm:$0xff]
    %v7868 = vld [vmem:[#allocation7 + $0x698] sm:$0xff]
    %v7869 = vld [vmem:[#allocation7 + $0x6a0] sm:$0xff]
    %v7870 = vld [vmem:[#allocation7 + $0x6a8] sm:$0xff]
    %v7871 = vld [vmem:[#allocation7 + $0x6b0] sm:$0xff]
    %v7872 = vld [vmem:[#allocation7 + $0x6b8] sm:$0xff]
    %v7873 = vld [vmem:[#allocation7 + $0x6c0] sm:$0xff]
    %v7874 = vld [vmem:[#allocation7 + $0x6c8] sm:$0xff]
    %v7875 = vld [vmem:[#allocation7 + $0x6d0] sm:$0xff]
    %v7876 = vld [vmem:[#allocation7 + $0x6d8] sm:$0xff]
    %v7877 = vld [vmem:[#allocation7 + $0x6e0] sm:$0xff]
    %v7878 = vld [vmem:[#allocation7 + $0x6e8] sm:$0xff]
    %v7879 = vld [vmem:[#allocation7 + $0x6f0] sm:$0xff]
    %v7880 = vld [vmem:[#allocation7 + $0x6f8] sm:$0xff]
    %v7881 = vld [vmem:[#allocation7 + $0x700] sm:$0xff]
    %v7882 = vld [vmem:[#allocation7 + $0x708] sm:$0xff]
    %v7883 = vld [vmem:[#allocation7 + $0x710] sm:$0xff]
    %v7884 = vld [vmem:[#allocation7 + $0x718] sm:$0xff]
    %v7885 = vld [vmem:[#allocation7 + $0x720] sm:$0xff]
    %v7886 = vld [vmem:[#allocation7 + $0x728] sm:$0xff]
    %v7887 = vld [vmem:[#allocation7 + $0x730] sm:$0xff]
    %v7888 = vld [vmem:[#allocation7 + $0x738] sm:$0xff]
    %v7889 = vld [vmem:[#allocation7 + $0x740] sm:$0xff]
    %v7890 = vld [vmem:[#allocation7 + $0x748] sm:$0xff]
    %v7891 = vld [vmem:[#allocation7 + $0x750] sm:$0xff]
    %v7892 = vld [vmem:[#allocation7 + $0x758] sm:$0xff]
    %v7893 = vld [vmem:[#allocation7 + $0x760] sm:$0xff]
    %v7894 = vld [vmem:[#allocation7 + $0x768] sm:$0xff]
    %v7895 = vld [vmem:[#allocation7 + $0x770] sm:$0xff]
    %v7896 = vld [vmem:[#allocation7 + $0x778] sm:$0xff]
    %v7897 = vld [vmem:[#allocation7 + $0x780] sm:$0xff]
    %v7898 = vld [vmem:[#allocation7 + $0x788] sm:$0xff]
    %v7899 = vld [vmem:[#allocation7 + $0x790] sm:$0xff]
    %v7900 = vld [vmem:[#allocation7 + $0x798] sm:$0xff]
    %v7901 = vld [vmem:[#allocation7 + $0x7a0] sm:$0xff]
    %v7902 = vld [vmem:[#allocation7 + $0x7a8] sm:$0xff]
    %v7903 = vld [vmem:[#allocation7 + $0x7b0] sm:$0xff]
    %v7904 = vld [vmem:[#allocation7 + $0x7b8] sm:$0xff]
    %v7905 = vld [vmem:[#allocation7 + $0x7c0] sm:$0xff]
    %v7906 = vld [vmem:[#allocation7 + $0x7c8] sm:$0xff]
    %v7907 = vld [vmem:[#allocation7 + $0x7d0] sm:$0xff]
    %v7908 = vld [vmem:[#allocation7 + $0x7d8] sm:$0xff]
    %v7909 = vld [vmem:[#allocation7 + $0x7e0] sm:$0xff]
    %v7910 = vld [vmem:[#allocation7 + $0x7e8] sm:$0xff]
    %v7911 = vld [vmem:[#allocation7 + $0x7f0] sm:$0xff]
    %v7912 = vld [vmem:[#allocation7 + $0x7f8] sm:$0xff]
    %v7913 = vld [vmem:[#allocation8] sm:$0xf]
    %v7915 = vlaneseq
    %v7916 = vshrl.u32 %v7915, 7
    %v7917 = vsub.s32 0, %v7916
    %v7918 = vrot.slane %v7913, %v7917
    %v7919 = vlaneseq
    %v7920 = vshrl.u32 %v7919, 7
    %v7921 = vsub.s32 1, %v7920
    %v7922 = vrot.slane %v7913, %v7921
    %v7923 = vlaneseq
    %v7924 = vshrl.u32 %v7923, 7
    %v7925 = vsub.s32 2, %v7924
    %v7926 = vrot.slane %v7913, %v7925
    %v7927 = vlaneseq
    %v7928 = vshrl.u32 %v7927, 7
    %v7929 = vsub.s32 3, %v7928
    %v7930 = vrot.slane %v7913, %v7929
    %v8191 = vunpack.c.l.b16 %v7657
    %v8192 = vunpack.c.h.b16 %v7657
    %v8193 = vunpack.c.l.b16 %v7658
    %v8194 = vunpack.c.h.b16 %v7658
    %v8195 = vunpack.c.l.b16 %v7659
    %v8196 = vunpack.c.h.b16 %v7659
    %v8197 = vunpack.c.l.b16 %v7660
    %v8198 = vunpack.c.h.b16 %v7660
    %v8199 = vunpack.c.l.b16 %v7661
    %v8200 = vunpack.c.h.b16 %v7661
    %v8201 = vunpack.c.l.b16 %v7662
    %v8202 = vunpack.c.h.b16 %v7662
    %v8203 = vunpack.c.l.b16 %v7663
    %v8204 = vunpack.c.h.b16 %v7663
    %v8205 = vunpack.c.l.b16 %v7664
    %v8206 = vunpack.c.h.b16 %v7664
    %v8207 = vunpack.c.l.b16 %v7665
    %v8208 = vunpack.c.h.b16 %v7665
    %v8209 = vunpack.c.l.b16 %v7666
    %v8210 = vunpack.c.h.b16 %v7666
    %v8211 = vunpack.c.l.b16 %v7667
    %v8212 = vunpack.c.h.b16 %v7667
    %v8213 = vunpack.c.l.b16 %v7668
    %v8214 = vunpack.c.h.b16 %v7668
    %v8215 = vunpack.c.l.b16 %v7669
    %v8216 = vunpack.c.h.b16 %v7669
    %v8217 = vunpack.c.l.b16 %v7670
    %v8218 = vunpack.c.h.b16 %v7670
    %v8219 = vunpack.c.l.b16 %v7671
    %v8220 = vunpack.c.h.b16 %v7671
    %v8221 = vunpack.c.l.b16 %v7672
    %v8222 = vunpack.c.h.b16 %v7672
    %v8223 = vunpack.c.l.b16 %v7673
    %v8224 = vunpack.c.h.b16 %v7673
    %v8225 = vunpack.c.l.b16 %v7674
    %v8226 = vunpack.c.h.b16 %v7674
    %v8227 = vunpack.c.l.b16 %v7675
    %v8228 = vunpack.c.h.b16 %v7675
    %v8229 = vunpack.c.l.b16 %v7676
    %v8230 = vunpack.c.h.b16 %v7676
    %v8231 = vunpack.c.l.b16 %v7677
    %v8232 = vunpack.c.h.b16 %v7677
    %v8233 = vunpack.c.l.b16 %v7678
    %v8234 = vunpack.c.h.b16 %v7678
    %v8235 = vunpack.c.l.b16 %v7679
    %v8236 = vunpack.c.h.b16 %v7679
    %v8237 = vunpack.c.l.b16 %v7680
    %v8238 = vunpack.c.h.b16 %v7680
    %v8239 = vunpack.c.l.b16 %v7681
    %v8240 = vunpack.c.h.b16 %v7681
    %v8241 = vunpack.c.l.b16 %v7682
    %v8242 = vunpack.c.h.b16 %v7682
    %v8243 = vunpack.c.l.b16 %v7683
    %v8244 = vunpack.c.h.b16 %v7683
    %v8245 = vunpack.c.l.b16 %v7684
    %v8246 = vunpack.c.h.b16 %v7684
    %v8247 = vunpack.c.l.b16 %v7685
    %v8248 = vunpack.c.h.b16 %v7685
    %v8249 = vunpack.c.l.b16 %v7686
    %v8250 = vunpack.c.h.b16 %v7686
    %v8251 = vunpack.c.l.b16 %v7687
    %v8252 = vunpack.c.h.b16 %v7687
    %v8253 = vunpack.c.l.b16 %v7688
    %v8254 = vunpack.c.h.b16 %v7688
    %v8255 = vunpack.c.l.b16 %v7689
    %v8256 = vunpack.c.h.b16 %v7689
    %v8257 = vunpack.c.l.b16 %v7690
    %v8258 = vunpack.c.h.b16 %v7690
    %v8259 = vunpack.c.l.b16 %v7691
    %v8260 = vunpack.c.h.b16 %v7691
    %v8261 = vunpack.c.l.b16 %v7692
    %v8262 = vunpack.c.h.b16 %v7692
    %v8263 = vunpack.c.l.b16 %v7693
    %v8264 = vunpack.c.h.b16 %v7693
    %v8265 = vunpack.c.l.b16 %v7694
    %v8266 = vunpack.c.h.b16 %v7694
    %v8267 = vunpack.c.l.b16 %v7695
    %v8268 = vunpack.c.h.b16 %v7695
    %v8269 = vunpack.c.l.b16 %v7696
    %v8270 = vunpack.c.h.b16 %v7696
    %v8271 = vunpack.c.l.b16 %v7697
    %v8272 = vunpack.c.h.b16 %v7697
    %v8273 = vunpack.c.l.b16 %v7698
    %v8274 = vunpack.c.h.b16 %v7698
    %v8275 = vunpack.c.l.b16 %v7699
    %v8276 = vunpack.c.h.b16 %v7699
    %v8277 = vunpack.c.l.b16 %v7700
    %v8278 = vunpack.c.h.b16 %v7700
    %v8279 = vunpack.c.l.b16 %v7701
    %v8280 = vunpack.c.h.b16 %v7701
    %v8281 = vunpack.c.l.b16 %v7702
    %v8282 = vunpack.c.h.b16 %v7702
    %v8283 = vunpack.c.l.b16 %v7703
    %v8284 = vunpack.c.h.b16 %v7703
    %v8285 = vunpack.c.l.b16 %v7704
    %v8286 = vunpack.c.h.b16 %v7704
    %v8287 = vunpack.c.l.b16 %v7705
    %v8288 = vunpack.c.h.b16 %v7705
    %v8289 = vunpack.c.l.b16 %v7706
    %v8290 = vunpack.c.h.b16 %v7706
    %v8291 = vunpack.c.l.b16 %v7707
    %v8292 = vunpack.c.h.b16 %v7707
    %v8293 = vunpack.c.l.b16 %v7708
    %v8294 = vunpack.c.h.b16 %v7708
    %v8295 = vunpack.c.l.b16 %v7709
    %v8296 = vunpack.c.h.b16 %v7709
    %v8297 = vunpack.c.l.b16 %v7710
    %v8298 = vunpack.c.h.b16 %v7710
    %v8299 = vunpack.c.l.b16 %v7711
    %v8300 = vunpack.c.h.b16 %v7711
    %v8301 = vunpack.c.l.b16 %v7712
    %v8302 = vunpack.c.h.b16 %v7712
    %v8303 = vunpack.c.l.b16 %v7713
    %v8304 = vunpack.c.h.b16 %v7713
    %v8305 = vunpack.c.l.b16 %v7714
    %v8306 = vunpack.c.h.b16 %v7714
    %v8307 = vunpack.c.l.b16 %v7715
    %v8308 = vunpack.c.h.b16 %v7715
    %v8309 = vunpack.c.l.b16 %v7716
    %v8310 = vunpack.c.h.b16 %v7716
    %v8311 = vunpack.c.l.b16 %v7717
    %v8312 = vunpack.c.h.b16 %v7717
    %v8313 = vunpack.c.l.b16 %v7718
    %v8314 = vunpack.c.h.b16 %v7718
    %v8315 = vunpack.c.l.b16 %v7719
    %v8316 = vunpack.c.h.b16 %v7719
    %v8317 = vunpack.c.l.b16 %v7720
    %v8318 = vunpack.c.h.b16 %v7720
    %v8319 = vunpack.c.l.b16 %v7721
    %v8320 = vunpack.c.h.b16 %v7721
    %v8321 = vunpack.c.l.b16 %v7722
    %v8322 = vunpack.c.h.b16 %v7722
    %v8323 = vunpack.c.l.b16 %v7723
    %v8324 = vunpack.c.h.b16 %v7723
    %v8325 = vunpack.c.l.b16 %v7724
    %v8326 = vunpack.c.h.b16 %v7724
    %v8327 = vunpack.c.l.b16 %v7725
    %v8328 = vunpack.c.h.b16 %v7725
    %v8329 = vunpack.c.l.b16 %v7726
    %v8330 = vunpack.c.h.b16 %v7726
    %v8331 = vunpack.c.l.b16 %v7727
    %v8332 = vunpack.c.h.b16 %v7727
    %v8333 = vunpack.c.l.b16 %v7728
    %v8334 = vunpack.c.h.b16 %v7728
    %v8335 = vunpack.c.l.b16 %v7729
    %v8336 = vunpack.c.h.b16 %v7729
    %v8337 = vunpack.c.l.b16 %v7730
    %v8338 = vunpack.c.h.b16 %v7730
    %v8339 = vunpack.c.l.b16 %v7731
    %v8340 = vunpack.c.h.b16 %v7731
    %v8341 = vunpack.c.l.b16 %v7732
    %v8342 = vunpack.c.h.b16 %v7732
    %v8343 = vunpack.c.l.b16 %v7733
    %v8344 = vunpack.c.h.b16 %v7733
    %v8345 = vunpack.c.l.b16 %v7734
    %v8346 = vunpack.c.h.b16 %v7734
    %v8347 = vunpack.c.l.b16 %v7735
    %v8348 = vunpack.c.h.b16 %v7735
    %v8349 = vunpack.c.l.b16 %v7736
    %v8350 = vunpack.c.h.b16 %v7736
    %v8351 = vunpack.c.l.b16 %v7737
    %v8352 = vunpack.c.h.b16 %v7737
    %v8353 = vunpack.c.l.b16 %v7738
    %v8354 = vunpack.c.h.b16 %v7738
    %v8355 = vunpack.c.l.b16 %v7739
    %v8356 = vunpack.c.h.b16 %v7739
    %v8357 = vunpack.c.l.b16 %v7740
    %v8358 = vunpack.c.h.b16 %v7740
    %v8359 = vunpack.c.l.b16 %v7741
    %v8360 = vunpack.c.h.b16 %v7741
    %v8361 = vunpack.c.l.b16 %v7742
    %v8362 = vunpack.c.h.b16 %v7742
    %v8363 = vunpack.c.l.b16 %v7743
    %v8364 = vunpack.c.h.b16 %v7743
    %v8365 = vunpack.c.l.b16 %v7744
    %v8366 = vunpack.c.h.b16 %v7744
    %v8367 = vunpack.c.l.b16 %v7745
    %v8368 = vunpack.c.h.b16 %v7745
    %v8369 = vunpack.c.l.b16 %v7746
    %v8370 = vunpack.c.h.b16 %v7746
    %v8371 = vunpack.c.l.b16 %v7747
    %v8372 = vunpack.c.h.b16 %v7747
    %v8373 = vunpack.c.l.b16 %v7748
    %v8374 = vunpack.c.h.b16 %v7748
    %v8375 = vunpack.c.l.b16 %v7749
    %v8376 = vunpack.c.h.b16 %v7749
    %v8377 = vunpack.c.l.b16 %v7750
    %v8378 = vunpack.c.h.b16 %v7750
    %v8379 = vunpack.c.l.b16 %v7751
    %v8380 = vunpack.c.h.b16 %v7751
    %v8381 = vunpack.c.l.b16 %v7752
    %v8382 = vunpack.c.h.b16 %v7752
    %v8383 = vunpack.c.l.b16 %v7753
    %v8384 = vunpack.c.h.b16 %v7753
    %v8385 = vunpack.c.l.b16 %v7754
    %v8386 = vunpack.c.h.b16 %v7754
    %v8387 = vunpack.c.l.b16 %v7755
    %v8388 = vunpack.c.h.b16 %v7755
    %v8389 = vunpack.c.l.b16 %v7756
    %v8390 = vunpack.c.h.b16 %v7756
    %v8391 = vunpack.c.l.b16 %v7757
    %v8392 = vunpack.c.h.b16 %v7757
    %v8393 = vunpack.c.l.b16 %v7758
    %v8394 = vunpack.c.h.b16 %v7758
    %v8395 = vunpack.c.l.b16 %v7759
    %v8396 = vunpack.c.h.b16 %v7759
    %v8397 = vunpack.c.l.b16 %v7760
    %v8398 = vunpack.c.h.b16 %v7760
    %v8399 = vunpack.c.l.b16 %v7761
    %v8400 = vunpack.c.h.b16 %v7761
    %v8401 = vunpack.c.l.b16 %v7762
    %v8402 = vunpack.c.h.b16 %v7762
    %v8403 = vunpack.c.l.b16 %v7763
    %v8404 = vunpack.c.h.b16 %v7763
    %v8405 = vunpack.c.l.b16 %v7764
    %v8406 = vunpack.c.h.b16 %v7764
    %v8407 = vunpack.c.l.b16 %v7765
    %v8408 = vunpack.c.h.b16 %v7765
    %v8409 = vunpack.c.l.b16 %v7766
    %v8410 = vunpack.c.h.b16 %v7766
    %v8411 = vunpack.c.l.b16 %v7767
    %v8412 = vunpack.c.h.b16 %v7767
    %v8413 = vunpack.c.l.b16 %v7768
    %v8414 = vunpack.c.h.b16 %v7768
    %v8415 = vunpack.c.l.b16 %v7769
    %v8416 = vunpack.c.h.b16 %v7769
    %v8417 = vunpack.c.l.b16 %v7770
    %v8418 = vunpack.c.h.b16 %v7770
    %v8419 = vunpack.c.l.b16 %v7771
    %v8420 = vunpack.c.h.b16 %v7771
    %v8421 = vunpack.c.l.b16 %v7772
    %v8422 = vunpack.c.h.b16 %v7772
    %v8423 = vunpack.c.l.b16 %v7773
    %v8424 = vunpack.c.h.b16 %v7773
    %v8425 = vunpack.c.l.b16 %v7774
    %v8426 = vunpack.c.h.b16 %v7774
    %v8427 = vunpack.c.l.b16 %v7775
    %v8428 = vunpack.c.h.b16 %v7775
    %v8429 = vunpack.c.l.b16 %v7776
    %v8430 = vunpack.c.h.b16 %v7776
    %v8431 = vunpack.c.l.b16 %v7777
    %v8432 = vunpack.c.h.b16 %v7777
    %v8433 = vunpack.c.l.b16 %v7778
    %v8434 = vunpack.c.h.b16 %v7778
    %v8435 = vunpack.c.l.b16 %v7779
    %v8436 = vunpack.c.h.b16 %v7779
    %v8437 = vunpack.c.l.b16 %v7780
    %v8438 = vunpack.c.h.b16 %v7780
    %v8439 = vunpack.c.l.b16 %v7781
    %v8440 = vunpack.c.h.b16 %v7781
    %v8441 = vunpack.c.l.b16 %v7782
    %v8442 = vunpack.c.h.b16 %v7782
    %v8443 = vunpack.c.l.b16 %v7783
    %v8444 = vunpack.c.h.b16 %v7783
    %v8445 = vunpack.c.l.b16 %v7784
    %v8446 = vunpack.c.h.b16 %v7784
    %v8447 = vunpack.c.l.b16 %v7785
    %v8448 = vunpack.c.h.b16 %v7785
    %v8449 = vunpack.c.l.b16 %v7786
    %v8450 = vunpack.c.h.b16 %v7786
    %v8451 = vunpack.c.l.b16 %v7787
    %v8452 = vunpack.c.h.b16 %v7787
    %v8453 = vunpack.c.l.b16 %v7788
    %v8454 = vunpack.c.h.b16 %v7788
    %v8455 = vunpack.c.l.b16 %v7789
    %v8456 = vunpack.c.h.b16 %v7789
    %v8457 = vunpack.c.l.b16 %v7790
    %v8458 = vunpack.c.h.b16 %v7790
    %v8459 = vunpack.c.l.b16 %v7791
    %v8460 = vunpack.c.h.b16 %v7791
    %v8461 = vunpack.c.l.b16 %v7792
    %v8462 = vunpack.c.h.b16 %v7792
    %v8463 = vunpack.c.l.b16 %v7793
    %v8464 = vunpack.c.h.b16 %v7793
    %v8465 = vunpack.c.l.b16 %v7794
    %v8466 = vunpack.c.h.b16 %v7794
    %v8467 = vunpack.c.l.b16 %v7795
    %v8468 = vunpack.c.h.b16 %v7795
    %v8469 = vunpack.c.l.b16 %v7796
    %v8470 = vunpack.c.h.b16 %v7796
    %v8471 = vunpack.c.l.b16 %v7797
    %v8472 = vunpack.c.h.b16 %v7797
    %v8473 = vunpack.c.l.b16 %v7798
    %v8474 = vunpack.c.h.b16 %v7798
    %v8475 = vunpack.c.l.b16 %v7799
    %v8476 = vunpack.c.h.b16 %v7799
    %v8477 = vunpack.c.l.b16 %v7800
    %v8478 = vunpack.c.h.b16 %v7800
    %v8479 = vunpack.c.l.b16 %v7801
    %v8480 = vunpack.c.h.b16 %v7801
    %v8481 = vunpack.c.l.b16 %v7802
    %v8482 = vunpack.c.h.b16 %v7802
    %v8483 = vunpack.c.l.b16 %v7803
    %v8484 = vunpack.c.h.b16 %v7803
    %v8485 = vunpack.c.l.b16 %v7804
    %v8486 = vunpack.c.h.b16 %v7804
    %v8487 = vunpack.c.l.b16 %v7805
    %v8488 = vunpack.c.h.b16 %v7805
    %v8489 = vunpack.c.l.b16 %v7806
    %v8490 = vunpack.c.h.b16 %v7806
    %v8491 = vunpack.c.l.b16 %v7807
    %v8492 = vunpack.c.h.b16 %v7807
    %v8493 = vunpack.c.l.b16 %v7808
    %v8494 = vunpack.c.h.b16 %v7808
    %v8495 = vunpack.c.l.b16 %v7809
    %v8496 = vunpack.c.h.b16 %v7809
    %v8497 = vunpack.c.l.b16 %v7810
    %v8498 = vunpack.c.h.b16 %v7810
    %v8499 = vunpack.c.l.b16 %v7811
    %v8500 = vunpack.c.h.b16 %v7811
    %v8501 = vunpack.c.l.b16 %v7812
    %v8502 = vunpack.c.h.b16 %v7812
    %v8503 = vunpack.c.l.b16 %v7813
    %v8504 = vunpack.c.h.b16 %v7813
    %v8505 = vunpack.c.l.b16 %v7814
    %v8506 = vunpack.c.h.b16 %v7814
    %v8507 = vunpack.c.l.b16 %v7815
    %v8508 = vunpack.c.h.b16 %v7815
    %v8509 = vunpack.c.l.b16 %v7816
    %v8510 = vunpack.c.h.b16 %v7816
    %v8511 = vunpack.c.l.b16 %v7817
    %v8512 = vunpack.c.h.b16 %v7817
    %v8513 = vunpack.c.l.b16 %v7818
    %v8514 = vunpack.c.h.b16 %v7818
    %v8515 = vunpack.c.l.b16 %v7819
    %v8516 = vunpack.c.h.b16 %v7819
    %v8517 = vunpack.c.l.b16 %v7820
    %v8518 = vunpack.c.h.b16 %v7820
    %v8519 = vunpack.c.l.b16 %v7821
    %v8520 = vunpack.c.h.b16 %v7821
    %v8521 = vunpack.c.l.b16 %v7822
    %v8522 = vunpack.c.h.b16 %v7822
    %v8523 = vunpack.c.l.b16 %v7823
    %v8524 = vunpack.c.h.b16 %v7823
    %v8525 = vunpack.c.l.b16 %v7824
    %v8526 = vunpack.c.h.b16 %v7824
    %v8527 = vunpack.c.l.b16 %v7825
    %v8528 = vunpack.c.h.b16 %v7825
    %v8529 = vunpack.c.l.b16 %v7826
    %v8530 = vunpack.c.h.b16 %v7826
    %v8531 = vunpack.c.l.b16 %v7827
    %v8532 = vunpack.c.h.b16 %v7827
    %v8533 = vunpack.c.l.b16 %v7828
    %v8534 = vunpack.c.h.b16 %v7828
    %v8535 = vunpack.c.l.b16 %v7829
    %v8536 = vunpack.c.h.b16 %v7829
    %v8537 = vunpack.c.l.b16 %v7830
    %v8538 = vunpack.c.h.b16 %v7830
    %v8539 = vunpack.c.l.b16 %v7831
    %v8540 = vunpack.c.h.b16 %v7831
    %v8541 = vunpack.c.l.b16 %v7832
    %v8542 = vunpack.c.h.b16 %v7832
    %v8543 = vunpack.c.l.b16 %v7833
    %v8544 = vunpack.c.h.b16 %v7833
    %v8545 = vunpack.c.l.b16 %v7834
    %v8546 = vunpack.c.h.b16 %v7834
    %v8547 = vunpack.c.l.b16 %v7835
    %v8548 = vunpack.c.h.b16 %v7835
    %v8549 = vunpack.c.l.b16 %v7836
    %v8550 = vunpack.c.h.b16 %v7836
    %v8551 = vunpack.c.l.b16 %v7837
    %v8552 = vunpack.c.h.b16 %v7837
    %v8553 = vunpack.c.l.b16 %v7838
    %v8554 = vunpack.c.h.b16 %v7838
    %v8555 = vunpack.c.l.b16 %v7839
    %v8556 = vunpack.c.h.b16 %v7839
    %v8557 = vunpack.c.l.b16 %v7840
    %v8558 = vunpack.c.h.b16 %v7840
    %v8559 = vunpack.c.l.b16 %v7841
    %v8560 = vunpack.c.h.b16 %v7841
    %v8561 = vunpack.c.l.b16 %v7842
    %v8562 = vunpack.c.h.b16 %v7842
    %v8563 = vunpack.c.l.b16 %v7843
    %v8564 = vunpack.c.h.b16 %v7843
    %v8565 = vunpack.c.l.b16 %v7844
    %v8566 = vunpack.c.h.b16 %v7844
    %v8567 = vunpack.c.l.b16 %v7845
    %v8568 = vunpack.c.h.b16 %v7845
    %v8569 = vunpack.c.l.b16 %v7846
    %v8570 = vunpack.c.h.b16 %v7846
    %v8571 = vunpack.c.l.b16 %v7847
    %v8572 = vunpack.c.h.b16 %v7847
    %v8573 = vunpack.c.l.b16 %v7848
    %v8574 = vunpack.c.h.b16 %v7848
    %v8575 = vunpack.c.l.b16 %v7849
    %v8576 = vunpack.c.h.b16 %v7849
    %v8577 = vunpack.c.l.b16 %v7850
    %v8578 = vunpack.c.h.b16 %v7850
    %v8579 = vunpack.c.l.b16 %v7851
    %v8580 = vunpack.c.h.b16 %v7851
    %v8581 = vunpack.c.l.b16 %v7852
    %v8582 = vunpack.c.h.b16 %v7852
    %v8583 = vunpack.c.l.b16 %v7853
    %v8584 = vunpack.c.h.b16 %v7853
    %v8585 = vunpack.c.l.b16 %v7854
    %v8586 = vunpack.c.h.b16 %v7854
    %v8587 = vunpack.c.l.b16 %v7855
    %v8588 = vunpack.c.h.b16 %v7855
    %v8589 = vunpack.c.l.b16 %v7856
    %v8590 = vunpack.c.h.b16 %v7856
    %v8591 = vunpack.c.l.b16 %v7857
    %v8592 = vunpack.c.h.b16 %v7857
    %v8593 = vunpack.c.l.b16 %v7858
    %v8594 = vunpack.c.h.b16 %v7858
    %v8595 = vunpack.c.l.b16 %v7859
    %v8596 = vunpack.c.h.b16 %v7859
    %v8597 = vunpack.c.l.b16 %v7860
    %v8598 = vunpack.c.h.b16 %v7860
    %v8599 = vunpack.c.l.b16 %v7861
    %v8600 = vunpack.c.h.b16 %v7861
    %v8601 = vunpack.c.l.b16 %v7862
    %v8602 = vunpack.c.h.b16 %v7862
    %v8603 = vunpack.c.l.b16 %v7863
    %v8604 = vunpack.c.h.b16 %v7863
    %v8605 = vunpack.c.l.b16 %v7864
    %v8606 = vunpack.c.h.b16 %v7864
    %v8607 = vunpack.c.l.b16 %v7865
    %v8608 = vunpack.c.h.b16 %v7865
    %v8609 = vunpack.c.l.b16 %v7866
    %v8610 = vunpack.c.h.b16 %v7866
    %v8611 = vunpack.c.l.b16 %v7867
    %v8612 = vunpack.c.h.b16 %v7867
    %v8613 = vunpack.c.l.b16 %v7868
    %v8614 = vunpack.c.h.b16 %v7868
    %v8615 = vunpack.c.l.b16 %v7869
    %v8616 = vunpack.c.h.b16 %v7869
    %v8617 = vunpack.c.l.b16 %v7870
    %v8618 = vunpack.c.h.b16 %v7870
    %v8619 = vunpack.c.l.b16 %v7871
    %v8620 = vunpack.c.h.b16 %v7871
    %v8621 = vunpack.c.l.b16 %v7872
    %v8622 = vunpack.c.h.b16 %v7872
    %v8623 = vunpack.c.l.b16 %v7873
    %v8624 = vunpack.c.h.b16 %v7873
    %v8625 = vunpack.c.l.b16 %v7874
    %v8626 = vunpack.c.h.b16 %v7874
    %v8627 = vunpack.c.l.b16 %v7875
    %v8628 = vunpack.c.h.b16 %v7875
    %v8629 = vunpack.c.l.b16 %v7876
    %v8630 = vunpack.c.h.b16 %v7876
    %v8631 = vunpack.c.l.b16 %v7877
    %v8632 = vunpack.c.h.b16 %v7877
    %v8633 = vunpack.c.l.b16 %v7878
    %v8634 = vunpack.c.h.b16 %v7878
    %v8635 = vunpack.c.l.b16 %v7879
    %v8636 = vunpack.c.h.b16 %v7879
    %v8637 = vunpack.c.l.b16 %v7880
    %v8638 = vunpack.c.h.b16 %v7880
    %v8639 = vunpack.c.l.b16 %v7881
    %v8640 = vunpack.c.h.b16 %v7881
    %v8641 = vunpack.c.l.b16 %v7882
    %v8642 = vunpack.c.h.b16 %v7882
    %v8643 = vunpack.c.l.b16 %v7883
    %v8644 = vunpack.c.h.b16 %v7883
    %v8645 = vunpack.c.l.b16 %v7884
    %v8646 = vunpack.c.h.b16 %v7884
    %v8647 = vunpack.c.l.b16 %v7885
    %v8648 = vunpack.c.h.b16 %v7885
    %v8649 = vunpack.c.l.b16 %v7886
    %v8650 = vunpack.c.h.b16 %v7886
    %v8651 = vunpack.c.l.b16 %v7887
    %v8652 = vunpack.c.h.b16 %v7887
    %v8653 = vunpack.c.l.b16 %v7888
    %v8654 = vunpack.c.h.b16 %v7888
    %v8655 = vunpack.c.l.b16 %v7889
    %v8656 = vunpack.c.h.b16 %v7889
    %v8657 = vunpack.c.l.b16 %v7890
    %v8658 = vunpack.c.h.b16 %v7890
    %v8659 = vunpack.c.l.b16 %v7891
    %v8660 = vunpack.c.h.b16 %v7891
    %v8661 = vunpack.c.l.b16 %v7892
    %v8662 = vunpack.c.h.b16 %v7892
    %v8663 = vunpack.c.l.b16 %v7893
    %v8664 = vunpack.c.h.b16 %v7893
    %v8665 = vunpack.c.l.b16 %v7894
    %v8666 = vunpack.c.h.b16 %v7894
    %v8667 = vunpack.c.l.b16 %v7895
    %v8668 = vunpack.c.h.b16 %v7895
    %v8669 = vunpack.c.l.b16 %v7896
    %v8670 = vunpack.c.h.b16 %v7896
    %v8671 = vunpack.c.l.b16 %v7897
    %v8672 = vunpack.c.h.b16 %v7897
    %v8673 = vunpack.c.l.b16 %v7898
    %v8674 = vunpack.c.h.b16 %v7898
    %v8675 = vunpack.c.l.b16 %v7899
    %v8676 = vunpack.c.h.b16 %v7899
    %v8677 = vunpack.c.l.b16 %v7900
    %v8678 = vunpack.c.h.b16 %v7900
    %v8679 = vunpack.c.l.b16 %v7901
    %v8680 = vunpack.c.h.b16 %v7901
    %v8681 = vunpack.c.l.b16 %v7902
    %v8682 = vunpack.c.h.b16 %v7902
    %v8683 = vunpack.c.l.b16 %v7903
    %v8684 = vunpack.c.h.b16 %v7903
    %v8685 = vunpack.c.l.b16 %v7904
    %v8686 = vunpack.c.h.b16 %v7904
    %v8687 = vunpack.c.l.b16 %v7905
    %v8688 = vunpack.c.h.b16 %v7905
    %v8689 = vunpack.c.l.b16 %v7906
    %v8690 = vunpack.c.h.b16 %v7906
    %v8691 = vunpack.c.l.b16 %v7907
    %v8692 = vunpack.c.h.b16 %v7907
    %v8693 = vunpack.c.l.b16 %v7908
    %v8694 = vunpack.c.h.b16 %v7908
    %v8695 = vunpack.c.l.b16 %v7909
    %v8696 = vunpack.c.h.b16 %v7909
    %v8697 = vunpack.c.l.b16 %v7910
    %v8698 = vunpack.c.h.b16 %v7910
    %v8699 = vunpack.c.l.b16 %v7911
    %v8700 = vunpack.c.h.b16 %v7911
    %v8701 = vunpack.c.l.b16 %v7912
    %v8702 = vunpack.c.h.b16 %v7912
    %v8703 = vpack.c.b16 %v8195, %v8191
    %v8704 = vpack.c.b16 %v8196, %v8192
    %v8705 = vpack.c.b16 %v8197, %v8193
    %v8706 = vpack.c.b16 %v8198, %v8194
    %v8707 = vpack.c.b16 %v8203, %v8199
    %v8708 = vpack.c.b16 %v8204, %v8200
    %v8709 = vpack.c.b16 %v8205, %v8201
    %v8710 = vpack.c.b16 %v8206, %v8202
    %v8711 = vpack.c.b16 %v8211, %v8207
    %v8712 = vpack.c.b16 %v8212, %v8208
    %v8713 = vpack.c.b16 %v8213, %v8209
    %v8714 = vpack.c.b16 %v8214, %v8210
    %v8715 = vpack.c.b16 %v8219, %v8215
    %v8716 = vpack.c.b16 %v8220, %v8216
    %v8717 = vpack.c.b16 %v8221, %v8217
    %v8718 = vpack.c.b16 %v8222, %v8218
    %v8719 = vpack.c.b16 %v8227, %v8223
    %v8720 = vpack.c.b16 %v8228, %v8224
    %v8721 = vpack.c.b16 %v8229, %v8225
    %v8722 = vpack.c.b16 %v8230, %v8226
    %v8723 = vpack.c.b16 %v8235, %v8231
    %v8724 = vpack.c.b16 %v8236, %v8232
    %v8725 = vpack.c.b16 %v8237, %v8233
    %v8726 = vpack.c.b16 %v8238, %v8234
    %v8727 = vpack.c.b16 %v8243, %v8239
    %v8728 = vpack.c.b16 %v8244, %v8240
    %v8729 = vpack.c.b16 %v8245, %v8241
    %v8730 = vpack.c.b16 %v8246, %v8242
    %v8731 = vpack.c.b16 %v8251, %v8247
    %v8732 = vpack.c.b16 %v8252, %v8248
    %v8733 = vpack.c.b16 %v8253, %v8249
    %v8734 = vpack.c.b16 %v8254, %v8250
    %v8735 = vpack.c.b16 %v8259, %v8255
    %v8736 = vpack.c.b16 %v8260, %v8256
    %v8737 = vpack.c.b16 %v8261, %v8257
    %v8738 = vpack.c.b16 %v8262, %v8258
    %v8739 = vpack.c.b16 %v8267, %v8263
    %v8740 = vpack.c.b16 %v8268, %v8264
    %v8741 = vpack.c.b16 %v8269, %v8265
    %v8742 = vpack.c.b16 %v8270, %v8266
    %v8743 = vpack.c.b16 %v8275, %v8271
    %v8744 = vpack.c.b16 %v8276, %v8272
    %v8745 = vpack.c.b16 %v8277, %v8273
    %v8746 = vpack.c.b16 %v8278, %v8274
    %v8747 = vpack.c.b16 %v8283, %v8279
    %v8748 = vpack.c.b16 %v8284, %v8280
    %v8749 = vpack.c.b16 %v8285, %v8281
    %v8750 = vpack.c.b16 %v8286, %v8282
    %v8751 = vpack.c.b16 %v8291, %v8287
    %v8752 = vpack.c.b16 %v8292, %v8288
    %v8753 = vpack.c.b16 %v8293, %v8289
    %v8754 = vpack.c.b16 %v8294, %v8290
    %v8755 = vpack.c.b16 %v8299, %v8295
    %v8756 = vpack.c.b16 %v8300, %v8296
    %v8757 = vpack.c.b16 %v8301, %v8297
    %v8758 = vpack.c.b16 %v8302, %v8298
    %v8759 = vpack.c.b16 %v8307, %v8303
    %v8760 = vpack.c.b16 %v8308, %v8304
    %v8761 = vpack.c.b16 %v8309, %v8305
    %v8762 = vpack.c.b16 %v8310, %v8306
    %v8763 = vpack.c.b16 %v8315, %v8311
    %v8764 = vpack.c.b16 %v8316, %v8312
    %v8765 = vpack.c.b16 %v8317, %v8313
    %v8766 = vpack.c.b16 %v8318, %v8314
    %v8767 = vpack.c.b16 %v8323, %v8319
    %v8768 = vpack.c.b16 %v8324, %v8320
    %v8769 = vpack.c.b16 %v8325, %v8321
    %v8770 = vpack.c.b16 %v8326, %v8322
    %v8771 = vpack.c.b16 %v8331, %v8327
    %v8772 = vpack.c.b16 %v8332, %v8328
    %v8773 = vpack.c.b16 %v8333, %v8329
    %v8774 = vpack.c.b16 %v8334, %v8330
    %v8775 = vpack.c.b16 %v8339, %v8335
    %v8776 = vpack.c.b16 %v8340, %v8336
    %v8777 = vpack.c.b16 %v8341, %v8337
    %v8778 = vpack.c.b16 %v8342, %v8338
    %v8779 = vpack.c.b16 %v8347, %v8343
    %v8780 = vpack.c.b16 %v8348, %v8344
    %v8781 = vpack.c.b16 %v8349, %v8345
    %v8782 = vpack.c.b16 %v8350, %v8346
    %v8783 = vpack.c.b16 %v8355, %v8351
    %v8784 = vpack.c.b16 %v8356, %v8352
    %v8785 = vpack.c.b16 %v8357, %v8353
    %v8786 = vpack.c.b16 %v8358, %v8354
    %v8787 = vpack.c.b16 %v8363, %v8359
    %v8788 = vpack.c.b16 %v8364, %v8360
    %v8789 = vpack.c.b16 %v8365, %v8361
    %v8790 = vpack.c.b16 %v8366, %v8362
    %v8791 = vpack.c.b16 %v8371, %v8367
    %v8792 = vpack.c.b16 %v8372, %v8368
    %v8793 = vpack.c.b16 %v8373, %v8369
    %v8794 = vpack.c.b16 %v8374, %v8370
    %v8795 = vpack.c.b16 %v8379, %v8375
    %v8796 = vpack.c.b16 %v8380, %v8376
    %v8797 = vpack.c.b16 %v8381, %v8377
    %v8798 = vpack.c.b16 %v8382, %v8378
    %v8799 = vpack.c.b16 %v8387, %v8383
    %v8800 = vpack.c.b16 %v8388, %v8384
    %v8801 = vpack.c.b16 %v8389, %v8385
    %v8802 = vpack.c.b16 %v8390, %v8386
    %v8803 = vpack.c.b16 %v8395, %v8391
    %v8804 = vpack.c.b16 %v8396, %v8392
    %v8805 = vpack.c.b16 %v8397, %v8393
    %v8806 = vpack.c.b16 %v8398, %v8394
    %v8807 = vpack.c.b16 %v8403, %v8399
    %v8808 = vpack.c.b16 %v8404, %v8400
    %v8809 = vpack.c.b16 %v8405, %v8401
    %v8810 = vpack.c.b16 %v8406, %v8402
    %v8811 = vpack.c.b16 %v8411, %v8407
    %v8812 = vpack.c.b16 %v8412, %v8408
    %v8813 = vpack.c.b16 %v8413, %v8409
    %v8814 = vpack.c.b16 %v8414, %v8410
    %v8815 = vpack.c.b16 %v8419, %v8415
    %v8816 = vpack.c.b16 %v8420, %v8416
    %v8817 = vpack.c.b16 %v8421, %v8417
    %v8818 = vpack.c.b16 %v8422, %v8418
    %v8819 = vpack.c.b16 %v8427, %v8423
    %v8820 = vpack.c.b16 %v8428, %v8424
    %v8821 = vpack.c.b16 %v8429, %v8425
    %v8822 = vpack.c.b16 %v8430, %v8426
    %v8823 = vpack.c.b16 %v8435, %v8431
    %v8824 = vpack.c.b16 %v8436, %v8432
    %v8825 = vpack.c.b16 %v8437, %v8433
    %v8826 = vpack.c.b16 %v8438, %v8434
    %v8827 = vpack.c.b16 %v8443, %v8439
    %v8828 = vpack.c.b16 %v8444, %v8440
    %v8829 = vpack.c.b16 %v8445, %v8441
    %v8830 = vpack.c.b16 %v8446, %v8442
    %v8831 = vpack.c.b16 %v8451, %v8447
    %v8832 = vpack.c.b16 %v8452, %v8448
    %v8833 = vpack.c.b16 %v8453, %v8449
    %v8834 = vpack.c.b16 %v8454, %v8450
    %v8835 = vpack.c.b16 %v8459, %v8455
    %v8836 = vpack.c.b16 %v8460, %v8456
    %v8837 = vpack.c.b16 %v8461, %v8457
    %v8838 = vpack.c.b16 %v8462, %v8458
    %v8839 = vpack.c.b16 %v8467, %v8463
    %v8840 = vpack.c.b16 %v8468, %v8464
    %v8841 = vpack.c.b16 %v8469, %v8465
    %v8842 = vpack.c.b16 %v8470, %v8466
    %v8843 = vpack.c.b16 %v8475, %v8471
    %v8844 = vpack.c.b16 %v8476, %v8472
    %v8845 = vpack.c.b16 %v8477, %v8473
    %v8846 = vpack.c.b16 %v8478, %v8474
    %v8847 = vpack.c.b16 %v8483, %v8479
    %v8848 = vpack.c.b16 %v8484, %v8480
    %v8849 = vpack.c.b16 %v8485, %v8481
    %v8850 = vpack.c.b16 %v8486, %v8482
    %v8851 = vpack.c.b16 %v8491, %v8487
    %v8852 = vpack.c.b16 %v8492, %v8488
    %v8853 = vpack.c.b16 %v8493, %v8489
    %v8854 = vpack.c.b16 %v8494, %v8490
    %v8855 = vpack.c.b16 %v8499, %v8495
    %v8856 = vpack.c.b16 %v8500, %v8496
    %v8857 = vpack.c.b16 %v8501, %v8497
    %v8858 = vpack.c.b16 %v8502, %v8498
    %v8859 = vpack.c.b16 %v8507, %v8503
    %v8860 = vpack.c.b16 %v8508, %v8504
    %v8861 = vpack.c.b16 %v8509, %v8505
    %v8862 = vpack.c.b16 %v8510, %v8506
    %v8863 = vpack.c.b16 %v8515, %v8511
    %v8864 = vpack.c.b16 %v8516, %v8512
    %v8865 = vpack.c.b16 %v8517, %v8513
    %v8866 = vpack.c.b16 %v8518, %v8514
    %v8867 = vpack.c.b16 %v8523, %v8519
    %v8868 = vpack.c.b16 %v8524, %v8520
    %v8869 = vpack.c.b16 %v8525, %v8521
    %v8870 = vpack.c.b16 %v8526, %v8522
    %v8871 = vpack.c.b16 %v8531, %v8527
    %v8872 = vpack.c.b16 %v8532, %v8528
    %v8873 = vpack.c.b16 %v8533, %v8529
    %v8874 = vpack.c.b16 %v8534, %v8530
    %v8875 = vpack.c.b16 %v8539, %v8535
    %v8876 = vpack.c.b16 %v8540, %v8536
    %v8877 = vpack.c.b16 %v8541, %v8537
    %v8878 = vpack.c.b16 %v8542, %v8538
    %v8879 = vpack.c.b16 %v8547, %v8543
    %v8880 = vpack.c.b16 %v8548, %v8544
    %v8881 = vpack.c.b16 %v8549, %v8545
    %v8882 = vpack.c.b16 %v8550, %v8546
    %v8883 = vpack.c.b16 %v8555, %v8551
    %v8884 = vpack.c.b16 %v8556, %v8552
    %v8885 = vpack.c.b16 %v8557, %v8553
    %v8886 = vpack.c.b16 %v8558, %v8554
    %v8887 = vpack.c.b16 %v8563, %v8559
    %v8888 = vpack.c.b16 %v8564, %v8560
    %v8889 = vpack.c.b16 %v8565, %v8561
    %v8890 = vpack.c.b16 %v8566, %v8562
    %v8891 = vpack.c.b16 %v8571, %v8567
    %v8892 = vpack.c.b16 %v8572, %v8568
    %v8893 = vpack.c.b16 %v8573, %v8569
    %v8894 = vpack.c.b16 %v8574, %v8570
    %v8895 = vpack.c.b16 %v8579, %v8575
    %v8896 = vpack.c.b16 %v8580, %v8576
    %v8897 = vpack.c.b16 %v8581, %v8577
    %v8898 = vpack.c.b16 %v8582, %v8578
    %v8899 = vpack.c.b16 %v8587, %v8583
    %v8900 = vpack.c.b16 %v8588, %v8584
    %v8901 = vpack.c.b16 %v8589, %v8585
    %v8902 = vpack.c.b16 %v8590, %v8586
    %v8903 = vpack.c.b16 %v8595, %v8591
    %v8904 = vpack.c.b16 %v8596, %v8592
    %v8905 = vpack.c.b16 %v8597, %v8593
    %v8906 = vpack.c.b16 %v8598, %v8594
    %v8907 = vpack.c.b16 %v8603, %v8599
    %v8908 = vpack.c.b16 %v8604, %v8600
    %v8909 = vpack.c.b16 %v8605, %v8601
    %v8910 = vpack.c.b16 %v8606, %v8602
    %v8911 = vpack.c.b16 %v8611, %v8607
    %v8912 = vpack.c.b16 %v8612, %v8608
    %v8913 = vpack.c.b16 %v8613, %v8609
    %v8914 = vpack.c.b16 %v8614, %v8610
    %v8915 = vpack.c.b16 %v8619, %v8615
    %v8916 = vpack.c.b16 %v8620, %v8616
    %v8917 = vpack.c.b16 %v8621, %v8617
    %v8918 = vpack.c.b16 %v8622, %v8618
    %v8919 = vpack.c.b16 %v8627, %v8623
    %v8920 = vpack.c.b16 %v8628, %v8624
    %v8921 = vpack.c.b16 %v8629, %v8625
    %v8922 = vpack.c.b16 %v8630, %v8626
    %v8923 = vpack.c.b16 %v8635, %v8631
    %v8924 = vpack.c.b16 %v8636, %v8632
    %v8925 = vpack.c.b16 %v8637, %v8633
    %v8926 = vpack.c.b16 %v8638, %v8634
    %v8927 = vpack.c.b16 %v8643, %v8639
    %v8928 = vpack.c.b16 %v8644, %v8640
    %v8929 = vpack.c.b16 %v8645, %v8641
    %v8930 = vpack.c.b16 %v8646, %v8642
    %v8931 = vpack.c.b16 %v8651, %v8647
    %v8932 = vpack.c.b16 %v8652, %v8648
    %v8933 = vpack.c.b16 %v8653, %v8649
    %v8934 = vpack.c.b16 %v8654, %v8650
    %v8935 = vpack.c.b16 %v8659, %v8655
    %v8936 = vpack.c.b16 %v8660, %v8656
    %v8937 = vpack.c.b16 %v8661, %v8657
    %v8938 = vpack.c.b16 %v8662, %v8658
    %v8939 = vpack.c.b16 %v8667, %v8663
    %v8940 = vpack.c.b16 %v8668, %v8664
    %v8941 = vpack.c.b16 %v8669, %v8665
    %v8942 = vpack.c.b16 %v8670, %v8666
    %v8943 = vpack.c.b16 %v8675, %v8671
    %v8944 = vpack.c.b16 %v8676, %v8672
    %v8945 = vpack.c.b16 %v8677, %v8673
    %v8946 = vpack.c.b16 %v8678, %v8674
    %v8947 = vpack.c.b16 %v8683, %v8679
    %v8948 = vpack.c.b16 %v8684, %v8680
    %v8949 = vpack.c.b16 %v8685, %v8681
    %v8950 = vpack.c.b16 %v8686, %v8682
    %v8951 = vpack.c.b16 %v8691, %v8687
    %v8952 = vpack.c.b16 %v8692, %v8688
    %v8953 = vpack.c.b16 %v8693, %v8689
    %v8954 = vpack.c.b16 %v8694, %v8690
    %v8955 = vpack.c.b16 %v8699, %v8695
    %v8956 = vpack.c.b16 %v8700, %v8696
    %v8957 = vpack.c.b16 %v8701, %v8697
    %v8958 = vpack.c.b16 %v8702, %v8698
    %9215 = vmatprep.subr.bf16.mxu0 %v8732
    %9216 = vmatpush1.bf16.msra.mxu0 %v8731
    %9217 = vmatprep.subr.bf16.mxu0 %v8728
    %9218 = vmatpush1.bf16.msra.mxu0 %v8727
    %9219 = vmatprep.subr.bf16.mxu0 %v8724
    %9220 = vmatpush1.bf16.msra.mxu0 %v8723
    %9221 = vmatprep.subr.bf16.mxu0 %v8720
    %9222 = vmatpush1.bf16.msra.mxu0 %v8719
    %9223 = vmatprep.subr.bf16.mxu0 %v8716
    %9224 = vmatpush1.bf16.msra.mxu0 %v8715
    %9225 = vmatprep.subr.bf16.mxu0 %v8712
    %9226 = vmatpush1.bf16.msra.mxu0 %v8711
    %9227 = vmatprep.subr.bf16.mxu0 %v8708
    %9228 = vmatpush1.bf16.msra.mxu0 %v8707
    %9229 = vmatprep.subr.bf16.mxu0 %v8704
    %9230 = vmatpush1.bf16.msra.mxu0 %v8703
    %9231 = vmatprep.subr.bf16.mxu0 %v8764
    %9232 = vmatpush2.bf16.msra.mxu0 %v8763
    %9233 = vmatprep.subr.bf16.mxu0 %v8760
    %9234 = vmatpush2.bf16.msra.mxu0 %v8759
    %9235 = vmatprep.subr.bf16.mxu0 %v8756
    %9236 = vmatpush2.bf16.msra.mxu0 %v8755
    %9237 = vmatprep.subr.bf16.mxu0 %v8752
    %9238 = vmatpush2.bf16.msra.mxu0 %v8751
    %9239 = vmatprep.subr.bf16.mxu0 %v8748
    %9240 = vmatpush2.bf16.msra.mxu0 %v8747
    %9241 = vmatprep.subr.bf16.mxu0 %v8744
    %9242 = vmatpush2.bf16.msra.mxu0 %v8743
    %9243 = vmatprep.subr.bf16.mxu0 %v8740
    %9244 = vmatpush2.bf16.msra.mxu0 %v8739
    %9245 = vmatprep.subr.bf16.mxu0 %v8736
    %9246 = vmatpush2.bf16.msra.mxu0 %v8735
    %9247 = vmatprep.mubr.bf16.mxu0 %v7650
    %9248 = vmatmul.mubr.bf16.gmra.mxu0 %v7649
    %v9249 = vpop.f32.mrf.mxu0
    %v9250 = vadd.f32 %v7918, %v9249
    %v9251 = vpop.f32.mrf.mxu0
    %v9252 = vadd.f32 %v7922, %v9251
    %v9253 = vpop.f32.mrf.mxu0
    %v9254 = vpop.f32.mrf.mxu0
    %9255 = vdwg.mxu0
    %9256 = vmatprep.subr.bf16.mxu0 %v8796
    %9257 = vmatpush1.bf16.msra.mxu0 %v8795
    %9258 = vmatprep.subr.bf16.mxu0 %v8792
    %9259 = vmatpush1.bf16.msra.mxu0 %v8791
    %9260 = vmatprep.subr.bf16.mxu0 %v8788
    %9261 = vmatpush1.bf16.msra.mxu0 %v8787
    %9262 = vmatprep.subr.bf16.mxu0 %v8784
    %9263 = vmatpush1.bf16.msra.mxu0 %v8783
    %9264 = vmatprep.subr.bf16.mxu0 %v8780
    %9265 = vmatpush1.bf16.msra.mxu0 %v8779
    %9266 = vmatprep.subr.bf16.mxu0 %v8776
    %9267 = vmatpush1.bf16.msra.mxu0 %v8775
    %9268 = vmatprep.subr.bf16.mxu0 %v8772
    %9269 = vmatpush1.bf16.msra.mxu0 %v8771
    %9270 = vmatprep.subr.bf16.mxu0 %v8768
    %9271 = vmatpush1.bf16.msra.mxu0 %v8767
    %9272 = vmatprep.subr.bf16.mxu0 %v8828
    %9273 = vmatpush2.bf16.msra.mxu0 %v8827
    %9274 = vmatprep.subr.bf16.mxu0 %v8824
    %9275 = vmatpush2.bf16.msra.mxu0 %v8823
    %9276 = vmatprep.subr.bf16.mxu0 %v8820
    %9277 = vmatpush2.bf16.msra.mxu0 %v8819
    %9278 = vmatprep.subr.bf16.mxu0 %v8816
    %9279 = vmatpush2.bf16.msra.mxu0 %v8815
    %9280 = vmatprep.subr.bf16.mxu0 %v8812
    %9281 = vmatpush2.bf16.msra.mxu0 %v8811
    %9282 = vmatprep.subr.bf16.mxu0 %v8808
    %9283 = vmatpush2.bf16.msra.mxu0 %v8807
    %9284 = vmatprep.subr.bf16.mxu0 %v8804
    %9285 = vmatpush2.bf16.msra.mxu0 %v8803
    %9286 = vmatprep.subr.bf16.mxu0 %v8800
    %9287 = vmatpush2.bf16.msra.mxu0 %v8799
    %9288 = vmatprep.mubr.bf16.mxu0 %v7652
    %9289 = vmatmul.mubr.bf16.gmra.mxu0 %v7651
    %v9290 = vpop.f32.mrf.mxu0
    %v9291 = vadd.f32 %v9250, %v9290
    %v9292 = vpop.f32.mrf.mxu0
    %v9293 = vadd.f32 %v9252, %v9292
    %v9294 = vpop.f32.mrf.mxu0
    %v9295 = vpop.f32.mrf.mxu0
    %9296 = vdwg.mxu0
    %9297 = vmatprep.subr.bf16.mxu0 %v8860
    %9298 = vmatpush1.bf16.msra.mxu0 %v8859
    %9299 = vmatprep.subr.bf16.mxu0 %v8856
    %9300 = vmatpush1.bf16.msra.mxu0 %v8855
    %9301 = vmatprep.subr.bf16.mxu0 %v8852
    %9302 = vmatpush1.bf16.msra.mxu0 %v8851
    %9303 = vmatprep.subr.bf16.mxu0 %v8848
    %9304 = vmatpush1.bf16.msra.mxu0 %v8847
    %9305 = vmatprep.subr.bf16.mxu0 %v8844
    %9306 = vmatpush1.bf16.msra.mxu0 %v8843
    %9307 = vmatprep.subr.bf16.mxu0 %v8840
    %9308 = vmatpush1.bf16.msra.mxu0 %v8839
    %9309 = vmatprep.subr.bf16.mxu0 %v8836
    %9310 = vmatpush1.bf16.msra.mxu0 %v8835
    %9311 = vmatprep.subr.bf16.mxu0 %v8832
    %9312 = vmatpush1.bf16.msra.mxu0 %v8831
    %9313 = vmatprep.subr.bf16.mxu0 %v8892
    %9314 = vmatpush2.bf16.msra.mxu0 %v8891
    %9315 = vmatprep.subr.bf16.mxu0 %v8888
    %9316 = vmatpush2.bf16.msra.mxu0 %v8887
    %9317 = vmatprep.subr.bf16.mxu0 %v8884
    %9318 = vmatpush2.bf16.msra.mxu0 %v8883
    %9319 = vmatprep.subr.bf16.mxu0 %v8880
    %9320 = vmatpush2.bf16.msra.mxu0 %v8879
    %9321 = vmatprep.subr.bf16.mxu0 %v8876
    %9322 = vmatpush2.bf16.msra.mxu0 %v8875
    %9323 = vmatprep.subr.bf16.mxu0 %v8872
    %9324 = vmatpush2.bf16.msra.mxu0 %v8871
    %9325 = vmatprep.subr.bf16.mxu0 %v8868
    %9326 = vmatpush2.bf16.msra.mxu0 %v8867
    %9327 = vmatprep.subr.bf16.mxu0 %v8864
    %9328 = vmatpush2.bf16.msra.mxu0 %v8863
    %9329 = vmatprep.mubr.bf16.mxu0 %v7654
    %9330 = vmatmul.mubr.bf16.gmra.mxu0 %v7653
    %v9331 = vpop.f32.mrf.mxu0
    %v9332 = vadd.f32 %v9291, %v9331
    %v9333 = vpop.f32.mrf.mxu0
    %v9334 = vadd.f32 %v9293, %v9333
    %v9335 = vpop.f32.mrf.mxu0
    %v9336 = vpop.f32.mrf.mxu0
    %9337 = vdwg.mxu0
    %9338 = vmatprep.subr.bf16.mxu0 %v8924
    %9339 = vmatpush1.bf16.msra.mxu0 %v8923
    %9340 = vmatprep.subr.bf16.mxu0 %v8920
    %9341 = vmatpush1.bf16.msra.mxu0 %v8919
    %9342 = vmatprep.subr.bf16.mxu0 %v8916
    %9343 = vmatpush1.bf16.msra.mxu0 %v8915
    %9344 = vmatprep.subr.bf16.mxu0 %v8912
    %9345 = vmatpush1.bf16.msra.mxu0 %v8911
    %9346 = vmatprep.subr.bf16.mxu0 %v8908
    %9347 = vmatpush1.bf16.msra.mxu0 %v8907
    %9348 = vmatprep.subr.bf16.mxu0 %v8904
    %9349 = vmatpush1.bf16.msra.mxu0 %v8903
    %9350 = vmatprep.subr.bf16.mxu0 %v8900
    %9351 = vmatpush1.bf16.msra.mxu0 %v8899
    %9352 = vmatprep.subr.bf16.mxu0 %v8896
    %9353 = vmatpush1.bf16.msra.mxu0 %v8895
    %9354 = vmatprep.subr.bf16.mxu0 %v8956
    %9355 = vmatpush2.bf16.msra.mxu0 %v8955
    %9356 = vmatprep.subr.bf16.mxu0 %v8952
    %9357 = vmatpush2.bf16.msra.mxu0 %v8951
    %9358 = vmatprep.subr.bf16.mxu0 %v8948
    %9359 = vmatpush2.bf16.msra.mxu0 %v8947
    %9360 = vmatprep.subr.bf16.mxu0 %v8944
    %9361 = vmatpush2.bf16.msra.mxu0 %v8943
    %9362 = vmatprep.subr.bf16.mxu0 %v8940
    %9363 = vmatpush2.bf16.msra.mxu0 %v8939
    %9364 = vmatprep.subr.bf16.mxu0 %v8936
    %9365 = vmatpush2.bf16.msra.mxu0 %v8935
    %9366 = vmatprep.subr.bf16.mxu0 %v8932
    %9367 = vmatpush2.bf16.msra.mxu0 %v8931
    %9368 = vmatprep.subr.bf16.mxu0 %v8928
    %9369 = vmatpush2.bf16.msra.mxu0 %v8927
    %9370 = vmatprep.mubr.bf16.mxu0 %v7656
    %9371 = vmatmul.mubr.bf16.gmra.mxu0 %v7655
    %v9372 = vpop.f32.mrf.mxu0
    %v9373 = vadd.f32 %v9332, %v9372
    %v9374 = vpop.f32.mrf.mxu0
    %v9375 = vadd.f32 %v9334, %v9374
    %v9376 = vpop.f32.mrf.mxu0
    %v9377 = vpop.f32.mrf.mxu0
    %9378 = vdwg.mxu0
    %9379 = vmatprep.subr.bf16.mxu0 %v8734
    %9380 = vmatpush1.bf16.msra.mxu0 %v8733
    %9381 = vmatprep.subr.bf16.mxu0 %v8730
    %9382 = vmatpush1.bf16.msra.mxu0 %v8729
    %9383 = vmatprep.subr.bf16.mxu0 %v8726
    %9384 = vmatpush1.bf16.msra.mxu0 %v8725
    %9385 = vmatprep.subr.bf16.mxu0 %v8722
    %9386 = vmatpush1.bf16.msra.mxu0 %v8721
    %9387 = vmatprep.subr.bf16.mxu0 %v8718
    %9388 = vmatpush1.bf16.msra.mxu0 %v8717
    %9389 = vmatprep.subr.bf16.mxu0 %v8714
    %9390 = vmatpush1.bf16.msra.mxu0 %v8713
    %9391 = vmatprep.subr.bf16.mxu0 %v8710
    %9392 = vmatpush1.bf16.msra.mxu0 %v8709
    %9393 = vmatprep.subr.bf16.mxu0 %v8706
    %9394 = vmatpush1.bf16.msra.mxu0 %v8705
    %9395 = vmatprep.subr.bf16.mxu0 %v8766
    %9396 = vmatpush2.bf16.msra.mxu0 %v8765
    %9397 = vmatprep.subr.bf16.mxu0 %v8762
    %9398 = vmatpush2.bf16.msra.mxu0 %v8761
    %9399 = vmatprep.subr.bf16.mxu0 %v8758
    %9400 = vmatpush2.bf16.msra.mxu0 %v8757
    %9401 = vmatprep.subr.bf16.mxu0 %v8754
    %9402 = vmatpush2.bf16.msra.mxu0 %v8753
    %9403 = vmatprep.subr.bf16.mxu0 %v8750
    %9404 = vmatpush2.bf16.msra.mxu0 %v8749
    %9405 = vmatprep.subr.bf16.mxu0 %v8746
    %9406 = vmatpush2.bf16.msra.mxu0 %v8745
    %9407 = vmatprep.subr.bf16.mxu0 %v8742
    %9408 = vmatpush2.bf16.msra.mxu0 %v8741
    %9409 = vmatprep.subr.bf16.mxu0 %v8738
    %9410 = vmatpush2.bf16.msra.mxu0 %v8737
    %9411 = vmatprep.mubr.bf16.mxu0 %v7650
    %9412 = vmatmul.mubr.bf16.gmra.mxu0 %v7649
    %v9413 = vpop.f32.mrf.mxu0
    %v9414 = vadd.f32 %v7926, %v9413
    %v9415 = vpop.f32.mrf.mxu0
    %v9416 = vadd.f32 %v7930, %v9415
    %v9417 = vpop.f32.mrf.mxu0
    %v9418 = vpop.f32.mrf.mxu0
    %9419 = vdwg.mxu0
    %9420 = vmatprep.subr.bf16.mxu0 %v8798
    %9421 = vmatpush1.bf16.msra.mxu0 %v8797
    %9422 = vmatprep.subr.bf16.mxu0 %v8794
    %9423 = vmatpush1.bf16.msra.mxu0 %v8793
    %9424 = vmatprep.subr.bf16.mxu0 %v8790
    %9425 = vmatpush1.bf16.msra.mxu0 %v8789
    %9426 = vmatprep.subr.bf16.mxu0 %v8786
    %9427 = vmatpush1.bf16.msra.mxu0 %v8785
    %9428 = vmatprep.subr.bf16.mxu0 %v8782
    %9429 = vmatpush1.bf16.msra.mxu0 %v8781
    %9430 = vmatprep.subr.bf16.mxu0 %v8778
    %9431 = vmatpush1.bf16.msra.mxu0 %v8777
    %9432 = vmatprep.subr.bf16.mxu0 %v8774
    %9433 = vmatpush1.bf16.msra.mxu0 %v8773
    %9434 = vmatprep.subr.bf16.mxu0 %v8770
    %9435 = vmatpush1.bf16.msra.mxu0 %v8769
    %9436 = vmatprep.subr.bf16.mxu0 %v8830
    %9437 = vmatpush2.bf16.msra.mxu0 %v8829
    %9438 = vmatprep.subr.bf16.mxu0 %v8826
    %9439 = vmatpush2.bf16.msra.mxu0 %v8825
    %9440 = vmatprep.subr.bf16.mxu0 %v8822
    %9441 = vmatpush2.bf16.msra.mxu0 %v8821
    %9442 = vmatprep.subr.bf16.mxu0 %v8818
    %9443 = vmatpush2.bf16.msra.mxu0 %v8817
    %9444 = vmatprep.subr.bf16.mxu0 %v8814
    %9445 = vmatpush2.bf16.msra.mxu0 %v8813
    %9446 = vmatprep.subr.bf16.mxu0 %v8810
    %9447 = vmatpush2.bf16.msra.mxu0 %v8809
    %9448 = vmatprep.subr.bf16.mxu0 %v8806
    %9449 = vmatpush2.bf16.msra.mxu0 %v8805
    %9450 = vmatprep.subr.bf16.mxu0 %v8802
    %9451 = vmatpush2.bf16.msra.mxu0 %v8801
    %9452 = vmatprep.mubr.bf16.mxu0 %v7652
    %9453 = vmatmul.mubr.bf16.gmra.mxu0 %v7651
    %v9454 = vpop.f32.mrf.mxu0
    %v9455 = vadd.f32 %v9414, %v9454
    %v9456 = vpop.f32.mrf.mxu0
    %v9457 = vadd.f32 %v9416, %v9456
    %v9458 = vpop.f32.mrf.mxu0
    %v9459 = vpop.f32.mrf.mxu0
    %9460 = vdwg.mxu0
    %9461 = vmatprep.subr.bf16.mxu0 %v8862
    %9462 = vmatpush1.bf16.msra.mxu0 %v8861
    %9463 = vmatprep.subr.bf16.mxu0 %v8858
    %9464 = vmatpush1.bf16.msra.mxu0 %v8857
    %9465 = vmatprep.subr.bf16.mxu0 %v8854
    %9466 = vmatpush1.bf16.msra.mxu0 %v8853
    %9467 = vmatprep.subr.bf16.mxu0 %v8850
    %9468 = vmatpush1.bf16.msra.mxu0 %v8849
    %9469 = vmatprep.subr.bf16.mxu0 %v8846
    %9470 = vmatpush1.bf16.msra.mxu0 %v8845
    %9471 = vmatprep.subr.bf16.mxu0 %v8842
    %9472 = vmatpush1.bf16.msra.mxu0 %v8841
    %9473 = vmatprep.subr.bf16.mxu0 %v8838
    %9474 = vmatpush1.bf16.msra.mxu0 %v8837
    %9475 = vmatprep.subr.bf16.mxu0 %v8834
    %9476 = vmatpush1.bf16.msra.mxu0 %v8833
    %9477 = vmatprep.subr.bf16.mxu0 %v8894
    %9478 = vmatpush2.bf16.msra.mxu0 %v8893
    %9479 = vmatprep.subr.bf16.mxu0 %v8890
    %9480 = vmatpush2.bf16.msra.mxu0 %v8889
    %9481 = vmatprep.subr.bf16.mxu0 %v8886
    %9482 = vmatpush2.bf16.msra.mxu0 %v8885
    %9483 = vmatprep.subr.bf16.mxu0 %v8882
    %9484 = vmatpush2.bf16.msra.mxu0 %v8881
    %9485 = vmatprep.subr.bf16.mxu0 %v8878
    %9486 = vmatpush2.bf16.msra.mxu0 %v8877
    %9487 = vmatprep.subr.bf16.mxu0 %v8874
    %9488 = vmatpush2.bf16.msra.mxu0 %v8873
    %9489 = vmatprep.subr.bf16.mxu0 %v8870
    %9490 = vmatpush2.bf16.msra.mxu0 %v8869
    %9491 = vmatprep.subr.bf16.mxu0 %v8866
    %9492 = vmatpush2.bf16.msra.mxu0 %v8865
    %9493 = vmatprep.mubr.bf16.mxu0 %v7654
    %9494 = vmatmul.mubr.bf16.gmra.mxu0 %v7653
    %v9495 = vpop.f32.mrf.mxu0
    %v9496 = vadd.f32 %v9455, %v9495
    %v9497 = vpop.f32.mrf.mxu0
    %v9498 = vadd.f32 %v9457, %v9497
    %v9499 = vpop.f32.mrf.mxu0
    %v9500 = vpop.f32.mrf.mxu0
    %9501 = vdwg.mxu0
    %9502 = vmatprep.subr.bf16.mxu0 %v8926
    %9503 = vmatpush1.bf16.msra.mxu0 %v8925
    %9504 = vmatprep.subr.bf16.mxu0 %v8922
    %9505 = vmatpush1.bf16.msra.mxu0 %v8921
    %9506 = vmatprep.subr.bf16.mxu0 %v8918
    %9507 = vmatpush1.bf16.msra.mxu0 %v8917
    %9508 = vmatprep.subr.bf16.mxu0 %v8914
    %9509 = vmatpush1.bf16.msra.mxu0 %v8913
    %9510 = vmatprep.subr.bf16.mxu0 %v8910
    %9511 = vmatpush1.bf16.msra.mxu0 %v8909
    %9512 = vmatprep.subr.bf16.mxu0 %v8906
    %9513 = vmatpush1.bf16.msra.mxu0 %v8905
    %9514 = vmatprep.subr.bf16.mxu0 %v8902
    %9515 = vmatpush1.bf16.msra.mxu0 %v8901
    %9516 = vmatprep.subr.bf16.mxu0 %v8898
    %9517 = vmatpush1.bf16.msra.mxu0 %v8897
    %9518 = vmatprep.subr.bf16.mxu0 %v8958
    %9519 = vmatpush2.bf16.msra.mxu0 %v8957
    %9520 = vmatprep.subr.bf16.mxu0 %v8954
    %9521 = vmatpush2.bf16.msra.mxu0 %v8953
    %9522 = vmatprep.subr.bf16.mxu0 %v8950
    %9523 = vmatpush2.bf16.msra.mxu0 %v8949
    %9524 = vmatprep.subr.bf16.mxu0 %v8946
    %9525 = vmatpush2.bf16.msra.mxu0 %v8945
    %9526 = vmatprep.subr.bf16.mxu0 %v8942
    %9527 = vmatpush2.bf16.msra.mxu0 %v8941
    %9528 = vmatprep.subr.bf16.mxu0 %v8938
    %9529 = vmatpush2.bf16.msra.mxu0 %v8937
    %9530 = vmatprep.subr.bf16.mxu0 %v8934
    %9531 = vmatpush2.bf16.msra.mxu0 %v8933
    %9532 = vmatprep.subr.bf16.mxu0 %v8930
    %9533 = vmatpush2.bf16.msra.mxu0 %v8929
    %9534 = vmatprep.mubr.bf16.mxu0 %v7656
    %9535 = vmatmul.mubr.bf16.gmra.mxu0 %v7655
    %v9536 = vpop.f32.mrf.mxu0
    %v9537 = vadd.f32 %v9496, %v9536
    %v9538 = vpop.f32.mrf.mxu0
    %v9539 = vadd.f32 %v9498, %v9538
    %v9540 = vpop.f32.mrf.mxu0
    %v9541 = vpop.f32.mrf.mxu0
    %9542 = vdwg.mxu0
    %v9543 = vmax.f32 %v9373, 0.0
    %v9544 = vmax.f32 %v9375, 0.0
    %v9545 = vmax.f32 %v9537, 0.0
    %v9546 = vmax.f32 %v9539, 0.0
    %v9547 = vpack.c.bf16 %v9543, %v9543
    %v9548 = vpack.c.bf16 %v9544, %v9544
    %v9549 = vpack.c.bf16 %v9545, %v9545
    %v9550 = vpack.c.bf16 %v9546, %v9546
    %v9551 = vld [vmem:[%s5] sm:$0xf]
    %v9552 = vld [vmem:[%s5 + $0x4] sm:$0xf]
    %v9553 = vld [vmem:[%s5 + $0x8] sm:$0xf]
    %v9554 = vld [vmem:[%s5 + $0xc] sm:$0xf]
    %v9555 = vld [vmem:[%s5 + $0x10] sm:$0xf]
    %v9556 = vld [vmem:[%s5 + $0x14] sm:$0xf]
    %v9557 = vld [vmem:[%s5 + $0x18] sm:$0xf]
    %v9558 = vld [vmem:[%s5 + $0x1c] sm:$0xf]
    %v9559 = vld [vmem:[%s5 + $0x20] sm:$0xf]
    %v9560 = vld [vmem:[%s5 + $0x24] sm:$0xf]
    %v9561 = vld [vmem:[%s5 + $0x28] sm:$0xf]
    %v9562 = vld [vmem:[%s5 + $0x2c] sm:$0xf]
    %v9563 = vld [vmem:[%s5 + $0x30] sm:$0xf]
    %v9564 = vld [vmem:[%s5 + $0x34] sm:$0xf]
    %v9565 = vld [vmem:[%s5 + $0x38] sm:$0xf]
    %v9566 = vld [vmem:[%s5 + $0x3c] sm:$0xf]
    %v9567 = vld [vmem:[%s5 + $0x40] sm:$0xf]
    %v9568 = vld [vmem:[%s5 + $0x44] sm:$0xf]
    %v9569 = vld [vmem:[%s5 + $0x48] sm:$0xf]
    %v9570 = vld [vmem:[%s5 + $0x4c] sm:$0xf]
    %v9571 = vld [vmem:[%s5 + $0x50] sm:$0xf]
    %v9572 = vld [vmem:[%s5 + $0x54] sm:$0xf]
    %v9573 = vld [vmem:[%s5 + $0x58] sm:$0xf]
    %v9574 = vld [vmem:[%s5 + $0x5c] sm:$0xf]
    %v9575 = vld [vmem:[%s5 + $0x60] sm:$0xf]
    %v9576 = vld [vmem:[%s5 + $0x64] sm:$0xf]
    %v9577 = vld [vmem:[%s5 + $0x68] sm:$0xf]
    %v9578 = vld [vmem:[%s5 + $0x6c] sm:$0xf]
    %v9579 = vld [vmem:[%s5 + $0x70] sm:$0xf]
    %v9580 = vld [vmem:[%s5 + $0x74] sm:$0xf]
    %v9581 = vld [vmem:[%s5 + $0x78] sm:$0xf]
    %v9582 = vld [vmem:[%s5 + $0x7c] sm:$0xf]
    %v9583 = vld [vmem:[%s5 + $0x80] sm:$0xf]
    %v9584 = vld [vmem:[%s5 + $0x84] sm:$0xf]
    %v9585 = vld [vmem:[%s5 + $0x88] sm:$0xf]
    %v9586 = vld [vmem:[%s5 + $0x8c] sm:$0xf]
    %v9587 = vld [vmem:[%s5 + $0x90] sm:$0xf]
    %v9588 = vld [vmem:[%s5 + $0x94] sm:$0xf]
    %v9589 = vld [vmem:[%s5 + $0x98] sm:$0xf]
    %v9590 = vld [vmem:[%s5 + $0x9c] sm:$0xf]
    %v9591 = vld [vmem:[%s5 + $0xa0] sm:$0xf]
    %v9592 = vld [vmem:[%s5 + $0xa4] sm:$0xf]
    %v9593 = vld [vmem:[%s5 + $0xa8] sm:$0xf]
    %v9594 = vld [vmem:[%s5 + $0xac] sm:$0xf]
    %v9595 = vld [vmem:[%s5 + $0xb0] sm:$0xf]
    %v9596 = vld [vmem:[%s5 + $0xb4] sm:$0xf]
    %v9597 = vld [vmem:[%s5 + $0xb8] sm:$0xf]
    %v9598 = vld [vmem:[%s5 + $0xbc] sm:$0xf]
    %v9599 = vld [vmem:[%s5 + $0xc0] sm:$0xf]
    %v9600 = vld [vmem:[%s5 + $0xc4] sm:$0xf]
    %v9601 = vld [vmem:[%s5 + $0xc8] sm:$0xf]
    %v9602 = vld [vmem:[%s5 + $0xcc] sm:$0xf]
    %v9603 = vld [vmem:[%s5 + $0xd0] sm:$0xf]
    %v9604 = vld [vmem:[%s5 + $0xd4] sm:$0xf]
    %v9605 = vld [vmem:[%s5 + $0xd8] sm:$0xf]
    %v9606 = vld [vmem:[%s5 + $0xdc] sm:$0xf]
    %v9607 = vld [vmem:[%s5 + $0xe0] sm:$0xf]
    %v9608 = vld [vmem:[%s5 + $0xe4] sm:$0xf]
    %v9609 = vld [vmem:[%s5 + $0xe8] sm:$0xf]
    %v9610 = vld [vmem:[%s5 + $0xec] sm:$0xf]
    %v9611 = vld [vmem:[%s5 + $0xf0] sm:$0xf]
    %v9612 = vld [vmem:[%s5 + $0xf4] sm:$0xf]
    %v9613 = vld [vmem:[%s5 + $0xf8] sm:$0xf]
    %v9614 = vld [vmem:[%s5 + $0xfc] sm:$0xf]
    %v9615 = vld [vmem:[%s6] sm:$0x1]
    %v9617 = vlaneseq
    %v9618 = vshrl.u32 %v9617, 7
    %v9619 = vsub.s32 0, %v9618
    %v9620 = vrot.slane %v9615, %v9619
    %v9686 = vunpack.c.l.b16 %v9551
    %v9687 = vunpack.c.l.b16 %v9552
    %v9688 = vunpack.c.l.b16 %v9553
    %v9689 = vunpack.c.l.b16 %v9554
    %v9690 = vunpack.c.l.b16 %v9555
    %v9691 = vunpack.c.l.b16 %v9556
    %v9692 = vunpack.c.l.b16 %v9557
    %v9693 = vunpack.c.l.b16 %v9558
    %v9694 = vunpack.c.l.b16 %v9559
    %v9695 = vunpack.c.l.b16 %v9560
    %v9696 = vunpack.c.l.b16 %v9561
    %v9697 = vunpack.c.l.b16 %v9562
    %v9698 = vunpack.c.l.b16 %v9563
    %v9699 = vunpack.c.l.b16 %v9564
    %v9700 = vunpack.c.l.b16 %v9565
    %v9701 = vunpack.c.l.b16 %v9566
    %v9702 = vunpack.c.l.b16 %v9567
    %v9703 = vunpack.c.l.b16 %v9568
    %v9704 = vunpack.c.l.b16 %v9569
    %v9705 = vunpack.c.l.b16 %v9570
    %v9706 = vunpack.c.l.b16 %v9571
    %v9707 = vunpack.c.l.b16 %v9572
    %v9708 = vunpack.c.l.b16 %v9573
    %v9709 = vunpack.c.l.b16 %v9574
    %v9710 = vunpack.c.l.b16 %v9575
    %v9711 = vunpack.c.l.b16 %v9576
    %v9712 = vunpack.c.l.b16 %v9577
    %v9713 = vunpack.c.l.b16 %v9578
    %v9714 = vunpack.c.l.b16 %v9579
    %v9715 = vunpack.c.l.b16 %v9580
    %v9716 = vunpack.c.l.b16 %v9581
    %v9717 = vunpack.c.l.b16 %v9582
    %v9718 = vunpack.c.l.b16 %v9583
    %v9719 = vunpack.c.l.b16 %v9584
    %v9720 = vunpack.c.l.b16 %v9585
    %v9721 = vunpack.c.l.b16 %v9586
    %v9722 = vunpack.c.l.b16 %v9587
    %v9723 = vunpack.c.l.b16 %v9588
    %v9724 = vunpack.c.l.b16 %v9589
    %v9725 = vunpack.c.l.b16 %v9590
    %v9726 = vunpack.c.l.b16 %v9591
    %v9727 = vunpack.c.l.b16 %v9592
    %v9728 = vunpack.c.l.b16 %v9593
    %v9729 = vunpack.c.l.b16 %v9594
    %v9730 = vunpack.c.l.b16 %v9595
    %v9731 = vunpack.c.l.b16 %v9596
    %v9732 = vunpack.c.l.b16 %v9597
    %v9733 = vunpack.c.l.b16 %v9598
    %v9734 = vunpack.c.l.b16 %v9599
    %v9735 = vunpack.c.l.b16 %v9600
    %v9736 = vunpack.c.l.b16 %v9601
    %v9737 = vunpack.c.l.b16 %v9602
    %v9738 = vunpack.c.l.b16 %v9603
    %v9739 = vunpack.c.l.b16 %v9604
    %v9740 = vunpack.c.l.b16 %v9605
    %v9741 = vunpack.c.l.b16 %v9606
    %v9742 = vunpack.c.l.b16 %v9607
    %v9743 = vunpack.c.l.b16 %v9608
    %v9744 = vunpack.c.l.b16 %v9609
    %v9745 = vunpack.c.l.b16 %v9610
    %v9746 = vunpack.c.l.b16 %v9611
    %v9747 = vunpack.c.l.b16 %v9612
    %v9748 = vunpack.c.l.b16 %v9613
    %v9749 = vunpack.c.l.b16 %v9614
    %v9750 = vpack.c.b16 %v9687, %v9686
    %v9751 = vpack.c.b16 %v9689, %v9688
    %v9752 = vpack.c.b16 %v9691, %v9690
    %v9753 = vpack.c.b16 %v9693, %v9692
    %v9754 = vpack.c.b16 %v9695, %v9694
    %v9755 = vpack.c.b16 %v9697, %v9696
    %v9756 = vpack.c.b16 %v9699, %v9698
    %v9757 = vpack.c.b16 %v9701, %v9700
    %v9758 = vpack.c.b16 %v9703, %v9702
    %v9759 = vpack.c.b16 %v9705, %v9704
    %v9760 = vpack.c.b16 %v9707, %v9706
    %v9761 = vpack.c.b16 %v9709, %v9708
    %v9762 = vpack.c.b16 %v9711, %v9710
    %v9763 = vpack.c.b16 %v9713, %v9712
    %v9764 = vpack.c.b16 %v9715, %v9714
    %v9765 = vpack.c.b16 %v9717, %v9716
    %v9766 = vpack.c.b16 %v9719, %v9718
    %v9767 = vpack.c.b16 %v9721, %v9720
    %v9768 = vpack.c.b16 %v9723, %v9722
    %v9769 = vpack.c.b16 %v9725, %v9724
    %v9770 = vpack.c.b16 %v9727, %v9726
    %v9771 = vpack.c.b16 %v9729, %v9728
    %v9772 = vpack.c.b16 %v9731, %v9730
    %v9773 = vpack.c.b16 %v9733, %v9732
    %v9774 = vpack.c.b16 %v9735, %v9734
    %v9775 = vpack.c.b16 %v9737, %v9736
    %v9776 = vpack.c.b16 %v9739, %v9738
    %v9777 = vpack.c.b16 %v9741, %v9740
    %v9778 = vpack.c.b16 %v9743, %v9742
    %v9779 = vpack.c.b16 %v9745, %v9744
    %v9780 = vpack.c.b16 %v9747, %v9746
    %v9781 = vpack.c.b16 %v9749, %v9748
    %9814 = vmatprep.subr.bf16.mxu0 0
    %9815 = vmatpush1.bf16.msra.mxu0 %v9757
    %9816 = vmatprep.subr.bf16.mxu0 0
    %9817 = vmatpush1.bf16.msra.mxu0 %v9756
    %9818 = vmatprep.subr.bf16.mxu0 0
    %9819 = vmatpush1.bf16.msra.mxu0 %v9755
    %9820 = vmatprep.subr.bf16.mxu0 0
    %9821 = vmatpush1.bf16.msra.mxu0 %v9754
    %9822 = vmatprep.subr.bf16.mxu0 0
    %9823 = vmatpush1.bf16.msra.mxu0 %v9753
    %9824 = vmatprep.subr.bf16.mxu0 0
    %9825 = vmatpush1.bf16.msra.mxu0 %v9752
    %9826 = vmatprep.subr.bf16.mxu0 0
    %9827 = vmatpush1.bf16.msra.mxu0 %v9751
    %9828 = vmatprep.subr.bf16.mxu0 0
    %9829 = vmatpush1.bf16.msra.mxu0 %v9750
    %9830 = vmatprep.subr.bf16.mxu0 0
    %9831 = vmatpush2.bf16.msra.mxu0 %v9765
    %9832 = vmatprep.subr.bf16.mxu0 0
    %9833 = vmatpush2.bf16.msra.mxu0 %v9764
    %9834 = vmatprep.subr.bf16.mxu0 0
    %9835 = vmatpush2.bf16.msra.mxu0 %v9763
    %9836 = vmatprep.subr.bf16.mxu0 0
    %9837 = vmatpush2.bf16.msra.mxu0 %v9762
    %9838 = vmatprep.subr.bf16.mxu0 0
    %9839 = vmatpush2.bf16.msra.mxu0 %v9761
    %9840 = vmatprep.subr.bf16.mxu0 0
    %9841 = vmatpush2.bf16.msra.mxu0 %v9760
    %9842 = vmatprep.subr.bf16.mxu0 0
    %9843 = vmatpush2.bf16.msra.mxu0 %v9759
    %9844 = vmatprep.subr.bf16.mxu0 0
    %9845 = vmatpush2.bf16.msra.mxu0 %v9758
    %9846 = vmatprep.mubr.bf16.mxu0 %v9548
    %9847 = vmatmul.mubr.bf16.gmra.mxu0 %v9547
    %v9848 = vpop.f32.mrf.mxu0
    %v9849 = vadd.f32 %v9620, %v9848
    %v9850 = vpop.f32.mrf.mxu0
    %v9851 = vpop.f32.mrf.mxu0
    %v9852 = vpop.f32.mrf.mxu0
    %9853 = vdwg.mxu0
    %9854 = vmatprep.subr.bf16.mxu0 0
    %9855 = vmatpush1.bf16.msra.mxu0 %v9773
    %9856 = vmatprep.subr.bf16.mxu0 0
    %9857 = vmatpush1.bf16.msra.mxu0 %v9772
    %9858 = vmatprep.subr.bf16.mxu0 0
    %9859 = vmatpush1.bf16.msra.mxu0 %v9771
    %9860 = vmatprep.subr.bf16.mxu0 0
    %9861 = vmatpush1.bf16.msra.mxu0 %v9770
    %9862 = vmatprep.subr.bf16.mxu0 0
    %9863 = vmatpush1.bf16.msra.mxu0 %v9769
    %9864 = vmatprep.subr.bf16.mxu0 0
    %9865 = vmatpush1.bf16.msra.mxu0 %v9768
    %9866 = vmatprep.subr.bf16.mxu0 0
    %9867 = vmatpush1.bf16.msra.mxu0 %v9767
    %9868 = vmatprep.subr.bf16.mxu0 0
    %9869 = vmatpush1.bf16.msra.mxu0 %v9766
    %9870 = vmatprep.subr.bf16.mxu0 0
    %9871 = vmatpush2.bf16.msra.mxu0 %v9781
    %9872 = vmatprep.subr.bf16.mxu0 0
    %9873 = vmatpush2.bf16.msra.mxu0 %v9780
    %9874 = vmatprep.subr.bf16.mxu0 0
    %9875 = vmatpush2.bf16.msra.mxu0 %v9779
    %9876 = vmatprep.subr.bf16.mxu0 0
    %9877 = vmatpush2.bf16.msra.mxu0 %v9778
    %9878 = vmatprep.subr.bf16.mxu0 0
    %9879 = vmatpush2.bf16.msra.mxu0 %v9777
    %9880 = vmatprep.subr.bf16.mxu0 0
    %9881 = vmatpush2.bf16.msra.mxu0 %v9776
    %9882 = vmatprep.subr.bf16.mxu0 0
    %9883 = vmatpush2.bf16.msra.mxu0 %v9775
    %9884 = vmatprep.subr.bf16.mxu0 0
    %9885 = vmatpush2.bf16.msra.mxu0 %v9774
    %9886 = vmatprep.mubr.bf16.mxu0 %v9550
    %9887 = vmatmul.mubr.bf16.gmra.mxu0 %v9549
    %v9888 = vpop.f32.mrf.mxu0
    %v9889 = vadd.f32 %v9849, %v9888
    %v9890 = vpop.f32.mrf.mxu0
    %v9891 = vpop.f32.mrf.mxu0
    %v9892 = vpop.f32.mrf.mxu0
    %9893 = vdwg.mxu0
    %9894 = vst [vmem:[#allocation10] sm:$0xff] %v9889
    // Predicated region
    $region46: #{net_forward.1} parent=1 // pred_check
      _
    $region47: #{net_forward.1} parent=1 // pred_check_branch
      %9896 = sbr.rel (0) target = $region49
    $region48: #{net_forward.1} parent=1 // pred_region
      %s9898 = ssub.s32 128, 128
      %9899 = vsyncadd [#allocation4], %s9898
      %s9901 = sshll.u32 [#allocation10], 4
      %s9902 = int_to_ptr.vmem [resolvable:$true] %s9901
      %9904 = dma.vmem_to_hbm [thread:$0]  %s9902, 128, %s7, [#allocation4]
    $region49: #{net_forward.1} parent=1 // pred_fallthru
      _
    // Predicated region
    $region50: #{net_forward.1} parent=1 // pred_check
      _
    $region51: #{net_forward.1} parent=1 // pred_check_branch
      %9906 = sbr.rel (0) target = $region53
    $region52: #{net_forward.1} parent=1 // pred_region
      %9907 = dma.done [#allocation4], 128
    $region53: #{net_forward.1} parent=1 // pred_fallthru
      _
    %9908 = vsyncpa [#allocation3], 1
    %9909 = vsyncpa [#allocation6], 1
    %9910 = vsyncpa [#allocation9], 1
    %9911 = vsyncpa [#allocation4], 1

</llo_original>
